<compile_context>
chip_gen: v7x
topology: tpu7x:2x2x1
jax: 0.10.0
libtpu: 0.0.40
codegen_flags: <defaults>
</compile_context>

<pallas_src>
import math

import jax
import jax.numpy as jnp
from jax.experimental import pallas as pl
from jax.experimental.pallas import tpu as pltpu

HIDDEN = 1000
HIDDEN_PAD = 1024          # next multiple of 128
IN_SIZE = 512
OUT_SIZE = 512


def _mlp_kernel(x_ref, w1_ref, b1_ref, w2_ref, b2_ref, wo_ref, bo_ref, o_ref):
    # One batch tile per grid step; the three bf16 weights (and biases) are
    # VMEM-resident across the grid (constant index_maps, single-buffered).
    x = x_ref[...].astype(jnp.bfloat16)
    # Materialize each activation once in bf16: only the bf16 copy stays live
    # between layers (f32 dot result + bias + tanh are transient).
    h1 = jnp.tanh(
        jnp.dot(x, w1_ref[...], preferred_element_type=jnp.float32) + b1_ref[...]
    ).astype(jnp.bfloat16)
    h2 = jnp.tanh(
        jnp.dot(h1, w2_ref[...], preferred_element_type=jnp.float32) + b2_ref[...]
    ).astype(jnp.bfloat16)
    out = (
        jnp.dot(h2, wo_ref[...], preferred_element_type=jnp.float32) + bo_ref[...]
    )
    o_ref[...] = out.astype(o_ref.dtype)


def _round_up(n, m):
    return ((n + m - 1) // m) * m


def net_forward(x, params, *, batch_tile=512):
    """x: (B, 512) f32.  params: padded/bf16 weights from init_params()."""
    B = x.shape[0]
    # Batch tile: multiple of 32 (keeps bf16 sublane-pair packing unmasked),
    # at most `batch_tile`.
    tb = min(batch_tile, _round_up(B, 32))
    b_pad = _round_up(B, tb)
    if b_pad != B:
        x = jnp.pad(x, ((0, b_pad - B), (0, 0)))

    w1, b1 = params["il_w"], params["il_b"]
    w2, b2 = params["h1_w"], params["h1_b"]
    wo, bo = params["ol_w"], params["ol_b"]

    n_tiles = b_pad // tb
    grid = (n_tiles,)

    # Megacore sharding only pays off when there are enough batch tiles to
    # amortize duplicating the ~4 MiB resident weights on each v7x TC.
    dim_sem = ("parallel",) if n_tiles > 2 else ("arbitrary",)

    flops = 2 * b_pad * (
        IN_SIZE * HIDDEN_PAD + HIDDEN_PAD * HIDDEN_PAD + HIDDEN_PAD * OUT_SIZE
    )
    transcendentals = 2 * b_pad * HIDDEN_PAD
    bytes_accessed = (
        w1.nbytes + b1.nbytes + w2.nbytes + b2.nbytes + wo.nbytes + bo.nbytes
        + x.nbytes + b_pad * OUT_SIZE * 4
    )

    out = pl.pallas_call(
        _mlp_kernel,
        out_shape=jax.ShapeDtypeStruct((b_pad, OUT_SIZE), jnp.float32),
        grid=grid,
        in_specs=[
            # Streaming x tile (default double-buffered pipeline).
            pl.BlockSpec((tb, IN_SIZE), lambda i: (i, 0)),
            # Resident weights/biases: constant index_map + single buffer.
            pl.BlockSpec((IN_SIZE, HIDDEN_PAD), lambda i: (0, 0),
                         pipeline_mode=pl.Buffered(1)),
            pl.BlockSpec((1, HIDDEN_PAD), lambda i: (0, 0),
                         pipeline_mode=pl.Buffered(1)),
            pl.BlockSpec((HIDDEN_PAD, HIDDEN_PAD), lambda i: (0, 0),
                         pipeline_mode=pl.Buffered(1)),
            pl.BlockSpec((1, HIDDEN_PAD), lambda i: (0, 0),
                         pipeline_mode=pl.Buffered(1)),
            pl.BlockSpec((HIDDEN_PAD, OUT_SIZE), lambda i: (0, 0),
                         pipeline_mode=pl.Buffered(1)),
            pl.BlockSpec((1, OUT_SIZE), lambda i: (0, 0),
                         pipeline_mode=pl.Buffered(1)),
        ],
        out_specs=pl.BlockSpec((tb, OUT_SIZE), lambda i: (i, 0)),
        compiler_params=pltpu.CompilerParams(
            dimension_semantics=dim_sem,
            vmem_limit_bytes=40 << 20,   # ~14-18 MiB footprint at tb=512
        ),
        cost_estimate=pl.CostEstimate(
            flops=flops,
            transcendentals=transcendentals,
            bytes_accessed=bytes_accessed,
        ),
    )(x, w1, b1, w2, b2, wo, bo)

    return out[:B]


def _xavier_uniform(key, fan_out, fan_in):
    # torch.nn.init.xavier_uniform_ on a (out, in) weight.
    bound = math.sqrt(6.0 / (fan_in + fan_out))
    return jax.random.uniform(
        key, (fan_out, fan_in), jnp.float32, minval=-bound, maxval=bound
    )


def _default_bias(key, fan_out, fan_in):
    # PyTorch nn.Linear default bias init: U(-1/sqrt(fan_in), 1/sqrt(fan_in)).
    bound = 1.0 / math.sqrt(fan_in)
    return jax.random.uniform(
        key, (fan_out,), jnp.float32, minval=-bound, maxval=bound
    )


def init_params(key):
    """Returns (kernel_params, reference_params_f32).

    kernel_params: weights transposed to (in, out), zero-padded HIDDEN->1024,
    cast to bf16; biases as (1, out) f32 rows (zero-padded where needed).
    reference_params_f32: unpadded f32 transposed weights for a pure-JAX check.
    """
    # Initialize ALL layers declared in __init__ (deterministically), even
    # though only il / hidden1 / ol affect the forward output.
    layer_dims = [
        ("il", IN_SIZE, HIDDEN),
        ("hidden1", HIDDEN, HIDDEN),
        ("hidden2", HIDDEN, HIDDEN),
        ("hidden3", HIDDEN, HIDDEN),
        ("hidden4", HIDDEN, HIDDEN),
        ("hidden5", HIDDEN, HIDDEN),
        ("ol", HIDDEN, OUT_SIZE),
    ]
    keys = jax.random.split(key, 2 * len(layer_dims))
    raw = {}
    for i, (name, fin, fout) in enumerate(layer_dims):
        w = _xavier_uniform(keys[2 * i], fout, fin)        # (out, in) like torch
        b = _default_bias(keys[2 * i + 1], fout, fin)
        raw[name] = (w, b)

    pad_h = HIDDEN_PAD - HIDDEN

    il_w = raw["il"][0].T                                  # (512, 1000)
    h1_w = raw["hidden1"][0].T                             # (1000, 1000)
    ol_w = raw["ol"][0].T                                  # (1000, 512)

    kernel_params = {
        # il: pad output columns; padded bias cols are 0 -> tanh(0)=0.
        "il_w": jnp.pad(il_w, ((0, 0), (0, pad_h))).astype(jnp.bfloat16),
        "il_b": jnp.pad(raw["il"][1], (0, pad_h))[None, :],
        # hidden1: pad both dims with zeros (padded h1 lanes are 0, contribute 0).
        "h1_w": jnp.pad(h1_w, ((0, pad_h), (0, pad_h))).astype(jnp.bfloat16),
        "h1_b": jnp.pad(raw["hidden1"][1], (0, pad_h))[None, :],
        # ol: pad input rows with zeros (padded h2 lanes are 0, contribute 0).
        "ol_w": jnp.pad(ol_w, ((0, pad_h), (0, 0))).astype(jnp.bfloat16),
        "ol_b": raw["ol"][1][None, :],
    }
    ref_params_f32 = {
        "il_w": il_w, "il_b": raw["il"][1][None, :],
        "h1_w": h1_w, "h1_b": raw["hidden1"][1][None, :],
        "ol_w": ol_w, "ol_b": raw["ol"][1][None, :],
    }
    return kernel_params, ref_params_f32


def _reference_bf16(x, params):
    # Same numerics as the kernel (bf16 weights/activations, f32 accumulate).
    xb = x.astype(jnp.bfloat16)
    h1 = jnp.tanh(
        jnp.dot(xb, params["il_w"], preferred_element_type=jnp.float32)
        + params["il_b"]
    ).astype(jnp.bfloat16)
    h2 = jnp.tanh(
        jnp.dot(h1, params["h1_w"], preferred_element_type=jnp.float32)
        + params["h1_b"]
    ).astype(jnp.bfloat16)
    return (
        jnp.dot(h2, params["ol_w"], preferred_element_type=jnp.float32)
        + params["ol_b"]
    )


def _reference_f32(x, params):
    # Full-precision, unpadded reference (matches the PyTorch forward).
    h1 = jnp.tanh(x @ params["il_w"] + params["il_b"])
    h2 = jnp.tanh(h1 @ params["h1_w"] + params["h1_b"])
    return h2 @ params["ol_w"] + params["ol_b"]


if __name__ == "__main__":
    key = jax.random.PRNGKey(0)
    pkey, xkey = jax.random.split(key)
    params, ref_params = init_params(pkey)

    # batch=37: batch padding, single tile (tb=64), "arbitrary" grid.
    # batch=1100: multi-step grid (tb=512, 3 tiles), "parallel" + resident
    # single-buffered weights exercised.
    for batch in (37, 1100):
        x = jax.random.normal(
            jax.random.fold_in(xkey, batch), (batch, IN_SIZE), jnp.float32
        )
        out = jax.block_until_ready(net_forward(x, params))
        assert out.shape == (batch, OUT_SIZE)

        ref_b = _reference_bf16(x, params)
        assert jnp.allclose(out, ref_b, atol=2e-3, rtol=2e-3), "bf16 ref mismatch"

        ref_f = _reference_f32(x, ref_params)
        assert jnp.allclose(out, ref_f, atol=5e-2, rtol=5e-2), "f32 ref mismatch"

    print("KERNEL_OK")
</pallas_src>

<mosaic_0001>
module attributes {stable_mosaic.version = 11 : i64} {
  func.func @_mlp_kernel(%arg0: i32, %arg1: memref<64x512xf32, #tpu.memory_space<vmem>>, %arg2: memref<512x1024xbf16, #tpu.memory_space<vmem>>, %arg3: memref<1x1024xf32, #tpu.memory_space<vmem>>, %arg4: memref<1024x1024xbf16, #tpu.memory_space<vmem>>, %arg5: memref<1x1024xf32, #tpu.memory_space<vmem>>, %arg6: memref<1024x512xbf16, #tpu.memory_space<vmem>>, %arg7: memref<1x512xf32, #tpu.memory_space<vmem>>, %arg8: memref<64x512xf32, #tpu.memory_space<vmem>>) attributes {dimension_semantics = [#tpu.dimension_semantics<arbitrary>], iteration_bounds = array<i64: 1>, scalar_prefetch = 0 : i64, scratch_operands = 0 : i64, tpu.core_type = #tpu.core_type<tc>, window_params = [{transform_indices = @transform_0, window_bounds = array<i64: 64, 512>}, {pipeline_mode = #tpu.pipeline_mode<synchronous>, transform_indices = @transform_1, window_bounds = array<i64: 512, 1024>}, {pipeline_mode = #tpu.pipeline_mode<synchronous>, transform_indices = @transform_2, window_bounds = array<i64: 1, 1024>}, {pipeline_mode = #tpu.pipeline_mode<synchronous>, transform_indices = @transform_3, window_bounds = array<i64: 1024, 1024>}, {pipeline_mode = #tpu.pipeline_mode<synchronous>, transform_indices = @transform_4, window_bounds = array<i64: 1, 1024>}, {pipeline_mode = #tpu.pipeline_mode<synchronous>, transform_indices = @transform_5, window_bounds = array<i64: 1024, 512>}, {pipeline_mode = #tpu.pipeline_mode<synchronous>, transform_indices = @transform_6, window_bounds = array<i64: 1, 512>}, {transform_indices = @transform_7, window_bounds = array<i64: 64, 512>}]} {
    %c0 = arith.constant 0 : index
    %c0_0 = arith.constant 0 : index
    %0 = vector.load %arg1[%c0, %c0_0] : memref<64x512xf32, #tpu.memory_space<vmem>>, vector<64x512xf32>
    %1 = arith.truncf %0 : vector<64x512xf32> to vector<64x512xbf16>
    %c0_1 = arith.constant 0 : index
    %c0_2 = arith.constant 0 : index
    %2 = vector.load %arg2[%c0_1, %c0_2] : memref<512x1024xbf16, #tpu.memory_space<vmem>>, vector<512x1024xbf16>
    %cst = arith.constant dense<0.000000e+00> : vector<64x1024xf32>
    %3 = tpu.matmul %1, %2, %cst {dimension_numbers = #tpu.dot_dimension_numbers<[1], [0], [0], [1], [0, 0, 1, 1], [], []>} : vector<64x512xbf16>, vector<512x1024xbf16>, vector<64x1024xf32> -> vector<64x1024xf32>
    %c0_3 = arith.constant 0 : index
    %c0_4 = arith.constant 0 : index
    %4 = vector.load %arg3[%c0_3, %c0_4] : memref<1x1024xf32, #tpu.memory_space<vmem>>, vector<1x1024xf32>
    %5 = vector.broadcast %4 : vector<1x1024xf32> to vector<64x1024xf32>
    %6 = arith.addf %3, %5 : vector<64x1024xf32>
    %7 = math.tanh %6 : vector<64x1024xf32>
    %8 = arith.truncf %7 : vector<64x1024xf32> to vector<64x1024xbf16>
    %c0_5 = arith.constant 0 : index
    %c0_6 = arith.constant 0 : index
    %9 = vector.load %arg4[%c0_5, %c0_6] : memref<1024x1024xbf16, #tpu.memory_space<vmem>>, vector<1024x1024xbf16>
    %cst_7 = arith.constant dense<0.000000e+00> : vector<64x1024xf32>
    %10 = tpu.matmul %8, %9, %cst_7 {dimension_numbers = #tpu.dot_dimension_numbers<[1], [0], [0], [1], [0, 0, 1, 1], [], []>} : vector<64x1024xbf16>, vector<1024x1024xbf16>, vector<64x1024xf32> -> vector<64x1024xf32>
    %c0_8 = arith.constant 0 : index
    %c0_9 = arith.constant 0 : index
    %11 = vector.load %arg5[%c0_8, %c0_9] : memref<1x1024xf32, #tpu.memory_space<vmem>>, vector<1x1024xf32>
    %12 = vector.broadcast %11 : vector<1x1024xf32> to vector<64x1024xf32>
    %13 = arith.addf %10, %12 : vector<64x1024xf32>
    %14 = math.tanh %13 : vector<64x1024xf32>
    %15 = arith.truncf %14 : vector<64x1024xf32> to vector<64x1024xbf16>
    %c0_10 = arith.constant 0 : index
    %c0_11 = arith.constant 0 : index
    %16 = vector.load %arg6[%c0_10, %c0_11] : memref<1024x512xbf16, #tpu.memory_space<vmem>>, vector<1024x512xbf16>
    %cst_12 = arith.constant dense<0.000000e+00> : vector<64x512xf32>
    %17 = tpu.matmul %15, %16, %cst_12 {dimension_numbers = #tpu.dot_dimension_numbers<[1], [0], [0], [1], [0, 0, 1, 1], [], []>} : vector<64x1024xbf16>, vector<1024x512xbf16>, vector<64x512xf32> -> vector<64x512xf32>
    %c0_13 = arith.constant 0 : index
    %c0_14 = arith.constant 0 : index
    %18 = vector.load %arg7[%c0_13, %c0_14] : memref<1x512xf32, #tpu.memory_space<vmem>>, vector<1x512xf32>
    %19 = vector.broadcast %18 : vector<1x512xf32> to vector<64x512xf32>
    %20 = arith.addf %17, %19 : vector<64x512xf32>
    %c0_15 = arith.constant 0 : index
    %c0_16 = arith.constant 0 : index
    %21 = vector.load %arg8[%c0_15, %c0_16] : memref<64x512xf32, #tpu.memory_space<vmem>>, vector<64x512xf32>
    tpu.vector_store %arg8[%c0_15, %c0_16], %20 {strides = array<i32>} : memref<64x512xf32, #tpu.memory_space<vmem>>, vector<64x512xf32>,
    return
  }
  func.func @transform_0(%arg0: i32) -> (i32, i32) {
    %c0_i32 = arith.constant 0 : i32
    %c0_i32_0 = arith.constant 0 : i32
    return %arg0, %c0_i32 : i32, i32
  }
  func.func @transform_1(%arg0: i32) -> (i32, i32) {
    %c0_i32 = arith.constant 0 : i32
    %c0_i32_0 = arith.constant 0 : i32
    %c0_i32_1 = arith.constant 0 : i32
    return %c0_i32, %c0_i32_0 : i32, i32
  }
  func.func @transform_2(%arg0: i32) -> (i32, i32) {
    %c0_i32 = arith.constant 0 : i32
    %c0_i32_0 = arith.constant 0 : i32
    %c0_i32_1 = arith.constant 0 : i32
    return %c0_i32, %c0_i32_0 : i32, i32
  }
  func.func @transform_3(%arg0: i32) -> (i32, i32) {
    %c0_i32 = arith.constant 0 : i32
    %c0_i32_0 = arith.constant 0 : i32
    %c0_i32_1 = arith.constant 0 : i32
    return %c0_i32, %c0_i32_0 : i32, i32
  }
  func.func @transform_4(%arg0: i32) -> (i32, i32) {
    %c0_i32 = arith.constant 0 : i32
    %c0_i32_0 = arith.constant 0 : i32
    %c0_i32_1 = arith.constant 0 : i32
    return %c0_i32, %c0_i32_0 : i32, i32
  }
  func.func @transform_5(%arg0: i32) -> (i32, i32) {
    %c0_i32 = arith.constant 0 : i32
    %c0_i32_0 = arith.constant 0 : i32
    %c0_i32_1 = arith.constant 0 : i32
    return %c0_i32, %c0_i32_0 : i32, i32
  }
  func.func @transform_6(%arg0: i32) -> (i32, i32) {
    %c0_i32 = arith.constant 0 : i32
    %c0_i32_0 = arith.constant 0 : i32
    %c0_i32_1 = arith.constant 0 : i32
    return %c0_i32, %c0_i32_0 : i32, i32
  }
  func.func @transform_7(%arg0: i32) -> (i32, i32) {
    %c0_i32 = arith.constant 0 : i32
    %c0_i32_0 = arith.constant 0 : i32
    return %arg0, %c0_i32 : i32, i32
  }
}

</mosaic_0001>

<llo_original>
// kernel: tpu_custom_call.1
$region0: #{tpu_custom_call.1}
  #allocation0 [shape = 'u32[]', space=smem, size = 0x4, offset = 0x4, fixed_abs, tag = 'smem constant byte address 0x4 - core index']
  #allocation1 [shape = 'u32[144,128]{1,0:T(1,128)}', space=vmem, size = 0x12000, scoped, tag = 'internal scratch']
  %s0 = inlined_call_operand.hbm [shape: f32[64,512], index: 0, kind: input, shape index: {}]
  %s1 = inlined_call_operand.hbm [shape: bf16[512,1024], index: 1, kind: input, shape index: {}]
  %s2 = inlined_call_operand.hbm [shape: f32[1,1024], index: 2, kind: input, shape index: {}]
  %s3 = inlined_call_operand.hbm [shape: bf16[1024,1024], index: 3, kind: input, shape index: {}]
  %s4 = inlined_call_operand.hbm [shape: f32[1,1024], index: 4, kind: input, shape index: {}]
  %s5 = inlined_call_operand.hbm [shape: bf16[1024,512], index: 5, kind: input, shape index: {}]
  %s6 = inlined_call_operand.hbm [shape: f32[1,512], index: 6, kind: input, shape index: {}]
  %s7 = inlined_call_operand.hbm [shape: f32[64,512], index: 7, kind: output, shape index: {}]
  %s8 = sld [smem:[#allocation0]]
  $region66: #{tpu_custom_call.1} parent=0
    _
  %s10 = ssub.s32 1, %s8
  %s11 = scalar_select 0, %s10, %s8
  $region1: #{tpu_custom_call.1} parent=0
    #allocation2 [shape = 'u8[131072]{0}', space=vmem, size = 0x20000, scoped, tag = 'input window, operand 0, single buffered']
    #allocation3 [shape = 's32[1]{0}', space=sflag, size = 0x4, scoped, tag = 'scoped memory for tpu_custom_call.1']
    #allocation4 [shape = 's32[1]{0}', space=sflag, size = 0x4, scoped, tag = 'scoped memory for tpu_custom_call.1']
    #allocation5 [shape = 'u8[1048576]{0}', space=vmem, size = 0x100000, scoped, tag = 'input window, operand 1, single buffered']
    #allocation6 [shape = 's32[1]{0}', space=sflag, size = 0x4, scoped, tag = 'scoped memory for tpu_custom_call.1']
    #allocation7 [shape = 'u8[4096]{0}', space=vmem, size = 0x1000, scoped, tag = 'input window, operand 2, single buffered']
    #allocation8 [shape = 'u8[2097152]{0}', space=vmem, size = 0x200000, scoped, tag = 'input window, operand 3, single buffered']
    #allocation9 [shape = 's32[1]{0}', space=sflag, size = 0x4, scoped, tag = 'scoped memory for tpu_custom_call.1']
    #allocation10 [shape = 'u8[4096]{0}', space=vmem, size = 0x1000, scoped, tag = 'input window, operand 4, single buffered']
    #allocation11 [shape = 'u8[1048576]{0}', space=vmem, size = 0x100000, scoped, tag = 'input window, operand 5, single buffered']
    #allocation12 [shape = 's32[1]{0}', space=sflag, size = 0x4, scoped, tag = 'scoped memory for tpu_custom_call.1']
    #allocation13 [shape = 'u8[2048]{0}', space=vmem, size = 0x800, scoped, tag = 'input window, operand 6, single buffered']
    #allocation14 [shape = 'u8[131072]{0}', space=vmem, size = 0x20000, scoped, tag = 'output window, operand 0, single buffered']
    %12 = vsyncpa [#allocation3], 0
    %13 = vsyncpa [#allocation6], 0
    %14 = vsyncpa [#allocation9], 0
    %15 = vsyncpa [#allocation12], 0
    %16 = vsyncpa [#allocation4], 0
    // Predicated region
    $region2: #{tpu_custom_call.1} parent=1 // pred_check
      _
    $region3: #{tpu_custom_call.1} parent=1 // pred_check_branch
      %18 = sbr.rel (0) target = $region5
    $region4: #{tpu_custom_call.1} parent=1 // pred_region
      %s20 = ssub.s32 4096, 4096
      %21 = vsyncadd [#allocation3], %s20
      %s22 = sshll.u32 [#allocation2], 4
      %s23 = int_to_ptr.vmem [resolvable:$true] %s22
      %28 = dma.hbm_to_vmem [thread:$0]  %s0, 4096, %s23, [#allocation3], 512, 512, 32
    $region5: #{tpu_custom_call.1} parent=1 // pred_fallthru
      _
    // Predicated region
    $region6: #{tpu_custom_call.1} parent=1 // pred_check
      _
    $region7: #{tpu_custom_call.1} parent=1 // pred_check_branch
      %30 = sbr.rel (0) target = $region9
    $region8: #{tpu_custom_call.1} parent=1 // pred_region
      %s32 = ssub.s32 32768, 32768
      %33 = vsyncadd [#allocation6], %s32
      %s34 = sshll.u32 [#allocation5], 4
      %s35 = int_to_ptr.vmem [resolvable:$true] %s34
      %40 = dma.hbm_to_vmem [thread:$0]  %s1, 32768, %s35, [#allocation6], 512, 512, 32
    $region9: #{tpu_custom_call.1} parent=1 // pred_fallthru
      _
    // Predicated region
    $region10: #{tpu_custom_call.1} parent=1 // pred_check
      _
    $region11: #{tpu_custom_call.1} parent=1 // pred_check_branch
      %42 = sbr.rel (0) target = $region13
    $region12: #{tpu_custom_call.1} parent=1 // pred_region
      %s44 = ssub.s32 128, 128
      %45 = vsyncadd [#allocation6], %s44
      %s47 = sshll.u32 [#allocation7], 4
      %s48 = int_to_ptr.vmem [resolvable:$true] %s47
      %50 = dma.hbm_to_vmem [thread:$0]  %s2, 128, %s48, [#allocation6]
    $region13: #{tpu_custom_call.1} parent=1 // pred_fallthru
      _
    // Predicated region
    $region14: #{tpu_custom_call.1} parent=1 // pred_check
      _
    $region15: #{tpu_custom_call.1} parent=1 // pred_check_branch
      %52 = sbr.rel (0) target = $region17
    $region16: #{tpu_custom_call.1} parent=1 // pred_region
      %s54 = ssub.s32 65536, 65536
      %55 = vsyncadd [#allocation9], %s54
      %s56 = sshll.u32 [#allocation8], 4
      %s57 = int_to_ptr.vmem [resolvable:$true] %s56
      %62 = dma.hbm_to_vmem [thread:$0]  %s3, 65536, %s57, [#allocation9], 512, 512, 32
    $region17: #{tpu_custom_call.1} parent=1 // pred_fallthru
      _
    // Predicated region
    $region18: #{tpu_custom_call.1} parent=1 // pred_check
      _
    $region19: #{tpu_custom_call.1} parent=1 // pred_check_branch
      %64 = sbr.rel (0) target = $region21
    $region20: #{tpu_custom_call.1} parent=1 // pred_region
      %s66 = ssub.s32 128, 128
      %67 = vsyncadd [#allocation9], %s66
      %s69 = sshll.u32 [#allocation10], 4
      %s70 = int_to_ptr.vmem [resolvable:$true] %s69
      %72 = dma.hbm_to_vmem [thread:$0]  %s4, 128, %s70, [#allocation9]
    $region21: #{tpu_custom_call.1} parent=1 // pred_fallthru
      _
    // Predicated region
    $region22: #{tpu_custom_call.1} parent=1 // pred_check
      _
    $region23: #{tpu_custom_call.1} parent=1 // pred_check_branch
      %74 = sbr.rel (0) target = $region25
    $region24: #{tpu_custom_call.1} parent=1 // pred_region
      %s76 = ssub.s32 32768, 32768
      %77 = vsyncadd [#allocation12], %s76
      %s78 = sshll.u32 [#allocation11], 4
      %s79 = int_to_ptr.vmem [resolvable:$true] %s78
      %84 = dma.hbm_to_vmem [thread:$0]  %s5, 32768, %s79, [#allocation12], 256, 256, 16
    $region25: #{tpu_custom_call.1} parent=1 // pred_fallthru
      _
    // Predicated region
    $region26: #{tpu_custom_call.1} parent=1 // pred_check
      _
    $region27: #{tpu_custom_call.1} parent=1 // pred_check_branch
      %86 = sbr.rel (0) target = $region29
    $region28: #{tpu_custom_call.1} parent=1 // pred_region
      %s88 = ssub.s32 64, 64
      %89 = vsyncadd [#allocation12], %s88
      %s91 = sshll.u32 [#allocation13], 4
      %s92 = int_to_ptr.vmem [resolvable:$true] %s91
      %94 = dma.hbm_to_vmem [thread:$0]  %s6, 64, %s92, [#allocation12]
    $region29: #{tpu_custom_call.1} parent=1 // pred_fallthru
      _
    // Predicated region
    $region30: #{tpu_custom_call.1} parent=1 // pred_check
      _
    $region31: #{tpu_custom_call.1} parent=1 // pred_check_branch
      %96 = sbr.rel (0) target = $region33
    $region32: #{tpu_custom_call.1} parent=1 // pred_region
      %97 = dma.done [#allocation3], 4096
    $region33: #{tpu_custom_call.1} parent=1 // pred_fallthru
      _
    // Predicated region
    $region34: #{tpu_custom_call.1} parent=1 // pred_check
      _
    $region35: #{tpu_custom_call.1} parent=1 // pred_check_branch
      %99 = sbr.rel (0) target = $region37
    $region36: #{tpu_custom_call.1} parent=1 // pred_region
      %100 = dma.done [#allocation6], 32768
    $region37: #{tpu_custom_call.1} parent=1 // pred_fallthru
      _
    // Predicated region
    $region38: #{tpu_custom_call.1} parent=1 // pred_check
      _
    $region39: #{tpu_custom_call.1} parent=1 // pred_check_branch
      %102 = sbr.rel (0) target = $region41
    $region40: #{tpu_custom_call.1} parent=1 // pred_region
      %103 = dma.done [#allocation6], 128
    $region41: #{tpu_custom_call.1} parent=1 // pred_fallthru
      _
    // Predicated region
    $region42: #{tpu_custom_call.1} parent=1 // pred_check
      _
    $region43: #{tpu_custom_call.1} parent=1 // pred_check_branch
      %105 = sbr.rel (0) target = $region45
    $region44: #{tpu_custom_call.1} parent=1 // pred_region
      %106 = dma.done [#allocation9], 65536
    $region45: #{tpu_custom_call.1} parent=1 // pred_fallthru
      _
    // Predicated region
    $region46: #{tpu_custom_call.1} parent=1 // pred_check
      _
    $region47: #{tpu_custom_call.1} parent=1 // pred_check_branch
      %108 = sbr.rel (0) target = $region49
    $region48: #{tpu_custom_call.1} parent=1 // pred_region
      %109 = dma.done [#allocation9], 128
    $region49: #{tpu_custom_call.1} parent=1 // pred_fallthru
      _
    // Predicated region
    $region50: #{tpu_custom_call.1} parent=1 // pred_check
      _
    $region51: #{tpu_custom_call.1} parent=1 // pred_check_branch
      %111 = sbr.rel (0) target = $region53
    $region52: #{tpu_custom_call.1} parent=1 // pred_region
      %112 = dma.done [#allocation12], 32768
    $region53: #{tpu_custom_call.1} parent=1 // pred_fallthru
      _
    // Predicated region
    $region54: #{tpu_custom_call.1} parent=1 // pred_check
      _
    $region55: #{tpu_custom_call.1} parent=1 // pred_check_branch
      %114 = sbr.rel (0) target = $region57
    $region56: #{tpu_custom_call.1} parent=1 // pred_region
      %115 = dma.done [#allocation12], 64
    $region57: #{tpu_custom_call.1} parent=1 // pred_fallthru
      _
    %v116 = vld [vmem:[#allocation2] sm:$0xff]
    %v117 = vld [vmem:[#allocation2 + $0x8] sm:$0xff]
    %v118 = vld [vmem:[#allocation2 + $0x10] sm:$0xff]
    %v119 = vld [vmem:[#allocation2 + $0x18] sm:$0xff]
    %v120 = vld [vmem:[#allocation2 + $0x20] sm:$0xff]
    %v121 = vld [vmem:[#allocation2 + $0x28] sm:$0xff]
    %v122 = vld [vmem:[#allocation2 + $0x30] sm:$0xff]
    %v123 = vld [vmem:[#allocation2 + $0x38] sm:$0xff]
    %v124 = vld [vmem:[#allocation2 + $0x40] sm:$0xff]
    %v125 = vld [vmem:[#allocation2 + $0x48] sm:$0xff]
    %v126 = vld [vmem:[#allocation2 + $0x50] sm:$0xff]
    %v127 = vld [vmem:[#allocation2 + $0x58] sm:$0xff]
    %v128 = vld [vmem:[#allocation2 + $0x60] sm:$0xff]
    %v129 = vld [vmem:[#allocation2 + $0x68] sm:$0xff]
    %v130 = vld [vmem:[#allocation2 + $0x70] sm:$0xff]
    %v131 = vld [vmem:[#allocation2 + $0x78] sm:$0xff]
    %v132 = vld [vmem:[#allocation2 + $0x80] sm:$0xff]
    %v133 = vld [vmem:[#allocation2 + $0x88] sm:$0xff]
    %v134 = vld [vmem:[#allocation2 + $0x90] sm:$0xff]
    %v135 = vld [vmem:[#allocation2 + $0x98] sm:$0xff]
    %v136 = vld [vmem:[#allocation2 + $0xa0] sm:$0xff]
    %v137 = vld [vmem:[#allocation2 + $0xa8] sm:$0xff]
    %v138 = vld [vmem:[#allocation2 + $0xb0] sm:$0xff]
    %v139 = vld [vmem:[#allocation2 + $0xb8] sm:$0xff]
    %v140 = vld [vmem:[#allocation2 + $0xc0] sm:$0xff]
    %v141 = vld [vmem:[#allocation2 + $0xc8] sm:$0xff]
    %v142 = vld [vmem:[#allocation2 + $0xd0] sm:$0xff]
    %v143 = vld [vmem:[#allocation2 + $0xd8] sm:$0xff]
    %v144 = vld [vmem:[#allocation2 + $0xe0] sm:$0xff]
    %v145 = vld [vmem:[#allocation2 + $0xe8] sm:$0xff]
    %v146 = vld [vmem:[#allocation2 + $0xf0] sm:$0xff]
    %v147 = vld [vmem:[#allocation2 + $0xf8] sm:$0xff]
    %v148 = vpack.c.bf16 %v120, %v116
    %v149 = vpack.c.bf16 %v121, %v117
    %v150 = vpack.c.bf16 %v122, %v118
    %v151 = vpack.c.bf16 %v123, %v119
    %v152 = vpack.c.bf16 %v128, %v124
    %v153 = vpack.c.bf16 %v129, %v125
    %v154 = vpack.c.bf16 %v130, %v126
    %v155 = vpack.c.bf16 %v131, %v127
    %v156 = vpack.c.bf16 %v136, %v132
    %v157 = vpack.c.bf16 %v137, %v133
    %v158 = vpack.c.bf16 %v138, %v134
    %v159 = vpack.c.bf16 %v139, %v135
    %v160 = vpack.c.bf16 %v144, %v140
    %v161 = vpack.c.bf16 %v145, %v141
    %v162 = vpack.c.bf16 %v146, %v142
    %v163 = vpack.c.bf16 %v147, %v143
    %v164 = vld [vmem:[#allocation5] sm:$0xff]
    %v165 = vld [vmem:[#allocation5 + $0x8] sm:$0xff]
    %v166 = vld [vmem:[#allocation5 + $0x10] sm:$0xff]
    %v167 = vld [vmem:[#allocation5 + $0x18] sm:$0xff]
    %v168 = vld [vmem:[#allocation5 + $0x20] sm:$0xff]
    %v169 = vld [vmem:[#allocation5 + $0x28] sm:$0xff]
    %v170 = vld [vmem:[#allocation5 + $0x30] sm:$0xff]
    %v171 = vld [vmem:[#allocation5 + $0x38] sm:$0xff]
    %v172 = vld [vmem:[#allocation5 + $0x40] sm:$0xff]
    %v173 = vld [vmem:[#allocation5 + $0x48] sm:$0xff]
    %v174 = vld [vmem:[#allocation5 + $0x50] sm:$0xff]
    %v175 = vld [vmem:[#allocation5 + $0x58] sm:$0xff]
    %v176 = vld [vmem:[#allocation5 + $0x60] sm:$0xff]
    %v177 = vld [vmem:[#allocation5 + $0x68] sm:$0xff]
    %v178 = vld [vmem:[#allocation5 + $0x70] sm:$0xff]
    %v179 = vld [vmem:[#allocation5 + $0x78] sm:$0xff]
    %v180 = vld [vmem:[#allocation5 + $0x80] sm:$0xff]
    %v181 = vld [vmem:[#allocation5 + $0x88] sm:$0xff]
    %v182 = vld [vmem:[#allocation5 + $0x90] sm:$0xff]
    %v183 = vld [vmem:[#allocation5 + $0x98] sm:$0xff]
    %v184 = vld [vmem:[#allocation5 + $0xa0] sm:$0xff]
    %v185 = vld [vmem:[#allocation5 + $0xa8] sm:$0xff]
    %v186 = vld [vmem:[#allocation5 + $0xb0] sm:$0xff]
    %v187 = vld [vmem:[#allocation5 + $0xb8] sm:$0xff]
    %v188 = vld [vmem:[#allocation5 + $0xc0] sm:$0xff]
    %v189 = vld [vmem:[#allocation5 + $0xc8] sm:$0xff]
    %v190 = vld [vmem:[#allocation5 + $0xd0] sm:$0xff]
    %v191 = vld [vmem:[#allocation5 + $0xd8] sm:$0xff]
    %v192 = vld [vmem:[#allocation5 + $0xe0] sm:$0xff]
    %v193 = vld [vmem:[#allocation5 + $0xe8] sm:$0xff]
    %v194 = vld [vmem:[#allocation5 + $0xf0] sm:$0xff]
    %v195 = vld [vmem:[#allocation5 + $0xf8] sm:$0xff]
    %v196 = vld [vmem:[#allocation5 + $0x100] sm:$0xff]
    %v197 = vld [vmem:[#allocation5 + $0x108] sm:$0xff]
    %v198 = vld [vmem:[#allocation5 + $0x110] sm:$0xff]
    %v199 = vld [vmem:[#allocation5 + $0x118] sm:$0xff]
    %v200 = vld [vmem:[#allocation5 + $0x120] sm:$0xff]
    %v201 = vld [vmem:[#allocation5 + $0x128] sm:$0xff]
    %v202 = vld [vmem:[#allocation5 + $0x130] sm:$0xff]
    %v203 = vld [vmem:[#allocation5 + $0x138] sm:$0xff]
    %v204 = vld [vmem:[#allocation5 + $0x140] sm:$0xff]
    %v205 = vld [vmem:[#allocation5 + $0x148] sm:$0xff]
    %v206 = vld [vmem:[#allocation5 + $0x150] sm:$0xff]
    %v207 = vld [vmem:[#allocation5 + $0x158] sm:$0xff]
    %v208 = vld [vmem:[#allocation5 + $0x160] sm:$0xff]
    %v209 = vld [vmem:[#allocation5 + $0x168] sm:$0xff]
    %v210 = vld [vmem:[#allocation5 + $0x170] sm:$0xff]
    %v211 = vld [vmem:[#allocation5 + $0x178] sm:$0xff]
    %v212 = vld [vmem:[#allocation5 + $0x180] sm:$0xff]
    %v213 = vld [vmem:[#allocation5 + $0x188] sm:$0xff]
    %v214 = vld [vmem:[#allocation5 + $0x190] sm:$0xff]
    %v215 = vld [vmem:[#allocation5 + $0x198] sm:$0xff]
    %v216 = vld [vmem:[#allocation5 + $0x1a0] sm:$0xff]
    %v217 = vld [vmem:[#allocation5 + $0x1a8] sm:$0xff]
    %v218 = vld [vmem:[#allocation5 + $0x1b0] sm:$0xff]
    %v219 = vld [vmem:[#allocation5 + $0x1b8] sm:$0xff]
    %v220 = vld [vmem:[#allocation5 + $0x1c0] sm:$0xff]
    %v221 = vld [vmem:[#allocation5 + $0x1c8] sm:$0xff]
    %v222 = vld [vmem:[#allocation5 + $0x1d0] sm:$0xff]
    %v223 = vld [vmem:[#allocation5 + $0x1d8] sm:$0xff]
    %v224 = vld [vmem:[#allocation5 + $0x1e0] sm:$0xff]
    %v225 = vld [vmem:[#allocation5 + $0x1e8] sm:$0xff]
    %v226 = vld [vmem:[#allocation5 + $0x1f0] sm:$0xff]
    %v227 = vld [vmem:[#allocation5 + $0x1f8] sm:$0xff]
    %v228 = vld [vmem:[#allocation5 + $0x200] sm:$0xff]
    %v229 = vld [vmem:[#allocation5 + $0x208] sm:$0xff]
    %v230 = vld [vmem:[#allocation5 + $0x210] sm:$0xff]
    %v231 = vld [vmem:[#allocation5 + $0x218] sm:$0xff]
    %v232 = vld [vmem:[#allocation5 + $0x220] sm:$0xff]
    %v233 = vld [vmem:[#allocation5 + $0x228] sm:$0xff]
    %v234 = vld [vmem:[#allocation5 + $0x230] sm:$0xff]
    %v235 = vld [vmem:[#allocation5 + $0x238] sm:$0xff]
    %v236 = vld [vmem:[#allocation5 + $0x240] sm:$0xff]
    %v237 = vld [vmem:[#allocation5 + $0x248] sm:$0xff]
    %v238 = vld [vmem:[#allocation5 + $0x250] sm:$0xff]
    %v239 = vld [vmem:[#allocation5 + $0x258] sm:$0xff]
    %v240 = vld [vmem:[#allocation5 + $0x260] sm:$0xff]
    %v241 = vld [vmem:[#allocation5 + $0x268] sm:$0xff]
    %v242 = vld [vmem:[#allocation5 + $0x270] sm:$0xff]
    %v243 = vld [vmem:[#allocation5 + $0x278] sm:$0xff]
    %v244 = vld [vmem:[#allocation5 + $0x280] sm:$0xff]
    %v245 = vld [vmem:[#allocation5 + $0x288] sm:$0xff]
    %v246 = vld [vmem:[#allocation5 + $0x290] sm:$0xff]
    %v247 = vld [vmem:[#allocation5 + $0x298] sm:$0xff]
    %v248 = vld [vmem:[#allocation5 + $0x2a0] sm:$0xff]
    %v249 = vld [vmem:[#allocation5 + $0x2a8] sm:$0xff]
    %v250 = vld [vmem:[#allocation5 + $0x2b0] sm:$0xff]
    %v251 = vld [vmem:[#allocation5 + $0x2b8] sm:$0xff]
    %v252 = vld [vmem:[#allocation5 + $0x2c0] sm:$0xff]
    %v253 = vld [vmem:[#allocation5 + $0x2c8] sm:$0xff]
    %v254 = vld [vmem:[#allocation5 + $0x2d0] sm:$0xff]
    %v255 = vld [vmem:[#allocation5 + $0x2d8] sm:$0xff]
    %v256 = vld [vmem:[#allocation5 + $0x2e0] sm:$0xff]
    %v257 = vld [vmem:[#allocation5 + $0x2e8] sm:$0xff]
    %v258 = vld [vmem:[#allocation5 + $0x2f0] sm:$0xff]
    %v259 = vld [vmem:[#allocation5 + $0x2f8] sm:$0xff]
    %v260 = vld [vmem:[#allocation5 + $0x300] sm:$0xff]
    %v261 = vld [vmem:[#allocation5 + $0x308] sm:$0xff]
    %v262 = vld [vmem:[#allocation5 + $0x310] sm:$0xff]
    %v263 = vld [vmem:[#allocation5 + $0x318] sm:$0xff]
    %v264 = vld [vmem:[#allocation5 + $0x320] sm:$0xff]
    %v265 = vld [vmem:[#allocation5 + $0x328] sm:$0xff]
    %v266 = vld [vmem:[#allocation5 + $0x330] sm:$0xff]
    %v267 = vld [vmem:[#allocation5 + $0x338] sm:$0xff]
    %v268 = vld [vmem:[#allocation5 + $0x340] sm:$0xff]
    %v269 = vld [vmem:[#allocation5 + $0x348] sm:$0xff]
    %v270 = vld [vmem:[#allocation5 + $0x350] sm:$0xff]
    %v271 = vld [vmem:[#allocation5 + $0x358] sm:$0xff]
    %v272 = vld [vmem:[#allocation5 + $0x360] sm:$0xff]
    %v273 = vld [vmem:[#allocation5 + $0x368] sm:$0xff]
    %v274 = vld [vmem:[#allocation5 + $0x370] sm:$0xff]
    %v275 = vld [vmem:[#allocation5 + $0x378] sm:$0xff]
    %v276 = vld [vmem:[#allocation5 + $0x380] sm:$0xff]
    %v277 = vld [vmem:[#allocation5 + $0x388] sm:$0xff]
    %v278 = vld [vmem:[#allocation5 + $0x390] sm:$0xff]
    %v279 = vld [vmem:[#allocation5 + $0x398] sm:$0xff]
    %v280 = vld [vmem:[#allocation5 + $0x3a0] sm:$0xff]
    %v281 = vld [vmem:[#allocation5 + $0x3a8] sm:$0xff]
    %v282 = vld [vmem:[#allocation5 + $0x3b0] sm:$0xff]
    %v283 = vld [vmem:[#allocation5 + $0x3b8] sm:$0xff]
    %v284 = vld [vmem:[#allocation5 + $0x3c0] sm:$0xff]
    %v285 = vld [vmem:[#allocation5 + $0x3c8] sm:$0xff]
    %v286 = vld [vmem:[#allocation5 + $0x3d0] sm:$0xff]
    %v287 = vld [vmem:[#allocation5 + $0x3d8] sm:$0xff]
    %v288 = vld [vmem:[#allocation5 + $0x3e0] sm:$0xff]
    %v289 = vld [vmem:[#allocation5 + $0x3e8] sm:$0xff]
    %v290 = vld [vmem:[#allocation5 + $0x3f0] sm:$0xff]
    %v291 = vld [vmem:[#allocation5 + $0x3f8] sm:$0xff]
    %v292 = vld [vmem:[#allocation5 + $0x400] sm:$0xff]
    %v293 = vld [vmem:[#allocation5 + $0x408] sm:$0xff]
    %v294 = vld [vmem:[#allocation5 + $0x410] sm:$0xff]
    %v295 = vld [vmem:[#allocation5 + $0x418] sm:$0xff]
    %v296 = vld [vmem:[#allocation5 + $0x420] sm:$0xff]
    %v297 = vld [vmem:[#allocation5 + $0x428] sm:$0xff]
    %v298 = vld [vmem:[#allocation5 + $0x430] sm:$0xff]
    %v299 = vld [vmem:[#allocation5 + $0x438] sm:$0xff]
    %v300 = vld [vmem:[#allocation5 + $0x440] sm:$0xff]
    %v301 = vld [vmem:[#allocation5 + $0x448] sm:$0xff]
    %v302 = vld [vmem:[#allocation5 + $0x450] sm:$0xff]
    %v303 = vld [vmem:[#allocation5 + $0x458] sm:$0xff]
    %v304 = vld [vmem:[#allocation5 + $0x460] sm:$0xff]
    %v305 = vld [vmem:[#allocation5 + $0x468] sm:$0xff]
    %v306 = vld [vmem:[#allocation5 + $0x470] sm:$0xff]
    %v307 = vld [vmem:[#allocation5 + $0x478] sm:$0xff]
    %v308 = vld [vmem:[#allocation5 + $0x480] sm:$0xff]
    %v309 = vld [vmem:[#allocation5 + $0x488] sm:$0xff]
    %v310 = vld [vmem:[#allocation5 + $0x490] sm:$0xff]
    %v311 = vld [vmem:[#allocation5 + $0x498] sm:$0xff]
    %v312 = vld [vmem:[#allocation5 + $0x4a0] sm:$0xff]
    %v313 = vld [vmem:[#allocation5 + $0x4a8] sm:$0xff]
    %v314 = vld [vmem:[#allocation5 + $0x4b0] sm:$0xff]
    %v315 = vld [vmem:[#allocation5 + $0x4b8] sm:$0xff]
    %v316 = vld [vmem:[#allocation5 + $0x4c0] sm:$0xff]
    %v317 = vld [vmem:[#allocation5 + $0x4c8] sm:$0xff]
    %v318 = vld [vmem:[#allocation5 + $0x4d0] sm:$0xff]
    %v319 = vld [vmem:[#allocation5 + $0x4d8] sm:$0xff]
    %v320 = vld [vmem:[#allocation5 + $0x4e0] sm:$0xff]
    %v321 = vld [vmem:[#allocation5 + $0x4e8] sm:$0xff]
    %v322 = vld [vmem:[#allocation5 + $0x4f0] sm:$0xff]
    %v323 = vld [vmem:[#allocation5 + $0x4f8] sm:$0xff]
    %v324 = vld [vmem:[#allocation5 + $0x500] sm:$0xff]
    %v325 = vld [vmem:[#allocation5 + $0x508] sm:$0xff]
    %v326 = vld [vmem:[#allocation5 + $0x510] sm:$0xff]
    %v327 = vld [vmem:[#allocation5 + $0x518] sm:$0xff]
    %v328 = vld [vmem:[#allocation5 + $0x520] sm:$0xff]
    %v329 = vld [vmem:[#allocation5 + $0x528] sm:$0xff]
    %v330 = vld [vmem:[#allocation5 + $0x530] sm:$0xff]
    %v331 = vld [vmem:[#allocation5 + $0x538] sm:$0xff]
    %v332 = vld [vmem:[#allocation5 + $0x540] sm:$0xff]
    %v333 = vld [vmem:[#allocation5 + $0x548] sm:$0xff]
    %v334 = vld [vmem:[#allocation5 + $0x550] sm:$0xff]
    %v335 = vld [vmem:[#allocation5 + $0x558] sm:$0xff]
    %v336 = vld [vmem:[#allocation5 + $0x560] sm:$0xff]
    %v337 = vld [vmem:[#allocation5 + $0x568] sm:$0xff]
    %v338 = vld [vmem:[#allocation5 + $0x570] sm:$0xff]
    %v339 = vld [vmem:[#allocation5 + $0x578] sm:$0xff]
    %v340 = vld [vmem:[#allocation5 + $0x580] sm:$0xff]
    %v341 = vld [vmem:[#allocation5 + $0x588] sm:$0xff]
    %v342 = vld [vmem:[#allocation5 + $0x590] sm:$0xff]
    %v343 = vld [vmem:[#allocation5 + $0x598] sm:$0xff]
    %v344 = vld [vmem:[#allocation5 + $0x5a0] sm:$0xff]
    %v345 = vld [vmem:[#allocation5 + $0x5a8] sm:$0xff]
    %v346 = vld [vmem:[#allocation5 + $0x5b0] sm:$0xff]
    %v347 = vld [vmem:[#allocation5 + $0x5b8] sm:$0xff]
    %v348 = vld [vmem:[#allocation5 + $0x5c0] sm:$0xff]
    %v349 = vld [vmem:[#allocation5 + $0x5c8] sm:$0xff]
    %v350 = vld [vmem:[#allocation5 + $0x5d0] sm:$0xff]
    %v351 = vld [vmem:[#allocation5 + $0x5d8] sm:$0xff]
    %v352 = vld [vmem:[#allocation5 + $0x5e0] sm:$0xff]
    %v353 = vld [vmem:[#allocation5 + $0x5e8] sm:$0xff]
    %v354 = vld [vmem:[#allocation5 + $0x5f0] sm:$0xff]
    %v355 = vld [vmem:[#allocation5 + $0x5f8] sm:$0xff]
    %v356 = vld [vmem:[#allocation5 + $0x600] sm:$0xff]
    %v357 = vld [vmem:[#allocation5 + $0x608] sm:$0xff]
    %v358 = vld [vmem:[#allocation5 + $0x610] sm:$0xff]
    %v359 = vld [vmem:[#allocation5 + $0x618] sm:$0xff]
    %v360 = vld [vmem:[#allocation5 + $0x620] sm:$0xff]
    %v361 = vld [vmem:[#allocation5 + $0x628] sm:$0xff]
    %v362 = vld [vmem:[#allocation5 + $0x630] sm:$0xff]
    %v363 = vld [vmem:[#allocation5 + $0x638] sm:$0xff]
    %v364 = vld [vmem:[#allocation5 + $0x640] sm:$0xff]
    %v365 = vld [vmem:[#allocation5 + $0x648] sm:$0xff]
    %v366 = vld [vmem:[#allocation5 + $0x650] sm:$0xff]
    %v367 = vld [vmem:[#allocation5 + $0x658] sm:$0xff]
    %v368 = vld [vmem:[#allocation5 + $0x660] sm:$0xff]
    %v369 = vld [vmem:[#allocation5 + $0x668] sm:$0xff]
    %v370 = vld [vmem:[#allocation5 + $0x670] sm:$0xff]
    %v371 = vld [vmem:[#allocation5 + $0x678] sm:$0xff]
    %v372 = vld [vmem:[#allocation5 + $0x680] sm:$0xff]
    %v373 = vld [vmem:[#allocation5 + $0x688] sm:$0xff]
    %v374 = vld [vmem:[#allocation5 + $0x690] sm:$0xff]
    %v375 = vld [vmem:[#allocation5 + $0x698] sm:$0xff]
    %v376 = vld [vmem:[#allocation5 + $0x6a0] sm:$0xff]
    %v377 = vld [vmem:[#allocation5 + $0x6a8] sm:$0xff]
    %v378 = vld [vmem:[#allocation5 + $0x6b0] sm:$0xff]
    %v379 = vld [vmem:[#allocation5 + $0x6b8] sm:$0xff]
    %v380 = vld [vmem:[#allocation5 + $0x6c0] sm:$0xff]
    %v381 = vld [vmem:[#allocation5 + $0x6c8] sm:$0xff]
    %v382 = vld [vmem:[#allocation5 + $0x6d0] sm:$0xff]
    %v383 = vld [vmem:[#allocation5 + $0x6d8] sm:$0xff]
    %v384 = vld [vmem:[#allocation5 + $0x6e0] sm:$0xff]
    %v385 = vld [vmem:[#allocation5 + $0x6e8] sm:$0xff]
    %v386 = vld [vmem:[#allocation5 + $0x6f0] sm:$0xff]
    %v387 = vld [vmem:[#allocation5 + $0x6f8] sm:$0xff]
    %v388 = vld [vmem:[#allocation5 + $0x700] sm:$0xff]
    %v389 = vld [vmem:[#allocation5 + $0x708] sm:$0xff]
    %v390 = vld [vmem:[#allocation5 + $0x710] sm:$0xff]
    %v391 = vld [vmem:[#allocation5 + $0x718] sm:$0xff]
    %v392 = vld [vmem:[#allocation5 + $0x720] sm:$0xff]
    %v393 = vld [vmem:[#allocation5 + $0x728] sm:$0xff]
    %v394 = vld [vmem:[#allocation5 + $0x730] sm:$0xff]
    %v395 = vld [vmem:[#allocation5 + $0x738] sm:$0xff]
    %v396 = vld [vmem:[#allocation5 + $0x740] sm:$0xff]
    %v397 = vld [vmem:[#allocation5 + $0x748] sm:$0xff]
    %v398 = vld [vmem:[#allocation5 + $0x750] sm:$0xff]
    %v399 = vld [vmem:[#allocation5 + $0x758] sm:$0xff]
    %v400 = vld [vmem:[#allocation5 + $0x760] sm:$0xff]
    %v401 = vld [vmem:[#allocation5 + $0x768] sm:$0xff]
    %v402 = vld [vmem:[#allocation5 + $0x770] sm:$0xff]
    %v403 = vld [vmem:[#allocation5 + $0x778] sm:$0xff]
    %v404 = vld [vmem:[#allocation5 + $0x780] sm:$0xff]
    %v405 = vld [vmem:[#allocation5 + $0x788] sm:$0xff]
    %v406 = vld [vmem:[#allocation5 + $0x790] sm:$0xff]
    %v407 = vld [vmem:[#allocation5 + $0x798] sm:$0xff]
    %v408 = vld [vmem:[#allocation5 + $0x7a0] sm:$0xff]
    %v409 = vld [vmem:[#allocation5 + $0x7a8] sm:$0xff]
    %v410 = vld [vmem:[#allocation5 + $0x7b0] sm:$0xff]
    %v411 = vld [vmem:[#allocation5 + $0x7b8] sm:$0xff]
    %v412 = vld [vmem:[#allocation5 + $0x7c0] sm:$0xff]
    %v413 = vld [vmem:[#allocation5 + $0x7c8] sm:$0xff]
    %v414 = vld [vmem:[#allocation5 + $0x7d0] sm:$0xff]
    %v415 = vld [vmem:[#allocation5 + $0x7d8] sm:$0xff]
    %v416 = vld [vmem:[#allocation5 + $0x7e0] sm:$0xff]
    %v417 = vld [vmem:[#allocation5 + $0x7e8] sm:$0xff]
    %v418 = vld [vmem:[#allocation5 + $0x7f0] sm:$0xff]
    %v419 = vld [vmem:[#allocation5 + $0x7f8] sm:$0xff]
    %v420 = vld [vmem:[#allocation7] sm:$0xff]
    %v422 = vlaneseq
    %v423 = vshrl.u32 %v422, 7
    %v424 = vsub.s32 0, %v423
    %v425 = vrot.slane %v420, %v424
    %v426 = vlaneseq
    %v427 = vshrl.u32 %v426, 7
    %v428 = vsub.s32 1, %v427
    %v429 = vrot.slane %v420, %v428
    %v430 = vlaneseq
    %v431 = vshrl.u32 %v430, 7
    %v432 = vsub.s32 2, %v431
    %v433 = vrot.slane %v420, %v432
    %v434 = vlaneseq
    %v435 = vshrl.u32 %v434, 7
    %v436 = vsub.s32 3, %v435
    %v437 = vrot.slane %v420, %v436
    %v438 = vlaneseq
    %v439 = vshrl.u32 %v438, 7
    %v440 = vsub.s32 4, %v439
    %v441 = vrot.slane %v420, %v440
    %v442 = vlaneseq
    %v443 = vshrl.u32 %v442, 7
    %v444 = vsub.s32 5, %v443
    %v445 = vrot.slane %v420, %v444
    %v446 = vlaneseq
    %v447 = vshrl.u32 %v446, 7
    %v448 = vsub.s32 6, %v447
    %v449 = vrot.slane %v420, %v448
    %v450 = vlaneseq
    %v451 = vshrl.u32 %v450, 7
    %v452 = vsub.s32 7, %v451
    %v453 = vrot.slane %v420, %v452
    %v718 = vunpack.c.l.b16 %v164
    %v719 = vunpack.c.h.b16 %v164
    %v720 = vunpack.c.l.b16 %v165
    %v721 = vunpack.c.h.b16 %v165
    %v722 = vunpack.c.l.b16 %v166
    %v723 = vunpack.c.h.b16 %v166
    %v724 = vunpack.c.l.b16 %v167
    %v725 = vunpack.c.h.b16 %v167
    %v726 = vunpack.c.l.b16 %v168
    %v727 = vunpack.c.h.b16 %v168
    %v728 = vunpack.c.l.b16 %v169
    %v729 = vunpack.c.h.b16 %v169
    %v730 = vunpack.c.l.b16 %v170
    %v731 = vunpack.c.h.b16 %v170
    %v732 = vunpack.c.l.b16 %v171
    %v733 = vunpack.c.h.b16 %v171
    %v734 = vunpack.c.l.b16 %v172
    %v735 = vunpack.c.h.b16 %v172
    %v736 = vunpack.c.l.b16 %v173
    %v737 = vunpack.c.h.b16 %v173
    %v738 = vunpack.c.l.b16 %v174
    %v739 = vunpack.c.h.b16 %v174
    %v740 = vunpack.c.l.b16 %v175
    %v741 = vunpack.c.h.b16 %v175
    %v742 = vunpack.c.l.b16 %v176
    %v743 = vunpack.c.h.b16 %v176
    %v744 = vunpack.c.l.b16 %v177
    %v745 = vunpack.c.h.b16 %v177
    %v746 = vunpack.c.l.b16 %v178
    %v747 = vunpack.c.h.b16 %v178
    %v748 = vunpack.c.l.b16 %v179
    %v749 = vunpack.c.h.b16 %v179
    %v750 = vunpack.c.l.b16 %v180
    %v751 = vunpack.c.h.b16 %v180
    %v752 = vunpack.c.l.b16 %v181
    %v753 = vunpack.c.h.b16 %v181
    %v754 = vunpack.c.l.b16 %v182
    %v755 = vunpack.c.h.b16 %v182
    %v756 = vunpack.c.l.b16 %v183
    %v757 = vunpack.c.h.b16 %v183
    %v758 = vunpack.c.l.b16 %v184
    %v759 = vunpack.c.h.b16 %v184
    %v760 = vunpack.c.l.b16 %v185
    %v761 = vunpack.c.h.b16 %v185
    %v762 = vunpack.c.l.b16 %v186
    %v763 = vunpack.c.h.b16 %v186
    %v764 = vunpack.c.l.b16 %v187
    %v765 = vunpack.c.h.b16 %v187
    %v766 = vunpack.c.l.b16 %v188
    %v767 = vunpack.c.h.b16 %v188
    %v768 = vunpack.c.l.b16 %v189
    %v769 = vunpack.c.h.b16 %v189
    %v770 = vunpack.c.l.b16 %v190
    %v771 = vunpack.c.h.b16 %v190
    %v772 = vunpack.c.l.b16 %v191
    %v773 = vunpack.c.h.b16 %v191
    %v774 = vunpack.c.l.b16 %v192
    %v775 = vunpack.c.h.b16 %v192
    %v776 = vunpack.c.l.b16 %v193
    %v777 = vunpack.c.h.b16 %v193
    %v778 = vunpack.c.l.b16 %v194
    %v779 = vunpack.c.h.b16 %v194
    %v780 = vunpack.c.l.b16 %v195
    %v781 = vunpack.c.h.b16 %v195
    %v782 = vunpack.c.l.b16 %v196
    %v783 = vunpack.c.h.b16 %v196
    %v784 = vunpack.c.l.b16 %v197
    %v785 = vunpack.c.h.b16 %v197
    %v786 = vunpack.c.l.b16 %v198
    %v787 = vunpack.c.h.b16 %v198
    %v788 = vunpack.c.l.b16 %v199
    %v789 = vunpack.c.h.b16 %v199
    %v790 = vunpack.c.l.b16 %v200
    %v791 = vunpack.c.h.b16 %v200
    %v792 = vunpack.c.l.b16 %v201
    %v793 = vunpack.c.h.b16 %v201
    %v794 = vunpack.c.l.b16 %v202
    %v795 = vunpack.c.h.b16 %v202
    %v796 = vunpack.c.l.b16 %v203
    %v797 = vunpack.c.h.b16 %v203
    %v798 = vunpack.c.l.b16 %v204
    %v799 = vunpack.c.h.b16 %v204
    %v800 = vunpack.c.l.b16 %v205
    %v801 = vunpack.c.h.b16 %v205
    %v802 = vunpack.c.l.b16 %v206
    %v803 = vunpack.c.h.b16 %v206
    %v804 = vunpack.c.l.b16 %v207
    %v805 = vunpack.c.h.b16 %v207
    %v806 = vunpack.c.l.b16 %v208
    %v807 = vunpack.c.h.b16 %v208
    %v808 = vunpack.c.l.b16 %v209
    %v809 = vunpack.c.h.b16 %v209
    %v810 = vunpack.c.l.b16 %v210
    %v811 = vunpack.c.h.b16 %v210
    %v812 = vunpack.c.l.b16 %v211
    %v813 = vunpack.c.h.b16 %v211
    %v814 = vunpack.c.l.b16 %v212
    %v815 = vunpack.c.h.b16 %v212
    %v816 = vunpack.c.l.b16 %v213
    %v817 = vunpack.c.h.b16 %v213
    %v818 = vunpack.c.l.b16 %v214
    %v819 = vunpack.c.h.b16 %v214
    %v820 = vunpack.c.l.b16 %v215
    %v821 = vunpack.c.h.b16 %v215
    %v822 = vunpack.c.l.b16 %v216
    %v823 = vunpack.c.h.b16 %v216
    %v824 = vunpack.c.l.b16 %v217
    %v825 = vunpack.c.h.b16 %v217
    %v826 = vunpack.c.l.b16 %v218
    %v827 = vunpack.c.h.b16 %v218
    %v828 = vunpack.c.l.b16 %v219
    %v829 = vunpack.c.h.b16 %v219
    %v830 = vunpack.c.l.b16 %v220
    %v831 = vunpack.c.h.b16 %v220
    %v832 = vunpack.c.l.b16 %v221
    %v833 = vunpack.c.h.b16 %v221
    %v834 = vunpack.c.l.b16 %v222
    %v835 = vunpack.c.h.b16 %v222
    %v836 = vunpack.c.l.b16 %v223
    %v837 = vunpack.c.h.b16 %v223
    %v838 = vunpack.c.l.b16 %v224
    %v839 = vunpack.c.h.b16 %v224
    %v840 = vunpack.c.l.b16 %v225
    %v841 = vunpack.c.h.b16 %v225
    %v842 = vunpack.c.l.b16 %v226
    %v843 = vunpack.c.h.b16 %v226
    %v844 = vunpack.c.l.b16 %v227
    %v845 = vunpack.c.h.b16 %v227
    %v846 = vunpack.c.l.b16 %v228
    %v847 = vunpack.c.h.b16 %v228
    %v848 = vunpack.c.l.b16 %v229
    %v849 = vunpack.c.h.b16 %v229
    %v850 = vunpack.c.l.b16 %v230
    %v851 = vunpack.c.h.b16 %v230
    %v852 = vunpack.c.l.b16 %v231
    %v853 = vunpack.c.h.b16 %v231
    %v854 = vunpack.c.l.b16 %v232
    %v855 = vunpack.c.h.b16 %v232
    %v856 = vunpack.c.l.b16 %v233
    %v857 = vunpack.c.h.b16 %v233
    %v858 = vunpack.c.l.b16 %v234
    %v859 = vunpack.c.h.b16 %v234
    %v860 = vunpack.c.l.b16 %v235
    %v861 = vunpack.c.h.b16 %v235
    %v862 = vunpack.c.l.b16 %v236
    %v863 = vunpack.c.h.b16 %v236
    %v864 = vunpack.c.l.b16 %v237
    %v865 = vunpack.c.h.b16 %v237
    %v866 = vunpack.c.l.b16 %v238
    %v867 = vunpack.c.h.b16 %v238
    %v868 = vunpack.c.l.b16 %v239
    %v869 = vunpack.c.h.b16 %v239
    %v870 = vunpack.c.l.b16 %v240
    %v871 = vunpack.c.h.b16 %v240
    %v872 = vunpack.c.l.b16 %v241
    %v873 = vunpack.c.h.b16 %v241
    %v874 = vunpack.c.l.b16 %v242
    %v875 = vunpack.c.h.b16 %v242
    %v876 = vunpack.c.l.b16 %v243
    %v877 = vunpack.c.h.b16 %v243
    %v878 = vunpack.c.l.b16 %v244
    %v879 = vunpack.c.h.b16 %v244
    %v880 = vunpack.c.l.b16 %v245
    %v881 = vunpack.c.h.b16 %v245
    %v882 = vunpack.c.l.b16 %v246
    %v883 = vunpack.c.h.b16 %v246
    %v884 = vunpack.c.l.b16 %v247
    %v885 = vunpack.c.h.b16 %v247
    %v886 = vunpack.c.l.b16 %v248
    %v887 = vunpack.c.h.b16 %v248
    %v888 = vunpack.c.l.b16 %v249
    %v889 = vunpack.c.h.b16 %v249
    %v890 = vunpack.c.l.b16 %v250
    %v891 = vunpack.c.h.b16 %v250
    %v892 = vunpack.c.l.b16 %v251
    %v893 = vunpack.c.h.b16 %v251
    %v894 = vunpack.c.l.b16 %v252
    %v895 = vunpack.c.h.b16 %v252
    %v896 = vunpack.c.l.b16 %v253
    %v897 = vunpack.c.h.b16 %v253
    %v898 = vunpack.c.l.b16 %v254
    %v899 = vunpack.c.h.b16 %v254
    %v900 = vunpack.c.l.b16 %v255
    %v901 = vunpack.c.h.b16 %v255
    %v902 = vunpack.c.l.b16 %v256
    %v903 = vunpack.c.h.b16 %v256
    %v904 = vunpack.c.l.b16 %v257
    %v905 = vunpack.c.h.b16 %v257
    %v906 = vunpack.c.l.b16 %v258
    %v907 = vunpack.c.h.b16 %v258
    %v908 = vunpack.c.l.b16 %v259
    %v909 = vunpack.c.h.b16 %v259
    %v910 = vunpack.c.l.b16 %v260
    %v911 = vunpack.c.h.b16 %v260
    %v912 = vunpack.c.l.b16 %v261
    %v913 = vunpack.c.h.b16 %v261
    %v914 = vunpack.c.l.b16 %v262
    %v915 = vunpack.c.h.b16 %v262
    %v916 = vunpack.c.l.b16 %v263
    %v917 = vunpack.c.h.b16 %v263
    %v918 = vunpack.c.l.b16 %v264
    %v919 = vunpack.c.h.b16 %v264
    %v920 = vunpack.c.l.b16 %v265
    %v921 = vunpack.c.h.b16 %v265
    %v922 = vunpack.c.l.b16 %v266
    %v923 = vunpack.c.h.b16 %v266
    %v924 = vunpack.c.l.b16 %v267
    %v925 = vunpack.c.h.b16 %v267
    %v926 = vunpack.c.l.b16 %v268
    %v927 = vunpack.c.h.b16 %v268
    %v928 = vunpack.c.l.b16 %v269
    %v929 = vunpack.c.h.b16 %v269
    %v930 = vunpack.c.l.b16 %v270
    %v931 = vunpack.c.h.b16 %v270
    %v932 = vunpack.c.l.b16 %v271
    %v933 = vunpack.c.h.b16 %v271
    %v934 = vunpack.c.l.b16 %v272
    %v935 = vunpack.c.h.b16 %v272
    %v936 = vunpack.c.l.b16 %v273
    %v937 = vunpack.c.h.b16 %v273
    %v938 = vunpack.c.l.b16 %v274
    %v939 = vunpack.c.h.b16 %v274
    %v940 = vunpack.c.l.b16 %v275
    %v941 = vunpack.c.h.b16 %v275
    %v942 = vunpack.c.l.b16 %v276
    %v943 = vunpack.c.h.b16 %v276
    %v944 = vunpack.c.l.b16 %v277
    %v945 = vunpack.c.h.b16 %v277
    %v946 = vunpack.c.l.b16 %v278
    %v947 = vunpack.c.h.b16 %v278
    %v948 = vunpack.c.l.b16 %v279
    %v949 = vunpack.c.h.b16 %v279
    %v950 = vunpack.c.l.b16 %v280
    %v951 = vunpack.c.h.b16 %v280
    %v952 = vunpack.c.l.b16 %v281
    %v953 = vunpack.c.h.b16 %v281
    %v954 = vunpack.c.l.b16 %v282
    %v955 = vunpack.c.h.b16 %v282
    %v956 = vunpack.c.l.b16 %v283
    %v957 = vunpack.c.h.b16 %v283
    %v958 = vunpack.c.l.b16 %v284
    %v959 = vunpack.c.h.b16 %v284
    %v960 = vunpack.c.l.b16 %v285
    %v961 = vunpack.c.h.b16 %v285
    %v962 = vunpack.c.l.b16 %v286
    %v963 = vunpack.c.h.b16 %v286
    %v964 = vunpack.c.l.b16 %v287
    %v965 = vunpack.c.h.b16 %v287
    %v966 = vunpack.c.l.b16 %v288
    %v967 = vunpack.c.h.b16 %v288
    %v968 = vunpack.c.l.b16 %v289
    %v969 = vunpack.c.h.b16 %v289
    %v970 = vunpack.c.l.b16 %v290
    %v971 = vunpack.c.h.b16 %v290
    %v972 = vunpack.c.l.b16 %v291
    %v973 = vunpack.c.h.b16 %v291
    %v974 = vunpack.c.l.b16 %v292
    %v975 = vunpack.c.h.b16 %v292
    %v976 = vunpack.c.l.b16 %v293
    %v977 = vunpack.c.h.b16 %v293
    %v978 = vunpack.c.l.b16 %v294
    %v979 = vunpack.c.h.b16 %v294
    %v980 = vunpack.c.l.b16 %v295
    %v981 = vunpack.c.h.b16 %v295
    %v982 = vunpack.c.l.b16 %v296
    %v983 = vunpack.c.h.b16 %v296
    %v984 = vunpack.c.l.b16 %v297
    %v985 = vunpack.c.h.b16 %v297
    %v986 = vunpack.c.l.b16 %v298
    %v987 = vunpack.c.h.b16 %v298
    %v988 = vunpack.c.l.b16 %v299
    %v989 = vunpack.c.h.b16 %v299
    %v990 = vunpack.c.l.b16 %v300
    %v991 = vunpack.c.h.b16 %v300
    %v992 = vunpack.c.l.b16 %v301
    %v993 = vunpack.c.h.b16 %v301
    %v994 = vunpack.c.l.b16 %v302
    %v995 = vunpack.c.h.b16 %v302
    %v996 = vunpack.c.l.b16 %v303
    %v997 = vunpack.c.h.b16 %v303
    %v998 = vunpack.c.l.b16 %v304
    %v999 = vunpack.c.h.b16 %v304
    %v1000 = vunpack.c.l.b16 %v305
    %v1001 = vunpack.c.h.b16 %v305
    %v1002 = vunpack.c.l.b16 %v306
    %v1003 = vunpack.c.h.b16 %v306
    %v1004 = vunpack.c.l.b16 %v307
    %v1005 = vunpack.c.h.b16 %v307
    %v1006 = vunpack.c.l.b16 %v308
    %v1007 = vunpack.c.h.b16 %v308
    %v1008 = vunpack.c.l.b16 %v309
    %v1009 = vunpack.c.h.b16 %v309
    %v1010 = vunpack.c.l.b16 %v310
    %v1011 = vunpack.c.h.b16 %v310
    %v1012 = vunpack.c.l.b16 %v311
    %v1013 = vunpack.c.h.b16 %v311
    %v1014 = vunpack.c.l.b16 %v312
    %v1015 = vunpack.c.h.b16 %v312
    %v1016 = vunpack.c.l.b16 %v313
    %v1017 = vunpack.c.h.b16 %v313
    %v1018 = vunpack.c.l.b16 %v314
    %v1019 = vunpack.c.h.b16 %v314
    %v1020 = vunpack.c.l.b16 %v315
    %v1021 = vunpack.c.h.b16 %v315
    %v1022 = vunpack.c.l.b16 %v316
    %v1023 = vunpack.c.h.b16 %v316
    %v1024 = vunpack.c.l.b16 %v317
    %v1025 = vunpack.c.h.b16 %v317
    %v1026 = vunpack.c.l.b16 %v318
    %v1027 = vunpack.c.h.b16 %v318
    %v1028 = vunpack.c.l.b16 %v319
    %v1029 = vunpack.c.h.b16 %v319
    %v1030 = vunpack.c.l.b16 %v320
    %v1031 = vunpack.c.h.b16 %v320
    %v1032 = vunpack.c.l.b16 %v321
    %v1033 = vunpack.c.h.b16 %v321
    %v1034 = vunpack.c.l.b16 %v322
    %v1035 = vunpack.c.h.b16 %v322
    %v1036 = vunpack.c.l.b16 %v323
    %v1037 = vunpack.c.h.b16 %v323
    %v1038 = vunpack.c.l.b16 %v324
    %v1039 = vunpack.c.h.b16 %v324
    %v1040 = vunpack.c.l.b16 %v325
    %v1041 = vunpack.c.h.b16 %v325
    %v1042 = vunpack.c.l.b16 %v326
    %v1043 = vunpack.c.h.b16 %v326
    %v1044 = vunpack.c.l.b16 %v327
    %v1045 = vunpack.c.h.b16 %v327
    %v1046 = vunpack.c.l.b16 %v328
    %v1047 = vunpack.c.h.b16 %v328
    %v1048 = vunpack.c.l.b16 %v329
    %v1049 = vunpack.c.h.b16 %v329
    %v1050 = vunpack.c.l.b16 %v330
    %v1051 = vunpack.c.h.b16 %v330
    %v1052 = vunpack.c.l.b16 %v331
    %v1053 = vunpack.c.h.b16 %v331
    %v1054 = vunpack.c.l.b16 %v332
    %v1055 = vunpack.c.h.b16 %v332
    %v1056 = vunpack.c.l.b16 %v333
    %v1057 = vunpack.c.h.b16 %v333
    %v1058 = vunpack.c.l.b16 %v334
    %v1059 = vunpack.c.h.b16 %v334
    %v1060 = vunpack.c.l.b16 %v335
    %v1061 = vunpack.c.h.b16 %v335
    %v1062 = vunpack.c.l.b16 %v336
    %v1063 = vunpack.c.h.b16 %v336
    %v1064 = vunpack.c.l.b16 %v337
    %v1065 = vunpack.c.h.b16 %v337
    %v1066 = vunpack.c.l.b16 %v338
    %v1067 = vunpack.c.h.b16 %v338
    %v1068 = vunpack.c.l.b16 %v339
    %v1069 = vunpack.c.h.b16 %v339
    %v1070 = vunpack.c.l.b16 %v340
    %v1071 = vunpack.c.h.b16 %v340
    %v1072 = vunpack.c.l.b16 %v341
    %v1073 = vunpack.c.h.b16 %v341
    %v1074 = vunpack.c.l.b16 %v342
    %v1075 = vunpack.c.h.b16 %v342
    %v1076 = vunpack.c.l.b16 %v343
    %v1077 = vunpack.c.h.b16 %v343
    %v1078 = vunpack.c.l.b16 %v344
    %v1079 = vunpack.c.h.b16 %v344
    %v1080 = vunpack.c.l.b16 %v345
    %v1081 = vunpack.c.h.b16 %v345
    %v1082 = vunpack.c.l.b16 %v346
    %v1083 = vunpack.c.h.b16 %v346
    %v1084 = vunpack.c.l.b16 %v347
    %v1085 = vunpack.c.h.b16 %v347
    %v1086 = vunpack.c.l.b16 %v348
    %v1087 = vunpack.c.h.b16 %v348
    %v1088 = vunpack.c.l.b16 %v349
    %v1089 = vunpack.c.h.b16 %v349
    %v1090 = vunpack.c.l.b16 %v350
    %v1091 = vunpack.c.h.b16 %v350
    %v1092 = vunpack.c.l.b16 %v351
    %v1093 = vunpack.c.h.b16 %v351
    %v1094 = vunpack.c.l.b16 %v352
    %v1095 = vunpack.c.h.b16 %v352
    %v1096 = vunpack.c.l.b16 %v353
    %v1097 = vunpack.c.h.b16 %v353
    %v1098 = vunpack.c.l.b16 %v354
    %v1099 = vunpack.c.h.b16 %v354
    %v1100 = vunpack.c.l.b16 %v355
    %v1101 = vunpack.c.h.b16 %v355
    %v1102 = vunpack.c.l.b16 %v356
    %v1103 = vunpack.c.h.b16 %v356
    %v1104 = vunpack.c.l.b16 %v357
    %v1105 = vunpack.c.h.b16 %v357
    %v1106 = vunpack.c.l.b16 %v358
    %v1107 = vunpack.c.h.b16 %v358
    %v1108 = vunpack.c.l.b16 %v359
    %v1109 = vunpack.c.h.b16 %v359
    %v1110 = vunpack.c.l.b16 %v360
    %v1111 = vunpack.c.h.b16 %v360
    %v1112 = vunpack.c.l.b16 %v361
    %v1113 = vunpack.c.h.b16 %v361
    %v1114 = vunpack.c.l.b16 %v362
    %v1115 = vunpack.c.h.b16 %v362
    %v1116 = vunpack.c.l.b16 %v363
    %v1117 = vunpack.c.h.b16 %v363
    %v1118 = vunpack.c.l.b16 %v364
    %v1119 = vunpack.c.h.b16 %v364
    %v1120 = vunpack.c.l.b16 %v365
    %v1121 = vunpack.c.h.b16 %v365
    %v1122 = vunpack.c.l.b16 %v366
    %v1123 = vunpack.c.h.b16 %v366
    %v1124 = vunpack.c.l.b16 %v367
    %v1125 = vunpack.c.h.b16 %v367
    %v1126 = vunpack.c.l.b16 %v368
    %v1127 = vunpack.c.h.b16 %v368
    %v1128 = vunpack.c.l.b16 %v369
    %v1129 = vunpack.c.h.b16 %v369
    %v1130 = vunpack.c.l.b16 %v370
    %v1131 = vunpack.c.h.b16 %v370
    %v1132 = vunpack.c.l.b16 %v371
    %v1133 = vunpack.c.h.b16 %v371
    %v1134 = vunpack.c.l.b16 %v372
    %v1135 = vunpack.c.h.b16 %v372
    %v1136 = vunpack.c.l.b16 %v373
    %v1137 = vunpack.c.h.b16 %v373
    %v1138 = vunpack.c.l.b16 %v374
    %v1139 = vunpack.c.h.b16 %v374
    %v1140 = vunpack.c.l.b16 %v375
    %v1141 = vunpack.c.h.b16 %v375
    %v1142 = vunpack.c.l.b16 %v376
    %v1143 = vunpack.c.h.b16 %v376
    %v1144 = vunpack.c.l.b16 %v377
    %v1145 = vunpack.c.h.b16 %v377
    %v1146 = vunpack.c.l.b16 %v378
    %v1147 = vunpack.c.h.b16 %v378
    %v1148 = vunpack.c.l.b16 %v379
    %v1149 = vunpack.c.h.b16 %v379
    %v1150 = vunpack.c.l.b16 %v380
    %v1151 = vunpack.c.h.b16 %v380
    %v1152 = vunpack.c.l.b16 %v381
    %v1153 = vunpack.c.h.b16 %v381
    %v1154 = vunpack.c.l.b16 %v382
    %v1155 = vunpack.c.h.b16 %v382
    %v1156 = vunpack.c.l.b16 %v383
    %v1157 = vunpack.c.h.b16 %v383
    %v1158 = vunpack.c.l.b16 %v384
    %v1159 = vunpack.c.h.b16 %v384
    %v1160 = vunpack.c.l.b16 %v385
    %v1161 = vunpack.c.h.b16 %v385
    %v1162 = vunpack.c.l.b16 %v386
    %v1163 = vunpack.c.h.b16 %v386
    %v1164 = vunpack.c.l.b16 %v387
    %v1165 = vunpack.c.h.b16 %v387
    %v1166 = vunpack.c.l.b16 %v388
    %v1167 = vunpack.c.h.b16 %v388
    %v1168 = vunpack.c.l.b16 %v389
    %v1169 = vunpack.c.h.b16 %v389
    %v1170 = vunpack.c.l.b16 %v390
    %v1171 = vunpack.c.h.b16 %v390
    %v1172 = vunpack.c.l.b16 %v391
    %v1173 = vunpack.c.h.b16 %v391
    %v1174 = vunpack.c.l.b16 %v392
    %v1175 = vunpack.c.h.b16 %v392
    %v1176 = vunpack.c.l.b16 %v393
    %v1177 = vunpack.c.h.b16 %v393
    %v1178 = vunpack.c.l.b16 %v394
    %v1179 = vunpack.c.h.b16 %v394
    %v1180 = vunpack.c.l.b16 %v395
    %v1181 = vunpack.c.h.b16 %v395
    %v1182 = vunpack.c.l.b16 %v396
    %v1183 = vunpack.c.h.b16 %v396
    %v1184 = vunpack.c.l.b16 %v397
    %v1185 = vunpack.c.h.b16 %v397
    %v1186 = vunpack.c.l.b16 %v398
    %v1187 = vunpack.c.h.b16 %v398
    %v1188 = vunpack.c.l.b16 %v399
    %v1189 = vunpack.c.h.b16 %v399
    %v1190 = vunpack.c.l.b16 %v400
    %v1191 = vunpack.c.h.b16 %v400
    %v1192 = vunpack.c.l.b16 %v401
    %v1193 = vunpack.c.h.b16 %v401
    %v1194 = vunpack.c.l.b16 %v402
    %v1195 = vunpack.c.h.b16 %v402
    %v1196 = vunpack.c.l.b16 %v403
    %v1197 = vunpack.c.h.b16 %v403
    %v1198 = vunpack.c.l.b16 %v404
    %v1199 = vunpack.c.h.b16 %v404
    %v1200 = vunpack.c.l.b16 %v405
    %v1201 = vunpack.c.h.b16 %v405
    %v1202 = vunpack.c.l.b16 %v406
    %v1203 = vunpack.c.h.b16 %v406
    %v1204 = vunpack.c.l.b16 %v407
    %v1205 = vunpack.c.h.b16 %v407
    %v1206 = vunpack.c.l.b16 %v408
    %v1207 = vunpack.c.h.b16 %v408
    %v1208 = vunpack.c.l.b16 %v409
    %v1209 = vunpack.c.h.b16 %v409
    %v1210 = vunpack.c.l.b16 %v410
    %v1211 = vunpack.c.h.b16 %v410
    %v1212 = vunpack.c.l.b16 %v411
    %v1213 = vunpack.c.h.b16 %v411
    %v1214 = vunpack.c.l.b16 %v412
    %v1215 = vunpack.c.h.b16 %v412
    %v1216 = vunpack.c.l.b16 %v413
    %v1217 = vunpack.c.h.b16 %v413
    %v1218 = vunpack.c.l.b16 %v414
    %v1219 = vunpack.c.h.b16 %v414
    %v1220 = vunpack.c.l.b16 %v415
    %v1221 = vunpack.c.h.b16 %v415
    %v1222 = vunpack.c.l.b16 %v416
    %v1223 = vunpack.c.h.b16 %v416
    %v1224 = vunpack.c.l.b16 %v417
    %v1225 = vunpack.c.h.b16 %v417
    %v1226 = vunpack.c.l.b16 %v418
    %v1227 = vunpack.c.h.b16 %v418
    %v1228 = vunpack.c.l.b16 %v419
    %v1229 = vunpack.c.h.b16 %v419
    %v1230 = vpack.c.b16 %v726, %v718
    %v1231 = vpack.c.b16 %v727, %v719
    %v1232 = vpack.c.b16 %v728, %v720
    %v1233 = vpack.c.b16 %v729, %v721
    %v1234 = vpack.c.b16 %v730, %v722
    %v1235 = vpack.c.b16 %v731, %v723
    %v1236 = vpack.c.b16 %v732, %v724
    %v1237 = vpack.c.b16 %v733, %v725
    %v1238 = vpack.c.b16 %v742, %v734
    %v1239 = vpack.c.b16 %v743, %v735
    %v1240 = vpack.c.b16 %v744, %v736
    %v1241 = vpack.c.b16 %v745, %v737
    %v1242 = vpack.c.b16 %v746, %v738
    %v1243 = vpack.c.b16 %v747, %v739
    %v1244 = vpack.c.b16 %v748, %v740
    %v1245 = vpack.c.b16 %v749, %v741
    %v1246 = vpack.c.b16 %v758, %v750
    %v1247 = vpack.c.b16 %v759, %v751
    %v1248 = vpack.c.b16 %v760, %v752
    %v1249 = vpack.c.b16 %v761, %v753
    %v1250 = vpack.c.b16 %v762, %v754
    %v1251 = vpack.c.b16 %v763, %v755
    %v1252 = vpack.c.b16 %v764, %v756
    %v1253 = vpack.c.b16 %v765, %v757
    %v1254 = vpack.c.b16 %v774, %v766
    %v1255 = vpack.c.b16 %v775, %v767
    %v1256 = vpack.c.b16 %v776, %v768
    %v1257 = vpack.c.b16 %v777, %v769
    %v1258 = vpack.c.b16 %v778, %v770
    %v1259 = vpack.c.b16 %v779, %v771
    %v1260 = vpack.c.b16 %v780, %v772
    %v1261 = vpack.c.b16 %v781, %v773
    %v1262 = vpack.c.b16 %v790, %v782
    %v1263 = vpack.c.b16 %v791, %v783
    %v1264 = vpack.c.b16 %v792, %v784
    %v1265 = vpack.c.b16 %v793, %v785
    %v1266 = vpack.c.b16 %v794, %v786
    %v1267 = vpack.c.b16 %v795, %v787
    %v1268 = vpack.c.b16 %v796, %v788
    %v1269 = vpack.c.b16 %v797, %v789
    %v1270 = vpack.c.b16 %v806, %v798
    %v1271 = vpack.c.b16 %v807, %v799
    %v1272 = vpack.c.b16 %v808, %v800
    %v1273 = vpack.c.b16 %v809, %v801
    %v1274 = vpack.c.b16 %v810, %v802
    %v1275 = vpack.c.b16 %v811, %v803
    %v1276 = vpack.c.b16 %v812, %v804
    %v1277 = vpack.c.b16 %v813, %v805
    %v1278 = vpack.c.b16 %v822, %v814
    %v1279 = vpack.c.b16 %v823, %v815
    %v1280 = vpack.c.b16 %v824, %v816
    %v1281 = vpack.c.b16 %v825, %v817
    %v1282 = vpack.c.b16 %v826, %v818
    %v1283 = vpack.c.b16 %v827, %v819
    %v1284 = vpack.c.b16 %v828, %v820
    %v1285 = vpack.c.b16 %v829, %v821
    %v1286 = vpack.c.b16 %v838, %v830
    %v1287 = vpack.c.b16 %v839, %v831
    %v1288 = vpack.c.b16 %v840, %v832
    %v1289 = vpack.c.b16 %v841, %v833
    %v1290 = vpack.c.b16 %v842, %v834
    %v1291 = vpack.c.b16 %v843, %v835
    %v1292 = vpack.c.b16 %v844, %v836
    %v1293 = vpack.c.b16 %v845, %v837
    %v1294 = vpack.c.b16 %v854, %v846
    %v1295 = vpack.c.b16 %v855, %v847
    %v1296 = vpack.c.b16 %v856, %v848
    %v1297 = vpack.c.b16 %v857, %v849
    %v1298 = vpack.c.b16 %v858, %v850
    %v1299 = vpack.c.b16 %v859, %v851
    %v1300 = vpack.c.b16 %v860, %v852
    %v1301 = vpack.c.b16 %v861, %v853
    %v1302 = vpack.c.b16 %v870, %v862
    %v1303 = vpack.c.b16 %v871, %v863
    %v1304 = vpack.c.b16 %v872, %v864
    %v1305 = vpack.c.b16 %v873, %v865
    %v1306 = vpack.c.b16 %v874, %v866
    %v1307 = vpack.c.b16 %v875, %v867
    %v1308 = vpack.c.b16 %v876, %v868
    %v1309 = vpack.c.b16 %v877, %v869
    %v1310 = vpack.c.b16 %v886, %v878
    %v1311 = vpack.c.b16 %v887, %v879
    %v1312 = vpack.c.b16 %v888, %v880
    %v1313 = vpack.c.b16 %v889, %v881
    %v1314 = vpack.c.b16 %v890, %v882
    %v1315 = vpack.c.b16 %v891, %v883
    %v1316 = vpack.c.b16 %v892, %v884
    %v1317 = vpack.c.b16 %v893, %v885
    %v1318 = vpack.c.b16 %v902, %v894
    %v1319 = vpack.c.b16 %v903, %v895
    %v1320 = vpack.c.b16 %v904, %v896
    %v1321 = vpack.c.b16 %v905, %v897
    %v1322 = vpack.c.b16 %v906, %v898
    %v1323 = vpack.c.b16 %v907, %v899
    %v1324 = vpack.c.b16 %v908, %v900
    %v1325 = vpack.c.b16 %v909, %v901
    %v1326 = vpack.c.b16 %v918, %v910
    %v1327 = vpack.c.b16 %v919, %v911
    %v1328 = vpack.c.b16 %v920, %v912
    %v1329 = vpack.c.b16 %v921, %v913
    %v1330 = vpack.c.b16 %v922, %v914
    %v1331 = vpack.c.b16 %v923, %v915
    %v1332 = vpack.c.b16 %v924, %v916
    %v1333 = vpack.c.b16 %v925, %v917
    %v1334 = vpack.c.b16 %v934, %v926
    %v1335 = vpack.c.b16 %v935, %v927
    %v1336 = vpack.c.b16 %v936, %v928
    %v1337 = vpack.c.b16 %v937, %v929
    %v1338 = vpack.c.b16 %v938, %v930
    %v1339 = vpack.c.b16 %v939, %v931
    %v1340 = vpack.c.b16 %v940, %v932
    %v1341 = vpack.c.b16 %v941, %v933
    %v1342 = vpack.c.b16 %v950, %v942
    %v1343 = vpack.c.b16 %v951, %v943
    %v1344 = vpack.c.b16 %v952, %v944
    %v1345 = vpack.c.b16 %v953, %v945
    %v1346 = vpack.c.b16 %v954, %v946
    %v1347 = vpack.c.b16 %v955, %v947
    %v1348 = vpack.c.b16 %v956, %v948
    %v1349 = vpack.c.b16 %v957, %v949
    %v1350 = vpack.c.b16 %v966, %v958
    %v1351 = vpack.c.b16 %v967, %v959
    %v1352 = vpack.c.b16 %v968, %v960
    %v1353 = vpack.c.b16 %v969, %v961
    %v1354 = vpack.c.b16 %v970, %v962
    %v1355 = vpack.c.b16 %v971, %v963
    %v1356 = vpack.c.b16 %v972, %v964
    %v1357 = vpack.c.b16 %v973, %v965
    %v1358 = vpack.c.b16 %v982, %v974
    %v1359 = vpack.c.b16 %v983, %v975
    %v1360 = vpack.c.b16 %v984, %v976
    %v1361 = vpack.c.b16 %v985, %v977
    %v1362 = vpack.c.b16 %v986, %v978
    %v1363 = vpack.c.b16 %v987, %v979
    %v1364 = vpack.c.b16 %v988, %v980
    %v1365 = vpack.c.b16 %v989, %v981
    %v1366 = vpack.c.b16 %v998, %v990
    %v1367 = vpack.c.b16 %v999, %v991
    %v1368 = vpack.c.b16 %v1000, %v992
    %v1369 = vpack.c.b16 %v1001, %v993
    %v1370 = vpack.c.b16 %v1002, %v994
    %v1371 = vpack.c.b16 %v1003, %v995
    %v1372 = vpack.c.b16 %v1004, %v996
    %v1373 = vpack.c.b16 %v1005, %v997
    %v1374 = vpack.c.b16 %v1014, %v1006
    %v1375 = vpack.c.b16 %v1015, %v1007
    %v1376 = vpack.c.b16 %v1016, %v1008
    %v1377 = vpack.c.b16 %v1017, %v1009
    %v1378 = vpack.c.b16 %v1018, %v1010
    %v1379 = vpack.c.b16 %v1019, %v1011
    %v1380 = vpack.c.b16 %v1020, %v1012
    %v1381 = vpack.c.b16 %v1021, %v1013
    %v1382 = vpack.c.b16 %v1030, %v1022
    %v1383 = vpack.c.b16 %v1031, %v1023
    %v1384 = vpack.c.b16 %v1032, %v1024
    %v1385 = vpack.c.b16 %v1033, %v1025
    %v1386 = vpack.c.b16 %v1034, %v1026
    %v1387 = vpack.c.b16 %v1035, %v1027
    %v1388 = vpack.c.b16 %v1036, %v1028
    %v1389 = vpack.c.b16 %v1037, %v1029
    %v1390 = vpack.c.b16 %v1046, %v1038
    %v1391 = vpack.c.b16 %v1047, %v1039
    %v1392 = vpack.c.b16 %v1048, %v1040
    %v1393 = vpack.c.b16 %v1049, %v1041
    %v1394 = vpack.c.b16 %v1050, %v1042
    %v1395 = vpack.c.b16 %v1051, %v1043
    %v1396 = vpack.c.b16 %v1052, %v1044
    %v1397 = vpack.c.b16 %v1053, %v1045
    %v1398 = vpack.c.b16 %v1062, %v1054
    %v1399 = vpack.c.b16 %v1063, %v1055
    %v1400 = vpack.c.b16 %v1064, %v1056
    %v1401 = vpack.c.b16 %v1065, %v1057
    %v1402 = vpack.c.b16 %v1066, %v1058
    %v1403 = vpack.c.b16 %v1067, %v1059
    %v1404 = vpack.c.b16 %v1068, %v1060
    %v1405 = vpack.c.b16 %v1069, %v1061
    %v1406 = vpack.c.b16 %v1078, %v1070
    %v1407 = vpack.c.b16 %v1079, %v1071
    %v1408 = vpack.c.b16 %v1080, %v1072
    %v1409 = vpack.c.b16 %v1081, %v1073
    %v1410 = vpack.c.b16 %v1082, %v1074
    %v1411 = vpack.c.b16 %v1083, %v1075
    %v1412 = vpack.c.b16 %v1084, %v1076
    %v1413 = vpack.c.b16 %v1085, %v1077
    %v1414 = vpack.c.b16 %v1094, %v1086
    %v1415 = vpack.c.b16 %v1095, %v1087
    %v1416 = vpack.c.b16 %v1096, %v1088
    %v1417 = vpack.c.b16 %v1097, %v1089
    %v1418 = vpack.c.b16 %v1098, %v1090
    %v1419 = vpack.c.b16 %v1099, %v1091
    %v1420 = vpack.c.b16 %v1100, %v1092
    %v1421 = vpack.c.b16 %v1101, %v1093
    %v1422 = vpack.c.b16 %v1110, %v1102
    %v1423 = vpack.c.b16 %v1111, %v1103
    %v1424 = vpack.c.b16 %v1112, %v1104
    %v1425 = vpack.c.b16 %v1113, %v1105
    %v1426 = vpack.c.b16 %v1114, %v1106
    %v1427 = vpack.c.b16 %v1115, %v1107
    %v1428 = vpack.c.b16 %v1116, %v1108
    %v1429 = vpack.c.b16 %v1117, %v1109
    %v1430 = vpack.c.b16 %v1126, %v1118
    %v1431 = vpack.c.b16 %v1127, %v1119
    %v1432 = vpack.c.b16 %v1128, %v1120
    %v1433 = vpack.c.b16 %v1129, %v1121
    %v1434 = vpack.c.b16 %v1130, %v1122
    %v1435 = vpack.c.b16 %v1131, %v1123
    %v1436 = vpack.c.b16 %v1132, %v1124
    %v1437 = vpack.c.b16 %v1133, %v1125
    %v1438 = vpack.c.b16 %v1142, %v1134
    %v1439 = vpack.c.b16 %v1143, %v1135
    %v1440 = vpack.c.b16 %v1144, %v1136
    %v1441 = vpack.c.b16 %v1145, %v1137
    %v1442 = vpack.c.b16 %v1146, %v1138
    %v1443 = vpack.c.b16 %v1147, %v1139
    %v1444 = vpack.c.b16 %v1148, %v1140
    %v1445 = vpack.c.b16 %v1149, %v1141
    %v1446 = vpack.c.b16 %v1158, %v1150
    %v1447 = vpack.c.b16 %v1159, %v1151
    %v1448 = vpack.c.b16 %v1160, %v1152
    %v1449 = vpack.c.b16 %v1161, %v1153
    %v1450 = vpack.c.b16 %v1162, %v1154
    %v1451 = vpack.c.b16 %v1163, %v1155
    %v1452 = vpack.c.b16 %v1164, %v1156
    %v1453 = vpack.c.b16 %v1165, %v1157
    %v1454 = vpack.c.b16 %v1174, %v1166
    %v1455 = vpack.c.b16 %v1175, %v1167
    %v1456 = vpack.c.b16 %v1176, %v1168
    %v1457 = vpack.c.b16 %v1177, %v1169
    %v1458 = vpack.c.b16 %v1178, %v1170
    %v1459 = vpack.c.b16 %v1179, %v1171
    %v1460 = vpack.c.b16 %v1180, %v1172
    %v1461 = vpack.c.b16 %v1181, %v1173
    %v1462 = vpack.c.b16 %v1190, %v1182
    %v1463 = vpack.c.b16 %v1191, %v1183
    %v1464 = vpack.c.b16 %v1192, %v1184
    %v1465 = vpack.c.b16 %v1193, %v1185
    %v1466 = vpack.c.b16 %v1194, %v1186
    %v1467 = vpack.c.b16 %v1195, %v1187
    %v1468 = vpack.c.b16 %v1196, %v1188
    %v1469 = vpack.c.b16 %v1197, %v1189
    %v1470 = vpack.c.b16 %v1206, %v1198
    %v1471 = vpack.c.b16 %v1207, %v1199
    %v1472 = vpack.c.b16 %v1208, %v1200
    %v1473 = vpack.c.b16 %v1209, %v1201
    %v1474 = vpack.c.b16 %v1210, %v1202
    %v1475 = vpack.c.b16 %v1211, %v1203
    %v1476 = vpack.c.b16 %v1212, %v1204
    %v1477 = vpack.c.b16 %v1213, %v1205
    %v1478 = vpack.c.b16 %v1222, %v1214
    %v1479 = vpack.c.b16 %v1223, %v1215
    %v1480 = vpack.c.b16 %v1224, %v1216
    %v1481 = vpack.c.b16 %v1225, %v1217
    %v1482 = vpack.c.b16 %v1226, %v1218
    %v1483 = vpack.c.b16 %v1227, %v1219
    %v1484 = vpack.c.b16 %v1228, %v1220
    %v1485 = vpack.c.b16 %v1229, %v1221
    %1742 = vmatprep.subr.bf16.mxu0 %v1231
    %1743 = vmatpush1.bf16.msra.mxu0 %v1230
    %1744 = vmatprep.subr.bf16.mxu0 %v1239
    %1745 = vmatpush1.bf16.msra.mxu0 %v1238
    %1746 = vmatprep.subr.bf16.mxu0 %v1247
    %1747 = vmatpush1.bf16.msra.mxu0 %v1246
    %1748 = vmatprep.subr.bf16.mxu0 %v1255
    %1749 = vmatpush1.bf16.msra.mxu0 %v1254
    %1750 = vmatprep.subr.bf16.mxu0 %v1263
    %1751 = vmatpush1.bf16.msra.mxu0 %v1262
    %1752 = vmatprep.subr.bf16.mxu0 %v1271
    %1753 = vmatpush1.bf16.msra.mxu0 %v1270
    %1754 = vmatprep.subr.bf16.mxu0 %v1279
    %1755 = vmatpush1.bf16.msra.mxu0 %v1278
    %1756 = vmatprep.subr.bf16.mxu0 %v1287
    %1757 = vmatpush1.bf16.msra.mxu0 %v1286
    %1758 = vmatprep.subr.bf16.mxu0 %v1295
    %1759 = vmatpush1.bf16.msra.mxu0 %v1294
    %1760 = vmatprep.subr.bf16.mxu0 %v1303
    %1761 = vmatpush1.bf16.msra.mxu0 %v1302
    %1762 = vmatprep.subr.bf16.mxu0 %v1311
    %1763 = vmatpush1.bf16.msra.mxu0 %v1310
    %1764 = vmatprep.subr.bf16.mxu0 %v1319
    %1765 = vmatpush1.bf16.msra.mxu0 %v1318
    %1766 = vmatprep.subr.bf16.mxu0 %v1327
    %1767 = vmatpush1.bf16.msra.mxu0 %v1326
    %1768 = vmatprep.subr.bf16.mxu0 %v1335
    %1769 = vmatpush1.bf16.msra.mxu0 %v1334
    %1770 = vmatprep.subr.bf16.mxu0 %v1343
    %1771 = vmatpush1.bf16.msra.mxu0 %v1342
    %1772 = vmatprep.subr.bf16.mxu0 %v1351
    %1773 = vmatpush1.bf16.msra.mxu0 %v1350
    %1774 = vmatprep.mubr.bf16.mxu0 %v149
    %1775 = vmatmul.mubr.bf16.gmra.mrb[0].mxu0 %v148
    %v1776 = vpop.f32.mrb[0].mxu0
    %v1777 = vadd.f32 %v425, %v1776
    %v1778 = vpop.f32.mrb[0].mxu0
    %v1779 = vadd.f32 %v429, %v1778
    %v1780 = vpop.f32.mrb[0].mxu0
    %v1781 = vadd.f32 %v425, %v1780
    %v1782 = vpop.f32.mrb[0].mxu0
    %v1783 = vadd.f32 %v429, %v1782
    %1784 = vmatprep.mubr.bf16.mxu0 %v153
    %1785 = vmatmul.mubr.bf16.gmra.mrb[0].mxu0 %v152
    %v1786 = vpop.f32.mrb[0].mxu0
    %v1787 = vadd.f32 %v425, %v1786
    %v1788 = vpop.f32.mrb[0].mxu0
    %v1789 = vadd.f32 %v429, %v1788
    %v1790 = vpop.f32.mrb[0].mxu0
    %v1791 = vadd.f32 %v425, %v1790
    %v1792 = vpop.f32.mrb[0].mxu0
    %v1793 = vadd.f32 %v429, %v1792
    %1794 = vmatprep.mubr.bf16.mxu0 %v157
    %1795 = vmatmul.mubr.bf16.gmra.mrb[0].mxu0 %v156
    %v1796 = vpop.f32.mrb[0].mxu0
    %v1797 = vadd.f32 %v425, %v1796
    %v1798 = vpop.f32.mrb[0].mxu0
    %v1799 = vadd.f32 %v429, %v1798
    %v1800 = vpop.f32.mrb[0].mxu0
    %v1801 = vadd.f32 %v425, %v1800
    %v1802 = vpop.f32.mrb[0].mxu0
    %v1803 = vadd.f32 %v429, %v1802
    %1804 = vmatprep.mubr.bf16.mxu0 %v161
    %1805 = vmatmul.mubr.bf16.gmra.mrb[0].mxu0 %v160
    %v1806 = vpop.f32.mrb[0].mxu0
    %v1807 = vadd.f32 %v425, %v1806
    %v1808 = vpop.f32.mrb[0].mxu0
    %v1809 = vadd.f32 %v429, %v1808
    %v1810 = vpop.f32.mrb[0].mxu0
    %v1811 = vadd.f32 %v425, %v1810
    %v1812 = vpop.f32.mrb[0].mxu0
    %v1813 = vadd.f32 %v429, %v1812
    %1814 = vdwg.mxu0
    %1815 = vmatprep.subr.bf16.mxu0 %v1359
    %1816 = vmatpush1.bf16.msra.mxu0 %v1358
    %1817 = vmatprep.subr.bf16.mxu0 %v1367
    %1818 = vmatpush1.bf16.msra.mxu0 %v1366
    %1819 = vmatprep.subr.bf16.mxu0 %v1375
    %1820 = vmatpush1.bf16.msra.mxu0 %v1374
    %1821 = vmatprep.subr.bf16.mxu0 %v1383
    %1822 = vmatpush1.bf16.msra.mxu0 %v1382
    %1823 = vmatprep.subr.bf16.mxu0 %v1391
    %1824 = vmatpush1.bf16.msra.mxu0 %v1390
    %1825 = vmatprep.subr.bf16.mxu0 %v1399
    %1826 = vmatpush1.bf16.msra.mxu0 %v1398
    %1827 = vmatprep.subr.bf16.mxu0 %v1407
    %1828 = vmatpush1.bf16.msra.mxu0 %v1406
    %1829 = vmatprep.subr.bf16.mxu0 %v1415
    %1830 = vmatpush1.bf16.msra.mxu0 %v1414
    %1831 = vmatprep.subr.bf16.mxu0 %v1423
    %1832 = vmatpush1.bf16.msra.mxu0 %v1422
    %1833 = vmatprep.subr.bf16.mxu0 %v1431
    %1834 = vmatpush1.bf16.msra.mxu0 %v1430
    %1835 = vmatprep.subr.bf16.mxu0 %v1439
    %1836 = vmatpush1.bf16.msra.mxu0 %v1438
    %1837 = vmatprep.subr.bf16.mxu0 %v1447
    %1838 = vmatpush1.bf16.msra.mxu0 %v1446
    %1839 = vmatprep.subr.bf16.mxu0 %v1455
    %1840 = vmatpush1.bf16.msra.mxu0 %v1454
    %1841 = vmatprep.subr.bf16.mxu0 %v1463
    %1842 = vmatpush1.bf16.msra.mxu0 %v1462
    %1843 = vmatprep.subr.bf16.mxu0 %v1471
    %1844 = vmatpush1.bf16.msra.mxu0 %v1470
    %1845 = vmatprep.subr.bf16.mxu0 %v1479
    %1846 = vmatpush1.bf16.msra.mxu0 %v1478
    %1847 = vmatprep.mubr.bf16.mxu0 %v151
    %1848 = vmatmul.mubr.bf16.gmra.mrb[0].mxu0 %v150
    %v1849 = vpop.f32.mrb[0].mxu0
    %v1850 = vadd.f32 %v1777, %v1849
    %v1851 = vpop.f32.mrb[0].mxu0
    %v1852 = vadd.f32 %v1779, %v1851
    %v1853 = vpop.f32.mrb[0].mxu0
    %v1854 = vadd.f32 %v1781, %v1853
    %v1855 = vpop.f32.mrb[0].mxu0
    %v1856 = vadd.f32 %v1783, %v1855
    %1857 = vmatprep.mubr.bf16.mxu0 %v155
    %1858 = vmatmul.mubr.bf16.gmra.mrb[0].mxu0 %v154
    %v1859 = vpop.f32.mrb[0].mxu0
    %v1860 = vadd.f32 %v1787, %v1859
    %v1861 = vpop.f32.mrb[0].mxu0
    %v1862 = vadd.f32 %v1789, %v1861
    %v1863 = vpop.f32.mrb[0].mxu0
    %v1864 = vadd.f32 %v1791, %v1863
    %v1865 = vpop.f32.mrb[0].mxu0
    %v1866 = vadd.f32 %v1793, %v1865
    %1867 = vmatprep.mubr.bf16.mxu0 %v159
    %1868 = vmatmul.mubr.bf16.gmra.mrb[0].mxu0 %v158
    %v1869 = vpop.f32.mrb[0].mxu0
    %v1870 = vadd.f32 %v1797, %v1869
    %v1871 = vpop.f32.mrb[0].mxu0
    %v1872 = vadd.f32 %v1799, %v1871
    %v1873 = vpop.f32.mrb[0].mxu0
    %v1874 = vadd.f32 %v1801, %v1873
    %v1875 = vpop.f32.mrb[0].mxu0
    %v1876 = vadd.f32 %v1803, %v1875
    %1877 = vmatprep.mubr.bf16.mxu0 %v163
    %1878 = vmatmul.mubr.bf16.gmra.mrb[0].mxu0 %v162
    %v1879 = vpop.f32.mrb[0].mxu0
    %v1880 = vadd.f32 %v1807, %v1879
    %v1881 = vpop.f32.mrb[0].mxu0
    %v1882 = vadd.f32 %v1809, %v1881
    %v1883 = vpop.f32.mrb[0].mxu0
    %v1884 = vadd.f32 %v1811, %v1883
    %v1885 = vpop.f32.mrb[0].mxu0
    %v1886 = vadd.f32 %v1813, %v1885
    %1887 = vdwg.mxu0
    %1888 = vmatprep.subr.bf16.mxu0 %v1233
    %1889 = vmatpush1.bf16.msra.mxu0 %v1232
    %1890 = vmatprep.subr.bf16.mxu0 %v1241
    %1891 = vmatpush1.bf16.msra.mxu0 %v1240
    %1892 = vmatprep.subr.bf16.mxu0 %v1249
    %1893 = vmatpush1.bf16.msra.mxu0 %v1248
    %1894 = vmatprep.subr.bf16.mxu0 %v1257
    %1895 = vmatpush1.bf16.msra.mxu0 %v1256
    %1896 = vmatprep.subr.bf16.mxu0 %v1265
    %1897 = vmatpush1.bf16.msra.mxu0 %v1264
    %1898 = vmatprep.subr.bf16.mxu0 %v1273
    %1899 = vmatpush1.bf16.msra.mxu0 %v1272
    %1900 = vmatprep.subr.bf16.mxu0 %v1281
    %1901 = vmatpush1.bf16.msra.mxu0 %v1280
    %1902 = vmatprep.subr.bf16.mxu0 %v1289
    %1903 = vmatpush1.bf16.msra.mxu0 %v1288
    %1904 = vmatprep.subr.bf16.mxu0 %v1297
    %1905 = vmatpush1.bf16.msra.mxu0 %v1296
    %1906 = vmatprep.subr.bf16.mxu0 %v1305
    %1907 = vmatpush1.bf16.msra.mxu0 %v1304
    %1908 = vmatprep.subr.bf16.mxu0 %v1313
    %1909 = vmatpush1.bf16.msra.mxu0 %v1312
    %1910 = vmatprep.subr.bf16.mxu0 %v1321
    %1911 = vmatpush1.bf16.msra.mxu0 %v1320
    %1912 = vmatprep.subr.bf16.mxu0 %v1329
    %1913 = vmatpush1.bf16.msra.mxu0 %v1328
    %1914 = vmatprep.subr.bf16.mxu0 %v1337
    %1915 = vmatpush1.bf16.msra.mxu0 %v1336
    %1916 = vmatprep.subr.bf16.mxu0 %v1345
    %1917 = vmatpush1.bf16.msra.mxu0 %v1344
    %1918 = vmatprep.subr.bf16.mxu0 %v1353
    %1919 = vmatpush1.bf16.msra.mxu0 %v1352
    %1920 = vmatprep.mubr.bf16.mxu0 %v149
    %1921 = vmatmul.mubr.bf16.gmra.mrb[0].mxu0 %v148
    %v1922 = vpop.f32.mrb[0].mxu0
    %v1923 = vadd.f32 %v433, %v1922
    %v1924 = vpop.f32.mrb[0].mxu0
    %v1925 = vadd.f32 %v437, %v1924
    %v1926 = vpop.f32.mrb[0].mxu0
    %v1927 = vadd.f32 %v433, %v1926
    %v1928 = vpop.f32.mrb[0].mxu0
    %v1929 = vadd.f32 %v437, %v1928
    %1930 = vmatprep.mubr.bf16.mxu0 %v153
    %1931 = vmatmul.mubr.bf16.gmra.mrb[0].mxu0 %v152
    %v1932 = vpop.f32.mrb[0].mxu0
    %v1933 = vadd.f32 %v433, %v1932
    %v1934 = vpop.f32.mrb[0].mxu0
    %v1935 = vadd.f32 %v437, %v1934
    %v1936 = vpop.f32.mrb[0].mxu0
    %v1937 = vadd.f32 %v433, %v1936
    %v1938 = vpop.f32.mrb[0].mxu0
    %v1939 = vadd.f32 %v437, %v1938
    %1940 = vmatprep.mubr.bf16.mxu0 %v157
    %1941 = vmatmul.mubr.bf16.gmra.mrb[0].mxu0 %v156
    %v1942 = vpop.f32.mrb[0].mxu0
    %v1943 = vadd.f32 %v433, %v1942
    %v1944 = vpop.f32.mrb[0].mxu0
    %v1945 = vadd.f32 %v437, %v1944
    %v1946 = vpop.f32.mrb[0].mxu0
    %v1947 = vadd.f32 %v433, %v1946
    %v1948 = vpop.f32.mrb[0].mxu0
    %v1949 = vadd.f32 %v437, %v1948
    %1950 = vmatprep.mubr.bf16.mxu0 %v161
    %1951 = vmatmul.mubr.bf16.gmra.mrb[0].mxu0 %v160
    %v1952 = vpop.f32.mrb[0].mxu0
    %v1953 = vadd.f32 %v433, %v1952
    %v1954 = vpop.f32.mrb[0].mxu0
    %v1955 = vadd.f32 %v437, %v1954
    %v1956 = vpop.f32.mrb[0].mxu0
    %v1957 = vadd.f32 %v433, %v1956
    %v1958 = vpop.f32.mrb[0].mxu0
    %v1959 = vadd.f32 %v437, %v1958
    %1960 = vdwg.mxu0
    %1961 = vmatprep.subr.bf16.mxu0 %v1361
    %1962 = vmatpush1.bf16.msra.mxu0 %v1360
    %1963 = vmatprep.subr.bf16.mxu0 %v1369
    %1964 = vmatpush1.bf16.msra.mxu0 %v1368
    %1965 = vmatprep.subr.bf16.mxu0 %v1377
    %1966 = vmatpush1.bf16.msra.mxu0 %v1376
    %1967 = vmatprep.subr.bf16.mxu0 %v1385
    %1968 = vmatpush1.bf16.msra.mxu0 %v1384
    %1969 = vmatprep.subr.bf16.mxu0 %v1393
    %1970 = vmatpush1.bf16.msra.mxu0 %v1392
    %1971 = vmatprep.subr.bf16.mxu0 %v1401
    %1972 = vmatpush1.bf16.msra.mxu0 %v1400
    %1973 = vmatprep.subr.bf16.mxu0 %v1409
    %1974 = vmatpush1.bf16.msra.mxu0 %v1408
    %1975 = vmatprep.subr.bf16.mxu0 %v1417
    %1976 = vmatpush1.bf16.msra.mxu0 %v1416
    %1977 = vmatprep.subr.bf16.mxu0 %v1425
    %1978 = vmatpush1.bf16.msra.mxu0 %v1424
    %1979 = vmatprep.subr.bf16.mxu0 %v1433
    %1980 = vmatpush1.bf16.msra.mxu0 %v1432
    %1981 = vmatprep.subr.bf16.mxu0 %v1441
    %1982 = vmatpush1.bf16.msra.mxu0 %v1440
    %1983 = vmatprep.subr.bf16.mxu0 %v1449
    %1984 = vmatpush1.bf16.msra.mxu0 %v1448
    %1985 = vmatprep.subr.bf16.mxu0 %v1457
    %1986 = vmatpush1.bf16.msra.mxu0 %v1456
    %1987 = vmatprep.subr.bf16.mxu0 %v1465
    %1988 = vmatpush1.bf16.msra.mxu0 %v1464
    %1989 = vmatprep.subr.bf16.mxu0 %v1473
    %1990 = vmatpush1.bf16.msra.mxu0 %v1472
    %1991 = vmatprep.subr.bf16.mxu0 %v1481
    %1992 = vmatpush1.bf16.msra.mxu0 %v1480
    %1993 = vmatprep.mubr.bf16.mxu0 %v151
    %1994 = vmatmul.mubr.bf16.gmra.mrb[0].mxu0 %v150
    %v1995 = vpop.f32.mrb[0].mxu0
    %v1996 = vadd.f32 %v1923, %v1995
    %v1997 = vpop.f32.mrb[0].mxu0
    %v1998 = vadd.f32 %v1925, %v1997
    %v1999 = vpop.f32.mrb[0].mxu0
    %v2000 = vadd.f32 %v1927, %v1999
    %v2001 = vpop.f32.mrb[0].mxu0
    %v2002 = vadd.f32 %v1929, %v2001
    %2003 = vmatprep.mubr.bf16.mxu0 %v155
    %2004 = vmatmul.mubr.bf16.gmra.mrb[0].mxu0 %v154
    %v2005 = vpop.f32.mrb[0].mxu0
    %v2006 = vadd.f32 %v1933, %v2005
    %v2007 = vpop.f32.mrb[0].mxu0
    %v2008 = vadd.f32 %v1935, %v2007
    %v2009 = vpop.f32.mrb[0].mxu0
    %v2010 = vadd.f32 %v1937, %v2009
    %v2011 = vpop.f32.mrb[0].mxu0
    %v2012 = vadd.f32 %v1939, %v2011
    %2013 = vmatprep.mubr.bf16.mxu0 %v159
    %2014 = vmatmul.mubr.bf16.gmra.mrb[0].mxu0 %v158
    %v2015 = vpop.f32.mrb[0].mxu0
    %v2016 = vadd.f32 %v1943, %v2015
    %v2017 = vpop.f32.mrb[0].mxu0
    %v2018 = vadd.f32 %v1945, %v2017
    %v2019 = vpop.f32.mrb[0].mxu0
    %v2020 = vadd.f32 %v1947, %v2019
    %v2021 = vpop.f32.mrb[0].mxu0
    %v2022 = vadd.f32 %v1949, %v2021
    %2023 = vmatprep.mubr.bf16.mxu0 %v163
    %2024 = vmatmul.mubr.bf16.gmra.mrb[0].mxu0 %v162
    %v2025 = vpop.f32.mrb[0].mxu0
    %v2026 = vadd.f32 %v1953, %v2025
    %v2027 = vpop.f32.mrb[0].mxu0
    %v2028 = vadd.f32 %v1955, %v2027
    %v2029 = vpop.f32.mrb[0].mxu0
    %v2030 = vadd.f32 %v1957, %v2029
    %v2031 = vpop.f32.mrb[0].mxu0
    %v2032 = vadd.f32 %v1959, %v2031
    %2033 = vdwg.mxu0
    %2034 = vmatprep.subr.bf16.mxu0 %v1235
    %2035 = vmatpush1.bf16.msra.mxu0 %v1234
    %2036 = vmatprep.subr.bf16.mxu0 %v1243
    %2037 = vmatpush1.bf16.msra.mxu0 %v1242
    %2038 = vmatprep.subr.bf16.mxu0 %v1251
    %2039 = vmatpush1.bf16.msra.mxu0 %v1250
    %2040 = vmatprep.subr.bf16.mxu0 %v1259
    %2041 = vmatpush1.bf16.msra.mxu0 %v1258
    %2042 = vmatprep.subr.bf16.mxu0 %v1267
    %2043 = vmatpush1.bf16.msra.mxu0 %v1266
    %2044 = vmatprep.subr.bf16.mxu0 %v1275
    %2045 = vmatpush1.bf16.msra.mxu0 %v1274
    %2046 = vmatprep.subr.bf16.mxu0 %v1283
    %2047 = vmatpush1.bf16.msra.mxu0 %v1282
    %2048 = vmatprep.subr.bf16.mxu0 %v1291
    %2049 = vmatpush1.bf16.msra.mxu0 %v1290
    %2050 = vmatprep.subr.bf16.mxu0 %v1299
    %2051 = vmatpush1.bf16.msra.mxu0 %v1298
    %2052 = vmatprep.subr.bf16.mxu0 %v1307
    %2053 = vmatpush1.bf16.msra.mxu0 %v1306
    %2054 = vmatprep.subr.bf16.mxu0 %v1315
    %2055 = vmatpush1.bf16.msra.mxu0 %v1314
    %2056 = vmatprep.subr.bf16.mxu0 %v1323
    %2057 = vmatpush1.bf16.msra.mxu0 %v1322
    %2058 = vmatprep.subr.bf16.mxu0 %v1331
    %2059 = vmatpush1.bf16.msra.mxu0 %v1330
    %2060 = vmatprep.subr.bf16.mxu0 %v1339
    %2061 = vmatpush1.bf16.msra.mxu0 %v1338
    %2062 = vmatprep.subr.bf16.mxu0 %v1347
    %2063 = vmatpush1.bf16.msra.mxu0 %v1346
    %2064 = vmatprep.subr.bf16.mxu0 %v1355
    %2065 = vmatpush1.bf16.msra.mxu0 %v1354
    %2066 = vmatprep.mubr.bf16.mxu0 %v149
    %2067 = vmatmul.mubr.bf16.gmra.mrb[0].mxu0 %v148
    %v2068 = vpop.f32.mrb[0].mxu0
    %v2069 = vadd.f32 %v441, %v2068
    %v2070 = vpop.f32.mrb[0].mxu0
    %v2071 = vadd.f32 %v445, %v2070
    %v2072 = vpop.f32.mrb[0].mxu0
    %v2073 = vadd.f32 %v441, %v2072
    %v2074 = vpop.f32.mrb[0].mxu0
    %v2075 = vadd.f32 %v445, %v2074
    %2076 = vmatprep.mubr.bf16.mxu0 %v153
    %2077 = vmatmul.mubr.bf16.gmra.mrb[0].mxu0 %v152
    %v2078 = vpop.f32.mrb[0].mxu0
    %v2079 = vadd.f32 %v441, %v2078
    %v2080 = vpop.f32.mrb[0].mxu0
    %v2081 = vadd.f32 %v445, %v2080
    %v2082 = vpop.f32.mrb[0].mxu0
    %v2083 = vadd.f32 %v441, %v2082
    %v2084 = vpop.f32.mrb[0].mxu0
    %v2085 = vadd.f32 %v445, %v2084
    %2086 = vmatprep.mubr.bf16.mxu0 %v157
    %2087 = vmatmul.mubr.bf16.gmra.mrb[0].mxu0 %v156
    %v2088 = vpop.f32.mrb[0].mxu0
    %v2089 = vadd.f32 %v441, %v2088
    %v2090 = vpop.f32.mrb[0].mxu0
    %v2091 = vadd.f32 %v445, %v2090
    %v2092 = vpop.f32.mrb[0].mxu0
    %v2093 = vadd.f32 %v441, %v2092
    %v2094 = vpop.f32.mrb[0].mxu0
    %v2095 = vadd.f32 %v445, %v2094
    %2096 = vmatprep.mubr.bf16.mxu0 %v161
    %2097 = vmatmul.mubr.bf16.gmra.mrb[0].mxu0 %v160
    %v2098 = vpop.f32.mrb[0].mxu0
    %v2099 = vadd.f32 %v441, %v2098
    %v2100 = vpop.f32.mrb[0].mxu0
    %v2101 = vadd.f32 %v445, %v2100
    %v2102 = vpop.f32.mrb[0].mxu0
    %v2103 = vadd.f32 %v441, %v2102
    %v2104 = vpop.f32.mrb[0].mxu0
    %v2105 = vadd.f32 %v445, %v2104
    %2106 = vdwg.mxu0
    %2107 = vmatprep.subr.bf16.mxu0 %v1363
    %2108 = vmatpush1.bf16.msra.mxu0 %v1362
    %2109 = vmatprep.subr.bf16.mxu0 %v1371
    %2110 = vmatpush1.bf16.msra.mxu0 %v1370
    %2111 = vmatprep.subr.bf16.mxu0 %v1379
    %2112 = vmatpush1.bf16.msra.mxu0 %v1378
    %2113 = vmatprep.subr.bf16.mxu0 %v1387
    %2114 = vmatpush1.bf16.msra.mxu0 %v1386
    %2115 = vmatprep.subr.bf16.mxu0 %v1395
    %2116 = vmatpush1.bf16.msra.mxu0 %v1394
    %2117 = vmatprep.subr.bf16.mxu0 %v1403
    %2118 = vmatpush1.bf16.msra.mxu0 %v1402
    %2119 = vmatprep.subr.bf16.mxu0 %v1411
    %2120 = vmatpush1.bf16.msra.mxu0 %v1410
    %2121 = vmatprep.subr.bf16.mxu0 %v1419
    %2122 = vmatpush1.bf16.msra.mxu0 %v1418
    %2123 = vmatprep.subr.bf16.mxu0 %v1427
    %2124 = vmatpush1.bf16.msra.mxu0 %v1426
    %2125 = vmatprep.subr.bf16.mxu0 %v1435
    %2126 = vmatpush1.bf16.msra.mxu0 %v1434
    %2127 = vmatprep.subr.bf16.mxu0 %v1443
    %2128 = vmatpush1.bf16.msra.mxu0 %v1442
    %2129 = vmatprep.subr.bf16.mxu0 %v1451
    %2130 = vmatpush1.bf16.msra.mxu0 %v1450
    %2131 = vmatprep.subr.bf16.mxu0 %v1459
    %2132 = vmatpush1.bf16.msra.mxu0 %v1458
    %2133 = vmatprep.subr.bf16.mxu0 %v1467
    %2134 = vmatpush1.bf16.msra.mxu0 %v1466
    %2135 = vmatprep.subr.bf16.mxu0 %v1475
    %2136 = vmatpush1.bf16.msra.mxu0 %v1474
    %2137 = vmatprep.subr.bf16.mxu0 %v1483
    %2138 = vmatpush1.bf16.msra.mxu0 %v1482
    %2139 = vmatprep.mubr.bf16.mxu0 %v151
    %2140 = vmatmul.mubr.bf16.gmra.mrb[0].mxu0 %v150
    %v2141 = vpop.f32.mrb[0].mxu0
    %v2142 = vadd.f32 %v2069, %v2141
    %v2143 = vpop.f32.mrb[0].mxu0
    %v2144 = vadd.f32 %v2071, %v2143
    %v2145 = vpop.f32.mrb[0].mxu0
    %v2146 = vadd.f32 %v2073, %v2145
    %v2147 = vpop.f32.mrb[0].mxu0
    %v2148 = vadd.f32 %v2075, %v2147
    %2149 = vmatprep.mubr.bf16.mxu0 %v155
    %2150 = vmatmul.mubr.bf16.gmra.mrb[0].mxu0 %v154
    %v2151 = vpop.f32.mrb[0].mxu0
    %v2152 = vadd.f32 %v2079, %v2151
    %v2153 = vpop.f32.mrb[0].mxu0
    %v2154 = vadd.f32 %v2081, %v2153
    %v2155 = vpop.f32.mrb[0].mxu0
    %v2156 = vadd.f32 %v2083, %v2155
    %v2157 = vpop.f32.mrb[0].mxu0
    %v2158 = vadd.f32 %v2085, %v2157
    %2159 = vmatprep.mubr.bf16.mxu0 %v159
    %2160 = vmatmul.mubr.bf16.gmra.mrb[0].mxu0 %v158
    %v2161 = vpop.f32.mrb[0].mxu0
    %v2162 = vadd.f32 %v2089, %v2161
    %v2163 = vpop.f32.mrb[0].mxu0
    %v2164 = vadd.f32 %v2091, %v2163
    %v2165 = vpop.f32.mrb[0].mxu0
    %v2166 = vadd.f32 %v2093, %v2165
    %v2167 = vpop.f32.mrb[0].mxu0
    %v2168 = vadd.f32 %v2095, %v2167
    %2169 = vmatprep.mubr.bf16.mxu0 %v163
    %2170 = vmatmul.mubr.bf16.gmra.mrb[0].mxu0 %v162
    %v2171 = vpop.f32.mrb[0].mxu0
    %v2172 = vadd.f32 %v2099, %v2171
    %v2173 = vpop.f32.mrb[0].mxu0
    %v2174 = vadd.f32 %v2101, %v2173
    %v2175 = vpop.f32.mrb[0].mxu0
    %v2176 = vadd.f32 %v2103, %v2175
    %v2177 = vpop.f32.mrb[0].mxu0
    %v2178 = vadd.f32 %v2105, %v2177
    %2179 = vdwg.mxu0
    %2180 = vmatprep.subr.bf16.mxu0 %v1237
    %2181 = vmatpush1.bf16.msra.mxu0 %v1236
    %2182 = vmatprep.subr.bf16.mxu0 %v1245
    %2183 = vmatpush1.bf16.msra.mxu0 %v1244
    %2184 = vmatprep.subr.bf16.mxu0 %v1253
    %2185 = vmatpush1.bf16.msra.mxu0 %v1252
    %2186 = vmatprep.subr.bf16.mxu0 %v1261
    %2187 = vmatpush1.bf16.msra.mxu0 %v1260
    %2188 = vmatprep.subr.bf16.mxu0 %v1269
    %2189 = vmatpush1.bf16.msra.mxu0 %v1268
    %2190 = vmatprep.subr.bf16.mxu0 %v1277
    %2191 = vmatpush1.bf16.msra.mxu0 %v1276
    %2192 = vmatprep.subr.bf16.mxu0 %v1285
    %2193 = vmatpush1.bf16.msra.mxu0 %v1284
    %2194 = vmatprep.subr.bf16.mxu0 %v1293
    %2195 = vmatpush1.bf16.msra.mxu0 %v1292
    %2196 = vmatprep.subr.bf16.mxu0 %v1301
    %2197 = vmatpush1.bf16.msra.mxu0 %v1300
    %2198 = vmatprep.subr.bf16.mxu0 %v1309
    %2199 = vmatpush1.bf16.msra.mxu0 %v1308
    %2200 = vmatprep.subr.bf16.mxu0 %v1317
    %2201 = vmatpush1.bf16.msra.mxu0 %v1316
    %2202 = vmatprep.subr.bf16.mxu0 %v1325
    %2203 = vmatpush1.bf16.msra.mxu0 %v1324
    %2204 = vmatprep.subr.bf16.mxu0 %v1333
    %2205 = vmatpush1.bf16.msra.mxu0 %v1332
    %2206 = vmatprep.subr.bf16.mxu0 %v1341
    %2207 = vmatpush1.bf16.msra.mxu0 %v1340
    %2208 = vmatprep.subr.bf16.mxu0 %v1349
    %2209 = vmatpush1.bf16.msra.mxu0 %v1348
    %2210 = vmatprep.subr.bf16.mxu0 %v1357
    %2211 = vmatpush1.bf16.msra.mxu0 %v1356
    %2212 = vmatprep.mubr.bf16.mxu0 %v149
    %2213 = vmatmul.mubr.bf16.gmra.mrb[0].mxu0 %v148
    %v2214 = vpop.f32.mrb[0].mxu0
    %v2215 = vadd.f32 %v449, %v2214
    %v2216 = vpop.f32.mrb[0].mxu0
    %v2217 = vadd.f32 %v453, %v2216
    %v2218 = vpop.f32.mrb[0].mxu0
    %v2219 = vadd.f32 %v449, %v2218
    %v2220 = vpop.f32.mrb[0].mxu0
    %v2221 = vadd.f32 %v453, %v2220
    %2222 = vmatprep.mubr.bf16.mxu0 %v153
    %2223 = vmatmul.mubr.bf16.gmra.mrb[0].mxu0 %v152
    %v2224 = vpop.f32.mrb[0].mxu0
    %v2225 = vadd.f32 %v449, %v2224
    %v2226 = vpop.f32.mrb[0].mxu0
    %v2227 = vadd.f32 %v453, %v2226
    %v2228 = vpop.f32.mrb[0].mxu0
    %v2229 = vadd.f32 %v449, %v2228
    %v2230 = vpop.f32.mrb[0].mxu0
    %v2231 = vadd.f32 %v453, %v2230
    %2232 = vmatprep.mubr.bf16.mxu0 %v157
    %2233 = vmatmul.mubr.bf16.gmra.mrb[0].mxu0 %v156
    %v2234 = vpop.f32.mrb[0].mxu0
    %v2235 = vadd.f32 %v449, %v2234
    %v2236 = vpop.f32.mrb[0].mxu0
    %v2237 = vadd.f32 %v453, %v2236
    %v2238 = vpop.f32.mrb[0].mxu0
    %v2239 = vadd.f32 %v449, %v2238
    %v2240 = vpop.f32.mrb[0].mxu0
    %v2241 = vadd.f32 %v453, %v2240
    %2242 = vmatprep.mubr.bf16.mxu0 %v161
    %2243 = vmatmul.mubr.bf16.gmra.mrb[0].mxu0 %v160
    %v2244 = vpop.f32.mrb[0].mxu0
    %v2245 = vadd.f32 %v449, %v2244
    %v2246 = vpop.f32.mrb[0].mxu0
    %v2247 = vadd.f32 %v453, %v2246
    %v2248 = vpop.f32.mrb[0].mxu0
    %v2249 = vadd.f32 %v449, %v2248
    %v2250 = vpop.f32.mrb[0].mxu0
    %v2251 = vadd.f32 %v453, %v2250
    %2252 = vdwg.mxu0
    %2253 = vmatprep.subr.bf16.mxu0 %v1365
    %2254 = vmatpush1.bf16.msra.mxu0 %v1364
    %2255 = vmatprep.subr.bf16.mxu0 %v1373
    %2256 = vmatpush1.bf16.msra.mxu0 %v1372
    %2257 = vmatprep.subr.bf16.mxu0 %v1381
    %2258 = vmatpush1.bf16.msra.mxu0 %v1380
    %2259 = vmatprep.subr.bf16.mxu0 %v1389
    %2260 = vmatpush1.bf16.msra.mxu0 %v1388
    %2261 = vmatprep.subr.bf16.mxu0 %v1397
    %2262 = vmatpush1.bf16.msra.mxu0 %v1396
    %2263 = vmatprep.subr.bf16.mxu0 %v1405
    %2264 = vmatpush1.bf16.msra.mxu0 %v1404
    %2265 = vmatprep.subr.bf16.mxu0 %v1413
    %2266 = vmatpush1.bf16.msra.mxu0 %v1412
    %2267 = vmatprep.subr.bf16.mxu0 %v1421
    %2268 = vmatpush1.bf16.msra.mxu0 %v1420
    %2269 = vmatprep.subr.bf16.mxu0 %v1429
    %2270 = vmatpush1.bf16.msra.mxu0 %v1428
    %2271 = vmatprep.subr.bf16.mxu0 %v1437
    %2272 = vmatpush1.bf16.msra.mxu0 %v1436
    %2273 = vmatprep.subr.bf16.mxu0 %v1445
    %2274 = vmatpush1.bf16.msra.mxu0 %v1444
    %2275 = vmatprep.subr.bf16.mxu0 %v1453
    %2276 = vmatpush1.bf16.msra.mxu0 %v1452
    %2277 = vmatprep.subr.bf16.mxu0 %v1461
    %2278 = vmatpush1.bf16.msra.mxu0 %v1460
    %2279 = vmatprep.subr.bf16.mxu0 %v1469
    %2280 = vmatpush1.bf16.msra.mxu0 %v1468
    %2281 = vmatprep.subr.bf16.mxu0 %v1477
    %2282 = vmatpush1.bf16.msra.mxu0 %v1476
    %2283 = vmatprep.subr.bf16.mxu0 %v1485
    %2284 = vmatpush1.bf16.msra.mxu0 %v1484
    %2285 = vmatprep.mubr.bf16.mxu0 %v151
    %2286 = vmatmul.mubr.bf16.gmra.mrb[0].mxu0 %v150
    %v2287 = vpop.f32.mrb[0].mxu0
    %v2288 = vadd.f32 %v2215, %v2287
    %v2289 = vpop.f32.mrb[0].mxu0
    %v2290 = vadd.f32 %v2217, %v2289
    %v2291 = vpop.f32.mrb[0].mxu0
    %v2292 = vadd.f32 %v2219, %v2291
    %v2293 = vpop.f32.mrb[0].mxu0
    %v2294 = vadd.f32 %v2221, %v2293
    %2295 = vmatprep.mubr.bf16.mxu0 %v155
    %2296 = vmatmul.mubr.bf16.gmra.mrb[0].mxu0 %v154
    %v2297 = vpop.f32.mrb[0].mxu0
    %v2298 = vadd.f32 %v2225, %v2297
    %v2299 = vpop.f32.mrb[0].mxu0
    %v2300 = vadd.f32 %v2227, %v2299
    %v2301 = vpop.f32.mrb[0].mxu0
    %v2302 = vadd.f32 %v2229, %v2301
    %v2303 = vpop.f32.mrb[0].mxu0
    %v2304 = vadd.f32 %v2231, %v2303
    %2305 = vmatprep.mubr.bf16.mxu0 %v159
    %2306 = vmatmul.mubr.bf16.gmra.mrb[0].mxu0 %v158
    %v2307 = vpop.f32.mrb[0].mxu0
    %v2308 = vadd.f32 %v2235, %v2307
    %v2309 = vpop.f32.mrb[0].mxu0
    %v2310 = vadd.f32 %v2237, %v2309
    %v2311 = vpop.f32.mrb[0].mxu0
    %v2312 = vadd.f32 %v2239, %v2311
    %v2313 = vpop.f32.mrb[0].mxu0
    %v2314 = vadd.f32 %v2241, %v2313
    %2315 = vmatprep.mubr.bf16.mxu0 %v163
    %2316 = vmatmul.mubr.bf16.gmra.mrb[0].mxu0 %v162
    %v2317 = vpop.f32.mrb[0].mxu0
    %v2318 = vadd.f32 %v2245, %v2317
    %v2319 = vpop.f32.mrb[0].mxu0
    %v2320 = vadd.f32 %v2247, %v2319
    %v2321 = vpop.f32.mrb[0].mxu0
    %v2322 = vadd.f32 %v2249, %v2321
    %v2323 = vpop.f32.mrb[0].mxu0
    %v2324 = vadd.f32 %v2251, %v2323
    %2325 = vdwg.mxu0
    %v2326 = vtanh.pop %v1850
    %v2327 = vtanh.pop %v1852
    %v2328 = vtanh.pop %v1996
    %v2329 = vtanh.pop %v1998
    %v2330 = vtanh.pop %v2142
    %v2331 = vtanh.pop %v2144
    %v2332 = vtanh.pop %v2288
    %v2333 = vtanh.pop %v2290
    %v2334 = vtanh.pop %v1854
    %v2335 = vtanh.pop %v1856
    %v2336 = vtanh.pop %v2000
    %v2337 = vtanh.pop %v2002
    %v2338 = vtanh.pop %v2146
    %v2339 = vtanh.pop %v2148
    %v2340 = vtanh.pop %v2292
    %v2341 = vtanh.pop %v2294
    %v2342 = vtanh.pop %v1860
    %v2343 = vtanh.pop %v1862
    %v2344 = vtanh.pop %v2006
    %v2345 = vtanh.pop %v2008
    %v2346 = vtanh.pop %v2152
    %v2347 = vtanh.pop %v2154
    %v2348 = vtanh.pop %v2298
    %v2349 = vtanh.pop %v2300
    %v2350 = vtanh.pop %v1864
    %v2351 = vtanh.pop %v1866
    %v2352 = vtanh.pop %v2010
    %v2353 = vtanh.pop %v2012
    %v2354 = vtanh.pop %v2156
    %v2355 = vtanh.pop %v2158
    %v2356 = vtanh.pop %v2302
    %v2357 = vtanh.pop %v2304
    %v2358 = vtanh.pop %v1870
    %v2359 = vtanh.pop %v1872
    %v2360 = vtanh.pop %v2016
    %v2361 = vtanh.pop %v2018
    %v2362 = vtanh.pop %v2162
    %v2363 = vtanh.pop %v2164
    %v2364 = vtanh.pop %v2308
    %v2365 = vtanh.pop %v2310
    %v2366 = vtanh.pop %v1874
    %v2367 = vtanh.pop %v1876
    %v2368 = vtanh.pop %v2020
    %v2369 = vtanh.pop %v2022
    %v2370 = vtanh.pop %v2166
    %v2371 = vtanh.pop %v2168
    %v2372 = vtanh.pop %v2312
    %v2373 = vtanh.pop %v2314
    %v2374 = vtanh.pop %v1880
    %v2375 = vtanh.pop %v1882
    %v2376 = vtanh.pop %v2026
    %v2377 = vtanh.pop %v2028
    %v2378 = vtanh.pop %v2172
    %v2379 = vtanh.pop %v2174
    %v2380 = vtanh.pop %v2318
    %v2381 = vtanh.pop %v2320
    %v2382 = vtanh.pop %v1884
    %v2383 = vtanh.pop %v1886
    %v2384 = vtanh.pop %v2030
    %v2385 = vtanh.pop %v2032
    %v2386 = vtanh.pop %v2176
    %v2387 = vtanh.pop %v2178
    %v2388 = vtanh.pop %v2322
    %v2389 = vtanh.pop %v2324
    %v2390 = vpack.c.bf16 %v2334, %v2326
    %v2391 = vpack.c.bf16 %v2335, %v2327
    %v2392 = vpack.c.bf16 %v2336, %v2328
    %v2393 = vpack.c.bf16 %v2337, %v2329
    %v2394 = vpack.c.bf16 %v2338, %v2330
    %v2395 = vpack.c.bf16 %v2339, %v2331
    %v2396 = vpack.c.bf16 %v2340, %v2332
    %v2397 = vpack.c.bf16 %v2341, %v2333
    %v2398 = vpack.c.bf16 %v2350, %v2342
    %v2399 = vpack.c.bf16 %v2351, %v2343
    %v2400 = vpack.c.bf16 %v2352, %v2344
    %v2401 = vpack.c.bf16 %v2353, %v2345
    %v2402 = vpack.c.bf16 %v2354, %v2346
    %v2403 = vpack.c.bf16 %v2355, %v2347
    %v2404 = vpack.c.bf16 %v2356, %v2348
    %v2405 = vpack.c.bf16 %v2357, %v2349
    %v2406 = vpack.c.bf16 %v2366, %v2358
    %v2407 = vpack.c.bf16 %v2367, %v2359
    %v2408 = vpack.c.bf16 %v2368, %v2360
    %v2409 = vpack.c.bf16 %v2369, %v2361
    %v2410 = vpack.c.bf16 %v2370, %v2362
    %v2411 = vpack.c.bf16 %v2371, %v2363
    %v2412 = vpack.c.bf16 %v2372, %v2364
    %v2413 = vpack.c.bf16 %v2373, %v2365
    %v2414 = vpack.c.bf16 %v2382, %v2374
    %v2415 = vpack.c.bf16 %v2383, %v2375
    %v2416 = vpack.c.bf16 %v2384, %v2376
    %v2417 = vpack.c.bf16 %v2385, %v2377
    %v2418 = vpack.c.bf16 %v2386, %v2378
    %v2419 = vpack.c.bf16 %v2387, %v2379
    %v2420 = vpack.c.bf16 %v2388, %v2380
    %v2421 = vpack.c.bf16 %v2389, %v2381
    %v2422 = vld [vmem:[#allocation8] sm:$0xff]
    %v2423 = vld [vmem:[#allocation8 + $0x8] sm:$0xff]
    %v2424 = vld [vmem:[#allocation8 + $0x10] sm:$0xff]
    %v2425 = vld [vmem:[#allocation8 + $0x18] sm:$0xff]
    %v2426 = vld [vmem:[#allocation8 + $0x20] sm:$0xff]
    %v2427 = vld [vmem:[#allocation8 + $0x28] sm:$0xff]
    %v2428 = vld [vmem:[#allocation8 + $0x30] sm:$0xff]
    %v2429 = vld [vmem:[#allocation8 + $0x38] sm:$0xff]
    %v2430 = vld [vmem:[#allocation8 + $0x40] sm:$0xff]
    %v2431 = vld [vmem:[#allocation8 + $0x48] sm:$0xff]
    %v2432 = vld [vmem:[#allocation8 + $0x50] sm:$0xff]
    %v2433 = vld [vmem:[#allocation8 + $0x58] sm:$0xff]
    %v2434 = vld [vmem:[#allocation8 + $0x60] sm:$0xff]
    %v2435 = vld [vmem:[#allocation8 + $0x68] sm:$0xff]
    %v2436 = vld [vmem:[#allocation8 + $0x70] sm:$0xff]
    %v2437 = vld [vmem:[#allocation8 + $0x78] sm:$0xff]
    %v2438 = vld [vmem:[#allocation8 + $0x80] sm:$0xff]
    %v2439 = vld [vmem:[#allocation8 + $0x88] sm:$0xff]
    %v2440 = vld [vmem:[#allocation8 + $0x90] sm:$0xff]
    %v2441 = vld [vmem:[#allocation8 + $0x98] sm:$0xff]
    %v2442 = vld [vmem:[#allocation8 + $0xa0] sm:$0xff]
    %v2443 = vld [vmem:[#allocation8 + $0xa8] sm:$0xff]
    %v2444 = vld [vmem:[#allocation8 + $0xb0] sm:$0xff]
    %v2445 = vld [vmem:[#allocation8 + $0xb8] sm:$0xff]
    %v2446 = vld [vmem:[#allocation8 + $0xc0] sm:$0xff]
    %v2447 = vld [vmem:[#allocation8 + $0xc8] sm:$0xff]
    %v2448 = vld [vmem:[#allocation8 + $0xd0] sm:$0xff]
    %v2449 = vld [vmem:[#allocation8 + $0xd8] sm:$0xff]
    %v2450 = vld [vmem:[#allocation8 + $0xe0] sm:$0xff]
    %v2451 = vld [vmem:[#allocation8 + $0xe8] sm:$0xff]
    %v2452 = vld [vmem:[#allocation8 + $0xf0] sm:$0xff]
    %v2453 = vld [vmem:[#allocation8 + $0xf8] sm:$0xff]
    %v2454 = vld [vmem:[#allocation8 + $0x100] sm:$0xff]
    %v2455 = vld [vmem:[#allocation8 + $0x108] sm:$0xff]
    %v2456 = vld [vmem:[#allocation8 + $0x110] sm:$0xff]
    %v2457 = vld [vmem:[#allocation8 + $0x118] sm:$0xff]
    %v2458 = vld [vmem:[#allocation8 + $0x120] sm:$0xff]
    %v2459 = vld [vmem:[#allocation8 + $0x128] sm:$0xff]
    %v2460 = vld [vmem:[#allocation8 + $0x130] sm:$0xff]
    %v2461 = vld [vmem:[#allocation8 + $0x138] sm:$0xff]
    %v2462 = vld [vmem:[#allocation8 + $0x140] sm:$0xff]
    %v2463 = vld [vmem:[#allocation8 + $0x148] sm:$0xff]
    %v2464 = vld [vmem:[#allocation8 + $0x150] sm:$0xff]
    %v2465 = vld [vmem:[#allocation8 + $0x158] sm:$0xff]
    %v2466 = vld [vmem:[#allocation8 + $0x160] sm:$0xff]
    %v2467 = vld [vmem:[#allocation8 + $0x168] sm:$0xff]
    %v2468 = vld [vmem:[#allocation8 + $0x170] sm:$0xff]
    %v2469 = vld [vmem:[#allocation8 + $0x178] sm:$0xff]
    %v2470 = vld [vmem:[#allocation8 + $0x180] sm:$0xff]
    %v2471 = vld [vmem:[#allocation8 + $0x188] sm:$0xff]
    %v2472 = vld [vmem:[#allocation8 + $0x190] sm:$0xff]
    %v2473 = vld [vmem:[#allocation8 + $0x198] sm:$0xff]
    %v2474 = vld [vmem:[#allocation8 + $0x1a0] sm:$0xff]
    %v2475 = vld [vmem:[#allocation8 + $0x1a8] sm:$0xff]
    %v2476 = vld [vmem:[#allocation8 + $0x1b0] sm:$0xff]
    %v2477 = vld [vmem:[#allocation8 + $0x1b8] sm:$0xff]
    %v2478 = vld [vmem:[#allocation8 + $0x1c0] sm:$0xff]
    %v2479 = vld [vmem:[#allocation8 + $0x1c8] sm:$0xff]
    %v2480 = vld [vmem:[#allocation8 + $0x1d0] sm:$0xff]
    %v2481 = vld [vmem:[#allocation8 + $0x1d8] sm:$0xff]
    %v2482 = vld [vmem:[#allocation8 + $0x1e0] sm:$0xff]
    %v2483 = vld [vmem:[#allocation8 + $0x1e8] sm:$0xff]
    %v2484 = vld [vmem:[#allocation8 + $0x1f0] sm:$0xff]
    %v2485 = vld [vmem:[#allocation8 + $0x1f8] sm:$0xff]
    %v2486 = vld [vmem:[#allocation8 + $0x200] sm:$0xff]
    %v2487 = vld [vmem:[#allocation8 + $0x208] sm:$0xff]
    %v2488 = vld [vmem:[#allocation8 + $0x210] sm:$0xff]
    %v2489 = vld [vmem:[#allocation8 + $0x218] sm:$0xff]
    %v2490 = vld [vmem:[#allocation8 + $0x220] sm:$0xff]
    %v2491 = vld [vmem:[#allocation8 + $0x228] sm:$0xff]
    %v2492 = vld [vmem:[#allocation8 + $0x230] sm:$0xff]
    %v2493 = vld [vmem:[#allocation8 + $0x238] sm:$0xff]
    %v2494 = vld [vmem:[#allocation8 + $0x240] sm:$0xff]
    %v2495 = vld [vmem:[#allocation8 + $0x248] sm:$0xff]
    %v2496 = vld [vmem:[#allocation8 + $0x250] sm:$0xff]
    %v2497 = vld [vmem:[#allocation8 + $0x258] sm:$0xff]
    %v2498 = vld [vmem:[#allocation8 + $0x260] sm:$0xff]
    %v2499 = vld [vmem:[#allocation8 + $0x268] sm:$0xff]
    %v2500 = vld [vmem:[#allocation8 + $0x270] sm:$0xff]
    %v2501 = vld [vmem:[#allocation8 + $0x278] sm:$0xff]
    %v2502 = vld [vmem:[#allocation8 + $0x280] sm:$0xff]
    %v2503 = vld [vmem:[#allocation8 + $0x288] sm:$0xff]
    %v2504 = vld [vmem:[#allocation8 + $0x290] sm:$0xff]
    %v2505 = vld [vmem:[#allocation8 + $0x298] sm:$0xff]
    %v2506 = vld [vmem:[#allocation8 + $0x2a0] sm:$0xff]
    %v2507 = vld [vmem:[#allocation8 + $0x2a8] sm:$0xff]
    %v2508 = vld [vmem:[#allocation8 + $0x2b0] sm:$0xff]
    %v2509 = vld [vmem:[#allocation8 + $0x2b8] sm:$0xff]
    %v2510 = vld [vmem:[#allocation8 + $0x2c0] sm:$0xff]
    %v2511 = vld [vmem:[#allocation8 + $0x2c8] sm:$0xff]
    %v2512 = vld [vmem:[#allocation8 + $0x2d0] sm:$0xff]
    %v2513 = vld [vmem:[#allocation8 + $0x2d8] sm:$0xff]
    %v2514 = vld [vmem:[#allocation8 + $0x2e0] sm:$0xff]
    %v2515 = vld [vmem:[#allocation8 + $0x2e8] sm:$0xff]
    %v2516 = vld [vmem:[#allocation8 + $0x2f0] sm:$0xff]
    %v2517 = vld [vmem:[#allocation8 + $0x2f8] sm:$0xff]
    %v2518 = vld [vmem:[#allocation8 + $0x300] sm:$0xff]
    %v2519 = vld [vmem:[#allocation8 + $0x308] sm:$0xff]
    %v2520 = vld [vmem:[#allocation8 + $0x310] sm:$0xff]
    %v2521 = vld [vmem:[#allocation8 + $0x318] sm:$0xff]
    %v2522 = vld [vmem:[#allocation8 + $0x320] sm:$0xff]
    %v2523 = vld [vmem:[#allocation8 + $0x328] sm:$0xff]
    %v2524 = vld [vmem:[#allocation8 + $0x330] sm:$0xff]
    %v2525 = vld [vmem:[#allocation8 + $0x338] sm:$0xff]
    %v2526 = vld [vmem:[#allocation8 + $0x340] sm:$0xff]
    %v2527 = vld [vmem:[#allocation8 + $0x348] sm:$0xff]
    %v2528 = vld [vmem:[#allocation8 + $0x350] sm:$0xff]
    %v2529 = vld [vmem:[#allocation8 + $0x358] sm:$0xff]
    %v2530 = vld [vmem:[#allocation8 + $0x360] sm:$0xff]
    %v2531 = vld [vmem:[#allocation8 + $0x368] sm:$0xff]
    %v2532 = vld [vmem:[#allocation8 + $0x370] sm:$0xff]
    %v2533 = vld [vmem:[#allocation8 + $0x378] sm:$0xff]
    %v2534 = vld [vmem:[#allocation8 + $0x380] sm:$0xff]
    %v2535 = vld [vmem:[#allocation8 + $0x388] sm:$0xff]
    %v2536 = vld [vmem:[#allocation8 + $0x390] sm:$0xff]
    %v2537 = vld [vmem:[#allocation8 + $0x398] sm:$0xff]
    %v2538 = vld [vmem:[#allocation8 + $0x3a0] sm:$0xff]
    %v2539 = vld [vmem:[#allocation8 + $0x3a8] sm:$0xff]
    %v2540 = vld [vmem:[#allocation8 + $0x3b0] sm:$0xff]
    %v2541 = vld [vmem:[#allocation8 + $0x3b8] sm:$0xff]
    %v2542 = vld [vmem:[#allocation8 + $0x3c0] sm:$0xff]
    %v2543 = vld [vmem:[#allocation8 + $0x3c8] sm:$0xff]
    %v2544 = vld [vmem:[#allocation8 + $0x3d0] sm:$0xff]
    %v2545 = vld [vmem:[#allocation8 + $0x3d8] sm:$0xff]
    %v2546 = vld [vmem:[#allocation8 + $0x3e0] sm:$0xff]
    %v2547 = vld [vmem:[#allocation8 + $0x3e8] sm:$0xff]
    %v2548 = vld [vmem:[#allocation8 + $0x3f0] sm:$0xff]
    %v2549 = vld [vmem:[#allocation8 + $0x3f8] sm:$0xff]
    %v2550 = vld [vmem:[#allocation8 + $0x400] sm:$0xff]
    %v2551 = vld [vmem:[#allocation8 + $0x408] sm:$0xff]
    %v2552 = vld [vmem:[#allocation8 + $0x410] sm:$0xff]
    %v2553 = vld [vmem:[#allocation8 + $0x418] sm:$0xff]
    %v2554 = vld [vmem:[#allocation8 + $0x420] sm:$0xff]
    %v2555 = vld [vmem:[#allocation8 + $0x428] sm:$0xff]
    %v2556 = vld [vmem:[#allocation8 + $0x430] sm:$0xff]
    %v2557 = vld [vmem:[#allocation8 + $0x438] sm:$0xff]
    %v2558 = vld [vmem:[#allocation8 + $0x440] sm:$0xff]
    %v2559 = vld [vmem:[#allocation8 + $0x448] sm:$0xff]
    %v2560 = vld [vmem:[#allocation8 + $0x450] sm:$0xff]
    %v2561 = vld [vmem:[#allocation8 + $0x458] sm:$0xff]
    %v2562 = vld [vmem:[#allocation8 + $0x460] sm:$0xff]
    %v2563 = vld [vmem:[#allocation8 + $0x468] sm:$0xff]
    %v2564 = vld [vmem:[#allocation8 + $0x470] sm:$0xff]
    %v2565 = vld [vmem:[#allocation8 + $0x478] sm:$0xff]
    %v2566 = vld [vmem:[#allocation8 + $0x480] sm:$0xff]
    %v2567 = vld [vmem:[#allocation8 + $0x488] sm:$0xff]
    %v2568 = vld [vmem:[#allocation8 + $0x490] sm:$0xff]
    %v2569 = vld [vmem:[#allocation8 + $0x498] sm:$0xff]
    %v2570 = vld [vmem:[#allocation8 + $0x4a0] sm:$0xff]
    %v2571 = vld [vmem:[#allocation8 + $0x4a8] sm:$0xff]
    %v2572 = vld [vmem:[#allocation8 + $0x4b0] sm:$0xff]
    %v2573 = vld [vmem:[#allocation8 + $0x4b8] sm:$0xff]
    %v2574 = vld [vmem:[#allocation8 + $0x4c0] sm:$0xff]
    %v2575 = vld [vmem:[#allocation8 + $0x4c8] sm:$0xff]
    %v2576 = vld [vmem:[#allocation8 + $0x4d0] sm:$0xff]
    %v2577 = vld [vmem:[#allocation8 + $0x4d8] sm:$0xff]
    %v2578 = vld [vmem:[#allocation8 + $0x4e0] sm:$0xff]
    %v2579 = vld [vmem:[#allocation8 + $0x4e8] sm:$0xff]
    %v2580 = vld [vmem:[#allocation8 + $0x4f0] sm:$0xff]
    %v2581 = vld [vmem:[#allocation8 + $0x4f8] sm:$0xff]
    %v2582 = vld [vmem:[#allocation8 + $0x500] sm:$0xff]
    %v2583 = vld [vmem:[#allocation8 + $0x508] sm:$0xff]
    %v2584 = vld [vmem:[#allocation8 + $0x510] sm:$0xff]
    %v2585 = vld [vmem:[#allocation8 + $0x518] sm:$0xff]
    %v2586 = vld [vmem:[#allocation8 + $0x520] sm:$0xff]
    %v2587 = vld [vmem:[#allocation8 + $0x528] sm:$0xff]
    %v2588 = vld [vmem:[#allocation8 + $0x530] sm:$0xff]
    %v2589 = vld [vmem:[#allocation8 + $0x538] sm:$0xff]
    %v2590 = vld [vmem:[#allocation8 + $0x540] sm:$0xff]
    %v2591 = vld [vmem:[#allocation8 + $0x548] sm:$0xff]
    %v2592 = vld [vmem:[#allocation8 + $0x550] sm:$0xff]
    %v2593 = vld [vmem:[#allocation8 + $0x558] sm:$0xff]
    %v2594 = vld [vmem:[#allocation8 + $0x560] sm:$0xff]
    %v2595 = vld [vmem:[#allocation8 + $0x568] sm:$0xff]
    %v2596 = vld [vmem:[#allocation8 + $0x570] sm:$0xff]
    %v2597 = vld [vmem:[#allocation8 + $0x578] sm:$0xff]
    %v2598 = vld [vmem:[#allocation8 + $0x580] sm:$0xff]
    %v2599 = vld [vmem:[#allocation8 + $0x588] sm:$0xff]
    %v2600 = vld [vmem:[#allocation8 + $0x590] sm:$0xff]
    %v2601 = vld [vmem:[#allocation8 + $0x598] sm:$0xff]
    %v2602 = vld [vmem:[#allocation8 + $0x5a0] sm:$0xff]
    %v2603 = vld [vmem:[#allocation8 + $0x5a8] sm:$0xff]
    %v2604 = vld [vmem:[#allocation8 + $0x5b0] sm:$0xff]
    %v2605 = vld [vmem:[#allocation8 + $0x5b8] sm:$0xff]
    %v2606 = vld [vmem:[#allocation8 + $0x5c0] sm:$0xff]
    %v2607 = vld [vmem:[#allocation8 + $0x5c8] sm:$0xff]
    %v2608 = vld [vmem:[#allocation8 + $0x5d0] sm:$0xff]
    %v2609 = vld [vmem:[#allocation8 + $0x5d8] sm:$0xff]
    %v2610 = vld [vmem:[#allocation8 + $0x5e0] sm:$0xff]
    %v2611 = vld [vmem:[#allocation8 + $0x5e8] sm:$0xff]
    %v2612 = vld [vmem:[#allocation8 + $0x5f0] sm:$0xff]
    %v2613 = vld [vmem:[#allocation8 + $0x5f8] sm:$0xff]
    %v2614 = vld [vmem:[#allocation8 + $0x600] sm:$0xff]
    %v2615 = vld [vmem:[#allocation8 + $0x608] sm:$0xff]
    %v2616 = vld [vmem:[#allocation8 + $0x610] sm:$0xff]
    %v2617 = vld [vmem:[#allocation8 + $0x618] sm:$0xff]
    %v2618 = vld [vmem:[#allocation8 + $0x620] sm:$0xff]
    %v2619 = vld [vmem:[#allocation8 + $0x628] sm:$0xff]
    %v2620 = vld [vmem:[#allocation8 + $0x630] sm:$0xff]
    %v2621 = vld [vmem:[#allocation8 + $0x638] sm:$0xff]
    %v2622 = vld [vmem:[#allocation8 + $0x640] sm:$0xff]
    %v2623 = vld [vmem:[#allocation8 + $0x648] sm:$0xff]
    %v2624 = vld [vmem:[#allocation8 + $0x650] sm:$0xff]
    %v2625 = vld [vmem:[#allocation8 + $0x658] sm:$0xff]
    %v2626 = vld [vmem:[#allocation8 + $0x660] sm:$0xff]
    %v2627 = vld [vmem:[#allocation8 + $0x668] sm:$0xff]
    %v2628 = vld [vmem:[#allocation8 + $0x670] sm:$0xff]
    %v2629 = vld [vmem:[#allocation8 + $0x678] sm:$0xff]
    %v2630 = vld [vmem:[#allocation8 + $0x680] sm:$0xff]
    %v2631 = vld [vmem:[#allocation8 + $0x688] sm:$0xff]
    %v2632 = vld [vmem:[#allocation8 + $0x690] sm:$0xff]
    %v2633 = vld [vmem:[#allocation8 + $0x698] sm:$0xff]
    %v2634 = vld [vmem:[#allocation8 + $0x6a0] sm:$0xff]
    %v2635 = vld [vmem:[#allocation8 + $0x6a8] sm:$0xff]
    %v2636 = vld [vmem:[#allocation8 + $0x6b0] sm:$0xff]
    %v2637 = vld [vmem:[#allocation8 + $0x6b8] sm:$0xff]
    %v2638 = vld [vmem:[#allocation8 + $0x6c0] sm:$0xff]
    %v2639 = vld [vmem:[#allocation8 + $0x6c8] sm:$0xff]
    %v2640 = vld [vmem:[#allocation8 + $0x6d0] sm:$0xff]
    %v2641 = vld [vmem:[#allocation8 + $0x6d8] sm:$0xff]
    %v2642 = vld [vmem:[#allocation8 + $0x6e0] sm:$0xff]
    %v2643 = vld [vmem:[#allocation8 + $0x6e8] sm:$0xff]
    %v2644 = vld [vmem:[#allocation8 + $0x6f0] sm:$0xff]
    %v2645 = vld [vmem:[#allocation8 + $0x6f8] sm:$0xff]
    %v2646 = vld [vmem:[#allocation8 + $0x700] sm:$0xff]
    %v2647 = vld [vmem:[#allocation8 + $0x708] sm:$0xff]
    %v2648 = vld [vmem:[#allocation8 + $0x710] sm:$0xff]
    %v2649 = vld [vmem:[#allocation8 + $0x718] sm:$0xff]
    %v2650 = vld [vmem:[#allocation8 + $0x720] sm:$0xff]
    %v2651 = vld [vmem:[#allocation8 + $0x728] sm:$0xff]
    %v2652 = vld [vmem:[#allocation8 + $0x730] sm:$0xff]
    %v2653 = vld [vmem:[#allocation8 + $0x738] sm:$0xff]
    %v2654 = vld [vmem:[#allocation8 + $0x740] sm:$0xff]
    %v2655 = vld [vmem:[#allocation8 + $0x748] sm:$0xff]
    %v2656 = vld [vmem:[#allocation8 + $0x750] sm:$0xff]
    %v2657 = vld [vmem:[#allocation8 + $0x758] sm:$0xff]
    %v2658 = vld [vmem:[#allocation8 + $0x760] sm:$0xff]
    %v2659 = vld [vmem:[#allocation8 + $0x768] sm:$0xff]
    %v2660 = vld [vmem:[#allocation8 + $0x770] sm:$0xff]
    %v2661 = vld [vmem:[#allocation8 + $0x778] sm:$0xff]
    %v2662 = vld [vmem:[#allocation8 + $0x780] sm:$0xff]
    %v2663 = vld [vmem:[#allocation8 + $0x788] sm:$0xff]
    %v2664 = vld [vmem:[#allocation8 + $0x790] sm:$0xff]
    %v2665 = vld [vmem:[#allocation8 + $0x798] sm:$0xff]
    %v2666 = vld [vmem:[#allocation8 + $0x7a0] sm:$0xff]
    %v2667 = vld [vmem:[#allocation8 + $0x7a8] sm:$0xff]
    %v2668 = vld [vmem:[#allocation8 + $0x7b0] sm:$0xff]
    %v2669 = vld [vmem:[#allocation8 + $0x7b8] sm:$0xff]
    %v2670 = vld [vmem:[#allocation8 + $0x7c0] sm:$0xff]
    %v2671 = vld [vmem:[#allocation8 + $0x7c8] sm:$0xff]
    %v2672 = vld [vmem:[#allocation8 + $0x7d0] sm:$0xff]
    %v2673 = vld [vmem:[#allocation8 + $0x7d8] sm:$0xff]
    %v2674 = vld [vmem:[#allocation8 + $0x7e0] sm:$0xff]
    %v2675 = vld [vmem:[#allocation8 + $0x7e8] sm:$0xff]
    %v2676 = vld [vmem:[#allocation8 + $0x7f0] sm:$0xff]
    %v2677 = vld [vmem:[#allocation8 + $0x7f8] sm:$0xff]
    %v2678 = vld [vmem:[#allocation8 + $0x800] sm:$0xff]
    %v2679 = vld [vmem:[#allocation8 + $0x808] sm:$0xff]
    %v2680 = vld [vmem:[#allocation8 + $0x810] sm:$0xff]
    %v2681 = vld [vmem:[#allocation8 + $0x818] sm:$0xff]
    %v2682 = vld [vmem:[#allocation8 + $0x820] sm:$0xff]
    %v2683 = vld [vmem:[#allocation8 + $0x828] sm:$0xff]
    %v2684 = vld [vmem:[#allocation8 + $0x830] sm:$0xff]
    %v2685 = vld [vmem:[#allocation8 + $0x838] sm:$0xff]
    %v2686 = vld [vmem:[#allocation8 + $0x840] sm:$0xff]
    %v2687 = vld [vmem:[#allocation8 + $0x848] sm:$0xff]
    %v2688 = vld [vmem:[#allocation8 + $0x850] sm:$0xff]
    %v2689 = vld [vmem:[#allocation8 + $0x858] sm:$0xff]
    %v2690 = vld [vmem:[#allocation8 + $0x860] sm:$0xff]
    %v2691 = vld [vmem:[#allocation8 + $0x868] sm:$0xff]
    %v2692 = vld [vmem:[#allocation8 + $0x870] sm:$0xff]
    %v2693 = vld [vmem:[#allocation8 + $0x878] sm:$0xff]
    %v2694 = vld [vmem:[#allocation8 + $0x880] sm:$0xff]
    %v2695 = vld [vmem:[#allocation8 + $0x888] sm:$0xff]
    %v2696 = vld [vmem:[#allocation8 + $0x890] sm:$0xff]
    %v2697 = vld [vmem:[#allocation8 + $0x898] sm:$0xff]
    %v2698 = vld [vmem:[#allocation8 + $0x8a0] sm:$0xff]
    %v2699 = vld [vmem:[#allocation8 + $0x8a8] sm:$0xff]
    %v2700 = vld [vmem:[#allocation8 + $0x8b0] sm:$0xff]
    %v2701 = vld [vmem:[#allocation8 + $0x8b8] sm:$0xff]
    %v2702 = vld [vmem:[#allocation8 + $0x8c0] sm:$0xff]
    %v2703 = vld [vmem:[#allocation8 + $0x8c8] sm:$0xff]
    %v2704 = vld [vmem:[#allocation8 + $0x8d0] sm:$0xff]
    %v2705 = vld [vmem:[#allocation8 + $0x8d8] sm:$0xff]
    %v2706 = vld [vmem:[#allocation8 + $0x8e0] sm:$0xff]
    %v2707 = vld [vmem:[#allocation8 + $0x8e8] sm:$0xff]
    %v2708 = vld [vmem:[#allocation8 + $0x8f0] sm:$0xff]
    %v2709 = vld [vmem:[#allocation8 + $0x8f8] sm:$0xff]
    %v2710 = vld [vmem:[#allocation8 + $0x900] sm:$0xff]
    %v2711 = vld [vmem:[#allocation8 + $0x908] sm:$0xff]
    %v2712 = vld [vmem:[#allocation8 + $0x910] sm:$0xff]
    %v2713 = vld [vmem:[#allocation8 + $0x918] sm:$0xff]
    %v2714 = vld [vmem:[#allocation8 + $0x920] sm:$0xff]
    %v2715 = vld [vmem:[#allocation8 + $0x928] sm:$0xff]
    %v2716 = vld [vmem:[#allocation8 + $0x930] sm:$0xff]
    %v2717 = vld [vmem:[#allocation8 + $0x938] sm:$0xff]
    %v2718 = vld [vmem:[#allocation8 + $0x940] sm:$0xff]
    %v2719 = vld [vmem:[#allocation8 + $0x948] sm:$0xff]
    %v2720 = vld [vmem:[#allocation8 + $0x950] sm:$0xff]
    %v2721 = vld [vmem:[#allocation8 + $0x958] sm:$0xff]
    %v2722 = vld [vmem:[#allocation8 + $0x960] sm:$0xff]
    %v2723 = vld [vmem:[#allocation8 + $0x968] sm:$0xff]
    %v2724 = vld [vmem:[#allocation8 + $0x970] sm:$0xff]
    %v2725 = vld [vmem:[#allocation8 + $0x978] sm:$0xff]
    %v2726 = vld [vmem:[#allocation8 + $0x980] sm:$0xff]
    %v2727 = vld [vmem:[#allocation8 + $0x988] sm:$0xff]
    %v2728 = vld [vmem:[#allocation8 + $0x990] sm:$0xff]
    %v2729 = vld [vmem:[#allocation8 + $0x998] sm:$0xff]
    %v2730 = vld [vmem:[#allocation8 + $0x9a0] sm:$0xff]
    %v2731 = vld [vmem:[#allocation8 + $0x9a8] sm:$0xff]
    %v2732 = vld [vmem:[#allocation8 + $0x9b0] sm:$0xff]
    %v2733 = vld [vmem:[#allocation8 + $0x9b8] sm:$0xff]
    %v2734 = vld [vmem:[#allocation8 + $0x9c0] sm:$0xff]
    %v2735 = vld [vmem:[#allocation8 + $0x9c8] sm:$0xff]
    %v2736 = vld [vmem:[#allocation8 + $0x9d0] sm:$0xff]
    %v2737 = vld [vmem:[#allocation8 + $0x9d8] sm:$0xff]
    %v2738 = vld [vmem:[#allocation8 + $0x9e0] sm:$0xff]
    %v2739 = vld [vmem:[#allocation8 + $0x9e8] sm:$0xff]
    %v2740 = vld [vmem:[#allocation8 + $0x9f0] sm:$0xff]
    %v2741 = vld [vmem:[#allocation8 + $0x9f8] sm:$0xff]
    %v2742 = vld [vmem:[#allocation8 + $0xa00] sm:$0xff]
    %v2743 = vld [vmem:[#allocation8 + $0xa08] sm:$0xff]
    %v2744 = vld [vmem:[#allocation8 + $0xa10] sm:$0xff]
    %v2745 = vld [vmem:[#allocation8 + $0xa18] sm:$0xff]
    %v2746 = vld [vmem:[#allocation8 + $0xa20] sm:$0xff]
    %v2747 = vld [vmem:[#allocation8 + $0xa28] sm:$0xff]
    %v2748 = vld [vmem:[#allocation8 + $0xa30] sm:$0xff]
    %v2749 = vld [vmem:[#allocation8 + $0xa38] sm:$0xff]
    %v2750 = vld [vmem:[#allocation8 + $0xa40] sm:$0xff]
    %v2751 = vld [vmem:[#allocation8 + $0xa48] sm:$0xff]
    %v2752 = vld [vmem:[#allocation8 + $0xa50] sm:$0xff]
    %v2753 = vld [vmem:[#allocation8 + $0xa58] sm:$0xff]
    %v2754 = vld [vmem:[#allocation8 + $0xa60] sm:$0xff]
    %v2755 = vld [vmem:[#allocation8 + $0xa68] sm:$0xff]
    %v2756 = vld [vmem:[#allocation8 + $0xa70] sm:$0xff]
    %v2757 = vld [vmem:[#allocation8 + $0xa78] sm:$0xff]
    %v2758 = vld [vmem:[#allocation8 + $0xa80] sm:$0xff]
    %v2759 = vld [vmem:[#allocation8 + $0xa88] sm:$0xff]
    %v2760 = vld [vmem:[#allocation8 + $0xa90] sm:$0xff]
    %v2761 = vld [vmem:[#allocation8 + $0xa98] sm:$0xff]
    %v2762 = vld [vmem:[#allocation8 + $0xaa0] sm:$0xff]
    %v2763 = vld [vmem:[#allocation8 + $0xaa8] sm:$0xff]
    %v2764 = vld [vmem:[#allocation8 + $0xab0] sm:$0xff]
    %v2765 = vld [vmem:[#allocation8 + $0xab8] sm:$0xff]
    %v2766 = vld [vmem:[#allocation8 + $0xac0] sm:$0xff]
    %v2767 = vld [vmem:[#allocation8 + $0xac8] sm:$0xff]
    %v2768 = vld [vmem:[#allocation8 + $0xad0] sm:$0xff]
    %v2769 = vld [vmem:[#allocation8 + $0xad8] sm:$0xff]
    %v2770 = vld [vmem:[#allocation8 + $0xae0] sm:$0xff]
    %v2771 = vld [vmem:[#allocation8 + $0xae8] sm:$0xff]
    %v2772 = vld [vmem:[#allocation8 + $0xaf0] sm:$0xff]
    %v2773 = vld [vmem:[#allocation8 + $0xaf8] sm:$0xff]
    %v2774 = vld [vmem:[#allocation8 + $0xb00] sm:$0xff]
    %v2775 = vld [vmem:[#allocation8 + $0xb08] sm:$0xff]
    %v2776 = vld [vmem:[#allocation8 + $0xb10] sm:$0xff]
    %v2777 = vld [vmem:[#allocation8 + $0xb18] sm:$0xff]
    %v2778 = vld [vmem:[#allocation8 + $0xb20] sm:$0xff]
    %v2779 = vld [vmem:[#allocation8 + $0xb28] sm:$0xff]
    %v2780 = vld [vmem:[#allocation8 + $0xb30] sm:$0xff]
    %v2781 = vld [vmem:[#allocation8 + $0xb38] sm:$0xff]
    %v2782 = vld [vmem:[#allocation8 + $0xb40] sm:$0xff]
    %v2783 = vld [vmem:[#allocation8 + $0xb48] sm:$0xff]
    %v2784 = vld [vmem:[#allocation8 + $0xb50] sm:$0xff]
    %v2785 = vld [vmem:[#allocation8 + $0xb58] sm:$0xff]
    %v2786 = vld [vmem:[#allocation8 + $0xb60] sm:$0xff]
    %v2787 = vld [vmem:[#allocation8 + $0xb68] sm:$0xff]
    %v2788 = vld [vmem:[#allocation8 + $0xb70] sm:$0xff]
    %v2789 = vld [vmem:[#allocation8 + $0xb78] sm:$0xff]
    %v2790 = vld [vmem:[#allocation8 + $0xb80] sm:$0xff]
    %v2791 = vld [vmem:[#allocation8 + $0xb88] sm:$0xff]
    %v2792 = vld [vmem:[#allocation8 + $0xb90] sm:$0xff]
    %v2793 = vld [vmem:[#allocation8 + $0xb98] sm:$0xff]
    %v2794 = vld [vmem:[#allocation8 + $0xba0] sm:$0xff]
    %v2795 = vld [vmem:[#allocation8 + $0xba8] sm:$0xff]
    %v2796 = vld [vmem:[#allocation8 + $0xbb0] sm:$0xff]
    %v2797 = vld [vmem:[#allocation8 + $0xbb8] sm:$0xff]
    %v2798 = vld [vmem:[#allocation8 + $0xbc0] sm:$0xff]
    %v2799 = vld [vmem:[#allocation8 + $0xbc8] sm:$0xff]
    %v2800 = vld [vmem:[#allocation8 + $0xbd0] sm:$0xff]
    %v2801 = vld [vmem:[#allocation8 + $0xbd8] sm:$0xff]
    %v2802 = vld [vmem:[#allocation8 + $0xbe0] sm:$0xff]
    %v2803 = vld [vmem:[#allocation8 + $0xbe8] sm:$0xff]
    %v2804 = vld [vmem:[#allocation8 + $0xbf0] sm:$0xff]
    %v2805 = vld [vmem:[#allocation8 + $0xbf8] sm:$0xff]
    %v2806 = vld [vmem:[#allocation8 + $0xc00] sm:$0xff]
    %v2807 = vld [vmem:[#allocation8 + $0xc08] sm:$0xff]
    %v2808 = vld [vmem:[#allocation8 + $0xc10] sm:$0xff]
    %v2809 = vld [vmem:[#allocation8 + $0xc18] sm:$0xff]
    %v2810 = vld [vmem:[#allocation8 + $0xc20] sm:$0xff]
    %v2811 = vld [vmem:[#allocation8 + $0xc28] sm:$0xff]
    %v2812 = vld [vmem:[#allocation8 + $0xc30] sm:$0xff]
    %v2813 = vld [vmem:[#allocation8 + $0xc38] sm:$0xff]
    %v2814 = vld [vmem:[#allocation8 + $0xc40] sm:$0xff]
    %v2815 = vld [vmem:[#allocation8 + $0xc48] sm:$0xff]
    %v2816 = vld [vmem:[#allocation8 + $0xc50] sm:$0xff]
    %v2817 = vld [vmem:[#allocation8 + $0xc58] sm:$0xff]
    %v2818 = vld [vmem:[#allocation8 + $0xc60] sm:$0xff]
    %v2819 = vld [vmem:[#allocation8 + $0xc68] sm:$0xff]
    %v2820 = vld [vmem:[#allocation8 + $0xc70] sm:$0xff]
    %v2821 = vld [vmem:[#allocation8 + $0xc78] sm:$0xff]
    %v2822 = vld [vmem:[#allocation8 + $0xc80] sm:$0xff]
    %v2823 = vld [vmem:[#allocation8 + $0xc88] sm:$0xff]
    %v2824 = vld [vmem:[#allocation8 + $0xc90] sm:$0xff]
    %v2825 = vld [vmem:[#allocation8 + $0xc98] sm:$0xff]
    %v2826 = vld [vmem:[#allocation8 + $0xca0] sm:$0xff]
    %v2827 = vld [vmem:[#allocation8 + $0xca8] sm:$0xff]
    %v2828 = vld [vmem:[#allocation8 + $0xcb0] sm:$0xff]
    %v2829 = vld [vmem:[#allocation8 + $0xcb8] sm:$0xff]
    %v2830 = vld [vmem:[#allocation8 + $0xcc0] sm:$0xff]
    %v2831 = vld [vmem:[#allocation8 + $0xcc8] sm:$0xff]
    %v2832 = vld [vmem:[#allocation8 + $0xcd0] sm:$0xff]
    %v2833 = vld [vmem:[#allocation8 + $0xcd8] sm:$0xff]
    %v2834 = vld [vmem:[#allocation8 + $0xce0] sm:$0xff]
    %v2835 = vld [vmem:[#allocation8 + $0xce8] sm:$0xff]
    %v2836 = vld [vmem:[#allocation8 + $0xcf0] sm:$0xff]
    %v2837 = vld [vmem:[#allocation8 + $0xcf8] sm:$0xff]
    %v2838 = vld [vmem:[#allocation8 + $0xd00] sm:$0xff]
    %v2839 = vld [vmem:[#allocation8 + $0xd08] sm:$0xff]
    %v2840 = vld [vmem:[#allocation8 + $0xd10] sm:$0xff]
    %v2841 = vld [vmem:[#allocation8 + $0xd18] sm:$0xff]
    %v2842 = vld [vmem:[#allocation8 + $0xd20] sm:$0xff]
    %v2843 = vld [vmem:[#allocation8 + $0xd28] sm:$0xff]
    %v2844 = vld [vmem:[#allocation8 + $0xd30] sm:$0xff]
    %v2845 = vld [vmem:[#allocation8 + $0xd38] sm:$0xff]
    %v2846 = vld [vmem:[#allocation8 + $0xd40] sm:$0xff]
    %v2847 = vld [vmem:[#allocation8 + $0xd48] sm:$0xff]
    %v2848 = vld [vmem:[#allocation8 + $0xd50] sm:$0xff]
    %v2849 = vld [vmem:[#allocation8 + $0xd58] sm:$0xff]
    %v2850 = vld [vmem:[#allocation8 + $0xd60] sm:$0xff]
    %v2851 = vld [vmem:[#allocation8 + $0xd68] sm:$0xff]
    %v2852 = vld [vmem:[#allocation8 + $0xd70] sm:$0xff]
    %v2853 = vld [vmem:[#allocation8 + $0xd78] sm:$0xff]
    %v2854 = vld [vmem:[#allocation8 + $0xd80] sm:$0xff]
    %v2855 = vld [vmem:[#allocation8 + $0xd88] sm:$0xff]
    %v2856 = vld [vmem:[#allocation8 + $0xd90] sm:$0xff]
    %v2857 = vld [vmem:[#allocation8 + $0xd98] sm:$0xff]
    %v2858 = vld [vmem:[#allocation8 + $0xda0] sm:$0xff]
    %v2859 = vld [vmem:[#allocation8 + $0xda8] sm:$0xff]
    %v2860 = vld [vmem:[#allocation8 + $0xdb0] sm:$0xff]
    %v2861 = vld [vmem:[#allocation8 + $0xdb8] sm:$0xff]
    %v2862 = vld [vmem:[#allocation8 + $0xdc0] sm:$0xff]
    %v2863 = vld [vmem:[#allocation8 + $0xdc8] sm:$0xff]
    %v2864 = vld [vmem:[#allocation8 + $0xdd0] sm:$0xff]
    %v2865 = vld [vmem:[#allocation8 + $0xdd8] sm:$0xff]
    %v2866 = vld [vmem:[#allocation8 + $0xde0] sm:$0xff]
    %v2867 = vld [vmem:[#allocation8 + $0xde8] sm:$0xff]
    %v2868 = vld [vmem:[#allocation8 + $0xdf0] sm:$0xff]
    %v2869 = vld [vmem:[#allocation8 + $0xdf8] sm:$0xff]
    %v2870 = vld [vmem:[#allocation8 + $0xe00] sm:$0xff]
    %v2871 = vld [vmem:[#allocation8 + $0xe08] sm:$0xff]
    %v2872 = vld [vmem:[#allocation8 + $0xe10] sm:$0xff]
    %v2873 = vld [vmem:[#allocation8 + $0xe18] sm:$0xff]
    %v2874 = vld [vmem:[#allocation8 + $0xe20] sm:$0xff]
    %v2875 = vld [vmem:[#allocation8 + $0xe28] sm:$0xff]
    %v2876 = vld [vmem:[#allocation8 + $0xe30] sm:$0xff]
    %v2877 = vld [vmem:[#allocation8 + $0xe38] sm:$0xff]
    %v2878 = vld [vmem:[#allocation8 + $0xe40] sm:$0xff]
    %v2879 = vld [vmem:[#allocation8 + $0xe48] sm:$0xff]
    %v2880 = vld [vmem:[#allocation8 + $0xe50] sm:$0xff]
    %v2881 = vld [vmem:[#allocation8 + $0xe58] sm:$0xff]
    %v2882 = vld [vmem:[#allocation8 + $0xe60] sm:$0xff]
    %v2883 = vld [vmem:[#allocation8 + $0xe68] sm:$0xff]
    %v2884 = vld [vmem:[#allocation8 + $0xe70] sm:$0xff]
    %v2885 = vld [vmem:[#allocation8 + $0xe78] sm:$0xff]
    %v2886 = vld [vmem:[#allocation8 + $0xe80] sm:$0xff]
    %v2887 = vld [vmem:[#allocation8 + $0xe88] sm:$0xff]
    %v2888 = vld [vmem:[#allocation8 + $0xe90] sm:$0xff]
    %v2889 = vld [vmem:[#allocation8 + $0xe98] sm:$0xff]
    %v2890 = vld [vmem:[#allocation8 + $0xea0] sm:$0xff]
    %v2891 = vld [vmem:[#allocation8 + $0xea8] sm:$0xff]
    %v2892 = vld [vmem:[#allocation8 + $0xeb0] sm:$0xff]
    %v2893 = vld [vmem:[#allocation8 + $0xeb8] sm:$0xff]
    %v2894 = vld [vmem:[#allocation8 + $0xec0] sm:$0xff]
    %v2895 = vld [vmem:[#allocation8 + $0xec8] sm:$0xff]
    %v2896 = vld [vmem:[#allocation8 + $0xed0] sm:$0xff]
    %v2897 = vld [vmem:[#allocation8 + $0xed8] sm:$0xff]
    %v2898 = vld [vmem:[#allocation8 + $0xee0] sm:$0xff]
    %v2899 = vld [vmem:[#allocation8 + $0xee8] sm:$0xff]
    %v2900 = vld [vmem:[#allocation8 + $0xef0] sm:$0xff]
    %v2901 = vld [vmem:[#allocation8 + $0xef8] sm:$0xff]
    %v2902 = vld [vmem:[#allocation8 + $0xf00] sm:$0xff]
    %v2903 = vld [vmem:[#allocation8 + $0xf08] sm:$0xff]
    %v2904 = vld [vmem:[#allocation8 + $0xf10] sm:$0xff]
    %v2905 = vld [vmem:[#allocation8 + $0xf18] sm:$0xff]
    %v2906 = vld [vmem:[#allocation8 + $0xf20] sm:$0xff]
    %v2907 = vld [vmem:[#allocation8 + $0xf28] sm:$0xff]
    %v2908 = vld [vmem:[#allocation8 + $0xf30] sm:$0xff]
    %v2909 = vld [vmem:[#allocation8 + $0xf38] sm:$0xff]
    %v2910 = vld [vmem:[#allocation8 + $0xf40] sm:$0xff]
    %v2911 = vld [vmem:[#allocation8 + $0xf48] sm:$0xff]
    %v2912 = vld [vmem:[#allocation8 + $0xf50] sm:$0xff]
    %v2913 = vld [vmem:[#allocation8 + $0xf58] sm:$0xff]
    %v2914 = vld [vmem:[#allocation8 + $0xf60] sm:$0xff]
    %v2915 = vld [vmem:[#allocation8 + $0xf68] sm:$0xff]
    %v2916 = vld [vmem:[#allocation8 + $0xf70] sm:$0xff]
    %v2917 = vld [vmem:[#allocation8 + $0xf78] sm:$0xff]
    %v2918 = vld [vmem:[#allocation8 + $0xf80] sm:$0xff]
    %v2919 = vld [vmem:[#allocation8 + $0xf88] sm:$0xff]
    %v2920 = vld [vmem:[#allocation8 + $0xf90] sm:$0xff]
    %v2921 = vld [vmem:[#allocation8 + $0xf98] sm:$0xff]
    %v2922 = vld [vmem:[#allocation8 + $0xfa0] sm:$0xff]
    %v2923 = vld [vmem:[#allocation8 + $0xfa8] sm:$0xff]
    %v2924 = vld [vmem:[#allocation8 + $0xfb0] sm:$0xff]
    %v2925 = vld [vmem:[#allocation8 + $0xfb8] sm:$0xff]
    %v2926 = vld [vmem:[#allocation8 + $0xfc0] sm:$0xff]
    %v2927 = vld [vmem:[#allocation8 + $0xfc8] sm:$0xff]
    %v2928 = vld [vmem:[#allocation8 + $0xfd0] sm:$0xff]
    %v2929 = vld [vmem:[#allocation8 + $0xfd8] sm:$0xff]
    %v2930 = vld [vmem:[#allocation8 + $0xfe0] sm:$0xff]
    %v2931 = vld [vmem:[#allocation8 + $0xfe8] sm:$0xff]
    %v2932 = vld [vmem:[#allocation8 + $0xff0] sm:$0xff]
    %v2933 = vld [vmem:[#allocation8 + $0xff8] sm:$0xff]
    %v2934 = vld [vmem:[#allocation10] sm:$0xff]
    %v2936 = vlaneseq
    %v2937 = vshrl.u32 %v2936, 7
    %v2938 = vsub.s32 0, %v2937
    %v2939 = vrot.slane %v2934, %v2938
    %v2940 = vlaneseq
    %v2941 = vshrl.u32 %v2940, 7
    %v2942 = vsub.s32 1, %v2941
    %v2943 = vrot.slane %v2934, %v2942
    %v2944 = vlaneseq
    %v2945 = vshrl.u32 %v2944, 7
    %v2946 = vsub.s32 2, %v2945
    %v2947 = vrot.slane %v2934, %v2946
    %v2948 = vlaneseq
    %v2949 = vshrl.u32 %v2948, 7
    %v2950 = vsub.s32 3, %v2949
    %v2951 = vrot.slane %v2934, %v2950
    %v2952 = vlaneseq
    %v2953 = vshrl.u32 %v2952, 7
    %v2954 = vsub.s32 4, %v2953
    %v2955 = vrot.slane %v2934, %v2954
    %v2956 = vlaneseq
    %v2957 = vshrl.u32 %v2956, 7
    %v2958 = vsub.s32 5, %v2957
    %v2959 = vrot.slane %v2934, %v2958
    %v2960 = vlaneseq
    %v2961 = vshrl.u32 %v2960, 7
    %v2962 = vsub.s32 6, %v2961
    %v2963 = vrot.slane %v2934, %v2962
    %v2964 = vlaneseq
    %v2965 = vshrl.u32 %v2964, 7
    %v2966 = vsub.s32 7, %v2965
    %v2967 = vrot.slane %v2934, %v2966
    %v3488 = vunpack.c.l.b16 %v2422
    %v3489 = vunpack.c.h.b16 %v2422
    %v3490 = vunpack.c.l.b16 %v2423
    %v3491 = vunpack.c.h.b16 %v2423
    %v3492 = vunpack.c.l.b16 %v2424
    %v3493 = vunpack.c.h.b16 %v2424
    %v3494 = vunpack.c.l.b16 %v2425
    %v3495 = vunpack.c.h.b16 %v2425
    %v3496 = vunpack.c.l.b16 %v2426
    %v3497 = vunpack.c.h.b16 %v2426
    %v3498 = vunpack.c.l.b16 %v2427
    %v3499 = vunpack.c.h.b16 %v2427
    %v3500 = vunpack.c.l.b16 %v2428
    %v3501 = vunpack.c.h.b16 %v2428
    %v3502 = vunpack.c.l.b16 %v2429
    %v3503 = vunpack.c.h.b16 %v2429
    %v3504 = vunpack.c.l.b16 %v2430
    %v3505 = vunpack.c.h.b16 %v2430
    %v3506 = vunpack.c.l.b16 %v2431
    %v3507 = vunpack.c.h.b16 %v2431
    %v3508 = vunpack.c.l.b16 %v2432
    %v3509 = vunpack.c.h.b16 %v2432
    %v3510 = vunpack.c.l.b16 %v2433
    %v3511 = vunpack.c.h.b16 %v2433
    %v3512 = vunpack.c.l.b16 %v2434
    %v3513 = vunpack.c.h.b16 %v2434
    %v3514 = vunpack.c.l.b16 %v2435
    %v3515 = vunpack.c.h.b16 %v2435
    %v3516 = vunpack.c.l.b16 %v2436
    %v3517 = vunpack.c.h.b16 %v2436
    %v3518 = vunpack.c.l.b16 %v2437
    %v3519 = vunpack.c.h.b16 %v2437
    %v3520 = vunpack.c.l.b16 %v2438
    %v3521 = vunpack.c.h.b16 %v2438
    %v3522 = vunpack.c.l.b16 %v2439
    %v3523 = vunpack.c.h.b16 %v2439
    %v3524 = vunpack.c.l.b16 %v2440
    %v3525 = vunpack.c.h.b16 %v2440
    %v3526 = vunpack.c.l.b16 %v2441
    %v3527 = vunpack.c.h.b16 %v2441
    %v3528 = vunpack.c.l.b16 %v2442
    %v3529 = vunpack.c.h.b16 %v2442
    %v3530 = vunpack.c.l.b16 %v2443
    %v3531 = vunpack.c.h.b16 %v2443
    %v3532 = vunpack.c.l.b16 %v2444
    %v3533 = vunpack.c.h.b16 %v2444
    %v3534 = vunpack.c.l.b16 %v2445
    %v3535 = vunpack.c.h.b16 %v2445
    %v3536 = vunpack.c.l.b16 %v2446
    %v3537 = vunpack.c.h.b16 %v2446
    %v3538 = vunpack.c.l.b16 %v2447
    %v3539 = vunpack.c.h.b16 %v2447
    %v3540 = vunpack.c.l.b16 %v2448
    %v3541 = vunpack.c.h.b16 %v2448
    %v3542 = vunpack.c.l.b16 %v2449
    %v3543 = vunpack.c.h.b16 %v2449
    %v3544 = vunpack.c.l.b16 %v2450
    %v3545 = vunpack.c.h.b16 %v2450
    %v3546 = vunpack.c.l.b16 %v2451
    %v3547 = vunpack.c.h.b16 %v2451
    %v3548 = vunpack.c.l.b16 %v2452
    %v3549 = vunpack.c.h.b16 %v2452
    %v3550 = vunpack.c.l.b16 %v2453
    %v3551 = vunpack.c.h.b16 %v2453
    %v3552 = vunpack.c.l.b16 %v2454
    %v3553 = vunpack.c.h.b16 %v2454
    %v3554 = vunpack.c.l.b16 %v2455
    %v3555 = vunpack.c.h.b16 %v2455
    %v3556 = vunpack.c.l.b16 %v2456
    %v3557 = vunpack.c.h.b16 %v2456
    %v3558 = vunpack.c.l.b16 %v2457
    %v3559 = vunpack.c.h.b16 %v2457
    %v3560 = vunpack.c.l.b16 %v2458
    %v3561 = vunpack.c.h.b16 %v2458
    %v3562 = vunpack.c.l.b16 %v2459
    %v3563 = vunpack.c.h.b16 %v2459
    %v3564 = vunpack.c.l.b16 %v2460
    %v3565 = vunpack.c.h.b16 %v2460
    %v3566 = vunpack.c.l.b16 %v2461
    %v3567 = vunpack.c.h.b16 %v2461
    %v3568 = vunpack.c.l.b16 %v2462
    %v3569 = vunpack.c.h.b16 %v2462
    %v3570 = vunpack.c.l.b16 %v2463
    %v3571 = vunpack.c.h.b16 %v2463
    %v3572 = vunpack.c.l.b16 %v2464
    %v3573 = vunpack.c.h.b16 %v2464
    %v3574 = vunpack.c.l.b16 %v2465
    %v3575 = vunpack.c.h.b16 %v2465
    %v3576 = vunpack.c.l.b16 %v2466
    %v3577 = vunpack.c.h.b16 %v2466
    %v3578 = vunpack.c.l.b16 %v2467
    %v3579 = vunpack.c.h.b16 %v2467
    %v3580 = vunpack.c.l.b16 %v2468
    %v3581 = vunpack.c.h.b16 %v2468
    %v3582 = vunpack.c.l.b16 %v2469
    %v3583 = vunpack.c.h.b16 %v2469
    %v3584 = vunpack.c.l.b16 %v2470
    %v3585 = vunpack.c.h.b16 %v2470
    %v3586 = vunpack.c.l.b16 %v2471
    %v3587 = vunpack.c.h.b16 %v2471
    %v3588 = vunpack.c.l.b16 %v2472
    %v3589 = vunpack.c.h.b16 %v2472
    %v3590 = vunpack.c.l.b16 %v2473
    %v3591 = vunpack.c.h.b16 %v2473
    %v3592 = vunpack.c.l.b16 %v2474
    %v3593 = vunpack.c.h.b16 %v2474
    %v3594 = vunpack.c.l.b16 %v2475
    %v3595 = vunpack.c.h.b16 %v2475
    %v3596 = vunpack.c.l.b16 %v2476
    %v3597 = vunpack.c.h.b16 %v2476
    %v3598 = vunpack.c.l.b16 %v2477
    %v3599 = vunpack.c.h.b16 %v2477
    %v3600 = vunpack.c.l.b16 %v2478
    %v3601 = vunpack.c.h.b16 %v2478
    %v3602 = vunpack.c.l.b16 %v2479
    %v3603 = vunpack.c.h.b16 %v2479
    %v3604 = vunpack.c.l.b16 %v2480
    %v3605 = vunpack.c.h.b16 %v2480
    %v3606 = vunpack.c.l.b16 %v2481
    %v3607 = vunpack.c.h.b16 %v2481
    %v3608 = vunpack.c.l.b16 %v2482
    %v3609 = vunpack.c.h.b16 %v2482
    %v3610 = vunpack.c.l.b16 %v2483
    %v3611 = vunpack.c.h.b16 %v2483
    %v3612 = vunpack.c.l.b16 %v2484
    %v3613 = vunpack.c.h.b16 %v2484
    %v3614 = vunpack.c.l.b16 %v2485
    %v3615 = vunpack.c.h.b16 %v2485
    %v3616 = vunpack.c.l.b16 %v2486
    %v3617 = vunpack.c.h.b16 %v2486
    %v3618 = vunpack.c.l.b16 %v2487
    %v3619 = vunpack.c.h.b16 %v2487
    %v3620 = vunpack.c.l.b16 %v2488
    %v3621 = vunpack.c.h.b16 %v2488
    %v3622 = vunpack.c.l.b16 %v2489
    %v3623 = vunpack.c.h.b16 %v2489
    %v3624 = vunpack.c.l.b16 %v2490
    %v3625 = vunpack.c.h.b16 %v2490
    %v3626 = vunpack.c.l.b16 %v2491
    %v3627 = vunpack.c.h.b16 %v2491
    %v3628 = vunpack.c.l.b16 %v2492
    %v3629 = vunpack.c.h.b16 %v2492
    %v3630 = vunpack.c.l.b16 %v2493
    %v3631 = vunpack.c.h.b16 %v2493
    %v3632 = vunpack.c.l.b16 %v2494
    %v3633 = vunpack.c.h.b16 %v2494
    %v3634 = vunpack.c.l.b16 %v2495
    %v3635 = vunpack.c.h.b16 %v2495
    %v3636 = vunpack.c.l.b16 %v2496
    %v3637 = vunpack.c.h.b16 %v2496
    %v3638 = vunpack.c.l.b16 %v2497
    %v3639 = vunpack.c.h.b16 %v2497
    %v3640 = vunpack.c.l.b16 %v2498
    %v3641 = vunpack.c.h.b16 %v2498
    %v3642 = vunpack.c.l.b16 %v2499
    %v3643 = vunpack.c.h.b16 %v2499
    %v3644 = vunpack.c.l.b16 %v2500
    %v3645 = vunpack.c.h.b16 %v2500
    %v3646 = vunpack.c.l.b16 %v2501
    %v3647 = vunpack.c.h.b16 %v2501
    %v3648 = vunpack.c.l.b16 %v2502
    %v3649 = vunpack.c.h.b16 %v2502
    %v3650 = vunpack.c.l.b16 %v2503
    %v3651 = vunpack.c.h.b16 %v2503
    %v3652 = vunpack.c.l.b16 %v2504
    %v3653 = vunpack.c.h.b16 %v2504
    %v3654 = vunpack.c.l.b16 %v2505
    %v3655 = vunpack.c.h.b16 %v2505
    %v3656 = vunpack.c.l.b16 %v2506
    %v3657 = vunpack.c.h.b16 %v2506
    %v3658 = vunpack.c.l.b16 %v2507
    %v3659 = vunpack.c.h.b16 %v2507
    %v3660 = vunpack.c.l.b16 %v2508
    %v3661 = vunpack.c.h.b16 %v2508
    %v3662 = vunpack.c.l.b16 %v2509
    %v3663 = vunpack.c.h.b16 %v2509
    %v3664 = vunpack.c.l.b16 %v2510
    %v3665 = vunpack.c.h.b16 %v2510
    %v3666 = vunpack.c.l.b16 %v2511
    %v3667 = vunpack.c.h.b16 %v2511
    %v3668 = vunpack.c.l.b16 %v2512
    %v3669 = vunpack.c.h.b16 %v2512
    %v3670 = vunpack.c.l.b16 %v2513
    %v3671 = vunpack.c.h.b16 %v2513
    %v3672 = vunpack.c.l.b16 %v2514
    %v3673 = vunpack.c.h.b16 %v2514
    %v3674 = vunpack.c.l.b16 %v2515
    %v3675 = vunpack.c.h.b16 %v2515
    %v3676 = vunpack.c.l.b16 %v2516
    %v3677 = vunpack.c.h.b16 %v2516
    %v3678 = vunpack.c.l.b16 %v2517
    %v3679 = vunpack.c.h.b16 %v2517
    %v3680 = vunpack.c.l.b16 %v2518
    %v3681 = vunpack.c.h.b16 %v2518
    %v3682 = vunpack.c.l.b16 %v2519
    %v3683 = vunpack.c.h.b16 %v2519
    %v3684 = vunpack.c.l.b16 %v2520
    %v3685 = vunpack.c.h.b16 %v2520
    %v3686 = vunpack.c.l.b16 %v2521
    %v3687 = vunpack.c.h.b16 %v2521
    %v3688 = vunpack.c.l.b16 %v2522
    %v3689 = vunpack.c.h.b16 %v2522
    %v3690 = vunpack.c.l.b16 %v2523
    %v3691 = vunpack.c.h.b16 %v2523
    %v3692 = vunpack.c.l.b16 %v2524
    %v3693 = vunpack.c.h.b16 %v2524
    %v3694 = vunpack.c.l.b16 %v2525
    %v3695 = vunpack.c.h.b16 %v2525
    %v3696 = vunpack.c.l.b16 %v2526
    %v3697 = vunpack.c.h.b16 %v2526
    %v3698 = vunpack.c.l.b16 %v2527
    %v3699 = vunpack.c.h.b16 %v2527
    %v3700 = vunpack.c.l.b16 %v2528
    %v3701 = vunpack.c.h.b16 %v2528
    %v3702 = vunpack.c.l.b16 %v2529
    %v3703 = vunpack.c.h.b16 %v2529
    %v3704 = vunpack.c.l.b16 %v2530
    %v3705 = vunpack.c.h.b16 %v2530
    %v3706 = vunpack.c.l.b16 %v2531
    %v3707 = vunpack.c.h.b16 %v2531
    %v3708 = vunpack.c.l.b16 %v2532
    %v3709 = vunpack.c.h.b16 %v2532
    %v3710 = vunpack.c.l.b16 %v2533
    %v3711 = vunpack.c.h.b16 %v2533
    %v3712 = vunpack.c.l.b16 %v2534
    %v3713 = vunpack.c.h.b16 %v2534
    %v3714 = vunpack.c.l.b16 %v2535
    %v3715 = vunpack.c.h.b16 %v2535
    %v3716 = vunpack.c.l.b16 %v2536
    %v3717 = vunpack.c.h.b16 %v2536
    %v3718 = vunpack.c.l.b16 %v2537
    %v3719 = vunpack.c.h.b16 %v2537
    %v3720 = vunpack.c.l.b16 %v2538
    %v3721 = vunpack.c.h.b16 %v2538
    %v3722 = vunpack.c.l.b16 %v2539
    %v3723 = vunpack.c.h.b16 %v2539
    %v3724 = vunpack.c.l.b16 %v2540
    %v3725 = vunpack.c.h.b16 %v2540
    %v3726 = vunpack.c.l.b16 %v2541
    %v3727 = vunpack.c.h.b16 %v2541
    %v3728 = vunpack.c.l.b16 %v2542
    %v3729 = vunpack.c.h.b16 %v2542
    %v3730 = vunpack.c.l.b16 %v2543
    %v3731 = vunpack.c.h.b16 %v2543
    %v3732 = vunpack.c.l.b16 %v2544
    %v3733 = vunpack.c.h.b16 %v2544
    %v3734 = vunpack.c.l.b16 %v2545
    %v3735 = vunpack.c.h.b16 %v2545
    %v3736 = vunpack.c.l.b16 %v2546
    %v3737 = vunpack.c.h.b16 %v2546
    %v3738 = vunpack.c.l.b16 %v2547
    %v3739 = vunpack.c.h.b16 %v2547
    %v3740 = vunpack.c.l.b16 %v2548
    %v3741 = vunpack.c.h.b16 %v2548
    %v3742 = vunpack.c.l.b16 %v2549
    %v3743 = vunpack.c.h.b16 %v2549
    %v3744 = vunpack.c.l.b16 %v2550
    %v3745 = vunpack.c.h.b16 %v2550
    %v3746 = vunpack.c.l.b16 %v2551
    %v3747 = vunpack.c.h.b16 %v2551
    %v3748 = vunpack.c.l.b16 %v2552
    %v3749 = vunpack.c.h.b16 %v2552
    %v3750 = vunpack.c.l.b16 %v2553
    %v3751 = vunpack.c.h.b16 %v2553
    %v3752 = vunpack.c.l.b16 %v2554
    %v3753 = vunpack.c.h.b16 %v2554
    %v3754 = vunpack.c.l.b16 %v2555
    %v3755 = vunpack.c.h.b16 %v2555
    %v3756 = vunpack.c.l.b16 %v2556
    %v3757 = vunpack.c.h.b16 %v2556
    %v3758 = vunpack.c.l.b16 %v2557
    %v3759 = vunpack.c.h.b16 %v2557
    %v3760 = vunpack.c.l.b16 %v2558
    %v3761 = vunpack.c.h.b16 %v2558
    %v3762 = vunpack.c.l.b16 %v2559
    %v3763 = vunpack.c.h.b16 %v2559
    %v3764 = vunpack.c.l.b16 %v2560
    %v3765 = vunpack.c.h.b16 %v2560
    %v3766 = vunpack.c.l.b16 %v2561
    %v3767 = vunpack.c.h.b16 %v2561
    %v3768 = vunpack.c.l.b16 %v2562
    %v3769 = vunpack.c.h.b16 %v2562
    %v3770 = vunpack.c.l.b16 %v2563
    %v3771 = vunpack.c.h.b16 %v2563
    %v3772 = vunpack.c.l.b16 %v2564
    %v3773 = vunpack.c.h.b16 %v2564
    %v3774 = vunpack.c.l.b16 %v2565
    %v3775 = vunpack.c.h.b16 %v2565
    %v3776 = vunpack.c.l.b16 %v2566
    %v3777 = vunpack.c.h.b16 %v2566
    %v3778 = vunpack.c.l.b16 %v2567
    %v3779 = vunpack.c.h.b16 %v2567
    %v3780 = vunpack.c.l.b16 %v2568
    %v3781 = vunpack.c.h.b16 %v2568
    %v3782 = vunpack.c.l.b16 %v2569
    %v3783 = vunpack.c.h.b16 %v2569
    %v3784 = vunpack.c.l.b16 %v2570
    %v3785 = vunpack.c.h.b16 %v2570
    %v3786 = vunpack.c.l.b16 %v2571
    %v3787 = vunpack.c.h.b16 %v2571
    %v3788 = vunpack.c.l.b16 %v2572
    %v3789 = vunpack.c.h.b16 %v2572
    %v3790 = vunpack.c.l.b16 %v2573
    %v3791 = vunpack.c.h.b16 %v2573
    %v3792 = vunpack.c.l.b16 %v2574
    %v3793 = vunpack.c.h.b16 %v2574
    %v3794 = vunpack.c.l.b16 %v2575
    %v3795 = vunpack.c.h.b16 %v2575
    %v3796 = vunpack.c.l.b16 %v2576
    %v3797 = vunpack.c.h.b16 %v2576
    %v3798 = vunpack.c.l.b16 %v2577
    %v3799 = vunpack.c.h.b16 %v2577
    %v3800 = vunpack.c.l.b16 %v2578
    %v3801 = vunpack.c.h.b16 %v2578
    %v3802 = vunpack.c.l.b16 %v2579
    %v3803 = vunpack.c.h.b16 %v2579
    %v3804 = vunpack.c.l.b16 %v2580
    %v3805 = vunpack.c.h.b16 %v2580
    %v3806 = vunpack.c.l.b16 %v2581
    %v3807 = vunpack.c.h.b16 %v2581
    %v3808 = vunpack.c.l.b16 %v2582
    %v3809 = vunpack.c.h.b16 %v2582
    %v3810 = vunpack.c.l.b16 %v2583
    %v3811 = vunpack.c.h.b16 %v2583
    %v3812 = vunpack.c.l.b16 %v2584
    %v3813 = vunpack.c.h.b16 %v2584
    %v3814 = vunpack.c.l.b16 %v2585
    %v3815 = vunpack.c.h.b16 %v2585
    %v3816 = vunpack.c.l.b16 %v2586
    %v3817 = vunpack.c.h.b16 %v2586
    %v3818 = vunpack.c.l.b16 %v2587
    %v3819 = vunpack.c.h.b16 %v2587
    %v3820 = vunpack.c.l.b16 %v2588
    %v3821 = vunpack.c.h.b16 %v2588
    %v3822 = vunpack.c.l.b16 %v2589
    %v3823 = vunpack.c.h.b16 %v2589
    %v3824 = vunpack.c.l.b16 %v2590
    %v3825 = vunpack.c.h.b16 %v2590
    %v3826 = vunpack.c.l.b16 %v2591
    %v3827 = vunpack.c.h.b16 %v2591
    %v3828 = vunpack.c.l.b16 %v2592
    %v3829 = vunpack.c.h.b16 %v2592
    %v3830 = vunpack.c.l.b16 %v2593
    %v3831 = vunpack.c.h.b16 %v2593
    %v3832 = vunpack.c.l.b16 %v2594
    %v3833 = vunpack.c.h.b16 %v2594
    %v3834 = vunpack.c.l.b16 %v2595
    %v3835 = vunpack.c.h.b16 %v2595
    %v3836 = vunpack.c.l.b16 %v2596
    %v3837 = vunpack.c.h.b16 %v2596
    %v3838 = vunpack.c.l.b16 %v2597
    %v3839 = vunpack.c.h.b16 %v2597
    %v3840 = vunpack.c.l.b16 %v2598
    %v3841 = vunpack.c.h.b16 %v2598
    %v3842 = vunpack.c.l.b16 %v2599
    %v3843 = vunpack.c.h.b16 %v2599
    %v3844 = vunpack.c.l.b16 %v2600
    %v3845 = vunpack.c.h.b16 %v2600
    %v3846 = vunpack.c.l.b16 %v2601
    %v3847 = vunpack.c.h.b16 %v2601
    %v3848 = vunpack.c.l.b16 %v2602
    %v3849 = vunpack.c.h.b16 %v2602
    %v3850 = vunpack.c.l.b16 %v2603
    %v3851 = vunpack.c.h.b16 %v2603
    %v3852 = vunpack.c.l.b16 %v2604
    %v3853 = vunpack.c.h.b16 %v2604
    %v3854 = vunpack.c.l.b16 %v2605
    %v3855 = vunpack.c.h.b16 %v2605
    %v3856 = vunpack.c.l.b16 %v2606
    %v3857 = vunpack.c.h.b16 %v2606
    %v3858 = vunpack.c.l.b16 %v2607
    %v3859 = vunpack.c.h.b16 %v2607
    %v3860 = vunpack.c.l.b16 %v2608
    %v3861 = vunpack.c.h.b16 %v2608
    %v3862 = vunpack.c.l.b16 %v2609
    %v3863 = vunpack.c.h.b16 %v2609
    %v3864 = vunpack.c.l.b16 %v2610
    %v3865 = vunpack.c.h.b16 %v2610
    %v3866 = vunpack.c.l.b16 %v2611
    %v3867 = vunpack.c.h.b16 %v2611
    %v3868 = vunpack.c.l.b16 %v2612
    %v3869 = vunpack.c.h.b16 %v2612
    %v3870 = vunpack.c.l.b16 %v2613
    %v3871 = vunpack.c.h.b16 %v2613
    %v3872 = vunpack.c.l.b16 %v2614
    %v3873 = vunpack.c.h.b16 %v2614
    %v3874 = vunpack.c.l.b16 %v2615
    %v3875 = vunpack.c.h.b16 %v2615
    %v3876 = vunpack.c.l.b16 %v2616
    %v3877 = vunpack.c.h.b16 %v2616
    %v3878 = vunpack.c.l.b16 %v2617
    %v3879 = vunpack.c.h.b16 %v2617
    %v3880 = vunpack.c.l.b16 %v2618
    %v3881 = vunpack.c.h.b16 %v2618
    %v3882 = vunpack.c.l.b16 %v2619
    %v3883 = vunpack.c.h.b16 %v2619
    %v3884 = vunpack.c.l.b16 %v2620
    %v3885 = vunpack.c.h.b16 %v2620
    %v3886 = vunpack.c.l.b16 %v2621
    %v3887 = vunpack.c.h.b16 %v2621
    %v3888 = vunpack.c.l.b16 %v2622
    %v3889 = vunpack.c.h.b16 %v2622
    %v3890 = vunpack.c.l.b16 %v2623
    %v3891 = vunpack.c.h.b16 %v2623
    %v3892 = vunpack.c.l.b16 %v2624
    %v3893 = vunpack.c.h.b16 %v2624
    %v3894 = vunpack.c.l.b16 %v2625
    %v3895 = vunpack.c.h.b16 %v2625
    %v3896 = vunpack.c.l.b16 %v2626
    %v3897 = vunpack.c.h.b16 %v2626
    %v3898 = vunpack.c.l.b16 %v2627
    %v3899 = vunpack.c.h.b16 %v2627
    %v3900 = vunpack.c.l.b16 %v2628
    %v3901 = vunpack.c.h.b16 %v2628
    %v3902 = vunpack.c.l.b16 %v2629
    %v3903 = vunpack.c.h.b16 %v2629
    %v3904 = vunpack.c.l.b16 %v2630
    %v3905 = vunpack.c.h.b16 %v2630
    %v3906 = vunpack.c.l.b16 %v2631
    %v3907 = vunpack.c.h.b16 %v2631
    %v3908 = vunpack.c.l.b16 %v2632
    %v3909 = vunpack.c.h.b16 %v2632
    %v3910 = vunpack.c.l.b16 %v2633
    %v3911 = vunpack.c.h.b16 %v2633
    %v3912 = vunpack.c.l.b16 %v2634
    %v3913 = vunpack.c.h.b16 %v2634
    %v3914 = vunpack.c.l.b16 %v2635
    %v3915 = vunpack.c.h.b16 %v2635
    %v3916 = vunpack.c.l.b16 %v2636
    %v3917 = vunpack.c.h.b16 %v2636
    %v3918 = vunpack.c.l.b16 %v2637
    %v3919 = vunpack.c.h.b16 %v2637
    %v3920 = vunpack.c.l.b16 %v2638
    %v3921 = vunpack.c.h.b16 %v2638
    %v3922 = vunpack.c.l.b16 %v2639
    %v3923 = vunpack.c.h.b16 %v2639
    %v3924 = vunpack.c.l.b16 %v2640
    %v3925 = vunpack.c.h.b16 %v2640
    %v3926 = vunpack.c.l.b16 %v2641
    %v3927 = vunpack.c.h.b16 %v2641
    %v3928 = vunpack.c.l.b16 %v2642
    %v3929 = vunpack.c.h.b16 %v2642
    %v3930 = vunpack.c.l.b16 %v2643
    %v3931 = vunpack.c.h.b16 %v2643
    %v3932 = vunpack.c.l.b16 %v2644
    %v3933 = vunpack.c.h.b16 %v2644
    %v3934 = vunpack.c.l.b16 %v2645
    %v3935 = vunpack.c.h.b16 %v2645
    %v3936 = vunpack.c.l.b16 %v2646
    %v3937 = vunpack.c.h.b16 %v2646
    %v3938 = vunpack.c.l.b16 %v2647
    %v3939 = vunpack.c.h.b16 %v2647
    %v3940 = vunpack.c.l.b16 %v2648
    %v3941 = vunpack.c.h.b16 %v2648
    %v3942 = vunpack.c.l.b16 %v2649
    %v3943 = vunpack.c.h.b16 %v2649
    %v3944 = vunpack.c.l.b16 %v2650
    %v3945 = vunpack.c.h.b16 %v2650
    %v3946 = vunpack.c.l.b16 %v2651
    %v3947 = vunpack.c.h.b16 %v2651
    %v3948 = vunpack.c.l.b16 %v2652
    %v3949 = vunpack.c.h.b16 %v2652
    %v3950 = vunpack.c.l.b16 %v2653
    %v3951 = vunpack.c.h.b16 %v2653
    %v3952 = vunpack.c.l.b16 %v2654
    %v3953 = vunpack.c.h.b16 %v2654
    %v3954 = vunpack.c.l.b16 %v2655
    %v3955 = vunpack.c.h.b16 %v2655
    %v3956 = vunpack.c.l.b16 %v2656
    %v3957 = vunpack.c.h.b16 %v2656
    %v3958 = vunpack.c.l.b16 %v2657
    %v3959 = vunpack.c.h.b16 %v2657
    %v3960 = vunpack.c.l.b16 %v2658
    %v3961 = vunpack.c.h.b16 %v2658
    %v3962 = vunpack.c.l.b16 %v2659
    %v3963 = vunpack.c.h.b16 %v2659
    %v3964 = vunpack.c.l.b16 %v2660
    %v3965 = vunpack.c.h.b16 %v2660
    %v3966 = vunpack.c.l.b16 %v2661
    %v3967 = vunpack.c.h.b16 %v2661
    %v3968 = vunpack.c.l.b16 %v2662
    %v3969 = vunpack.c.h.b16 %v2662
    %v3970 = vunpack.c.l.b16 %v2663
    %v3971 = vunpack.c.h.b16 %v2663
    %v3972 = vunpack.c.l.b16 %v2664
    %v3973 = vunpack.c.h.b16 %v2664
    %v3974 = vunpack.c.l.b16 %v2665
    %v3975 = vunpack.c.h.b16 %v2665
    %v3976 = vunpack.c.l.b16 %v2666
    %v3977 = vunpack.c.h.b16 %v2666
    %v3978 = vunpack.c.l.b16 %v2667
    %v3979 = vunpack.c.h.b16 %v2667
    %v3980 = vunpack.c.l.b16 %v2668
    %v3981 = vunpack.c.h.b16 %v2668
    %v3982 = vunpack.c.l.b16 %v2669
    %v3983 = vunpack.c.h.b16 %v2669
    %v3984 = vunpack.c.l.b16 %v2670
    %v3985 = vunpack.c.h.b16 %v2670
    %v3986 = vunpack.c.l.b16 %v2671
    %v3987 = vunpack.c.h.b16 %v2671
    %v3988 = vunpack.c.l.b16 %v2672
    %v3989 = vunpack.c.h.b16 %v2672
    %v3990 = vunpack.c.l.b16 %v2673
    %v3991 = vunpack.c.h.b16 %v2673
    %v3992 = vunpack.c.l.b16 %v2674
    %v3993 = vunpack.c.h.b16 %v2674
    %v3994 = vunpack.c.l.b16 %v2675
    %v3995 = vunpack.c.h.b16 %v2675
    %v3996 = vunpack.c.l.b16 %v2676
    %v3997 = vunpack.c.h.b16 %v2676
    %v3998 = vunpack.c.l.b16 %v2677
    %v3999 = vunpack.c.h.b16 %v2677
    %v4000 = vunpack.c.l.b16 %v2678
    %v4001 = vunpack.c.h.b16 %v2678
    %v4002 = vunpack.c.l.b16 %v2679
    %v4003 = vunpack.c.h.b16 %v2679
    %v4004 = vunpack.c.l.b16 %v2680
    %v4005 = vunpack.c.h.b16 %v2680
    %v4006 = vunpack.c.l.b16 %v2681
    %v4007 = vunpack.c.h.b16 %v2681
    %v4008 = vunpack.c.l.b16 %v2682
    %v4009 = vunpack.c.h.b16 %v2682
    %v4010 = vunpack.c.l.b16 %v2683
    %v4011 = vunpack.c.h.b16 %v2683
    %v4012 = vunpack.c.l.b16 %v2684
    %v4013 = vunpack.c.h.b16 %v2684
    %v4014 = vunpack.c.l.b16 %v2685
    %v4015 = vunpack.c.h.b16 %v2685
    %v4016 = vunpack.c.l.b16 %v2686
    %v4017 = vunpack.c.h.b16 %v2686
    %v4018 = vunpack.c.l.b16 %v2687
    %v4019 = vunpack.c.h.b16 %v2687
    %v4020 = vunpack.c.l.b16 %v2688
    %v4021 = vunpack.c.h.b16 %v2688
    %v4022 = vunpack.c.l.b16 %v2689
    %v4023 = vunpack.c.h.b16 %v2689
    %v4024 = vunpack.c.l.b16 %v2690
    %v4025 = vunpack.c.h.b16 %v2690
    %v4026 = vunpack.c.l.b16 %v2691
    %v4027 = vunpack.c.h.b16 %v2691
    %v4028 = vunpack.c.l.b16 %v2692
    %v4029 = vunpack.c.h.b16 %v2692
    %v4030 = vunpack.c.l.b16 %v2693
    %v4031 = vunpack.c.h.b16 %v2693
    %v4032 = vunpack.c.l.b16 %v2694
    %v4033 = vunpack.c.h.b16 %v2694
    %v4034 = vunpack.c.l.b16 %v2695
    %v4035 = vunpack.c.h.b16 %v2695
    %v4036 = vunpack.c.l.b16 %v2696
    %v4037 = vunpack.c.h.b16 %v2696
    %v4038 = vunpack.c.l.b16 %v2697
    %v4039 = vunpack.c.h.b16 %v2697
    %v4040 = vunpack.c.l.b16 %v2698
    %v4041 = vunpack.c.h.b16 %v2698
    %v4042 = vunpack.c.l.b16 %v2699
    %v4043 = vunpack.c.h.b16 %v2699
    %v4044 = vunpack.c.l.b16 %v2700
    %v4045 = vunpack.c.h.b16 %v2700
    %v4046 = vunpack.c.l.b16 %v2701
    %v4047 = vunpack.c.h.b16 %v2701
    %v4048 = vunpack.c.l.b16 %v2702
    %v4049 = vunpack.c.h.b16 %v2702
    %v4050 = vunpack.c.l.b16 %v2703
    %v4051 = vunpack.c.h.b16 %v2703
    %v4052 = vunpack.c.l.b16 %v2704
    %v4053 = vunpack.c.h.b16 %v2704
    %v4054 = vunpack.c.l.b16 %v2705
    %v4055 = vunpack.c.h.b16 %v2705
    %v4056 = vunpack.c.l.b16 %v2706
    %v4057 = vunpack.c.h.b16 %v2706
    %v4058 = vunpack.c.l.b16 %v2707
    %v4059 = vunpack.c.h.b16 %v2707
    %v4060 = vunpack.c.l.b16 %v2708
    %v4061 = vunpack.c.h.b16 %v2708
    %v4062 = vunpack.c.l.b16 %v2709
    %v4063 = vunpack.c.h.b16 %v2709
    %v4064 = vunpack.c.l.b16 %v2710
    %v4065 = vunpack.c.h.b16 %v2710
    %v4066 = vunpack.c.l.b16 %v2711
    %v4067 = vunpack.c.h.b16 %v2711
    %v4068 = vunpack.c.l.b16 %v2712
    %v4069 = vunpack.c.h.b16 %v2712
    %v4070 = vunpack.c.l.b16 %v2713
    %v4071 = vunpack.c.h.b16 %v2713
    %v4072 = vunpack.c.l.b16 %v2714
    %v4073 = vunpack.c.h.b16 %v2714
    %v4074 = vunpack.c.l.b16 %v2715
    %v4075 = vunpack.c.h.b16 %v2715
    %v4076 = vunpack.c.l.b16 %v2716
    %v4077 = vunpack.c.h.b16 %v2716
    %v4078 = vunpack.c.l.b16 %v2717
    %v4079 = vunpack.c.h.b16 %v2717
    %v4080 = vunpack.c.l.b16 %v2718
    %v4081 = vunpack.c.h.b16 %v2718
    %v4082 = vunpack.c.l.b16 %v2719
    %v4083 = vunpack.c.h.b16 %v2719
    %v4084 = vunpack.c.l.b16 %v2720
    %v4085 = vunpack.c.h.b16 %v2720
    %v4086 = vunpack.c.l.b16 %v2721
    %v4087 = vunpack.c.h.b16 %v2721
    %v4088 = vunpack.c.l.b16 %v2722
    %v4089 = vunpack.c.h.b16 %v2722
    %v4090 = vunpack.c.l.b16 %v2723
    %v4091 = vunpack.c.h.b16 %v2723
    %v4092 = vunpack.c.l.b16 %v2724
    %v4093 = vunpack.c.h.b16 %v2724
    %v4094 = vunpack.c.l.b16 %v2725
    %v4095 = vunpack.c.h.b16 %v2725
    %v4096 = vunpack.c.l.b16 %v2726
    %v4097 = vunpack.c.h.b16 %v2726
    %v4098 = vunpack.c.l.b16 %v2727
    %v4099 = vunpack.c.h.b16 %v2727
    %v4100 = vunpack.c.l.b16 %v2728
    %v4101 = vunpack.c.h.b16 %v2728
    %v4102 = vunpack.c.l.b16 %v2729
    %v4103 = vunpack.c.h.b16 %v2729
    %v4104 = vunpack.c.l.b16 %v2730
    %v4105 = vunpack.c.h.b16 %v2730
    %v4106 = vunpack.c.l.b16 %v2731
    %v4107 = vunpack.c.h.b16 %v2731
    %v4108 = vunpack.c.l.b16 %v2732
    %v4109 = vunpack.c.h.b16 %v2732
    %v4110 = vunpack.c.l.b16 %v2733
    %v4111 = vunpack.c.h.b16 %v2733
    %v4112 = vunpack.c.l.b16 %v2734
    %v4113 = vunpack.c.h.b16 %v2734
    %v4114 = vunpack.c.l.b16 %v2735
    %v4115 = vunpack.c.h.b16 %v2735
    %v4116 = vunpack.c.l.b16 %v2736
    %v4117 = vunpack.c.h.b16 %v2736
    %v4118 = vunpack.c.l.b16 %v2737
    %v4119 = vunpack.c.h.b16 %v2737
    %v4120 = vunpack.c.l.b16 %v2738
    %v4121 = vunpack.c.h.b16 %v2738
    %v4122 = vunpack.c.l.b16 %v2739
    %v4123 = vunpack.c.h.b16 %v2739
    %v4124 = vunpack.c.l.b16 %v2740
    %v4125 = vunpack.c.h.b16 %v2740
    %v4126 = vunpack.c.l.b16 %v2741
    %v4127 = vunpack.c.h.b16 %v2741
    %v4128 = vunpack.c.l.b16 %v2742
    %v4129 = vunpack.c.h.b16 %v2742
    %v4130 = vunpack.c.l.b16 %v2743
    %v4131 = vunpack.c.h.b16 %v2743
    %v4132 = vunpack.c.l.b16 %v2744
    %v4133 = vunpack.c.h.b16 %v2744
    %v4134 = vunpack.c.l.b16 %v2745
    %v4135 = vunpack.c.h.b16 %v2745
    %v4136 = vunpack.c.l.b16 %v2746
    %v4137 = vunpack.c.h.b16 %v2746
    %v4138 = vunpack.c.l.b16 %v2747
    %v4139 = vunpack.c.h.b16 %v2747
    %v4140 = vunpack.c.l.b16 %v2748
    %v4141 = vunpack.c.h.b16 %v2748
    %v4142 = vunpack.c.l.b16 %v2749
    %v4143 = vunpack.c.h.b16 %v2749
    %v4144 = vunpack.c.l.b16 %v2750
    %v4145 = vunpack.c.h.b16 %v2750
    %v4146 = vunpack.c.l.b16 %v2751
    %v4147 = vunpack.c.h.b16 %v2751
    %v4148 = vunpack.c.l.b16 %v2752
    %v4149 = vunpack.c.h.b16 %v2752
    %v4150 = vunpack.c.l.b16 %v2753
    %v4151 = vunpack.c.h.b16 %v2753
    %v4152 = vunpack.c.l.b16 %v2754
    %v4153 = vunpack.c.h.b16 %v2754
    %v4154 = vunpack.c.l.b16 %v2755
    %v4155 = vunpack.c.h.b16 %v2755
    %v4156 = vunpack.c.l.b16 %v2756
    %v4157 = vunpack.c.h.b16 %v2756
    %v4158 = vunpack.c.l.b16 %v2757
    %v4159 = vunpack.c.h.b16 %v2757
    %v4160 = vunpack.c.l.b16 %v2758
    %v4161 = vunpack.c.h.b16 %v2758
    %v4162 = vunpack.c.l.b16 %v2759
    %v4163 = vunpack.c.h.b16 %v2759
    %v4164 = vunpack.c.l.b16 %v2760
    %v4165 = vunpack.c.h.b16 %v2760
    %v4166 = vunpack.c.l.b16 %v2761
    %v4167 = vunpack.c.h.b16 %v2761
    %v4168 = vunpack.c.l.b16 %v2762
    %v4169 = vunpack.c.h.b16 %v2762
    %v4170 = vunpack.c.l.b16 %v2763
    %v4171 = vunpack.c.h.b16 %v2763
    %v4172 = vunpack.c.l.b16 %v2764
    %v4173 = vunpack.c.h.b16 %v2764
    %v4174 = vunpack.c.l.b16 %v2765
    %v4175 = vunpack.c.h.b16 %v2765
    %v4176 = vunpack.c.l.b16 %v2766
    %v4177 = vunpack.c.h.b16 %v2766
    %v4178 = vunpack.c.l.b16 %v2767
    %v4179 = vunpack.c.h.b16 %v2767
    %v4180 = vunpack.c.l.b16 %v2768
    %v4181 = vunpack.c.h.b16 %v2768
    %v4182 = vunpack.c.l.b16 %v2769
    %v4183 = vunpack.c.h.b16 %v2769
    %v4184 = vunpack.c.l.b16 %v2770
    %v4185 = vunpack.c.h.b16 %v2770
    %v4186 = vunpack.c.l.b16 %v2771
    %v4187 = vunpack.c.h.b16 %v2771
    %v4188 = vunpack.c.l.b16 %v2772
    %v4189 = vunpack.c.h.b16 %v2772
    %v4190 = vunpack.c.l.b16 %v2773
    %v4191 = vunpack.c.h.b16 %v2773
    %v4192 = vunpack.c.l.b16 %v2774
    %v4193 = vunpack.c.h.b16 %v2774
    %v4194 = vunpack.c.l.b16 %v2775
    %v4195 = vunpack.c.h.b16 %v2775
    %v4196 = vunpack.c.l.b16 %v2776
    %v4197 = vunpack.c.h.b16 %v2776
    %v4198 = vunpack.c.l.b16 %v2777
    %v4199 = vunpack.c.h.b16 %v2777
    %v4200 = vunpack.c.l.b16 %v2778
    %v4201 = vunpack.c.h.b16 %v2778
    %v4202 = vunpack.c.l.b16 %v2779
    %v4203 = vunpack.c.h.b16 %v2779
    %v4204 = vunpack.c.l.b16 %v2780
    %v4205 = vunpack.c.h.b16 %v2780
    %v4206 = vunpack.c.l.b16 %v2781
    %v4207 = vunpack.c.h.b16 %v2781
    %v4208 = vunpack.c.l.b16 %v2782
    %v4209 = vunpack.c.h.b16 %v2782
    %v4210 = vunpack.c.l.b16 %v2783
    %v4211 = vunpack.c.h.b16 %v2783
    %v4212 = vunpack.c.l.b16 %v2784
    %v4213 = vunpack.c.h.b16 %v2784
    %v4214 = vunpack.c.l.b16 %v2785
    %v4215 = vunpack.c.h.b16 %v2785
    %v4216 = vunpack.c.l.b16 %v2786
    %v4217 = vunpack.c.h.b16 %v2786
    %v4218 = vunpack.c.l.b16 %v2787
    %v4219 = vunpack.c.h.b16 %v2787
    %v4220 = vunpack.c.l.b16 %v2788
    %v4221 = vunpack.c.h.b16 %v2788
    %v4222 = vunpack.c.l.b16 %v2789
    %v4223 = vunpack.c.h.b16 %v2789
    %v4224 = vunpack.c.l.b16 %v2790
    %v4225 = vunpack.c.h.b16 %v2790
    %v4226 = vunpack.c.l.b16 %v2791
    %v4227 = vunpack.c.h.b16 %v2791
    %v4228 = vunpack.c.l.b16 %v2792
    %v4229 = vunpack.c.h.b16 %v2792
    %v4230 = vunpack.c.l.b16 %v2793
    %v4231 = vunpack.c.h.b16 %v2793
    %v4232 = vunpack.c.l.b16 %v2794
    %v4233 = vunpack.c.h.b16 %v2794
    %v4234 = vunpack.c.l.b16 %v2795
    %v4235 = vunpack.c.h.b16 %v2795
    %v4236 = vunpack.c.l.b16 %v2796
    %v4237 = vunpack.c.h.b16 %v2796
    %v4238 = vunpack.c.l.b16 %v2797
    %v4239 = vunpack.c.h.b16 %v2797
    %v4240 = vunpack.c.l.b16 %v2798
    %v4241 = vunpack.c.h.b16 %v2798
    %v4242 = vunpack.c.l.b16 %v2799
    %v4243 = vunpack.c.h.b16 %v2799
    %v4244 = vunpack.c.l.b16 %v2800
    %v4245 = vunpack.c.h.b16 %v2800
    %v4246 = vunpack.c.l.b16 %v2801
    %v4247 = vunpack.c.h.b16 %v2801
    %v4248 = vunpack.c.l.b16 %v2802
    %v4249 = vunpack.c.h.b16 %v2802
    %v4250 = vunpack.c.l.b16 %v2803
    %v4251 = vunpack.c.h.b16 %v2803
    %v4252 = vunpack.c.l.b16 %v2804
    %v4253 = vunpack.c.h.b16 %v2804
    %v4254 = vunpack.c.l.b16 %v2805
    %v4255 = vunpack.c.h.b16 %v2805
    %v4256 = vunpack.c.l.b16 %v2806
    %v4257 = vunpack.c.h.b16 %v2806
    %v4258 = vunpack.c.l.b16 %v2807
    %v4259 = vunpack.c.h.b16 %v2807
    %v4260 = vunpack.c.l.b16 %v2808
    %v4261 = vunpack.c.h.b16 %v2808
    %v4262 = vunpack.c.l.b16 %v2809
    %v4263 = vunpack.c.h.b16 %v2809
    %v4264 = vunpack.c.l.b16 %v2810
    %v4265 = vunpack.c.h.b16 %v2810
    %v4266 = vunpack.c.l.b16 %v2811
    %v4267 = vunpack.c.h.b16 %v2811
    %v4268 = vunpack.c.l.b16 %v2812
    %v4269 = vunpack.c.h.b16 %v2812
    %v4270 = vunpack.c.l.b16 %v2813
    %v4271 = vunpack.c.h.b16 %v2813
    %v4272 = vunpack.c.l.b16 %v2814
    %v4273 = vunpack.c.h.b16 %v2814
    %v4274 = vunpack.c.l.b16 %v2815
    %v4275 = vunpack.c.h.b16 %v2815
    %v4276 = vunpack.c.l.b16 %v2816
    %v4277 = vunpack.c.h.b16 %v2816
    %v4278 = vunpack.c.l.b16 %v2817
    %v4279 = vunpack.c.h.b16 %v2817
    %v4280 = vunpack.c.l.b16 %v2818
    %v4281 = vunpack.c.h.b16 %v2818
    %v4282 = vunpack.c.l.b16 %v2819
    %v4283 = vunpack.c.h.b16 %v2819
    %v4284 = vunpack.c.l.b16 %v2820
    %v4285 = vunpack.c.h.b16 %v2820
    %v4286 = vunpack.c.l.b16 %v2821
    %v4287 = vunpack.c.h.b16 %v2821
    %v4288 = vunpack.c.l.b16 %v2822
    %v4289 = vunpack.c.h.b16 %v2822
    %v4290 = vunpack.c.l.b16 %v2823
    %v4291 = vunpack.c.h.b16 %v2823
    %v4292 = vunpack.c.l.b16 %v2824
    %v4293 = vunpack.c.h.b16 %v2824
    %v4294 = vunpack.c.l.b16 %v2825
    %v4295 = vunpack.c.h.b16 %v2825
    %v4296 = vunpack.c.l.b16 %v2826
    %v4297 = vunpack.c.h.b16 %v2826
    %v4298 = vunpack.c.l.b16 %v2827
    %v4299 = vunpack.c.h.b16 %v2827
    %v4300 = vunpack.c.l.b16 %v2828
    %v4301 = vunpack.c.h.b16 %v2828
    %v4302 = vunpack.c.l.b16 %v2829
    %v4303 = vunpack.c.h.b16 %v2829
    %v4304 = vunpack.c.l.b16 %v2830
    %v4305 = vunpack.c.h.b16 %v2830
    %v4306 = vunpack.c.l.b16 %v2831
    %v4307 = vunpack.c.h.b16 %v2831
    %v4308 = vunpack.c.l.b16 %v2832
    %v4309 = vunpack.c.h.b16 %v2832
    %v4310 = vunpack.c.l.b16 %v2833
    %v4311 = vunpack.c.h.b16 %v2833
    %v4312 = vunpack.c.l.b16 %v2834
    %v4313 = vunpack.c.h.b16 %v2834
    %v4314 = vunpack.c.l.b16 %v2835
    %v4315 = vunpack.c.h.b16 %v2835
    %v4316 = vunpack.c.l.b16 %v2836
    %v4317 = vunpack.c.h.b16 %v2836
    %v4318 = vunpack.c.l.b16 %v2837
    %v4319 = vunpack.c.h.b16 %v2837
    %v4320 = vunpack.c.l.b16 %v2838
    %v4321 = vunpack.c.h.b16 %v2838
    %v4322 = vunpack.c.l.b16 %v2839
    %v4323 = vunpack.c.h.b16 %v2839
    %v4324 = vunpack.c.l.b16 %v2840
    %v4325 = vunpack.c.h.b16 %v2840
    %v4326 = vunpack.c.l.b16 %v2841
    %v4327 = vunpack.c.h.b16 %v2841
    %v4328 = vunpack.c.l.b16 %v2842
    %v4329 = vunpack.c.h.b16 %v2842
    %v4330 = vunpack.c.l.b16 %v2843
    %v4331 = vunpack.c.h.b16 %v2843
    %v4332 = vunpack.c.l.b16 %v2844
    %v4333 = vunpack.c.h.b16 %v2844
    %v4334 = vunpack.c.l.b16 %v2845
    %v4335 = vunpack.c.h.b16 %v2845
    %v4336 = vunpack.c.l.b16 %v2846
    %v4337 = vunpack.c.h.b16 %v2846
    %v4338 = vunpack.c.l.b16 %v2847
    %v4339 = vunpack.c.h.b16 %v2847
    %v4340 = vunpack.c.l.b16 %v2848
    %v4341 = vunpack.c.h.b16 %v2848
    %v4342 = vunpack.c.l.b16 %v2849
    %v4343 = vunpack.c.h.b16 %v2849
    %v4344 = vunpack.c.l.b16 %v2850
    %v4345 = vunpack.c.h.b16 %v2850
    %v4346 = vunpack.c.l.b16 %v2851
    %v4347 = vunpack.c.h.b16 %v2851
    %v4348 = vunpack.c.l.b16 %v2852
    %v4349 = vunpack.c.h.b16 %v2852
    %v4350 = vunpack.c.l.b16 %v2853
    %v4351 = vunpack.c.h.b16 %v2853
    %v4352 = vunpack.c.l.b16 %v2854
    %v4353 = vunpack.c.h.b16 %v2854
    %v4354 = vunpack.c.l.b16 %v2855
    %v4355 = vunpack.c.h.b16 %v2855
    %v4356 = vunpack.c.l.b16 %v2856
    %v4357 = vunpack.c.h.b16 %v2856
    %v4358 = vunpack.c.l.b16 %v2857
    %v4359 = vunpack.c.h.b16 %v2857
    %v4360 = vunpack.c.l.b16 %v2858
    %v4361 = vunpack.c.h.b16 %v2858
    %v4362 = vunpack.c.l.b16 %v2859
    %v4363 = vunpack.c.h.b16 %v2859
    %v4364 = vunpack.c.l.b16 %v2860
    %v4365 = vunpack.c.h.b16 %v2860
    %v4366 = vunpack.c.l.b16 %v2861
    %v4367 = vunpack.c.h.b16 %v2861
    %v4368 = vunpack.c.l.b16 %v2862
    %v4369 = vunpack.c.h.b16 %v2862
    %v4370 = vunpack.c.l.b16 %v2863
    %v4371 = vunpack.c.h.b16 %v2863
    %v4372 = vunpack.c.l.b16 %v2864
    %v4373 = vunpack.c.h.b16 %v2864
    %v4374 = vunpack.c.l.b16 %v2865
    %v4375 = vunpack.c.h.b16 %v2865
    %v4376 = vunpack.c.l.b16 %v2866
    %v4377 = vunpack.c.h.b16 %v2866
    %v4378 = vunpack.c.l.b16 %v2867
    %v4379 = vunpack.c.h.b16 %v2867
    %v4380 = vunpack.c.l.b16 %v2868
    %v4381 = vunpack.c.h.b16 %v2868
    %v4382 = vunpack.c.l.b16 %v2869
    %v4383 = vunpack.c.h.b16 %v2869
    %v4384 = vunpack.c.l.b16 %v2870
    %v4385 = vunpack.c.h.b16 %v2870
    %v4386 = vunpack.c.l.b16 %v2871
    %v4387 = vunpack.c.h.b16 %v2871
    %v4388 = vunpack.c.l.b16 %v2872
    %v4389 = vunpack.c.h.b16 %v2872
    %v4390 = vunpack.c.l.b16 %v2873
    %v4391 = vunpack.c.h.b16 %v2873
    %v4392 = vunpack.c.l.b16 %v2874
    %v4393 = vunpack.c.h.b16 %v2874
    %v4394 = vunpack.c.l.b16 %v2875
    %v4395 = vunpack.c.h.b16 %v2875
    %v4396 = vunpack.c.l.b16 %v2876
    %v4397 = vunpack.c.h.b16 %v2876
    %v4398 = vunpack.c.l.b16 %v2877
    %v4399 = vunpack.c.h.b16 %v2877
    %v4400 = vunpack.c.l.b16 %v2878
    %v4401 = vunpack.c.h.b16 %v2878
    %v4402 = vunpack.c.l.b16 %v2879
    %v4403 = vunpack.c.h.b16 %v2879
    %v4404 = vunpack.c.l.b16 %v2880
    %v4405 = vunpack.c.h.b16 %v2880
    %v4406 = vunpack.c.l.b16 %v2881
    %v4407 = vunpack.c.h.b16 %v2881
    %v4408 = vunpack.c.l.b16 %v2882
    %v4409 = vunpack.c.h.b16 %v2882
    %v4410 = vunpack.c.l.b16 %v2883
    %v4411 = vunpack.c.h.b16 %v2883
    %v4412 = vunpack.c.l.b16 %v2884
    %v4413 = vunpack.c.h.b16 %v2884
    %v4414 = vunpack.c.l.b16 %v2885
    %v4415 = vunpack.c.h.b16 %v2885
    %v4416 = vunpack.c.l.b16 %v2886
    %v4417 = vunpack.c.h.b16 %v2886
    %v4418 = vunpack.c.l.b16 %v2887
    %v4419 = vunpack.c.h.b16 %v2887
    %v4420 = vunpack.c.l.b16 %v2888
    %v4421 = vunpack.c.h.b16 %v2888
    %v4422 = vunpack.c.l.b16 %v2889
    %v4423 = vunpack.c.h.b16 %v2889
    %v4424 = vunpack.c.l.b16 %v2890
    %v4425 = vunpack.c.h.b16 %v2890
    %v4426 = vunpack.c.l.b16 %v2891
    %v4427 = vunpack.c.h.b16 %v2891
    %v4428 = vunpack.c.l.b16 %v2892
    %v4429 = vunpack.c.h.b16 %v2892
    %v4430 = vunpack.c.l.b16 %v2893
    %v4431 = vunpack.c.h.b16 %v2893
    %v4432 = vunpack.c.l.b16 %v2894
    %v4433 = vunpack.c.h.b16 %v2894
    %v4434 = vunpack.c.l.b16 %v2895
    %v4435 = vunpack.c.h.b16 %v2895
    %v4436 = vunpack.c.l.b16 %v2896
    %v4437 = vunpack.c.h.b16 %v2896
    %v4438 = vunpack.c.l.b16 %v2897
    %v4439 = vunpack.c.h.b16 %v2897
    %v4440 = vunpack.c.l.b16 %v2898
    %v4441 = vunpack.c.h.b16 %v2898
    %v4442 = vunpack.c.l.b16 %v2899
    %v4443 = vunpack.c.h.b16 %v2899
    %v4444 = vunpack.c.l.b16 %v2900
    %v4445 = vunpack.c.h.b16 %v2900
    %v4446 = vunpack.c.l.b16 %v2901
    %v4447 = vunpack.c.h.b16 %v2901
    %v4448 = vunpack.c.l.b16 %v2902
    %v4449 = vunpack.c.h.b16 %v2902
    %v4450 = vunpack.c.l.b16 %v2903
    %v4451 = vunpack.c.h.b16 %v2903
    %v4452 = vunpack.c.l.b16 %v2904
    %v4453 = vunpack.c.h.b16 %v2904
    %v4454 = vunpack.c.l.b16 %v2905
    %v4455 = vunpack.c.h.b16 %v2905
    %v4456 = vunpack.c.l.b16 %v2906
    %v4457 = vunpack.c.h.b16 %v2906
    %v4458 = vunpack.c.l.b16 %v2907
    %v4459 = vunpack.c.h.b16 %v2907
    %v4460 = vunpack.c.l.b16 %v2908
    %v4461 = vunpack.c.h.b16 %v2908
    %v4462 = vunpack.c.l.b16 %v2909
    %v4463 = vunpack.c.h.b16 %v2909
    %v4464 = vunpack.c.l.b16 %v2910
    %v4465 = vunpack.c.h.b16 %v2910
    %v4466 = vunpack.c.l.b16 %v2911
    %v4467 = vunpack.c.h.b16 %v2911
    %v4468 = vunpack.c.l.b16 %v2912
    %v4469 = vunpack.c.h.b16 %v2912
    %v4470 = vunpack.c.l.b16 %v2913
    %v4471 = vunpack.c.h.b16 %v2913
    %v4472 = vunpack.c.l.b16 %v2914
    %v4473 = vunpack.c.h.b16 %v2914
    %v4474 = vunpack.c.l.b16 %v2915
    %v4475 = vunpack.c.h.b16 %v2915
    %v4476 = vunpack.c.l.b16 %v2916
    %v4477 = vunpack.c.h.b16 %v2916
    %v4478 = vunpack.c.l.b16 %v2917
    %v4479 = vunpack.c.h.b16 %v2917
    %v4480 = vunpack.c.l.b16 %v2918
    %v4481 = vunpack.c.h.b16 %v2918
    %v4482 = vunpack.c.l.b16 %v2919
    %v4483 = vunpack.c.h.b16 %v2919
    %v4484 = vunpack.c.l.b16 %v2920
    %v4485 = vunpack.c.h.b16 %v2920
    %v4486 = vunpack.c.l.b16 %v2921
    %v4487 = vunpack.c.h.b16 %v2921
    %v4488 = vunpack.c.l.b16 %v2922
    %v4489 = vunpack.c.h.b16 %v2922
    %v4490 = vunpack.c.l.b16 %v2923
    %v4491 = vunpack.c.h.b16 %v2923
    %v4492 = vunpack.c.l.b16 %v2924
    %v4493 = vunpack.c.h.b16 %v2924
    %v4494 = vunpack.c.l.b16 %v2925
    %v4495 = vunpack.c.h.b16 %v2925
    %v4496 = vunpack.c.l.b16 %v2926
    %v4497 = vunpack.c.h.b16 %v2926
    %v4498 = vunpack.c.l.b16 %v2927
    %v4499 = vunpack.c.h.b16 %v2927
    %v4500 = vunpack.c.l.b16 %v2928
    %v4501 = vunpack.c.h.b16 %v2928
    %v4502 = vunpack.c.l.b16 %v2929
    %v4503 = vunpack.c.h.b16 %v2929
    %v4504 = vunpack.c.l.b16 %v2930
    %v4505 = vunpack.c.h.b16 %v2930
    %v4506 = vunpack.c.l.b16 %v2931
    %v4507 = vunpack.c.h.b16 %v2931
    %v4508 = vunpack.c.l.b16 %v2932
    %v4509 = vunpack.c.h.b16 %v2932
    %v4510 = vunpack.c.l.b16 %v2933
    %v4511 = vunpack.c.h.b16 %v2933
    %v4512 = vpack.c.b16 %v3496, %v3488
    %v4513 = vpack.c.b16 %v3497, %v3489
    %v4514 = vpack.c.b16 %v3498, %v3490
    %v4515 = vpack.c.b16 %v3499, %v3491
    %v4516 = vpack.c.b16 %v3500, %v3492
    %v4517 = vpack.c.b16 %v3501, %v3493
    %v4518 = vpack.c.b16 %v3502, %v3494
    %v4519 = vpack.c.b16 %v3503, %v3495
    %v4520 = vpack.c.b16 %v3512, %v3504
    %v4521 = vpack.c.b16 %v3513, %v3505
    %v4522 = vpack.c.b16 %v3514, %v3506
    %v4523 = vpack.c.b16 %v3515, %v3507
    %v4524 = vpack.c.b16 %v3516, %v3508
    %v4525 = vpack.c.b16 %v3517, %v3509
    %v4526 = vpack.c.b16 %v3518, %v3510
    %v4527 = vpack.c.b16 %v3519, %v3511
    %v4528 = vpack.c.b16 %v3528, %v3520
    %v4529 = vpack.c.b16 %v3529, %v3521
    %v4530 = vpack.c.b16 %v3530, %v3522
    %v4531 = vpack.c.b16 %v3531, %v3523
    %v4532 = vpack.c.b16 %v3532, %v3524
    %v4533 = vpack.c.b16 %v3533, %v3525
    %v4534 = vpack.c.b16 %v3534, %v3526
    %v4535 = vpack.c.b16 %v3535, %v3527
    %v4536 = vpack.c.b16 %v3544, %v3536
    %v4537 = vpack.c.b16 %v3545, %v3537
    %v4538 = vpack.c.b16 %v3546, %v3538
    %v4539 = vpack.c.b16 %v3547, %v3539
    %v4540 = vpack.c.b16 %v3548, %v3540
    %v4541 = vpack.c.b16 %v3549, %v3541
    %v4542 = vpack.c.b16 %v3550, %v3542
    %v4543 = vpack.c.b16 %v3551, %v3543
    %v4544 = vpack.c.b16 %v3560, %v3552
    %v4545 = vpack.c.b16 %v3561, %v3553
    %v4546 = vpack.c.b16 %v3562, %v3554
    %v4547 = vpack.c.b16 %v3563, %v3555
    %v4548 = vpack.c.b16 %v3564, %v3556
    %v4549 = vpack.c.b16 %v3565, %v3557
    %v4550 = vpack.c.b16 %v3566, %v3558
    %v4551 = vpack.c.b16 %v3567, %v3559
    %v4552 = vpack.c.b16 %v3576, %v3568
    %v4553 = vpack.c.b16 %v3577, %v3569
    %v4554 = vpack.c.b16 %v3578, %v3570
    %v4555 = vpack.c.b16 %v3579, %v3571
    %v4556 = vpack.c.b16 %v3580, %v3572
    %v4557 = vpack.c.b16 %v3581, %v3573
    %v4558 = vpack.c.b16 %v3582, %v3574
    %v4559 = vpack.c.b16 %v3583, %v3575
    %v4560 = vpack.c.b16 %v3592, %v3584
    %v4561 = vpack.c.b16 %v3593, %v3585
    %v4562 = vpack.c.b16 %v3594, %v3586
    %v4563 = vpack.c.b16 %v3595, %v3587
    %v4564 = vpack.c.b16 %v3596, %v3588
    %v4565 = vpack.c.b16 %v3597, %v3589
    %v4566 = vpack.c.b16 %v3598, %v3590
    %v4567 = vpack.c.b16 %v3599, %v3591
    %v4568 = vpack.c.b16 %v3608, %v3600
    %v4569 = vpack.c.b16 %v3609, %v3601
    %v4570 = vpack.c.b16 %v3610, %v3602
    %v4571 = vpack.c.b16 %v3611, %v3603
    %v4572 = vpack.c.b16 %v3612, %v3604
    %v4573 = vpack.c.b16 %v3613, %v3605
    %v4574 = vpack.c.b16 %v3614, %v3606
    %v4575 = vpack.c.b16 %v3615, %v3607
    %v4576 = vpack.c.b16 %v3624, %v3616
    %v4577 = vpack.c.b16 %v3625, %v3617
    %v4578 = vpack.c.b16 %v3626, %v3618
    %v4579 = vpack.c.b16 %v3627, %v3619
    %v4580 = vpack.c.b16 %v3628, %v3620
    %v4581 = vpack.c.b16 %v3629, %v3621
    %v4582 = vpack.c.b16 %v3630, %v3622
    %v4583 = vpack.c.b16 %v3631, %v3623
    %v4584 = vpack.c.b16 %v3640, %v3632
    %v4585 = vpack.c.b16 %v3641, %v3633
    %v4586 = vpack.c.b16 %v3642, %v3634
    %v4587 = vpack.c.b16 %v3643, %v3635
    %v4588 = vpack.c.b16 %v3644, %v3636
    %v4589 = vpack.c.b16 %v3645, %v3637
    %v4590 = vpack.c.b16 %v3646, %v3638
    %v4591 = vpack.c.b16 %v3647, %v3639
    %v4592 = vpack.c.b16 %v3656, %v3648
    %v4593 = vpack.c.b16 %v3657, %v3649
    %v4594 = vpack.c.b16 %v3658, %v3650
    %v4595 = vpack.c.b16 %v3659, %v3651
    %v4596 = vpack.c.b16 %v3660, %v3652
    %v4597 = vpack.c.b16 %v3661, %v3653
    %v4598 = vpack.c.b16 %v3662, %v3654
    %v4599 = vpack.c.b16 %v3663, %v3655
    %v4600 = vpack.c.b16 %v3672, %v3664
    %v4601 = vpack.c.b16 %v3673, %v3665
    %v4602 = vpack.c.b16 %v3674, %v3666
    %v4603 = vpack.c.b16 %v3675, %v3667
    %v4604 = vpack.c.b16 %v3676, %v3668
    %v4605 = vpack.c.b16 %v3677, %v3669
    %v4606 = vpack.c.b16 %v3678, %v3670
    %v4607 = vpack.c.b16 %v3679, %v3671
    %v4608 = vpack.c.b16 %v3688, %v3680
    %v4609 = vpack.c.b16 %v3689, %v3681
    %v4610 = vpack.c.b16 %v3690, %v3682
    %v4611 = vpack.c.b16 %v3691, %v3683
    %v4612 = vpack.c.b16 %v3692, %v3684
    %v4613 = vpack.c.b16 %v3693, %v3685
    %v4614 = vpack.c.b16 %v3694, %v3686
    %v4615 = vpack.c.b16 %v3695, %v3687
    %v4616 = vpack.c.b16 %v3704, %v3696
    %v4617 = vpack.c.b16 %v3705, %v3697
    %v4618 = vpack.c.b16 %v3706, %v3698
    %v4619 = vpack.c.b16 %v3707, %v3699
    %v4620 = vpack.c.b16 %v3708, %v3700
    %v4621 = vpack.c.b16 %v3709, %v3701
    %v4622 = vpack.c.b16 %v3710, %v3702
    %v4623 = vpack.c.b16 %v3711, %v3703
    %v4624 = vpack.c.b16 %v3720, %v3712
    %v4625 = vpack.c.b16 %v3721, %v3713
    %v4626 = vpack.c.b16 %v3722, %v3714
    %v4627 = vpack.c.b16 %v3723, %v3715
    %v4628 = vpack.c.b16 %v3724, %v3716
    %v4629 = vpack.c.b16 %v3725, %v3717
    %v4630 = vpack.c.b16 %v3726, %v3718
    %v4631 = vpack.c.b16 %v3727, %v3719
    %v4632 = vpack.c.b16 %v3736, %v3728
    %v4633 = vpack.c.b16 %v3737, %v3729
    %v4634 = vpack.c.b16 %v3738, %v3730
    %v4635 = vpack.c.b16 %v3739, %v3731
    %v4636 = vpack.c.b16 %v3740, %v3732
    %v4637 = vpack.c.b16 %v3741, %v3733
    %v4638 = vpack.c.b16 %v3742, %v3734
    %v4639 = vpack.c.b16 %v3743, %v3735
    %v4640 = vpack.c.b16 %v3752, %v3744
    %v4641 = vpack.c.b16 %v3753, %v3745
    %v4642 = vpack.c.b16 %v3754, %v3746
    %v4643 = vpack.c.b16 %v3755, %v3747
    %v4644 = vpack.c.b16 %v3756, %v3748
    %v4645 = vpack.c.b16 %v3757, %v3749
    %v4646 = vpack.c.b16 %v3758, %v3750
    %v4647 = vpack.c.b16 %v3759, %v3751
    %v4648 = vpack.c.b16 %v3768, %v3760
    %v4649 = vpack.c.b16 %v3769, %v3761
    %v4650 = vpack.c.b16 %v3770, %v3762
    %v4651 = vpack.c.b16 %v3771, %v3763
    %v4652 = vpack.c.b16 %v3772, %v3764
    %v4653 = vpack.c.b16 %v3773, %v3765
    %v4654 = vpack.c.b16 %v3774, %v3766
    %v4655 = vpack.c.b16 %v3775, %v3767
    %v4656 = vpack.c.b16 %v3784, %v3776
    %v4657 = vpack.c.b16 %v3785, %v3777
    %v4658 = vpack.c.b16 %v3786, %v3778
    %v4659 = vpack.c.b16 %v3787, %v3779
    %v4660 = vpack.c.b16 %v3788, %v3780
    %v4661 = vpack.c.b16 %v3789, %v3781
    %v4662 = vpack.c.b16 %v3790, %v3782
    %v4663 = vpack.c.b16 %v3791, %v3783
    %v4664 = vpack.c.b16 %v3800, %v3792
    %v4665 = vpack.c.b16 %v3801, %v3793
    %v4666 = vpack.c.b16 %v3802, %v3794
    %v4667 = vpack.c.b16 %v3803, %v3795
    %v4668 = vpack.c.b16 %v3804, %v3796
    %v4669 = vpack.c.b16 %v3805, %v3797
    %v4670 = vpack.c.b16 %v3806, %v3798
    %v4671 = vpack.c.b16 %v3807, %v3799
    %v4672 = vpack.c.b16 %v3816, %v3808
    %v4673 = vpack.c.b16 %v3817, %v3809
    %v4674 = vpack.c.b16 %v3818, %v3810
    %v4675 = vpack.c.b16 %v3819, %v3811
    %v4676 = vpack.c.b16 %v3820, %v3812
    %v4677 = vpack.c.b16 %v3821, %v3813
    %v4678 = vpack.c.b16 %v3822, %v3814
    %v4679 = vpack.c.b16 %v3823, %v3815
    %v4680 = vpack.c.b16 %v3832, %v3824
    %v4681 = vpack.c.b16 %v3833, %v3825
    %v4682 = vpack.c.b16 %v3834, %v3826
    %v4683 = vpack.c.b16 %v3835, %v3827
    %v4684 = vpack.c.b16 %v3836, %v3828
    %v4685 = vpack.c.b16 %v3837, %v3829
    %v4686 = vpack.c.b16 %v3838, %v3830
    %v4687 = vpack.c.b16 %v3839, %v3831
    %v4688 = vpack.c.b16 %v3848, %v3840
    %v4689 = vpack.c.b16 %v3849, %v3841
    %v4690 = vpack.c.b16 %v3850, %v3842
    %v4691 = vpack.c.b16 %v3851, %v3843
    %v4692 = vpack.c.b16 %v3852, %v3844
    %v4693 = vpack.c.b16 %v3853, %v3845
    %v4694 = vpack.c.b16 %v3854, %v3846
    %v4695 = vpack.c.b16 %v3855, %v3847
    %v4696 = vpack.c.b16 %v3864, %v3856
    %v4697 = vpack.c.b16 %v3865, %v3857
    %v4698 = vpack.c.b16 %v3866, %v3858
    %v4699 = vpack.c.b16 %v3867, %v3859
    %v4700 = vpack.c.b16 %v3868, %v3860
    %v4701 = vpack.c.b16 %v3869, %v3861
    %v4702 = vpack.c.b16 %v3870, %v3862
    %v4703 = vpack.c.b16 %v3871, %v3863
    %v4704 = vpack.c.b16 %v3880, %v3872
    %v4705 = vpack.c.b16 %v3881, %v3873
    %v4706 = vpack.c.b16 %v3882, %v3874
    %v4707 = vpack.c.b16 %v3883, %v3875
    %v4708 = vpack.c.b16 %v3884, %v3876
    %v4709 = vpack.c.b16 %v3885, %v3877
    %v4710 = vpack.c.b16 %v3886, %v3878
    %v4711 = vpack.c.b16 %v3887, %v3879
    %v4712 = vpack.c.b16 %v3896, %v3888
    %v4713 = vpack.c.b16 %v3897, %v3889
    %v4714 = vpack.c.b16 %v3898, %v3890
    %v4715 = vpack.c.b16 %v3899, %v3891
    %v4716 = vpack.c.b16 %v3900, %v3892
    %v4717 = vpack.c.b16 %v3901, %v3893
    %v4718 = vpack.c.b16 %v3902, %v3894
    %v4719 = vpack.c.b16 %v3903, %v3895
    %v4720 = vpack.c.b16 %v3912, %v3904
    %v4721 = vpack.c.b16 %v3913, %v3905
    %v4722 = vpack.c.b16 %v3914, %v3906
    %v4723 = vpack.c.b16 %v3915, %v3907
    %v4724 = vpack.c.b16 %v3916, %v3908
    %v4725 = vpack.c.b16 %v3917, %v3909
    %v4726 = vpack.c.b16 %v3918, %v3910
    %v4727 = vpack.c.b16 %v3919, %v3911
    %v4728 = vpack.c.b16 %v3928, %v3920
    %v4729 = vpack.c.b16 %v3929, %v3921
    %v4730 = vpack.c.b16 %v3930, %v3922
    %v4731 = vpack.c.b16 %v3931, %v3923
    %v4732 = vpack.c.b16 %v3932, %v3924
    %v4733 = vpack.c.b16 %v3933, %v3925
    %v4734 = vpack.c.b16 %v3934, %v3926
    %v4735 = vpack.c.b16 %v3935, %v3927
    %v4736 = vpack.c.b16 %v3944, %v3936
    %v4737 = vpack.c.b16 %v3945, %v3937
    %v4738 = vpack.c.b16 %v3946, %v3938
    %v4739 = vpack.c.b16 %v3947, %v3939
    %v4740 = vpack.c.b16 %v3948, %v3940
    %v4741 = vpack.c.b16 %v3949, %v3941
    %v4742 = vpack.c.b16 %v3950, %v3942
    %v4743 = vpack.c.b16 %v3951, %v3943
    %v4744 = vpack.c.b16 %v3960, %v3952
    %v4745 = vpack.c.b16 %v3961, %v3953
    %v4746 = vpack.c.b16 %v3962, %v3954
    %v4747 = vpack.c.b16 %v3963, %v3955
    %v4748 = vpack.c.b16 %v3964, %v3956
    %v4749 = vpack.c.b16 %v3965, %v3957
    %v4750 = vpack.c.b16 %v3966, %v3958
    %v4751 = vpack.c.b16 %v3967, %v3959
    %v4752 = vpack.c.b16 %v3976, %v3968
    %v4753 = vpack.c.b16 %v3977, %v3969
    %v4754 = vpack.c.b16 %v3978, %v3970
    %v4755 = vpack.c.b16 %v3979, %v3971
    %v4756 = vpack.c.b16 %v3980, %v3972
    %v4757 = vpack.c.b16 %v3981, %v3973
    %v4758 = vpack.c.b16 %v3982, %v3974
    %v4759 = vpack.c.b16 %v3983, %v3975
    %v4760 = vpack.c.b16 %v3992, %v3984
    %v4761 = vpack.c.b16 %v3993, %v3985
    %v4762 = vpack.c.b16 %v3994, %v3986
    %v4763 = vpack.c.b16 %v3995, %v3987
    %v4764 = vpack.c.b16 %v3996, %v3988
    %v4765 = vpack.c.b16 %v3997, %v3989
    %v4766 = vpack.c.b16 %v3998, %v3990
    %v4767 = vpack.c.b16 %v3999, %v3991
    %v4768 = vpack.c.b16 %v4008, %v4000
    %v4769 = vpack.c.b16 %v4009, %v4001
    %v4770 = vpack.c.b16 %v4010, %v4002
    %v4771 = vpack.c.b16 %v4011, %v4003
    %v4772 = vpack.c.b16 %v4012, %v4004
    %v4773 = vpack.c.b16 %v4013, %v4005
    %v4774 = vpack.c.b16 %v4014, %v4006
    %v4775 = vpack.c.b16 %v4015, %v4007
    %v4776 = vpack.c.b16 %v4024, %v4016
    %v4777 = vpack.c.b16 %v4025, %v4017
    %v4778 = vpack.c.b16 %v4026, %v4018
    %v4779 = vpack.c.b16 %v4027, %v4019
    %v4780 = vpack.c.b16 %v4028, %v4020
    %v4781 = vpack.c.b16 %v4029, %v4021
    %v4782 = vpack.c.b16 %v4030, %v4022
    %v4783 = vpack.c.b16 %v4031, %v4023
    %v4784 = vpack.c.b16 %v4040, %v4032
    %v4785 = vpack.c.b16 %v4041, %v4033
    %v4786 = vpack.c.b16 %v4042, %v4034
    %v4787 = vpack.c.b16 %v4043, %v4035
    %v4788 = vpack.c.b16 %v4044, %v4036
    %v4789 = vpack.c.b16 %v4045, %v4037
    %v4790 = vpack.c.b16 %v4046, %v4038
    %v4791 = vpack.c.b16 %v4047, %v4039
    %v4792 = vpack.c.b16 %v4056, %v4048
    %v4793 = vpack.c.b16 %v4057, %v4049
    %v4794 = vpack.c.b16 %v4058, %v4050
    %v4795 = vpack.c.b16 %v4059, %v4051
    %v4796 = vpack.c.b16 %v4060, %v4052
    %v4797 = vpack.c.b16 %v4061, %v4053
    %v4798 = vpack.c.b16 %v4062, %v4054
    %v4799 = vpack.c.b16 %v4063, %v4055
    %v4800 = vpack.c.b16 %v4072, %v4064
    %v4801 = vpack.c.b16 %v4073, %v4065
    %v4802 = vpack.c.b16 %v4074, %v4066
    %v4803 = vpack.c.b16 %v4075, %v4067
    %v4804 = vpack.c.b16 %v4076, %v4068
    %v4805 = vpack.c.b16 %v4077, %v4069
    %v4806 = vpack.c.b16 %v4078, %v4070
    %v4807 = vpack.c.b16 %v4079, %v4071
    %v4808 = vpack.c.b16 %v4088, %v4080
    %v4809 = vpack.c.b16 %v4089, %v4081
    %v4810 = vpack.c.b16 %v4090, %v4082
    %v4811 = vpack.c.b16 %v4091, %v4083
    %v4812 = vpack.c.b16 %v4092, %v4084
    %v4813 = vpack.c.b16 %v4093, %v4085
    %v4814 = vpack.c.b16 %v4094, %v4086
    %v4815 = vpack.c.b16 %v4095, %v4087
    %v4816 = vpack.c.b16 %v4104, %v4096
    %v4817 = vpack.c.b16 %v4105, %v4097
    %v4818 = vpack.c.b16 %v4106, %v4098
    %v4819 = vpack.c.b16 %v4107, %v4099
    %v4820 = vpack.c.b16 %v4108, %v4100
    %v4821 = vpack.c.b16 %v4109, %v4101
    %v4822 = vpack.c.b16 %v4110, %v4102
    %v4823 = vpack.c.b16 %v4111, %v4103
    %v4824 = vpack.c.b16 %v4120, %v4112
    %v4825 = vpack.c.b16 %v4121, %v4113
    %v4826 = vpack.c.b16 %v4122, %v4114
    %v4827 = vpack.c.b16 %v4123, %v4115
    %v4828 = vpack.c.b16 %v4124, %v4116
    %v4829 = vpack.c.b16 %v4125, %v4117
    %v4830 = vpack.c.b16 %v4126, %v4118
    %v4831 = vpack.c.b16 %v4127, %v4119
    %v4832 = vpack.c.b16 %v4136, %v4128
    %v4833 = vpack.c.b16 %v4137, %v4129
    %v4834 = vpack.c.b16 %v4138, %v4130
    %v4835 = vpack.c.b16 %v4139, %v4131
    %v4836 = vpack.c.b16 %v4140, %v4132
    %v4837 = vpack.c.b16 %v4141, %v4133
    %v4838 = vpack.c.b16 %v4142, %v4134
    %v4839 = vpack.c.b16 %v4143, %v4135
    %v4840 = vpack.c.b16 %v4152, %v4144
    %v4841 = vpack.c.b16 %v4153, %v4145
    %v4842 = vpack.c.b16 %v4154, %v4146
    %v4843 = vpack.c.b16 %v4155, %v4147
    %v4844 = vpack.c.b16 %v4156, %v4148
    %v4845 = vpack.c.b16 %v4157, %v4149
    %v4846 = vpack.c.b16 %v4158, %v4150
    %v4847 = vpack.c.b16 %v4159, %v4151
    %v4848 = vpack.c.b16 %v4168, %v4160
    %v4849 = vpack.c.b16 %v4169, %v4161
    %v4850 = vpack.c.b16 %v4170, %v4162
    %v4851 = vpack.c.b16 %v4171, %v4163
    %v4852 = vpack.c.b16 %v4172, %v4164
    %v4853 = vpack.c.b16 %v4173, %v4165
    %v4854 = vpack.c.b16 %v4174, %v4166
    %v4855 = vpack.c.b16 %v4175, %v4167
    %v4856 = vpack.c.b16 %v4184, %v4176
    %v4857 = vpack.c.b16 %v4185, %v4177
    %v4858 = vpack.c.b16 %v4186, %v4178
    %v4859 = vpack.c.b16 %v4187, %v4179
    %v4860 = vpack.c.b16 %v4188, %v4180
    %v4861 = vpack.c.b16 %v4189, %v4181
    %v4862 = vpack.c.b16 %v4190, %v4182
    %v4863 = vpack.c.b16 %v4191, %v4183
    %v4864 = vpack.c.b16 %v4200, %v4192
    %v4865 = vpack.c.b16 %v4201, %v4193
    %v4866 = vpack.c.b16 %v4202, %v4194
    %v4867 = vpack.c.b16 %v4203, %v4195
    %v4868 = vpack.c.b16 %v4204, %v4196
    %v4869 = vpack.c.b16 %v4205, %v4197
    %v4870 = vpack.c.b16 %v4206, %v4198
    %v4871 = vpack.c.b16 %v4207, %v4199
    %v4872 = vpack.c.b16 %v4216, %v4208
    %v4873 = vpack.c.b16 %v4217, %v4209
    %v4874 = vpack.c.b16 %v4218, %v4210
    %v4875 = vpack.c.b16 %v4219, %v4211
    %v4876 = vpack.c.b16 %v4220, %v4212
    %v4877 = vpack.c.b16 %v4221, %v4213
    %v4878 = vpack.c.b16 %v4222, %v4214
    %v4879 = vpack.c.b16 %v4223, %v4215
    %v4880 = vpack.c.b16 %v4232, %v4224
    %v4881 = vpack.c.b16 %v4233, %v4225
    %v4882 = vpack.c.b16 %v4234, %v4226
    %v4883 = vpack.c.b16 %v4235, %v4227
    %v4884 = vpack.c.b16 %v4236, %v4228
    %v4885 = vpack.c.b16 %v4237, %v4229
    %v4886 = vpack.c.b16 %v4238, %v4230
    %v4887 = vpack.c.b16 %v4239, %v4231
    %v4888 = vpack.c.b16 %v4248, %v4240
    %v4889 = vpack.c.b16 %v4249, %v4241
    %v4890 = vpack.c.b16 %v4250, %v4242
    %v4891 = vpack.c.b16 %v4251, %v4243
    %v4892 = vpack.c.b16 %v4252, %v4244
    %v4893 = vpack.c.b16 %v4253, %v4245
    %v4894 = vpack.c.b16 %v4254, %v4246
    %v4895 = vpack.c.b16 %v4255, %v4247
    %v4896 = vpack.c.b16 %v4264, %v4256
    %v4897 = vpack.c.b16 %v4265, %v4257
    %v4898 = vpack.c.b16 %v4266, %v4258
    %v4899 = vpack.c.b16 %v4267, %v4259
    %v4900 = vpack.c.b16 %v4268, %v4260
    %v4901 = vpack.c.b16 %v4269, %v4261
    %v4902 = vpack.c.b16 %v4270, %v4262
    %v4903 = vpack.c.b16 %v4271, %v4263
    %v4904 = vpack.c.b16 %v4280, %v4272
    %v4905 = vpack.c.b16 %v4281, %v4273
    %v4906 = vpack.c.b16 %v4282, %v4274
    %v4907 = vpack.c.b16 %v4283, %v4275
    %v4908 = vpack.c.b16 %v4284, %v4276
    %v4909 = vpack.c.b16 %v4285, %v4277
    %v4910 = vpack.c.b16 %v4286, %v4278
    %v4911 = vpack.c.b16 %v4287, %v4279
    %v4912 = vpack.c.b16 %v4296, %v4288
    %v4913 = vpack.c.b16 %v4297, %v4289
    %v4914 = vpack.c.b16 %v4298, %v4290
    %v4915 = vpack.c.b16 %v4299, %v4291
    %v4916 = vpack.c.b16 %v4300, %v4292
    %v4917 = vpack.c.b16 %v4301, %v4293
    %v4918 = vpack.c.b16 %v4302, %v4294
    %v4919 = vpack.c.b16 %v4303, %v4295
    %v4920 = vpack.c.b16 %v4312, %v4304
    %v4921 = vpack.c.b16 %v4313, %v4305
    %v4922 = vpack.c.b16 %v4314, %v4306
    %v4923 = vpack.c.b16 %v4315, %v4307
    %v4924 = vpack.c.b16 %v4316, %v4308
    %v4925 = vpack.c.b16 %v4317, %v4309
    %v4926 = vpack.c.b16 %v4318, %v4310
    %v4927 = vpack.c.b16 %v4319, %v4311
    %v4928 = vpack.c.b16 %v4328, %v4320
    %v4929 = vpack.c.b16 %v4329, %v4321
    %v4930 = vpack.c.b16 %v4330, %v4322
    %v4931 = vpack.c.b16 %v4331, %v4323
    %v4932 = vpack.c.b16 %v4332, %v4324
    %v4933 = vpack.c.b16 %v4333, %v4325
    %v4934 = vpack.c.b16 %v4334, %v4326
    %v4935 = vpack.c.b16 %v4335, %v4327
    %v4936 = vpack.c.b16 %v4344, %v4336
    %v4937 = vpack.c.b16 %v4345, %v4337
    %v4938 = vpack.c.b16 %v4346, %v4338
    %v4939 = vpack.c.b16 %v4347, %v4339
    %v4940 = vpack.c.b16 %v4348, %v4340
    %v4941 = vpack.c.b16 %v4349, %v4341
    %v4942 = vpack.c.b16 %v4350, %v4342
    %v4943 = vpack.c.b16 %v4351, %v4343
    %v4944 = vpack.c.b16 %v4360, %v4352
    %v4945 = vpack.c.b16 %v4361, %v4353
    %v4946 = vpack.c.b16 %v4362, %v4354
    %v4947 = vpack.c.b16 %v4363, %v4355
    %v4948 = vpack.c.b16 %v4364, %v4356
    %v4949 = vpack.c.b16 %v4365, %v4357
    %v4950 = vpack.c.b16 %v4366, %v4358
    %v4951 = vpack.c.b16 %v4367, %v4359
    %v4952 = vpack.c.b16 %v4376, %v4368
    %v4953 = vpack.c.b16 %v4377, %v4369
    %v4954 = vpack.c.b16 %v4378, %v4370
    %v4955 = vpack.c.b16 %v4379, %v4371
    %v4956 = vpack.c.b16 %v4380, %v4372
    %v4957 = vpack.c.b16 %v4381, %v4373
    %v4958 = vpack.c.b16 %v4382, %v4374
    %v4959 = vpack.c.b16 %v4383, %v4375
    %v4960 = vpack.c.b16 %v4392, %v4384
    %v4961 = vpack.c.b16 %v4393, %v4385
    %v4962 = vpack.c.b16 %v4394, %v4386
    %v4963 = vpack.c.b16 %v4395, %v4387
    %v4964 = vpack.c.b16 %v4396, %v4388
    %v4965 = vpack.c.b16 %v4397, %v4389
    %v4966 = vpack.c.b16 %v4398, %v4390
    %v4967 = vpack.c.b16 %v4399, %v4391
    %v4968 = vpack.c.b16 %v4408, %v4400
    %v4969 = vpack.c.b16 %v4409, %v4401
    %v4970 = vpack.c.b16 %v4410, %v4402
    %v4971 = vpack.c.b16 %v4411, %v4403
    %v4972 = vpack.c.b16 %v4412, %v4404
    %v4973 = vpack.c.b16 %v4413, %v4405
    %v4974 = vpack.c.b16 %v4414, %v4406
    %v4975 = vpack.c.b16 %v4415, %v4407
    %v4976 = vpack.c.b16 %v4424, %v4416
    %v4977 = vpack.c.b16 %v4425, %v4417
    %v4978 = vpack.c.b16 %v4426, %v4418
    %v4979 = vpack.c.b16 %v4427, %v4419
    %v4980 = vpack.c.b16 %v4428, %v4420
    %v4981 = vpack.c.b16 %v4429, %v4421
    %v4982 = vpack.c.b16 %v4430, %v4422
    %v4983 = vpack.c.b16 %v4431, %v4423
    %v4984 = vpack.c.b16 %v4440, %v4432
    %v4985 = vpack.c.b16 %v4441, %v4433
    %v4986 = vpack.c.b16 %v4442, %v4434
    %v4987 = vpack.c.b16 %v4443, %v4435
    %v4988 = vpack.c.b16 %v4444, %v4436
    %v4989 = vpack.c.b16 %v4445, %v4437
    %v4990 = vpack.c.b16 %v4446, %v4438
    %v4991 = vpack.c.b16 %v4447, %v4439
    %v4992 = vpack.c.b16 %v4456, %v4448
    %v4993 = vpack.c.b16 %v4457, %v4449
    %v4994 = vpack.c.b16 %v4458, %v4450
    %v4995 = vpack.c.b16 %v4459, %v4451
    %v4996 = vpack.c.b16 %v4460, %v4452
    %v4997 = vpack.c.b16 %v4461, %v4453
    %v4998 = vpack.c.b16 %v4462, %v4454
    %v4999 = vpack.c.b16 %v4463, %v4455
    %v5000 = vpack.c.b16 %v4472, %v4464
    %v5001 = vpack.c.b16 %v4473, %v4465
    %v5002 = vpack.c.b16 %v4474, %v4466
    %v5003 = vpack.c.b16 %v4475, %v4467
    %v5004 = vpack.c.b16 %v4476, %v4468
    %v5005 = vpack.c.b16 %v4477, %v4469
    %v5006 = vpack.c.b16 %v4478, %v4470
    %v5007 = vpack.c.b16 %v4479, %v4471
    %v5008 = vpack.c.b16 %v4488, %v4480
    %v5009 = vpack.c.b16 %v4489, %v4481
    %v5010 = vpack.c.b16 %v4490, %v4482
    %v5011 = vpack.c.b16 %v4491, %v4483
    %v5012 = vpack.c.b16 %v4492, %v4484
    %v5013 = vpack.c.b16 %v4493, %v4485
    %v5014 = vpack.c.b16 %v4494, %v4486
    %v5015 = vpack.c.b16 %v4495, %v4487
    %v5016 = vpack.c.b16 %v4504, %v4496
    %v5017 = vpack.c.b16 %v4505, %v4497
    %v5018 = vpack.c.b16 %v4506, %v4498
    %v5019 = vpack.c.b16 %v4507, %v4499
    %v5020 = vpack.c.b16 %v4508, %v4500
    %v5021 = vpack.c.b16 %v4509, %v4501
    %v5022 = vpack.c.b16 %v4510, %v4502
    %v5023 = vpack.c.b16 %v4511, %v4503
    %5536 = vmatprep.subr.bf16.mxu0 %v4513
    %5537 = vmatpush1.bf16.msra.mxu0 %v4512
    %5538 = vmatprep.subr.bf16.mxu0 %v4521
    %5539 = vmatpush1.bf16.msra.mxu0 %v4520
    %5540 = vmatprep.subr.bf16.mxu0 %v4529
    %5541 = vmatpush1.bf16.msra.mxu0 %v4528
    %5542 = vmatprep.subr.bf16.mxu0 %v4537
    %5543 = vmatpush1.bf16.msra.mxu0 %v4536
    %5544 = vmatprep.subr.bf16.mxu0 %v4545
    %5545 = vmatpush1.bf16.msra.mxu0 %v4544
    %5546 = vmatprep.subr.bf16.mxu0 %v4553
    %5547 = vmatpush1.bf16.msra.mxu0 %v4552
    %5548 = vmatprep.subr.bf16.mxu0 %v4561
    %5549 = vmatpush1.bf16.msra.mxu0 %v4560
    %5550 = vmatprep.subr.bf16.mxu0 %v4569
    %5551 = vmatpush1.bf16.msra.mxu0 %v4568
    %5552 = vmatprep.subr.bf16.mxu0 %v4577
    %5553 = vmatpush1.bf16.msra.mxu0 %v4576
    %5554 = vmatprep.subr.bf16.mxu0 %v4585
    %5555 = vmatpush1.bf16.msra.mxu0 %v4584
    %5556 = vmatprep.subr.bf16.mxu0 %v4593
    %5557 = vmatpush1.bf16.msra.mxu0 %v4592
    %5558 = vmatprep.subr.bf16.mxu0 %v4601
    %5559 = vmatpush1.bf16.msra.mxu0 %v4600
    %5560 = vmatprep.subr.bf16.mxu0 %v4609
    %5561 = vmatpush1.bf16.msra.mxu0 %v4608
    %5562 = vmatprep.subr.bf16.mxu0 %v4617
    %5563 = vmatpush1.bf16.msra.mxu0 %v4616
    %5564 = vmatprep.subr.bf16.mxu0 %v4625
    %5565 = vmatpush1.bf16.msra.mxu0 %v4624
    %5566 = vmatprep.subr.bf16.mxu0 %v4633
    %5567 = vmatpush1.bf16.msra.mxu0 %v4632
    %5568 = vmatprep.mubr.bf16.mxu0 %v2391
    %5569 = vmatmul.mubr.bf16.gmra.mrb[0].mxu0 %v2390
    %v5570 = vpop.f32.mrb[0].mxu0
    %v5571 = vadd.f32 %v2939, %v5570
    %v5572 = vpop.f32.mrb[0].mxu0
    %v5573 = vadd.f32 %v2943, %v5572
    %v5574 = vpop.f32.mrb[0].mxu0
    %v5575 = vadd.f32 %v2939, %v5574
    %v5576 = vpop.f32.mrb[0].mxu0
    %v5577 = vadd.f32 %v2943, %v5576
    %5578 = vmatprep.mubr.bf16.mxu0 %v2399
    %5579 = vmatmul.mubr.bf16.gmra.mrb[0].mxu0 %v2398
    %v5580 = vpop.f32.mrb[0].mxu0
    %v5581 = vadd.f32 %v2939, %v5580
    %v5582 = vpop.f32.mrb[0].mxu0
    %v5583 = vadd.f32 %v2943, %v5582
    %v5584 = vpop.f32.mrb[0].mxu0
    %v5585 = vadd.f32 %v2939, %v5584
    %v5586 = vpop.f32.mrb[0].mxu0
    %v5587 = vadd.f32 %v2943, %v5586
    %5588 = vmatprep.mubr.bf16.mxu0 %v2407
    %5589 = vmatmul.mubr.bf16.gmra.mrb[0].mxu0 %v2406
    %v5590 = vpop.f32.mrb[0].mxu0
    %v5591 = vadd.f32 %v2939, %v5590
    %v5592 = vpop.f32.mrb[0].mxu0
    %v5593 = vadd.f32 %v2943, %v5592
    %v5594 = vpop.f32.mrb[0].mxu0
    %v5595 = vadd.f32 %v2939, %v5594
    %v5596 = vpop.f32.mrb[0].mxu0
    %v5597 = vadd.f32 %v2943, %v5596
    %5598 = vmatprep.mubr.bf16.mxu0 %v2415
    %5599 = vmatmul.mubr.bf16.gmra.mrb[0].mxu0 %v2414
    %v5600 = vpop.f32.mrb[0].mxu0
    %v5601 = vadd.f32 %v2939, %v5600
    %v5602 = vpop.f32.mrb[0].mxu0
    %v5603 = vadd.f32 %v2943, %v5602
    %v5604 = vpop.f32.mrb[0].mxu0
    %v5605 = vadd.f32 %v2939, %v5604
    %v5606 = vpop.f32.mrb[0].mxu0
    %v5607 = vadd.f32 %v2943, %v5606
    %5608 = vdwg.mxu0
    %5609 = vmatprep.subr.bf16.mxu0 %v4641
    %5610 = vmatpush1.bf16.msra.mxu0 %v4640
    %5611 = vmatprep.subr.bf16.mxu0 %v4649
    %5612 = vmatpush1.bf16.msra.mxu0 %v4648
    %5613 = vmatprep.subr.bf16.mxu0 %v4657
    %5614 = vmatpush1.bf16.msra.mxu0 %v4656
    %5615 = vmatprep.subr.bf16.mxu0 %v4665
    %5616 = vmatpush1.bf16.msra.mxu0 %v4664
    %5617 = vmatprep.subr.bf16.mxu0 %v4673
    %5618 = vmatpush1.bf16.msra.mxu0 %v4672
    %5619 = vmatprep.subr.bf16.mxu0 %v4681
    %5620 = vmatpush1.bf16.msra.mxu0 %v4680
    %5621 = vmatprep.subr.bf16.mxu0 %v4689
    %5622 = vmatpush1.bf16.msra.mxu0 %v4688
    %5623 = vmatprep.subr.bf16.mxu0 %v4697
    %5624 = vmatpush1.bf16.msra.mxu0 %v4696
    %5625 = vmatprep.subr.bf16.mxu0 %v4705
    %5626 = vmatpush1.bf16.msra.mxu0 %v4704
    %5627 = vmatprep.subr.bf16.mxu0 %v4713
    %5628 = vmatpush1.bf16.msra.mxu0 %v4712
    %5629 = vmatprep.subr.bf16.mxu0 %v4721
    %5630 = vmatpush1.bf16.msra.mxu0 %v4720
    %5631 = vmatprep.subr.bf16.mxu0 %v4729
    %5632 = vmatpush1.bf16.msra.mxu0 %v4728
    %5633 = vmatprep.subr.bf16.mxu0 %v4737
    %5634 = vmatpush1.bf16.msra.mxu0 %v4736
    %5635 = vmatprep.subr.bf16.mxu0 %v4745
    %5636 = vmatpush1.bf16.msra.mxu0 %v4744
    %5637 = vmatprep.subr.bf16.mxu0 %v4753
    %5638 = vmatpush1.bf16.msra.mxu0 %v4752
    %5639 = vmatprep.subr.bf16.mxu0 %v4761
    %5640 = vmatpush1.bf16.msra.mxu0 %v4760
    %5641 = vmatprep.mubr.bf16.mxu0 %v2393
    %5642 = vmatmul.mubr.bf16.gmra.mrb[0].mxu0 %v2392
    %v5643 = vpop.f32.mrb[0].mxu0
    %v5644 = vadd.f32 %v5571, %v5643
    %v5645 = vpop.f32.mrb[0].mxu0
    %v5646 = vadd.f32 %v5573, %v5645
    %v5647 = vpop.f32.mrb[0].mxu0
    %v5648 = vadd.f32 %v5575, %v5647
    %v5649 = vpop.f32.mrb[0].mxu0
    %v5650 = vadd.f32 %v5577, %v5649
    %5651 = vmatprep.mubr.bf16.mxu0 %v2401
    %5652 = vmatmul.mubr.bf16.gmra.mrb[0].mxu0 %v2400
    %v5653 = vpop.f32.mrb[0].mxu0
    %v5654 = vadd.f32 %v5581, %v5653
    %v5655 = vpop.f32.mrb[0].mxu0
    %v5656 = vadd.f32 %v5583, %v5655
    %v5657 = vpop.f32.mrb[0].mxu0
    %v5658 = vadd.f32 %v5585, %v5657
    %v5659 = vpop.f32.mrb[0].mxu0
    %v5660 = vadd.f32 %v5587, %v5659
    %5661 = vmatprep.mubr.bf16.mxu0 %v2409
    %5662 = vmatmul.mubr.bf16.gmra.mrb[0].mxu0 %v2408
    %v5663 = vpop.f32.mrb[0].mxu0
    %v5664 = vadd.f32 %v5591, %v5663
    %v5665 = vpop.f32.mrb[0].mxu0
    %v5666 = vadd.f32 %v5593, %v5665
    %v5667 = vpop.f32.mrb[0].mxu0
    %v5668 = vadd.f32 %v5595, %v5667
    %v5669 = vpop.f32.mrb[0].mxu0
    %v5670 = vadd.f32 %v5597, %v5669
    %5671 = vmatprep.mubr.bf16.mxu0 %v2417
    %5672 = vmatmul.mubr.bf16.gmra.mrb[0].mxu0 %v2416
    %v5673 = vpop.f32.mrb[0].mxu0
    %v5674 = vadd.f32 %v5601, %v5673
    %v5675 = vpop.f32.mrb[0].mxu0
    %v5676 = vadd.f32 %v5603, %v5675
    %v5677 = vpop.f32.mrb[0].mxu0
    %v5678 = vadd.f32 %v5605, %v5677
    %v5679 = vpop.f32.mrb[0].mxu0
    %v5680 = vadd.f32 %v5607, %v5679
    %5681 = vdwg.mxu0
    %5682 = vmatprep.subr.bf16.mxu0 %v4769
    %5683 = vmatpush1.bf16.msra.mxu0 %v4768
    %5684 = vmatprep.subr.bf16.mxu0 %v4777
    %5685 = vmatpush1.bf16.msra.mxu0 %v4776
    %5686 = vmatprep.subr.bf16.mxu0 %v4785
    %5687 = vmatpush1.bf16.msra.mxu0 %v4784
    %5688 = vmatprep.subr.bf16.mxu0 %v4793
    %5689 = vmatpush1.bf16.msra.mxu0 %v4792
    %5690 = vmatprep.subr.bf16.mxu0 %v4801
    %5691 = vmatpush1.bf16.msra.mxu0 %v4800
    %5692 = vmatprep.subr.bf16.mxu0 %v4809
    %5693 = vmatpush1.bf16.msra.mxu0 %v4808
    %5694 = vmatprep.subr.bf16.mxu0 %v4817
    %5695 = vmatpush1.bf16.msra.mxu0 %v4816
    %5696 = vmatprep.subr.bf16.mxu0 %v4825
    %5697 = vmatpush1.bf16.msra.mxu0 %v4824
    %5698 = vmatprep.subr.bf16.mxu0 %v4833
    %5699 = vmatpush1.bf16.msra.mxu0 %v4832
    %5700 = vmatprep.subr.bf16.mxu0 %v4841
    %5701 = vmatpush1.bf16.msra.mxu0 %v4840
    %5702 = vmatprep.subr.bf16.mxu0 %v4849
    %5703 = vmatpush1.bf16.msra.mxu0 %v4848
    %5704 = vmatprep.subr.bf16.mxu0 %v4857
    %5705 = vmatpush1.bf16.msra.mxu0 %v4856
    %5706 = vmatprep.subr.bf16.mxu0 %v4865
    %5707 = vmatpush1.bf16.msra.mxu0 %v4864
    %5708 = vmatprep.subr.bf16.mxu0 %v4873
    %5709 = vmatpush1.bf16.msra.mxu0 %v4872
    %5710 = vmatprep.subr.bf16.mxu0 %v4881
    %5711 = vmatpush1.bf16.msra.mxu0 %v4880
    %5712 = vmatprep.subr.bf16.mxu0 %v4889
    %5713 = vmatpush1.bf16.msra.mxu0 %v4888
    %5714 = vmatprep.mubr.bf16.mxu0 %v2395
    %5715 = vmatmul.mubr.bf16.gmra.mrb[0].mxu0 %v2394
    %v5716 = vpop.f32.mrb[0].mxu0
    %v5717 = vadd.f32 %v5644, %v5716
    %v5718 = vpop.f32.mrb[0].mxu0
    %v5719 = vadd.f32 %v5646, %v5718
    %v5720 = vpop.f32.mrb[0].mxu0
    %v5721 = vadd.f32 %v5648, %v5720
    %v5722 = vpop.f32.mrb[0].mxu0
    %v5723 = vadd.f32 %v5650, %v5722
    %5724 = vmatprep.mubr.bf16.mxu0 %v2403
    %5725 = vmatmul.mubr.bf16.gmra.mrb[0].mxu0 %v2402
    %v5726 = vpop.f32.mrb[0].mxu0
    %v5727 = vadd.f32 %v5654, %v5726
    %v5728 = vpop.f32.mrb[0].mxu0
    %v5729 = vadd.f32 %v5656, %v5728
    %v5730 = vpop.f32.mrb[0].mxu0
    %v5731 = vadd.f32 %v5658, %v5730
    %v5732 = vpop.f32.mrb[0].mxu0
    %v5733 = vadd.f32 %v5660, %v5732
    %5734 = vmatprep.mubr.bf16.mxu0 %v2411
    %5735 = vmatmul.mubr.bf16.gmra.mrb[0].mxu0 %v2410
    %v5736 = vpop.f32.mrb[0].mxu0
    %v5737 = vadd.f32 %v5664, %v5736
    %v5738 = vpop.f32.mrb[0].mxu0
    %v5739 = vadd.f32 %v5666, %v5738
    %v5740 = vpop.f32.mrb[0].mxu0
    %v5741 = vadd.f32 %v5668, %v5740
    %v5742 = vpop.f32.mrb[0].mxu0
    %v5743 = vadd.f32 %v5670, %v5742
    %5744 = vmatprep.mubr.bf16.mxu0 %v2419
    %5745 = vmatmul.mubr.bf16.gmra.mrb[0].mxu0 %v2418
    %v5746 = vpop.f32.mrb[0].mxu0
    %v5747 = vadd.f32 %v5674, %v5746
    %v5748 = vpop.f32.mrb[0].mxu0
    %v5749 = vadd.f32 %v5676, %v5748
    %v5750 = vpop.f32.mrb[0].mxu0
    %v5751 = vadd.f32 %v5678, %v5750
    %v5752 = vpop.f32.mrb[0].mxu0
    %v5753 = vadd.f32 %v5680, %v5752
    %5754 = vdwg.mxu0
    %5755 = vmatprep.subr.bf16.mxu0 %v4897
    %5756 = vmatpush1.bf16.msra.mxu0 %v4896
    %5757 = vmatprep.subr.bf16.mxu0 %v4905
    %5758 = vmatpush1.bf16.msra.mxu0 %v4904
    %5759 = vmatprep.subr.bf16.mxu0 %v4913
    %5760 = vmatpush1.bf16.msra.mxu0 %v4912
    %5761 = vmatprep.subr.bf16.mxu0 %v4921
    %5762 = vmatpush1.bf16.msra.mxu0 %v4920
    %5763 = vmatprep.subr.bf16.mxu0 %v4929
    %5764 = vmatpush1.bf16.msra.mxu0 %v4928
    %5765 = vmatprep.subr.bf16.mxu0 %v4937
    %5766 = vmatpush1.bf16.msra.mxu0 %v4936
    %5767 = vmatprep.subr.bf16.mxu0 %v4945
    %5768 = vmatpush1.bf16.msra.mxu0 %v4944
    %5769 = vmatprep.subr.bf16.mxu0 %v4953
    %5770 = vmatpush1.bf16.msra.mxu0 %v4952
    %5771 = vmatprep.subr.bf16.mxu0 %v4961
    %5772 = vmatpush1.bf16.msra.mxu0 %v4960
    %5773 = vmatprep.subr.bf16.mxu0 %v4969
    %5774 = vmatpush1.bf16.msra.mxu0 %v4968
    %5775 = vmatprep.subr.bf16.mxu0 %v4977
    %5776 = vmatpush1.bf16.msra.mxu0 %v4976
    %5777 = vmatprep.subr.bf16.mxu0 %v4985
    %5778 = vmatpush1.bf16.msra.mxu0 %v4984
    %5779 = vmatprep.subr.bf16.mxu0 %v4993
    %5780 = vmatpush1.bf16.msra.mxu0 %v4992
    %5781 = vmatprep.subr.bf16.mxu0 %v5001
    %5782 = vmatpush1.bf16.msra.mxu0 %v5000
    %5783 = vmatprep.subr.bf16.mxu0 %v5009
    %5784 = vmatpush1.bf16.msra.mxu0 %v5008
    %5785 = vmatprep.subr.bf16.mxu0 %v5017
    %5786 = vmatpush1.bf16.msra.mxu0 %v5016
    %5787 = vmatprep.mubr.bf16.mxu0 %v2397
    %5788 = vmatmul.mubr.bf16.gmra.mrb[0].mxu0 %v2396
    %v5789 = vpop.f32.mrb[0].mxu0
    %v5790 = vadd.f32 %v5717, %v5789
    %v5791 = vpop.f32.mrb[0].mxu0
    %v5792 = vadd.f32 %v5719, %v5791
    %v5793 = vpop.f32.mrb[0].mxu0
    %v5794 = vadd.f32 %v5721, %v5793
    %v5795 = vpop.f32.mrb[0].mxu0
    %v5796 = vadd.f32 %v5723, %v5795
    %5797 = vmatprep.mubr.bf16.mxu0 %v2405
    %5798 = vmatmul.mubr.bf16.gmra.mrb[0].mxu0 %v2404
    %v5799 = vpop.f32.mrb[0].mxu0
    %v5800 = vadd.f32 %v5727, %v5799
    %v5801 = vpop.f32.mrb[0].mxu0
    %v5802 = vadd.f32 %v5729, %v5801
    %v5803 = vpop.f32.mrb[0].mxu0
    %v5804 = vadd.f32 %v5731, %v5803
    %v5805 = vpop.f32.mrb[0].mxu0
    %v5806 = vadd.f32 %v5733, %v5805
    %5807 = vmatprep.mubr.bf16.mxu0 %v2413
    %5808 = vmatmul.mubr.bf16.gmra.mrb[0].mxu0 %v2412
    %v5809 = vpop.f32.mrb[0].mxu0
    %v5810 = vadd.f32 %v5737, %v5809
    %v5811 = vpop.f32.mrb[0].mxu0
    %v5812 = vadd.f32 %v5739, %v5811
    %v5813 = vpop.f32.mrb[0].mxu0
    %v5814 = vadd.f32 %v5741, %v5813
    %v5815 = vpop.f32.mrb[0].mxu0
    %v5816 = vadd.f32 %v5743, %v5815
    %5817 = vmatprep.mubr.bf16.mxu0 %v2421
    %5818 = vmatmul.mubr.bf16.gmra.mrb[0].mxu0 %v2420
    %v5819 = vpop.f32.mrb[0].mxu0
    %v5820 = vadd.f32 %v5747, %v5819
    %v5821 = vpop.f32.mrb[0].mxu0
    %v5822 = vadd.f32 %v5749, %v5821
    %v5823 = vpop.f32.mrb[0].mxu0
    %v5824 = vadd.f32 %v5751, %v5823
    %v5825 = vpop.f32.mrb[0].mxu0
    %v5826 = vadd.f32 %v5753, %v5825
    %5827 = vdwg.mxu0
    %5828 = vmatprep.subr.bf16.mxu0 %v4515
    %5829 = vmatpush1.bf16.msra.mxu0 %v4514
    %5830 = vmatprep.subr.bf16.mxu0 %v4523
    %5831 = vmatpush1.bf16.msra.mxu0 %v4522
    %5832 = vmatprep.subr.bf16.mxu0 %v4531
    %5833 = vmatpush1.bf16.msra.mxu0 %v4530
    %5834 = vmatprep.subr.bf16.mxu0 %v4539
    %5835 = vmatpush1.bf16.msra.mxu0 %v4538
    %5836 = vmatprep.subr.bf16.mxu0 %v4547
    %5837 = vmatpush1.bf16.msra.mxu0 %v4546
    %5838 = vmatprep.subr.bf16.mxu0 %v4555
    %5839 = vmatpush1.bf16.msra.mxu0 %v4554
    %5840 = vmatprep.subr.bf16.mxu0 %v4563
    %5841 = vmatpush1.bf16.msra.mxu0 %v4562
    %5842 = vmatprep.subr.bf16.mxu0 %v4571
    %5843 = vmatpush1.bf16.msra.mxu0 %v4570
    %5844 = vmatprep.subr.bf16.mxu0 %v4579
    %5845 = vmatpush1.bf16.msra.mxu0 %v4578
    %5846 = vmatprep.subr.bf16.mxu0 %v4587
    %5847 = vmatpush1.bf16.msra.mxu0 %v4586
    %5848 = vmatprep.subr.bf16.mxu0 %v4595
    %5849 = vmatpush1.bf16.msra.mxu0 %v4594
    %5850 = vmatprep.subr.bf16.mxu0 %v4603
    %5851 = vmatpush1.bf16.msra.mxu0 %v4602
    %5852 = vmatprep.subr.bf16.mxu0 %v4611
    %5853 = vmatpush1.bf16.msra.mxu0 %v4610
    %5854 = vmatprep.subr.bf16.mxu0 %v4619
    %5855 = vmatpush1.bf16.msra.mxu0 %v4618
    %5856 = vmatprep.subr.bf16.mxu0 %v4627
    %5857 = vmatpush1.bf16.msra.mxu0 %v4626
    %5858 = vmatprep.subr.bf16.mxu0 %v4635
    %5859 = vmatpush1.bf16.msra.mxu0 %v4634
    %5860 = vmatprep.mubr.bf16.mxu0 %v2391
    %5861 = vmatmul.mubr.bf16.gmra.mrb[0].mxu0 %v2390
    %v5862 = vpop.f32.mrb[0].mxu0
    %v5863 = vadd.f32 %v2947, %v5862
    %v5864 = vpop.f32.mrb[0].mxu0
    %v5865 = vadd.f32 %v2951, %v5864
    %v5866 = vpop.f32.mrb[0].mxu0
    %v5867 = vadd.f32 %v2947, %v5866
    %v5868 = vpop.f32.mrb[0].mxu0
    %v5869 = vadd.f32 %v2951, %v5868
    %5870 = vmatprep.mubr.bf16.mxu0 %v2399
    %5871 = vmatmul.mubr.bf16.gmra.mrb[0].mxu0 %v2398
    %v5872 = vpop.f32.mrb[0].mxu0
    %v5873 = vadd.f32 %v2947, %v5872
    %v5874 = vpop.f32.mrb[0].mxu0
    %v5875 = vadd.f32 %v2951, %v5874
    %v5876 = vpop.f32.mrb[0].mxu0
    %v5877 = vadd.f32 %v2947, %v5876
    %v5878 = vpop.f32.mrb[0].mxu0
    %v5879 = vadd.f32 %v2951, %v5878
    %5880 = vmatprep.mubr.bf16.mxu0 %v2407
    %5881 = vmatmul.mubr.bf16.gmra.mrb[0].mxu0 %v2406
    %v5882 = vpop.f32.mrb[0].mxu0
    %v5883 = vadd.f32 %v2947, %v5882
    %v5884 = vpop.f32.mrb[0].mxu0
    %v5885 = vadd.f32 %v2951, %v5884
    %v5886 = vpop.f32.mrb[0].mxu0
    %v5887 = vadd.f32 %v2947, %v5886
    %v5888 = vpop.f32.mrb[0].mxu0
    %v5889 = vadd.f32 %v2951, %v5888
    %5890 = vmatprep.mubr.bf16.mxu0 %v2415
    %5891 = vmatmul.mubr.bf16.gmra.mrb[0].mxu0 %v2414
    %v5892 = vpop.f32.mrb[0].mxu0
    %v5893 = vadd.f32 %v2947, %v5892
    %v5894 = vpop.f32.mrb[0].mxu0
    %v5895 = vadd.f32 %v2951, %v5894
    %v5896 = vpop.f32.mrb[0].mxu0
    %v5897 = vadd.f32 %v2947, %v5896
    %v5898 = vpop.f32.mrb[0].mxu0
    %v5899 = vadd.f32 %v2951, %v5898
    %5900 = vdwg.mxu0
    %5901 = vmatprep.subr.bf16.mxu0 %v4643
    %5902 = vmatpush1.bf16.msra.mxu0 %v4642
    %5903 = vmatprep.subr.bf16.mxu0 %v4651
    %5904 = vmatpush1.bf16.msra.mxu0 %v4650
    %5905 = vmatprep.subr.bf16.mxu0 %v4659
    %5906 = vmatpush1.bf16.msra.mxu0 %v4658
    %5907 = vmatprep.subr.bf16.mxu0 %v4667
    %5908 = vmatpush1.bf16.msra.mxu0 %v4666
    %5909 = vmatprep.subr.bf16.mxu0 %v4675
    %5910 = vmatpush1.bf16.msra.mxu0 %v4674
    %5911 = vmatprep.subr.bf16.mxu0 %v4683
    %5912 = vmatpush1.bf16.msra.mxu0 %v4682
    %5913 = vmatprep.subr.bf16.mxu0 %v4691
    %5914 = vmatpush1.bf16.msra.mxu0 %v4690
    %5915 = vmatprep.subr.bf16.mxu0 %v4699
    %5916 = vmatpush1.bf16.msra.mxu0 %v4698
    %5917 = vmatprep.subr.bf16.mxu0 %v4707
    %5918 = vmatpush1.bf16.msra.mxu0 %v4706
    %5919 = vmatprep.subr.bf16.mxu0 %v4715
    %5920 = vmatpush1.bf16.msra.mxu0 %v4714
    %5921 = vmatprep.subr.bf16.mxu0 %v4723
    %5922 = vmatpush1.bf16.msra.mxu0 %v4722
    %5923 = vmatprep.subr.bf16.mxu0 %v4731
    %5924 = vmatpush1.bf16.msra.mxu0 %v4730
    %5925 = vmatprep.subr.bf16.mxu0 %v4739
    %5926 = vmatpush1.bf16.msra.mxu0 %v4738
    %5927 = vmatprep.subr.bf16.mxu0 %v4747
    %5928 = vmatpush1.bf16.msra.mxu0 %v4746
    %5929 = vmatprep.subr.bf16.mxu0 %v4755
    %5930 = vmatpush1.bf16.msra.mxu0 %v4754
    %5931 = vmatprep.subr.bf16.mxu0 %v4763
    %5932 = vmatpush1.bf16.msra.mxu0 %v4762
    %5933 = vmatprep.mubr.bf16.mxu0 %v2393
    %5934 = vmatmul.mubr.bf16.gmra.mrb[0].mxu0 %v2392
    %v5935 = vpop.f32.mrb[0].mxu0
    %v5936 = vadd.f32 %v5863, %v5935
    %v5937 = vpop.f32.mrb[0].mxu0
    %v5938 = vadd.f32 %v5865, %v5937
    %v5939 = vpop.f32.mrb[0].mxu0
    %v5940 = vadd.f32 %v5867, %v5939
    %v5941 = vpop.f32.mrb[0].mxu0
    %v5942 = vadd.f32 %v5869, %v5941
    %5943 = vmatprep.mubr.bf16.mxu0 %v2401
    %5944 = vmatmul.mubr.bf16.gmra.mrb[0].mxu0 %v2400
    %v5945 = vpop.f32.mrb[0].mxu0
    %v5946 = vadd.f32 %v5873, %v5945
    %v5947 = vpop.f32.mrb[0].mxu0
    %v5948 = vadd.f32 %v5875, %v5947
    %v5949 = vpop.f32.mrb[0].mxu0
    %v5950 = vadd.f32 %v5877, %v5949
    %v5951 = vpop.f32.mrb[0].mxu0
    %v5952 = vadd.f32 %v5879, %v5951
    %5953 = vmatprep.mubr.bf16.mxu0 %v2409
    %5954 = vmatmul.mubr.bf16.gmra.mrb[0].mxu0 %v2408
    %v5955 = vpop.f32.mrb[0].mxu0
    %v5956 = vadd.f32 %v5883, %v5955
    %v5957 = vpop.f32.mrb[0].mxu0
    %v5958 = vadd.f32 %v5885, %v5957
    %v5959 = vpop.f32.mrb[0].mxu0
    %v5960 = vadd.f32 %v5887, %v5959
    %v5961 = vpop.f32.mrb[0].mxu0
    %v5962 = vadd.f32 %v5889, %v5961
    %5963 = vmatprep.mubr.bf16.mxu0 %v2417
    %5964 = vmatmul.mubr.bf16.gmra.mrb[0].mxu0 %v2416
    %v5965 = vpop.f32.mrb[0].mxu0
    %v5966 = vadd.f32 %v5893, %v5965
    %v5967 = vpop.f32.mrb[0].mxu0
    %v5968 = vadd.f32 %v5895, %v5967
    %v5969 = vpop.f32.mrb[0].mxu0
    %v5970 = vadd.f32 %v5897, %v5969
    %v5971 = vpop.f32.mrb[0].mxu0
    %v5972 = vadd.f32 %v5899, %v5971
    %5973 = vdwg.mxu0
    %5974 = vmatprep.subr.bf16.mxu0 %v4771
    %5975 = vmatpush1.bf16.msra.mxu0 %v4770
    %5976 = vmatprep.subr.bf16.mxu0 %v4779
    %5977 = vmatpush1.bf16.msra.mxu0 %v4778
    %5978 = vmatprep.subr.bf16.mxu0 %v4787
    %5979 = vmatpush1.bf16.msra.mxu0 %v4786
    %5980 = vmatprep.subr.bf16.mxu0 %v4795
    %5981 = vmatpush1.bf16.msra.mxu0 %v4794
    %5982 = vmatprep.subr.bf16.mxu0 %v4803
    %5983 = vmatpush1.bf16.msra.mxu0 %v4802
    %5984 = vmatprep.subr.bf16.mxu0 %v4811
    %5985 = vmatpush1.bf16.msra.mxu0 %v4810
    %5986 = vmatprep.subr.bf16.mxu0 %v4819
    %5987 = vmatpush1.bf16.msra.mxu0 %v4818
    %5988 = vmatprep.subr.bf16.mxu0 %v4827
    %5989 = vmatpush1.bf16.msra.mxu0 %v4826
    %5990 = vmatprep.subr.bf16.mxu0 %v4835
    %5991 = vmatpush1.bf16.msra.mxu0 %v4834
    %5992 = vmatprep.subr.bf16.mxu0 %v4843
    %5993 = vmatpush1.bf16.msra.mxu0 %v4842
    %5994 = vmatprep.subr.bf16.mxu0 %v4851
    %5995 = vmatpush1.bf16.msra.mxu0 %v4850
    %5996 = vmatprep.subr.bf16.mxu0 %v4859
    %5997 = vmatpush1.bf16.msra.mxu0 %v4858
    %5998 = vmatprep.subr.bf16.mxu0 %v4867
    %5999 = vmatpush1.bf16.msra.mxu0 %v4866
    %6000 = vmatprep.subr.bf16.mxu0 %v4875
    %6001 = vmatpush1.bf16.msra.mxu0 %v4874
    %6002 = vmatprep.subr.bf16.mxu0 %v4883
    %6003 = vmatpush1.bf16.msra.mxu0 %v4882
    %6004 = vmatprep.subr.bf16.mxu0 %v4891
    %6005 = vmatpush1.bf16.msra.mxu0 %v4890
    %6006 = vmatprep.mubr.bf16.mxu0 %v2395
    %6007 = vmatmul.mubr.bf16.gmra.mrb[0].mxu0 %v2394
    %v6008 = vpop.f32.mrb[0].mxu0
    %v6009 = vadd.f32 %v5936, %v6008
    %v6010 = vpop.f32.mrb[0].mxu0
    %v6011 = vadd.f32 %v5938, %v6010
    %v6012 = vpop.f32.mrb[0].mxu0
    %v6013 = vadd.f32 %v5940, %v6012
    %v6014 = vpop.f32.mrb[0].mxu0
    %v6015 = vadd.f32 %v5942, %v6014
    %6016 = vmatprep.mubr.bf16.mxu0 %v2403
    %6017 = vmatmul.mubr.bf16.gmra.mrb[0].mxu0 %v2402
    %v6018 = vpop.f32.mrb[0].mxu0
    %v6019 = vadd.f32 %v5946, %v6018
    %v6020 = vpop.f32.mrb[0].mxu0
    %v6021 = vadd.f32 %v5948, %v6020
    %v6022 = vpop.f32.mrb[0].mxu0
    %v6023 = vadd.f32 %v5950, %v6022
    %v6024 = vpop.f32.mrb[0].mxu0
    %v6025 = vadd.f32 %v5952, %v6024
    %6026 = vmatprep.mubr.bf16.mxu0 %v2411
    %6027 = vmatmul.mubr.bf16.gmra.mrb[0].mxu0 %v2410
    %v6028 = vpop.f32.mrb[0].mxu0
    %v6029 = vadd.f32 %v5956, %v6028
    %v6030 = vpop.f32.mrb[0].mxu0
    %v6031 = vadd.f32 %v5958, %v6030
    %v6032 = vpop.f32.mrb[0].mxu0
    %v6033 = vadd.f32 %v5960, %v6032
    %v6034 = vpop.f32.mrb[0].mxu0
    %v6035 = vadd.f32 %v5962, %v6034
    %6036 = vmatprep.mubr.bf16.mxu0 %v2419
    %6037 = vmatmul.mubr.bf16.gmra.mrb[0].mxu0 %v2418
    %v6038 = vpop.f32.mrb[0].mxu0
    %v6039 = vadd.f32 %v5966, %v6038
    %v6040 = vpop.f32.mrb[0].mxu0
    %v6041 = vadd.f32 %v5968, %v6040
    %v6042 = vpop.f32.mrb[0].mxu0
    %v6043 = vadd.f32 %v5970, %v6042
    %v6044 = vpop.f32.mrb[0].mxu0
    %v6045 = vadd.f32 %v5972, %v6044
    %6046 = vdwg.mxu0
    %6047 = vmatprep.subr.bf16.mxu0 %v4899
    %6048 = vmatpush1.bf16.msra.mxu0 %v4898
    %6049 = vmatprep.subr.bf16.mxu0 %v4907
    %6050 = vmatpush1.bf16.msra.mxu0 %v4906
    %6051 = vmatprep.subr.bf16.mxu0 %v4915
    %6052 = vmatpush1.bf16.msra.mxu0 %v4914
    %6053 = vmatprep.subr.bf16.mxu0 %v4923
    %6054 = vmatpush1.bf16.msra.mxu0 %v4922
    %6055 = vmatprep.subr.bf16.mxu0 %v4931
    %6056 = vmatpush1.bf16.msra.mxu0 %v4930
    %6057 = vmatprep.subr.bf16.mxu0 %v4939
    %6058 = vmatpush1.bf16.msra.mxu0 %v4938
    %6059 = vmatprep.subr.bf16.mxu0 %v4947
    %6060 = vmatpush1.bf16.msra.mxu0 %v4946
    %6061 = vmatprep.subr.bf16.mxu0 %v4955
    %6062 = vmatpush1.bf16.msra.mxu0 %v4954
    %6063 = vmatprep.subr.bf16.mxu0 %v4963
    %6064 = vmatpush1.bf16.msra.mxu0 %v4962
    %6065 = vmatprep.subr.bf16.mxu0 %v4971
    %6066 = vmatpush1.bf16.msra.mxu0 %v4970
    %6067 = vmatprep.subr.bf16.mxu0 %v4979
    %6068 = vmatpush1.bf16.msra.mxu0 %v4978
    %6069 = vmatprep.subr.bf16.mxu0 %v4987
    %6070 = vmatpush1.bf16.msra.mxu0 %v4986
    %6071 = vmatprep.subr.bf16.mxu0 %v4995
    %6072 = vmatpush1.bf16.msra.mxu0 %v4994
    %6073 = vmatprep.subr.bf16.mxu0 %v5003
    %6074 = vmatpush1.bf16.msra.mxu0 %v5002
    %6075 = vmatprep.subr.bf16.mxu0 %v5011
    %6076 = vmatpush1.bf16.msra.mxu0 %v5010
    %6077 = vmatprep.subr.bf16.mxu0 %v5019
    %6078 = vmatpush1.bf16.msra.mxu0 %v5018
    %6079 = vmatprep.mubr.bf16.mxu0 %v2397
    %6080 = vmatmul.mubr.bf16.gmra.mrb[0].mxu0 %v2396
    %v6081 = vpop.f32.mrb[0].mxu0
    %v6082 = vadd.f32 %v6009, %v6081
    %v6083 = vpop.f32.mrb[0].mxu0
    %v6084 = vadd.f32 %v6011, %v6083
    %v6085 = vpop.f32.mrb[0].mxu0
    %v6086 = vadd.f32 %v6013, %v6085
    %v6087 = vpop.f32.mrb[0].mxu0
    %v6088 = vadd.f32 %v6015, %v6087
    %6089 = vmatprep.mubr.bf16.mxu0 %v2405
    %6090 = vmatmul.mubr.bf16.gmra.mrb[0].mxu0 %v2404
    %v6091 = vpop.f32.mrb[0].mxu0
    %v6092 = vadd.f32 %v6019, %v6091
    %v6093 = vpop.f32.mrb[0].mxu0
    %v6094 = vadd.f32 %v6021, %v6093
    %v6095 = vpop.f32.mrb[0].mxu0
    %v6096 = vadd.f32 %v6023, %v6095
    %v6097 = vpop.f32.mrb[0].mxu0
    %v6098 = vadd.f32 %v6025, %v6097
    %6099 = vmatprep.mubr.bf16.mxu0 %v2413
    %6100 = vmatmul.mubr.bf16.gmra.mrb[0].mxu0 %v2412
    %v6101 = vpop.f32.mrb[0].mxu0
    %v6102 = vadd.f32 %v6029, %v6101
    %v6103 = vpop.f32.mrb[0].mxu0
    %v6104 = vadd.f32 %v6031, %v6103
    %v6105 = vpop.f32.mrb[0].mxu0
    %v6106 = vadd.f32 %v6033, %v6105
    %v6107 = vpop.f32.mrb[0].mxu0
    %v6108 = vadd.f32 %v6035, %v6107
    %6109 = vmatprep.mubr.bf16.mxu0 %v2421
    %6110 = vmatmul.mubr.bf16.gmra.mrb[0].mxu0 %v2420
    %v6111 = vpop.f32.mrb[0].mxu0
    %v6112 = vadd.f32 %v6039, %v6111
    %v6113 = vpop.f32.mrb[0].mxu0
    %v6114 = vadd.f32 %v6041, %v6113
    %v6115 = vpop.f32.mrb[0].mxu0
    %v6116 = vadd.f32 %v6043, %v6115
    %v6117 = vpop.f32.mrb[0].mxu0
    %v6118 = vadd.f32 %v6045, %v6117
    %6119 = vdwg.mxu0
    %6120 = vmatprep.subr.bf16.mxu0 %v4517
    %6121 = vmatpush1.bf16.msra.mxu0 %v4516
    %6122 = vmatprep.subr.bf16.mxu0 %v4525
    %6123 = vmatpush1.bf16.msra.mxu0 %v4524
    %6124 = vmatprep.subr.bf16.mxu0 %v4533
    %6125 = vmatpush1.bf16.msra.mxu0 %v4532
    %6126 = vmatprep.subr.bf16.mxu0 %v4541
    %6127 = vmatpush1.bf16.msra.mxu0 %v4540
    %6128 = vmatprep.subr.bf16.mxu0 %v4549
    %6129 = vmatpush1.bf16.msra.mxu0 %v4548
    %6130 = vmatprep.subr.bf16.mxu0 %v4557
    %6131 = vmatpush1.bf16.msra.mxu0 %v4556
    %6132 = vmatprep.subr.bf16.mxu0 %v4565
    %6133 = vmatpush1.bf16.msra.mxu0 %v4564
    %6134 = vmatprep.subr.bf16.mxu0 %v4573
    %6135 = vmatpush1.bf16.msra.mxu0 %v4572
    %6136 = vmatprep.subr.bf16.mxu0 %v4581
    %6137 = vmatpush1.bf16.msra.mxu0 %v4580
    %6138 = vmatprep.subr.bf16.mxu0 %v4589
    %6139 = vmatpush1.bf16.msra.mxu0 %v4588
    %6140 = vmatprep.subr.bf16.mxu0 %v4597
    %6141 = vmatpush1.bf16.msra.mxu0 %v4596
    %6142 = vmatprep.subr.bf16.mxu0 %v4605
    %6143 = vmatpush1.bf16.msra.mxu0 %v4604
    %6144 = vmatprep.subr.bf16.mxu0 %v4613
    %6145 = vmatpush1.bf16.msra.mxu0 %v4612
    %6146 = vmatprep.subr.bf16.mxu0 %v4621
    %6147 = vmatpush1.bf16.msra.mxu0 %v4620
    %6148 = vmatprep.subr.bf16.mxu0 %v4629
    %6149 = vmatpush1.bf16.msra.mxu0 %v4628
    %6150 = vmatprep.subr.bf16.mxu0 %v4637
    %6151 = vmatpush1.bf16.msra.mxu0 %v4636
    %6152 = vmatprep.mubr.bf16.mxu0 %v2391
    %6153 = vmatmul.mubr.bf16.gmra.mrb[0].mxu0 %v2390
    %v6154 = vpop.f32.mrb[0].mxu0
    %v6155 = vadd.f32 %v2955, %v6154
    %v6156 = vpop.f32.mrb[0].mxu0
    %v6157 = vadd.f32 %v2959, %v6156
    %v6158 = vpop.f32.mrb[0].mxu0
    %v6159 = vadd.f32 %v2955, %v6158
    %v6160 = vpop.f32.mrb[0].mxu0
    %v6161 = vadd.f32 %v2959, %v6160
    %6162 = vmatprep.mubr.bf16.mxu0 %v2399
    %6163 = vmatmul.mubr.bf16.gmra.mrb[0].mxu0 %v2398
    %v6164 = vpop.f32.mrb[0].mxu0
    %v6165 = vadd.f32 %v2955, %v6164
    %v6166 = vpop.f32.mrb[0].mxu0
    %v6167 = vadd.f32 %v2959, %v6166
    %v6168 = vpop.f32.mrb[0].mxu0
    %v6169 = vadd.f32 %v2955, %v6168
    %v6170 = vpop.f32.mrb[0].mxu0
    %v6171 = vadd.f32 %v2959, %v6170
    %6172 = vmatprep.mubr.bf16.mxu0 %v2407
    %6173 = vmatmul.mubr.bf16.gmra.mrb[0].mxu0 %v2406
    %v6174 = vpop.f32.mrb[0].mxu0
    %v6175 = vadd.f32 %v2955, %v6174
    %v6176 = vpop.f32.mrb[0].mxu0
    %v6177 = vadd.f32 %v2959, %v6176
    %v6178 = vpop.f32.mrb[0].mxu0
    %v6179 = vadd.f32 %v2955, %v6178
    %v6180 = vpop.f32.mrb[0].mxu0
    %v6181 = vadd.f32 %v2959, %v6180
    %6182 = vmatprep.mubr.bf16.mxu0 %v2415
    %6183 = vmatmul.mubr.bf16.gmra.mrb[0].mxu0 %v2414
    %v6184 = vpop.f32.mrb[0].mxu0
    %v6185 = vadd.f32 %v2955, %v6184
    %v6186 = vpop.f32.mrb[0].mxu0
    %v6187 = vadd.f32 %v2959, %v6186
    %v6188 = vpop.f32.mrb[0].mxu0
    %v6189 = vadd.f32 %v2955, %v6188
    %v6190 = vpop.f32.mrb[0].mxu0
    %v6191 = vadd.f32 %v2959, %v6190
    %6192 = vdwg.mxu0
    %6193 = vmatprep.subr.bf16.mxu0 %v4645
    %6194 = vmatpush1.bf16.msra.mxu0 %v4644
    %6195 = vmatprep.subr.bf16.mxu0 %v4653
    %6196 = vmatpush1.bf16.msra.mxu0 %v4652
    %6197 = vmatprep.subr.bf16.mxu0 %v4661
    %6198 = vmatpush1.bf16.msra.mxu0 %v4660
    %6199 = vmatprep.subr.bf16.mxu0 %v4669
    %6200 = vmatpush1.bf16.msra.mxu0 %v4668
    %6201 = vmatprep.subr.bf16.mxu0 %v4677
    %6202 = vmatpush1.bf16.msra.mxu0 %v4676
    %6203 = vmatprep.subr.bf16.mxu0 %v4685
    %6204 = vmatpush1.bf16.msra.mxu0 %v4684
    %6205 = vmatprep.subr.bf16.mxu0 %v4693
    %6206 = vmatpush1.bf16.msra.mxu0 %v4692
    %6207 = vmatprep.subr.bf16.mxu0 %v4701
    %6208 = vmatpush1.bf16.msra.mxu0 %v4700
    %6209 = vmatprep.subr.bf16.mxu0 %v4709
    %6210 = vmatpush1.bf16.msra.mxu0 %v4708
    %6211 = vmatprep.subr.bf16.mxu0 %v4717
    %6212 = vmatpush1.bf16.msra.mxu0 %v4716
    %6213 = vmatprep.subr.bf16.mxu0 %v4725
    %6214 = vmatpush1.bf16.msra.mxu0 %v4724
    %6215 = vmatprep.subr.bf16.mxu0 %v4733
    %6216 = vmatpush1.bf16.msra.mxu0 %v4732
    %6217 = vmatprep.subr.bf16.mxu0 %v4741
    %6218 = vmatpush1.bf16.msra.mxu0 %v4740
    %6219 = vmatprep.subr.bf16.mxu0 %v4749
    %6220 = vmatpush1.bf16.msra.mxu0 %v4748
    %6221 = vmatprep.subr.bf16.mxu0 %v4757
    %6222 = vmatpush1.bf16.msra.mxu0 %v4756
    %6223 = vmatprep.subr.bf16.mxu0 %v4765
    %6224 = vmatpush1.bf16.msra.mxu0 %v4764
    %6225 = vmatprep.mubr.bf16.mxu0 %v2393
    %6226 = vmatmul.mubr.bf16.gmra.mrb[0].mxu0 %v2392
    %v6227 = vpop.f32.mrb[0].mxu0
    %v6228 = vadd.f32 %v6155, %v6227
    %v6229 = vpop.f32.mrb[0].mxu0
    %v6230 = vadd.f32 %v6157, %v6229
    %v6231 = vpop.f32.mrb[0].mxu0
    %v6232 = vadd.f32 %v6159, %v6231
    %v6233 = vpop.f32.mrb[0].mxu0
    %v6234 = vadd.f32 %v6161, %v6233
    %6235 = vmatprep.mubr.bf16.mxu0 %v2401
    %6236 = vmatmul.mubr.bf16.gmra.mrb[0].mxu0 %v2400
    %v6237 = vpop.f32.mrb[0].mxu0
    %v6238 = vadd.f32 %v6165, %v6237
    %v6239 = vpop.f32.mrb[0].mxu0
    %v6240 = vadd.f32 %v6167, %v6239
    %v6241 = vpop.f32.mrb[0].mxu0
    %v6242 = vadd.f32 %v6169, %v6241
    %v6243 = vpop.f32.mrb[0].mxu0
    %v6244 = vadd.f32 %v6171, %v6243
    %6245 = vmatprep.mubr.bf16.mxu0 %v2409
    %6246 = vmatmul.mubr.bf16.gmra.mrb[0].mxu0 %v2408
    %v6247 = vpop.f32.mrb[0].mxu0
    %v6248 = vadd.f32 %v6175, %v6247
    %v6249 = vpop.f32.mrb[0].mxu0
    %v6250 = vadd.f32 %v6177, %v6249
    %v6251 = vpop.f32.mrb[0].mxu0
    %v6252 = vadd.f32 %v6179, %v6251
    %v6253 = vpop.f32.mrb[0].mxu0
    %v6254 = vadd.f32 %v6181, %v6253
    %6255 = vmatprep.mubr.bf16.mxu0 %v2417
    %6256 = vmatmul.mubr.bf16.gmra.mrb[0].mxu0 %v2416
    %v6257 = vpop.f32.mrb[0].mxu0
    %v6258 = vadd.f32 %v6185, %v6257
    %v6259 = vpop.f32.mrb[0].mxu0
    %v6260 = vadd.f32 %v6187, %v6259
    %v6261 = vpop.f32.mrb[0].mxu0
    %v6262 = vadd.f32 %v6189, %v6261
    %v6263 = vpop.f32.mrb[0].mxu0
    %v6264 = vadd.f32 %v6191, %v6263
    %6265 = vdwg.mxu0
    %6266 = vmatprep.subr.bf16.mxu0 %v4773
    %6267 = vmatpush1.bf16.msra.mxu0 %v4772
    %6268 = vmatprep.subr.bf16.mxu0 %v4781
    %6269 = vmatpush1.bf16.msra.mxu0 %v4780
    %6270 = vmatprep.subr.bf16.mxu0 %v4789
    %6271 = vmatpush1.bf16.msra.mxu0 %v4788
    %6272 = vmatprep.subr.bf16.mxu0 %v4797
    %6273 = vmatpush1.bf16.msra.mxu0 %v4796
    %6274 = vmatprep.subr.bf16.mxu0 %v4805
    %6275 = vmatpush1.bf16.msra.mxu0 %v4804
    %6276 = vmatprep.subr.bf16.mxu0 %v4813
    %6277 = vmatpush1.bf16.msra.mxu0 %v4812
    %6278 = vmatprep.subr.bf16.mxu0 %v4821
    %6279 = vmatpush1.bf16.msra.mxu0 %v4820
    %6280 = vmatprep.subr.bf16.mxu0 %v4829
    %6281 = vmatpush1.bf16.msra.mxu0 %v4828
    %6282 = vmatprep.subr.bf16.mxu0 %v4837
    %6283 = vmatpush1.bf16.msra.mxu0 %v4836
    %6284 = vmatprep.subr.bf16.mxu0 %v4845
    %6285 = vmatpush1.bf16.msra.mxu0 %v4844
    %6286 = vmatprep.subr.bf16.mxu0 %v4853
    %6287 = vmatpush1.bf16.msra.mxu0 %v4852
    %6288 = vmatprep.subr.bf16.mxu0 %v4861
    %6289 = vmatpush1.bf16.msra.mxu0 %v4860
    %6290 = vmatprep.subr.bf16.mxu0 %v4869
    %6291 = vmatpush1.bf16.msra.mxu0 %v4868
    %6292 = vmatprep.subr.bf16.mxu0 %v4877
    %6293 = vmatpush1.bf16.msra.mxu0 %v4876
    %6294 = vmatprep.subr.bf16.mxu0 %v4885
    %6295 = vmatpush1.bf16.msra.mxu0 %v4884
    %6296 = vmatprep.subr.bf16.mxu0 %v4893
    %6297 = vmatpush1.bf16.msra.mxu0 %v4892
    %6298 = vmatprep.mubr.bf16.mxu0 %v2395
    %6299 = vmatmul.mubr.bf16.gmra.mrb[0].mxu0 %v2394
    %v6300 = vpop.f32.mrb[0].mxu0
    %v6301 = vadd.f32 %v6228, %v6300
    %v6302 = vpop.f32.mrb[0].mxu0
    %v6303 = vadd.f32 %v6230, %v6302
    %v6304 = vpop.f32.mrb[0].mxu0
    %v6305 = vadd.f32 %v6232, %v6304
    %v6306 = vpop.f32.mrb[0].mxu0
    %v6307 = vadd.f32 %v6234, %v6306
    %6308 = vmatprep.mubr.bf16.mxu0 %v2403
    %6309 = vmatmul.mubr.bf16.gmra.mrb[0].mxu0 %v2402
    %v6310 = vpop.f32.mrb[0].mxu0
    %v6311 = vadd.f32 %v6238, %v6310
    %v6312 = vpop.f32.mrb[0].mxu0
    %v6313 = vadd.f32 %v6240, %v6312
    %v6314 = vpop.f32.mrb[0].mxu0
    %v6315 = vadd.f32 %v6242, %v6314
    %v6316 = vpop.f32.mrb[0].mxu0
    %v6317 = vadd.f32 %v6244, %v6316
    %6318 = vmatprep.mubr.bf16.mxu0 %v2411
    %6319 = vmatmul.mubr.bf16.gmra.mrb[0].mxu0 %v2410
    %v6320 = vpop.f32.mrb[0].mxu0
    %v6321 = vadd.f32 %v6248, %v6320
    %v6322 = vpop.f32.mrb[0].mxu0
    %v6323 = vadd.f32 %v6250, %v6322
    %v6324 = vpop.f32.mrb[0].mxu0
    %v6325 = vadd.f32 %v6252, %v6324
    %v6326 = vpop.f32.mrb[0].mxu0
    %v6327 = vadd.f32 %v6254, %v6326
    %6328 = vmatprep.mubr.bf16.mxu0 %v2419
    %6329 = vmatmul.mubr.bf16.gmra.mrb[0].mxu0 %v2418
    %v6330 = vpop.f32.mrb[0].mxu0
    %v6331 = vadd.f32 %v6258, %v6330
    %v6332 = vpop.f32.mrb[0].mxu0
    %v6333 = vadd.f32 %v6260, %v6332
    %v6334 = vpop.f32.mrb[0].mxu0
    %v6335 = vadd.f32 %v6262, %v6334
    %v6336 = vpop.f32.mrb[0].mxu0
    %v6337 = vadd.f32 %v6264, %v6336
    %6338 = vdwg.mxu0
    %6339 = vmatprep.subr.bf16.mxu0 %v4901
    %6340 = vmatpush1.bf16.msra.mxu0 %v4900
    %6341 = vmatprep.subr.bf16.mxu0 %v4909
    %6342 = vmatpush1.bf16.msra.mxu0 %v4908
    %6343 = vmatprep.subr.bf16.mxu0 %v4917
    %6344 = vmatpush1.bf16.msra.mxu0 %v4916
    %6345 = vmatprep.subr.bf16.mxu0 %v4925
    %6346 = vmatpush1.bf16.msra.mxu0 %v4924
    %6347 = vmatprep.subr.bf16.mxu0 %v4933
    %6348 = vmatpush1.bf16.msra.mxu0 %v4932
    %6349 = vmatprep.subr.bf16.mxu0 %v4941
    %6350 = vmatpush1.bf16.msra.mxu0 %v4940
    %6351 = vmatprep.subr.bf16.mxu0 %v4949
    %6352 = vmatpush1.bf16.msra.mxu0 %v4948
    %6353 = vmatprep.subr.bf16.mxu0 %v4957
    %6354 = vmatpush1.bf16.msra.mxu0 %v4956
    %6355 = vmatprep.subr.bf16.mxu0 %v4965
    %6356 = vmatpush1.bf16.msra.mxu0 %v4964
    %6357 = vmatprep.subr.bf16.mxu0 %v4973
    %6358 = vmatpush1.bf16.msra.mxu0 %v4972
    %6359 = vmatprep.subr.bf16.mxu0 %v4981
    %6360 = vmatpush1.bf16.msra.mxu0 %v4980
    %6361 = vmatprep.subr.bf16.mxu0 %v4989
    %6362 = vmatpush1.bf16.msra.mxu0 %v4988
    %6363 = vmatprep.subr.bf16.mxu0 %v4997
    %6364 = vmatpush1.bf16.msra.mxu0 %v4996
    %6365 = vmatprep.subr.bf16.mxu0 %v5005
    %6366 = vmatpush1.bf16.msra.mxu0 %v5004
    %6367 = vmatprep.subr.bf16.mxu0 %v5013
    %6368 = vmatpush1.bf16.msra.mxu0 %v5012
    %6369 = vmatprep.subr.bf16.mxu0 %v5021
    %6370 = vmatpush1.bf16.msra.mxu0 %v5020
    %6371 = vmatprep.mubr.bf16.mxu0 %v2397
    %6372 = vmatmul.mubr.bf16.gmra.mrb[0].mxu0 %v2396
    %v6373 = vpop.f32.mrb[0].mxu0
    %v6374 = vadd.f32 %v6301, %v6373
    %v6375 = vpop.f32.mrb[0].mxu0
    %v6376 = vadd.f32 %v6303, %v6375
    %v6377 = vpop.f32.mrb[0].mxu0
    %v6378 = vadd.f32 %v6305, %v6377
    %v6379 = vpop.f32.mrb[0].mxu0
    %v6380 = vadd.f32 %v6307, %v6379
    %6381 = vmatprep.mubr.bf16.mxu0 %v2405
    %6382 = vmatmul.mubr.bf16.gmra.mrb[0].mxu0 %v2404
    %v6383 = vpop.f32.mrb[0].mxu0
    %v6384 = vadd.f32 %v6311, %v6383
    %v6385 = vpop.f32.mrb[0].mxu0
    %v6386 = vadd.f32 %v6313, %v6385
    %v6387 = vpop.f32.mrb[0].mxu0
    %v6388 = vadd.f32 %v6315, %v6387
    %v6389 = vpop.f32.mrb[0].mxu0
    %v6390 = vadd.f32 %v6317, %v6389
    %6391 = vmatprep.mubr.bf16.mxu0 %v2413
    %6392 = vmatmul.mubr.bf16.gmra.mrb[0].mxu0 %v2412
    %v6393 = vpop.f32.mrb[0].mxu0
    %v6394 = vadd.f32 %v6321, %v6393
    %v6395 = vpop.f32.mrb[0].mxu0
    %v6396 = vadd.f32 %v6323, %v6395
    %v6397 = vpop.f32.mrb[0].mxu0
    %v6398 = vadd.f32 %v6325, %v6397
    %v6399 = vpop.f32.mrb[0].mxu0
    %v6400 = vadd.f32 %v6327, %v6399
    %6401 = vmatprep.mubr.bf16.mxu0 %v2421
    %6402 = vmatmul.mubr.bf16.gmra.mrb[0].mxu0 %v2420
    %v6403 = vpop.f32.mrb[0].mxu0
    %v6404 = vadd.f32 %v6331, %v6403
    %v6405 = vpop.f32.mrb[0].mxu0
    %v6406 = vadd.f32 %v6333, %v6405
    %v6407 = vpop.f32.mrb[0].mxu0
    %v6408 = vadd.f32 %v6335, %v6407
    %v6409 = vpop.f32.mrb[0].mxu0
    %v6410 = vadd.f32 %v6337, %v6409
    %6411 = vdwg.mxu0
    %6412 = vmatprep.subr.bf16.mxu0 %v4519
    %6413 = vmatpush1.bf16.msra.mxu0 %v4518
    %6414 = vmatprep.subr.bf16.mxu0 %v4527
    %6415 = vmatpush1.bf16.msra.mxu0 %v4526
    %6416 = vmatprep.subr.bf16.mxu0 %v4535
    %6417 = vmatpush1.bf16.msra.mxu0 %v4534
    %6418 = vmatprep.subr.bf16.mxu0 %v4543
    %6419 = vmatpush1.bf16.msra.mxu0 %v4542
    %6420 = vmatprep.subr.bf16.mxu0 %v4551
    %6421 = vmatpush1.bf16.msra.mxu0 %v4550
    %6422 = vmatprep.subr.bf16.mxu0 %v4559
    %6423 = vmatpush1.bf16.msra.mxu0 %v4558
    %6424 = vmatprep.subr.bf16.mxu0 %v4567
    %6425 = vmatpush1.bf16.msra.mxu0 %v4566
    %6426 = vmatprep.subr.bf16.mxu0 %v4575
    %6427 = vmatpush1.bf16.msra.mxu0 %v4574
    %6428 = vmatprep.subr.bf16.mxu0 %v4583
    %6429 = vmatpush1.bf16.msra.mxu0 %v4582
    %6430 = vmatprep.subr.bf16.mxu0 %v4591
    %6431 = vmatpush1.bf16.msra.mxu0 %v4590
    %6432 = vmatprep.subr.bf16.mxu0 %v4599
    %6433 = vmatpush1.bf16.msra.mxu0 %v4598
    %6434 = vmatprep.subr.bf16.mxu0 %v4607
    %6435 = vmatpush1.bf16.msra.mxu0 %v4606
    %6436 = vmatprep.subr.bf16.mxu0 %v4615
    %6437 = vmatpush1.bf16.msra.mxu0 %v4614
    %6438 = vmatprep.subr.bf16.mxu0 %v4623
    %6439 = vmatpush1.bf16.msra.mxu0 %v4622
    %6440 = vmatprep.subr.bf16.mxu0 %v4631
    %6441 = vmatpush1.bf16.msra.mxu0 %v4630
    %6442 = vmatprep.subr.bf16.mxu0 %v4639
    %6443 = vmatpush1.bf16.msra.mxu0 %v4638
    %6444 = vmatprep.mubr.bf16.mxu0 %v2391
    %6445 = vmatmul.mubr.bf16.gmra.mrb[0].mxu0 %v2390
    %v6446 = vpop.f32.mrb[0].mxu0
    %v6447 = vadd.f32 %v2963, %v6446
    %v6448 = vpop.f32.mrb[0].mxu0
    %v6449 = vadd.f32 %v2967, %v6448
    %v6450 = vpop.f32.mrb[0].mxu0
    %v6451 = vadd.f32 %v2963, %v6450
    %v6452 = vpop.f32.mrb[0].mxu0
    %v6453 = vadd.f32 %v2967, %v6452
    %6454 = vmatprep.mubr.bf16.mxu0 %v2399
    %6455 = vmatmul.mubr.bf16.gmra.mrb[0].mxu0 %v2398
    %v6456 = vpop.f32.mrb[0].mxu0
    %v6457 = vadd.f32 %v2963, %v6456
    %v6458 = vpop.f32.mrb[0].mxu0
    %v6459 = vadd.f32 %v2967, %v6458
    %v6460 = vpop.f32.mrb[0].mxu0
    %v6461 = vadd.f32 %v2963, %v6460
    %v6462 = vpop.f32.mrb[0].mxu0
    %v6463 = vadd.f32 %v2967, %v6462
    %6464 = vmatprep.mubr.bf16.mxu0 %v2407
    %6465 = vmatmul.mubr.bf16.gmra.mrb[0].mxu0 %v2406
    %v6466 = vpop.f32.mrb[0].mxu0
    %v6467 = vadd.f32 %v2963, %v6466
    %v6468 = vpop.f32.mrb[0].mxu0
    %v6469 = vadd.f32 %v2967, %v6468
    %v6470 = vpop.f32.mrb[0].mxu0
    %v6471 = vadd.f32 %v2963, %v6470
    %v6472 = vpop.f32.mrb[0].mxu0
    %v6473 = vadd.f32 %v2967, %v6472
    %6474 = vmatprep.mubr.bf16.mxu0 %v2415
    %6475 = vmatmul.mubr.bf16.gmra.mrb[0].mxu0 %v2414
    %v6476 = vpop.f32.mrb[0].mxu0
    %v6477 = vadd.f32 %v2963, %v6476
    %v6478 = vpop.f32.mrb[0].mxu0
    %v6479 = vadd.f32 %v2967, %v6478
    %v6480 = vpop.f32.mrb[0].mxu0
    %v6481 = vadd.f32 %v2963, %v6480
    %v6482 = vpop.f32.mrb[0].mxu0
    %v6483 = vadd.f32 %v2967, %v6482
    %6484 = vdwg.mxu0
    %6485 = vmatprep.subr.bf16.mxu0 %v4647
    %6486 = vmatpush1.bf16.msra.mxu0 %v4646
    %6487 = vmatprep.subr.bf16.mxu0 %v4655
    %6488 = vmatpush1.bf16.msra.mxu0 %v4654
    %6489 = vmatprep.subr.bf16.mxu0 %v4663
    %6490 = vmatpush1.bf16.msra.mxu0 %v4662
    %6491 = vmatprep.subr.bf16.mxu0 %v4671
    %6492 = vmatpush1.bf16.msra.mxu0 %v4670
    %6493 = vmatprep.subr.bf16.mxu0 %v4679
    %6494 = vmatpush1.bf16.msra.mxu0 %v4678
    %6495 = vmatprep.subr.bf16.mxu0 %v4687
    %6496 = vmatpush1.bf16.msra.mxu0 %v4686
    %6497 = vmatprep.subr.bf16.mxu0 %v4695
    %6498 = vmatpush1.bf16.msra.mxu0 %v4694
    %6499 = vmatprep.subr.bf16.mxu0 %v4703
    %6500 = vmatpush1.bf16.msra.mxu0 %v4702
    %6501 = vmatprep.subr.bf16.mxu0 %v4711
    %6502 = vmatpush1.bf16.msra.mxu0 %v4710
    %6503 = vmatprep.subr.bf16.mxu0 %v4719
    %6504 = vmatpush1.bf16.msra.mxu0 %v4718
    %6505 = vmatprep.subr.bf16.mxu0 %v4727
    %6506 = vmatpush1.bf16.msra.mxu0 %v4726
    %6507 = vmatprep.subr.bf16.mxu0 %v4735
    %6508 = vmatpush1.bf16.msra.mxu0 %v4734
    %6509 = vmatprep.subr.bf16.mxu0 %v4743
    %6510 = vmatpush1.bf16.msra.mxu0 %v4742
    %6511 = vmatprep.subr.bf16.mxu0 %v4751
    %6512 = vmatpush1.bf16.msra.mxu0 %v4750
    %6513 = vmatprep.subr.bf16.mxu0 %v4759
    %6514 = vmatpush1.bf16.msra.mxu0 %v4758
    %6515 = vmatprep.subr.bf16.mxu0 %v4767
    %6516 = vmatpush1.bf16.msra.mxu0 %v4766
    %6517 = vmatprep.mubr.bf16.mxu0 %v2393
    %6518 = vmatmul.mubr.bf16.gmra.mrb[0].mxu0 %v2392
    %v6519 = vpop.f32.mrb[0].mxu0
    %v6520 = vadd.f32 %v6447, %v6519
    %v6521 = vpop.f32.mrb[0].mxu0
    %v6522 = vadd.f32 %v6449, %v6521
    %v6523 = vpop.f32.mrb[0].mxu0
    %v6524 = vadd.f32 %v6451, %v6523
    %v6525 = vpop.f32.mrb[0].mxu0
    %v6526 = vadd.f32 %v6453, %v6525
    %6527 = vmatprep.mubr.bf16.mxu0 %v2401
    %6528 = vmatmul.mubr.bf16.gmra.mrb[0].mxu0 %v2400
    %v6529 = vpop.f32.mrb[0].mxu0
    %v6530 = vadd.f32 %v6457, %v6529
    %v6531 = vpop.f32.mrb[0].mxu0
    %v6532 = vadd.f32 %v6459, %v6531
    %v6533 = vpop.f32.mrb[0].mxu0
    %v6534 = vadd.f32 %v6461, %v6533
    %v6535 = vpop.f32.mrb[0].mxu0
    %v6536 = vadd.f32 %v6463, %v6535
    %6537 = vmatprep.mubr.bf16.mxu0 %v2409
    %6538 = vmatmul.mubr.bf16.gmra.mrb[0].mxu0 %v2408
    %v6539 = vpop.f32.mrb[0].mxu0
    %v6540 = vadd.f32 %v6467, %v6539
    %v6541 = vpop.f32.mrb[0].mxu0
    %v6542 = vadd.f32 %v6469, %v6541
    %v6543 = vpop.f32.mrb[0].mxu0
    %v6544 = vadd.f32 %v6471, %v6543
    %v6545 = vpop.f32.mrb[0].mxu0
    %v6546 = vadd.f32 %v6473, %v6545
    %6547 = vmatprep.mubr.bf16.mxu0 %v2417
    %6548 = vmatmul.mubr.bf16.gmra.mrb[0].mxu0 %v2416
    %v6549 = vpop.f32.mrb[0].mxu0
    %v6550 = vadd.f32 %v6477, %v6549
    %v6551 = vpop.f32.mrb[0].mxu0
    %v6552 = vadd.f32 %v6479, %v6551
    %v6553 = vpop.f32.mrb[0].mxu0
    %v6554 = vadd.f32 %v6481, %v6553
    %v6555 = vpop.f32.mrb[0].mxu0
    %v6556 = vadd.f32 %v6483, %v6555
    %6557 = vdwg.mxu0
    %6558 = vmatprep.subr.bf16.mxu0 %v4775
    %6559 = vmatpush1.bf16.msra.mxu0 %v4774
    %6560 = vmatprep.subr.bf16.mxu0 %v4783
    %6561 = vmatpush1.bf16.msra.mxu0 %v4782
    %6562 = vmatprep.subr.bf16.mxu0 %v4791
    %6563 = vmatpush1.bf16.msra.mxu0 %v4790
    %6564 = vmatprep.subr.bf16.mxu0 %v4799
    %6565 = vmatpush1.bf16.msra.mxu0 %v4798
    %6566 = vmatprep.subr.bf16.mxu0 %v4807
    %6567 = vmatpush1.bf16.msra.mxu0 %v4806
    %6568 = vmatprep.subr.bf16.mxu0 %v4815
    %6569 = vmatpush1.bf16.msra.mxu0 %v4814
    %6570 = vmatprep.subr.bf16.mxu0 %v4823
    %6571 = vmatpush1.bf16.msra.mxu0 %v4822
    %6572 = vmatprep.subr.bf16.mxu0 %v4831
    %6573 = vmatpush1.bf16.msra.mxu0 %v4830
    %6574 = vmatprep.subr.bf16.mxu0 %v4839
    %6575 = vmatpush1.bf16.msra.mxu0 %v4838
    %6576 = vmatprep.subr.bf16.mxu0 %v4847
    %6577 = vmatpush1.bf16.msra.mxu0 %v4846
    %6578 = vmatprep.subr.bf16.mxu0 %v4855
    %6579 = vmatpush1.bf16.msra.mxu0 %v4854
    %6580 = vmatprep.subr.bf16.mxu0 %v4863
    %6581 = vmatpush1.bf16.msra.mxu0 %v4862
    %6582 = vmatprep.subr.bf16.mxu0 %v4871
    %6583 = vmatpush1.bf16.msra.mxu0 %v4870
    %6584 = vmatprep.subr.bf16.mxu0 %v4879
    %6585 = vmatpush1.bf16.msra.mxu0 %v4878
    %6586 = vmatprep.subr.bf16.mxu0 %v4887
    %6587 = vmatpush1.bf16.msra.mxu0 %v4886
    %6588 = vmatprep.subr.bf16.mxu0 %v4895
    %6589 = vmatpush1.bf16.msra.mxu0 %v4894
    %6590 = vmatprep.mubr.bf16.mxu0 %v2395
    %6591 = vmatmul.mubr.bf16.gmra.mrb[0].mxu0 %v2394
    %v6592 = vpop.f32.mrb[0].mxu0
    %v6593 = vadd.f32 %v6520, %v6592
    %v6594 = vpop.f32.mrb[0].mxu0
    %v6595 = vadd.f32 %v6522, %v6594
    %v6596 = vpop.f32.mrb[0].mxu0
    %v6597 = vadd.f32 %v6524, %v6596
    %v6598 = vpop.f32.mrb[0].mxu0
    %v6599 = vadd.f32 %v6526, %v6598
    %6600 = vmatprep.mubr.bf16.mxu0 %v2403
    %6601 = vmatmul.mubr.bf16.gmra.mrb[0].mxu0 %v2402
    %v6602 = vpop.f32.mrb[0].mxu0
    %v6603 = vadd.f32 %v6530, %v6602
    %v6604 = vpop.f32.mrb[0].mxu0
    %v6605 = vadd.f32 %v6532, %v6604
    %v6606 = vpop.f32.mrb[0].mxu0
    %v6607 = vadd.f32 %v6534, %v6606
    %v6608 = vpop.f32.mrb[0].mxu0
    %v6609 = vadd.f32 %v6536, %v6608
    %6610 = vmatprep.mubr.bf16.mxu0 %v2411
    %6611 = vmatmul.mubr.bf16.gmra.mrb[0].mxu0 %v2410
    %v6612 = vpop.f32.mrb[0].mxu0
    %v6613 = vadd.f32 %v6540, %v6612
    %v6614 = vpop.f32.mrb[0].mxu0
    %v6615 = vadd.f32 %v6542, %v6614
    %v6616 = vpop.f32.mrb[0].mxu0
    %v6617 = vadd.f32 %v6544, %v6616
    %v6618 = vpop.f32.mrb[0].mxu0
    %v6619 = vadd.f32 %v6546, %v6618
    %6620 = vmatprep.mubr.bf16.mxu0 %v2419
    %6621 = vmatmul.mubr.bf16.gmra.mrb[0].mxu0 %v2418
    %v6622 = vpop.f32.mrb[0].mxu0
    %v6623 = vadd.f32 %v6550, %v6622
    %v6624 = vpop.f32.mrb[0].mxu0
    %v6625 = vadd.f32 %v6552, %v6624
    %v6626 = vpop.f32.mrb[0].mxu0
    %v6627 = vadd.f32 %v6554, %v6626
    %v6628 = vpop.f32.mrb[0].mxu0
    %v6629 = vadd.f32 %v6556, %v6628
    %6630 = vdwg.mxu0
    %6631 = vmatprep.subr.bf16.mxu0 %v4903
    %6632 = vmatpush1.bf16.msra.mxu0 %v4902
    %6633 = vmatprep.subr.bf16.mxu0 %v4911
    %6634 = vmatpush1.bf16.msra.mxu0 %v4910
    %6635 = vmatprep.subr.bf16.mxu0 %v4919
    %6636 = vmatpush1.bf16.msra.mxu0 %v4918
    %6637 = vmatprep.subr.bf16.mxu0 %v4927
    %6638 = vmatpush1.bf16.msra.mxu0 %v4926
    %6639 = vmatprep.subr.bf16.mxu0 %v4935
    %6640 = vmatpush1.bf16.msra.mxu0 %v4934
    %6641 = vmatprep.subr.bf16.mxu0 %v4943
    %6642 = vmatpush1.bf16.msra.mxu0 %v4942
    %6643 = vmatprep.subr.bf16.mxu0 %v4951
    %6644 = vmatpush1.bf16.msra.mxu0 %v4950
    %6645 = vmatprep.subr.bf16.mxu0 %v4959
    %6646 = vmatpush1.bf16.msra.mxu0 %v4958
    %6647 = vmatprep.subr.bf16.mxu0 %v4967
    %6648 = vmatpush1.bf16.msra.mxu0 %v4966
    %6649 = vmatprep.subr.bf16.mxu0 %v4975
    %6650 = vmatpush1.bf16.msra.mxu0 %v4974
    %6651 = vmatprep.subr.bf16.mxu0 %v4983
    %6652 = vmatpush1.bf16.msra.mxu0 %v4982
    %6653 = vmatprep.subr.bf16.mxu0 %v4991
    %6654 = vmatpush1.bf16.msra.mxu0 %v4990
    %6655 = vmatprep.subr.bf16.mxu0 %v4999
    %6656 = vmatpush1.bf16.msra.mxu0 %v4998
    %6657 = vmatprep.subr.bf16.mxu0 %v5007
    %6658 = vmatpush1.bf16.msra.mxu0 %v5006
    %6659 = vmatprep.subr.bf16.mxu0 %v5015
    %6660 = vmatpush1.bf16.msra.mxu0 %v5014
    %6661 = vmatprep.subr.bf16.mxu0 %v5023
    %6662 = vmatpush1.bf16.msra.mxu0 %v5022
    %6663 = vmatprep.mubr.bf16.mxu0 %v2397
    %6664 = vmatmul.mubr.bf16.gmra.mrb[0].mxu0 %v2396
    %v6665 = vpop.f32.mrb[0].mxu0
    %v6666 = vadd.f32 %v6593, %v6665
    %v6667 = vpop.f32.mrb[0].mxu0
    %v6668 = vadd.f32 %v6595, %v6667
    %v6669 = vpop.f32.mrb[0].mxu0
    %v6670 = vadd.f32 %v6597, %v6669
    %v6671 = vpop.f32.mrb[0].mxu0
    %v6672 = vadd.f32 %v6599, %v6671
    %6673 = vmatprep.mubr.bf16.mxu0 %v2405
    %6674 = vmatmul.mubr.bf16.gmra.mrb[0].mxu0 %v2404
    %v6675 = vpop.f32.mrb[0].mxu0
    %v6676 = vadd.f32 %v6603, %v6675
    %v6677 = vpop.f32.mrb[0].mxu0
    %v6678 = vadd.f32 %v6605, %v6677
    %v6679 = vpop.f32.mrb[0].mxu0
    %v6680 = vadd.f32 %v6607, %v6679
    %v6681 = vpop.f32.mrb[0].mxu0
    %v6682 = vadd.f32 %v6609, %v6681
    %6683 = vmatprep.mubr.bf16.mxu0 %v2413
    %6684 = vmatmul.mubr.bf16.gmra.mrb[0].mxu0 %v2412
    %v6685 = vpop.f32.mrb[0].mxu0
    %v6686 = vadd.f32 %v6613, %v6685
    %v6687 = vpop.f32.mrb[0].mxu0
    %v6688 = vadd.f32 %v6615, %v6687
    %v6689 = vpop.f32.mrb[0].mxu0
    %v6690 = vadd.f32 %v6617, %v6689
    %v6691 = vpop.f32.mrb[0].mxu0
    %v6692 = vadd.f32 %v6619, %v6691
    %6693 = vmatprep.mubr.bf16.mxu0 %v2421
    %6694 = vmatmul.mubr.bf16.gmra.mrb[0].mxu0 %v2420
    %v6695 = vpop.f32.mrb[0].mxu0
    %v6696 = vadd.f32 %v6623, %v6695
    %v6697 = vpop.f32.mrb[0].mxu0
    %v6698 = vadd.f32 %v6625, %v6697
    %v6699 = vpop.f32.mrb[0].mxu0
    %v6700 = vadd.f32 %v6627, %v6699
    %v6701 = vpop.f32.mrb[0].mxu0
    %v6702 = vadd.f32 %v6629, %v6701
    %6703 = vdwg.mxu0
    %v6704 = vtanh.pop %v5790
    %v6705 = vtanh.pop %v5792
    %v6706 = vtanh.pop %v6082
    %v6707 = vtanh.pop %v6084
    %v6708 = vtanh.pop %v6374
    %v6709 = vtanh.pop %v6376
    %v6710 = vtanh.pop %v6666
    %v6711 = vtanh.pop %v6668
    %v6712 = vtanh.pop %v5794
    %v6713 = vtanh.pop %v5796
    %v6714 = vtanh.pop %v6086
    %v6715 = vtanh.pop %v6088
    %v6716 = vtanh.pop %v6378
    %v6717 = vtanh.pop %v6380
    %v6718 = vtanh.pop %v6670
    %v6719 = vtanh.pop %v6672
    %v6720 = vtanh.pop %v5800
    %v6721 = vtanh.pop %v5802
    %v6722 = vtanh.pop %v6092
    %v6723 = vtanh.pop %v6094
    %v6724 = vtanh.pop %v6384
    %v6725 = vtanh.pop %v6386
    %v6726 = vtanh.pop %v6676
    %v6727 = vtanh.pop %v6678
    %v6728 = vtanh.pop %v5804
    %v6729 = vtanh.pop %v5806
    %v6730 = vtanh.pop %v6096
    %v6731 = vtanh.pop %v6098
    %v6732 = vtanh.pop %v6388
    %v6733 = vtanh.pop %v6390
    %v6734 = vtanh.pop %v6680
    %v6735 = vtanh.pop %v6682
    %v6736 = vtanh.pop %v5810
    %v6737 = vtanh.pop %v5812
    %v6738 = vtanh.pop %v6102
    %v6739 = vtanh.pop %v6104
    %v6740 = vtanh.pop %v6394
    %v6741 = vtanh.pop %v6396
    %v6742 = vtanh.pop %v6686
    %v6743 = vtanh.pop %v6688
    %v6744 = vtanh.pop %v5814
    %v6745 = vtanh.pop %v5816
    %v6746 = vtanh.pop %v6106
    %v6747 = vtanh.pop %v6108
    %v6748 = vtanh.pop %v6398
    %v6749 = vtanh.pop %v6400
    %v6750 = vtanh.pop %v6690
    %v6751 = vtanh.pop %v6692
    %v6752 = vtanh.pop %v5820
    %v6753 = vtanh.pop %v5822
    %v6754 = vtanh.pop %v6112
    %v6755 = vtanh.pop %v6114
    %v6756 = vtanh.pop %v6404
    %v6757 = vtanh.pop %v6406
    %v6758 = vtanh.pop %v6696
    %v6759 = vtanh.pop %v6698
    %v6760 = vtanh.pop %v5824
    %v6761 = vtanh.pop %v5826
    %v6762 = vtanh.pop %v6116
    %v6763 = vtanh.pop %v6118
    %v6764 = vtanh.pop %v6408
    %v6765 = vtanh.pop %v6410
    %v6766 = vtanh.pop %v6700
    %v6767 = vtanh.pop %v6702
    %v6768 = vpack.c.bf16 %v6712, %v6704
    %v6769 = vpack.c.bf16 %v6713, %v6705
    %v6770 = vpack.c.bf16 %v6714, %v6706
    %v6771 = vpack.c.bf16 %v6715, %v6707
    %v6772 = vpack.c.bf16 %v6716, %v6708
    %v6773 = vpack.c.bf16 %v6717, %v6709
    %v6774 = vpack.c.bf16 %v6718, %v6710
    %v6775 = vpack.c.bf16 %v6719, %v6711
    %v6776 = vpack.c.bf16 %v6728, %v6720
    %v6777 = vpack.c.bf16 %v6729, %v6721
    %v6778 = vpack.c.bf16 %v6730, %v6722
    %v6779 = vpack.c.bf16 %v6731, %v6723
    %v6780 = vpack.c.bf16 %v6732, %v6724
    %v6781 = vpack.c.bf16 %v6733, %v6725
    %v6782 = vpack.c.bf16 %v6734, %v6726
    %v6783 = vpack.c.bf16 %v6735, %v6727
    %v6784 = vpack.c.bf16 %v6744, %v6736
    %v6785 = vpack.c.bf16 %v6745, %v6737
    %v6786 = vpack.c.bf16 %v6746, %v6738
    %v6787 = vpack.c.bf16 %v6747, %v6739
    %v6788 = vpack.c.bf16 %v6748, %v6740
    %v6789 = vpack.c.bf16 %v6749, %v6741
    %v6790 = vpack.c.bf16 %v6750, %v6742
    %v6791 = vpack.c.bf16 %v6751, %v6743
    %v6792 = vpack.c.bf16 %v6760, %v6752
    %v6793 = vpack.c.bf16 %v6761, %v6753
    %v6794 = vpack.c.bf16 %v6762, %v6754
    %v6795 = vpack.c.bf16 %v6763, %v6755
    %v6796 = vpack.c.bf16 %v6764, %v6756
    %v6797 = vpack.c.bf16 %v6765, %v6757
    %v6798 = vpack.c.bf16 %v6766, %v6758
    %v6799 = vpack.c.bf16 %v6767, %v6759
    %v6800 = vld [vmem:[#allocation11] sm:$0xff]
    %v6801 = vld [vmem:[#allocation11 + $0x8] sm:$0xff]
    %v6802 = vld [vmem:[#allocation11 + $0x10] sm:$0xff]
    %v6803 = vld [vmem:[#allocation11 + $0x18] sm:$0xff]
    %v6804 = vld [vmem:[#allocation11 + $0x20] sm:$0xff]
    %v6805 = vld [vmem:[#allocation11 + $0x28] sm:$0xff]
    %v6806 = vld [vmem:[#allocation11 + $0x30] sm:$0xff]
    %v6807 = vld [vmem:[#allocation11 + $0x38] sm:$0xff]
    %v6808 = vld [vmem:[#allocation11 + $0x40] sm:$0xff]
    %v6809 = vld [vmem:[#allocation11 + $0x48] sm:$0xff]
    %v6810 = vld [vmem:[#allocation11 + $0x50] sm:$0xff]
    %v6811 = vld [vmem:[#allocation11 + $0x58] sm:$0xff]
    %v6812 = vld [vmem:[#allocation11 + $0x60] sm:$0xff]
    %v6813 = vld [vmem:[#allocation11 + $0x68] sm:$0xff]
    %v6814 = vld [vmem:[#allocation11 + $0x70] sm:$0xff]
    %v6815 = vld [vmem:[#allocation11 + $0x78] sm:$0xff]
    %v6816 = vld [vmem:[#allocation11 + $0x80] sm:$0xff]
    %v6817 = vld [vmem:[#allocation11 + $0x88] sm:$0xff]
    %v6818 = vld [vmem:[#allocation11 + $0x90] sm:$0xff]
    %v6819 = vld [vmem:[#allocation11 + $0x98] sm:$0xff]
    %v6820 = vld [vmem:[#allocation11 + $0xa0] sm:$0xff]
    %v6821 = vld [vmem:[#allocation11 + $0xa8] sm:$0xff]
    %v6822 = vld [vmem:[#allocation11 + $0xb0] sm:$0xff]
    %v6823 = vld [vmem:[#allocation11 + $0xb8] sm:$0xff]
    %v6824 = vld [vmem:[#allocation11 + $0xc0] sm:$0xff]
    %v6825 = vld [vmem:[#allocation11 + $0xc8] sm:$0xff]
    %v6826 = vld [vmem:[#allocation11 + $0xd0] sm:$0xff]
    %v6827 = vld [vmem:[#allocation11 + $0xd8] sm:$0xff]
    %v6828 = vld [vmem:[#allocation11 + $0xe0] sm:$0xff]
    %v6829 = vld [vmem:[#allocation11 + $0xe8] sm:$0xff]
    %v6830 = vld [vmem:[#allocation11 + $0xf0] sm:$0xff]
    %v6831 = vld [vmem:[#allocation11 + $0xf8] sm:$0xff]
    %v6832 = vld [vmem:[#allocation11 + $0x100] sm:$0xff]
    %v6833 = vld [vmem:[#allocation11 + $0x108] sm:$0xff]
    %v6834 = vld [vmem:[#allocation11 + $0x110] sm:$0xff]
    %v6835 = vld [vmem:[#allocation11 + $0x118] sm:$0xff]
    %v6836 = vld [vmem:[#allocation11 + $0x120] sm:$0xff]
    %v6837 = vld [vmem:[#allocation11 + $0x128] sm:$0xff]
    %v6838 = vld [vmem:[#allocation11 + $0x130] sm:$0xff]
    %v6839 = vld [vmem:[#allocation11 + $0x138] sm:$0xff]
    %v6840 = vld [vmem:[#allocation11 + $0x140] sm:$0xff]
    %v6841 = vld [vmem:[#allocation11 + $0x148] sm:$0xff]
    %v6842 = vld [vmem:[#allocation11 + $0x150] sm:$0xff]
    %v6843 = vld [vmem:[#allocation11 + $0x158] sm:$0xff]
    %v6844 = vld [vmem:[#allocation11 + $0x160] sm:$0xff]
    %v6845 = vld [vmem:[#allocation11 + $0x168] sm:$0xff]
    %v6846 = vld [vmem:[#allocation11 + $0x170] sm:$0xff]
    %v6847 = vld [vmem:[#allocation11 + $0x178] sm:$0xff]
    %v6848 = vld [vmem:[#allocation11 + $0x180] sm:$0xff]
    %v6849 = vld [vmem:[#allocation11 + $0x188] sm:$0xff]
    %v6850 = vld [vmem:[#allocation11 + $0x190] sm:$0xff]
    %v6851 = vld [vmem:[#allocation11 + $0x198] sm:$0xff]
    %v6852 = vld [vmem:[#allocation11 + $0x1a0] sm:$0xff]
    %v6853 = vld [vmem:[#allocation11 + $0x1a8] sm:$0xff]
    %v6854 = vld [vmem:[#allocation11 + $0x1b0] sm:$0xff]
    %v6855 = vld [vmem:[#allocation11 + $0x1b8] sm:$0xff]
    %v6856 = vld [vmem:[#allocation11 + $0x1c0] sm:$0xff]
    %v6857 = vld [vmem:[#allocation11 + $0x1c8] sm:$0xff]
    %v6858 = vld [vmem:[#allocation11 + $0x1d0] sm:$0xff]
    %v6859 = vld [vmem:[#allocation11 + $0x1d8] sm:$0xff]
    %v6860 = vld [vmem:[#allocation11 + $0x1e0] sm:$0xff]
    %v6861 = vld [vmem:[#allocation11 + $0x1e8] sm:$0xff]
    %v6862 = vld [vmem:[#allocation11 + $0x1f0] sm:$0xff]
    %v6863 = vld [vmem:[#allocation11 + $0x1f8] sm:$0xff]
    %v6864 = vld [vmem:[#allocation11 + $0x200] sm:$0xff]
    %v6865 = vld [vmem:[#allocation11 + $0x208] sm:$0xff]
    %v6866 = vld [vmem:[#allocation11 + $0x210] sm:$0xff]
    %v6867 = vld [vmem:[#allocation11 + $0x218] sm:$0xff]
    %v6868 = vld [vmem:[#allocation11 + $0x220] sm:$0xff]
    %v6869 = vld [vmem:[#allocation11 + $0x228] sm:$0xff]
    %v6870 = vld [vmem:[#allocation11 + $0x230] sm:$0xff]
    %v6871 = vld [vmem:[#allocation11 + $0x238] sm:$0xff]
    %v6872 = vld [vmem:[#allocation11 + $0x240] sm:$0xff]
    %v6873 = vld [vmem:[#allocation11 + $0x248] sm:$0xff]
    %v6874 = vld [vmem:[#allocation11 + $0x250] sm:$0xff]
    %v6875 = vld [vmem:[#allocation11 + $0x258] sm:$0xff]
    %v6876 = vld [vmem:[#allocation11 + $0x260] sm:$0xff]
    %v6877 = vld [vmem:[#allocation11 + $0x268] sm:$0xff]
    %v6878 = vld [vmem:[#allocation11 + $0x270] sm:$0xff]
    %v6879 = vld [vmem:[#allocation11 + $0x278] sm:$0xff]
    %v6880 = vld [vmem:[#allocation11 + $0x280] sm:$0xff]
    %v6881 = vld [vmem:[#allocation11 + $0x288] sm:$0xff]
    %v6882 = vld [vmem:[#allocation11 + $0x290] sm:$0xff]
    %v6883 = vld [vmem:[#allocation11 + $0x298] sm:$0xff]
    %v6884 = vld [vmem:[#allocation11 + $0x2a0] sm:$0xff]
    %v6885 = vld [vmem:[#allocation11 + $0x2a8] sm:$0xff]
    %v6886 = vld [vmem:[#allocation11 + $0x2b0] sm:$0xff]
    %v6887 = vld [vmem:[#allocation11 + $0x2b8] sm:$0xff]
    %v6888 = vld [vmem:[#allocation11 + $0x2c0] sm:$0xff]
    %v6889 = vld [vmem:[#allocation11 + $0x2c8] sm:$0xff]
    %v6890 = vld [vmem:[#allocation11 + $0x2d0] sm:$0xff]
    %v6891 = vld [vmem:[#allocation11 + $0x2d8] sm:$0xff]
    %v6892 = vld [vmem:[#allocation11 + $0x2e0] sm:$0xff]
    %v6893 = vld [vmem:[#allocation11 + $0x2e8] sm:$0xff]
    %v6894 = vld [vmem:[#allocation11 + $0x2f0] sm:$0xff]
    %v6895 = vld [vmem:[#allocation11 + $0x2f8] sm:$0xff]
    %v6896 = vld [vmem:[#allocation11 + $0x300] sm:$0xff]
    %v6897 = vld [vmem:[#allocation11 + $0x308] sm:$0xff]
    %v6898 = vld [vmem:[#allocation11 + $0x310] sm:$0xff]
    %v6899 = vld [vmem:[#allocation11 + $0x318] sm:$0xff]
    %v6900 = vld [vmem:[#allocation11 + $0x320] sm:$0xff]
    %v6901 = vld [vmem:[#allocation11 + $0x328] sm:$0xff]
    %v6902 = vld [vmem:[#allocation11 + $0x330] sm:$0xff]
    %v6903 = vld [vmem:[#allocation11 + $0x338] sm:$0xff]
    %v6904 = vld [vmem:[#allocation11 + $0x340] sm:$0xff]
    %v6905 = vld [vmem:[#allocation11 + $0x348] sm:$0xff]
    %v6906 = vld [vmem:[#allocation11 + $0x350] sm:$0xff]
    %v6907 = vld [vmem:[#allocation11 + $0x358] sm:$0xff]
    %v6908 = vld [vmem:[#allocation11 + $0x360] sm:$0xff]
    %v6909 = vld [vmem:[#allocation11 + $0x368] sm:$0xff]
    %v6910 = vld [vmem:[#allocation11 + $0x370] sm:$0xff]
    %v6911 = vld [vmem:[#allocation11 + $0x378] sm:$0xff]
    %v6912 = vld [vmem:[#allocation11 + $0x380] sm:$0xff]
    %v6913 = vld [vmem:[#allocation11 + $0x388] sm:$0xff]
    %v6914 = vld [vmem:[#allocation11 + $0x390] sm:$0xff]
    %v6915 = vld [vmem:[#allocation11 + $0x398] sm:$0xff]
    %v6916 = vld [vmem:[#allocation11 + $0x3a0] sm:$0xff]
    %v6917 = vld [vmem:[#allocation11 + $0x3a8] sm:$0xff]
    %v6918 = vld [vmem:[#allocation11 + $0x3b0] sm:$0xff]
    %v6919 = vld [vmem:[#allocation11 + $0x3b8] sm:$0xff]
    %v6920 = vld [vmem:[#allocation11 + $0x3c0] sm:$0xff]
    %v6921 = vld [vmem:[#allocation11 + $0x3c8] sm:$0xff]
    %v6922 = vld [vmem:[#allocation11 + $0x3d0] sm:$0xff]
    %v6923 = vld [vmem:[#allocation11 + $0x3d8] sm:$0xff]
    %v6924 = vld [vmem:[#allocation11 + $0x3e0] sm:$0xff]
    %v6925 = vld [vmem:[#allocation11 + $0x3e8] sm:$0xff]
    %v6926 = vld [vmem:[#allocation11 + $0x3f0] sm:$0xff]
    %v6927 = vld [vmem:[#allocation11 + $0x3f8] sm:$0xff]
    %v6928 = vld [vmem:[#allocation11 + $0x400] sm:$0xff]
    %v6929 = vld [vmem:[#allocation11 + $0x408] sm:$0xff]
    %v6930 = vld [vmem:[#allocation11 + $0x410] sm:$0xff]
    %v6931 = vld [vmem:[#allocation11 + $0x418] sm:$0xff]
    %v6932 = vld [vmem:[#allocation11 + $0x420] sm:$0xff]
    %v6933 = vld [vmem:[#allocation11 + $0x428] sm:$0xff]
    %v6934 = vld [vmem:[#allocation11 + $0x430] sm:$0xff]
    %v6935 = vld [vmem:[#allocation11 + $0x438] sm:$0xff]
    %v6936 = vld [vmem:[#allocation11 + $0x440] sm:$0xff]
    %v6937 = vld [vmem:[#allocation11 + $0x448] sm:$0xff]
    %v6938 = vld [vmem:[#allocation11 + $0x450] sm:$0xff]
    %v6939 = vld [vmem:[#allocation11 + $0x458] sm:$0xff]
    %v6940 = vld [vmem:[#allocation11 + $0x460] sm:$0xff]
    %v6941 = vld [vmem:[#allocation11 + $0x468] sm:$0xff]
    %v6942 = vld [vmem:[#allocation11 + $0x470] sm:$0xff]
    %v6943 = vld [vmem:[#allocation11 + $0x478] sm:$0xff]
    %v6944 = vld [vmem:[#allocation11 + $0x480] sm:$0xff]
    %v6945 = vld [vmem:[#allocation11 + $0x488] sm:$0xff]
    %v6946 = vld [vmem:[#allocation11 + $0x490] sm:$0xff]
    %v6947 = vld [vmem:[#allocation11 + $0x498] sm:$0xff]
    %v6948 = vld [vmem:[#allocation11 + $0x4a0] sm:$0xff]
    %v6949 = vld [vmem:[#allocation11 + $0x4a8] sm:$0xff]
    %v6950 = vld [vmem:[#allocation11 + $0x4b0] sm:$0xff]
    %v6951 = vld [vmem:[#allocation11 + $0x4b8] sm:$0xff]
    %v6952 = vld [vmem:[#allocation11 + $0x4c0] sm:$0xff]
    %v6953 = vld [vmem:[#allocation11 + $0x4c8] sm:$0xff]
    %v6954 = vld [vmem:[#allocation11 + $0x4d0] sm:$0xff]
    %v6955 = vld [vmem:[#allocation11 + $0x4d8] sm:$0xff]
    %v6956 = vld [vmem:[#allocation11 + $0x4e0] sm:$0xff]
    %v6957 = vld [vmem:[#allocation11 + $0x4e8] sm:$0xff]
    %v6958 = vld [vmem:[#allocation11 + $0x4f0] sm:$0xff]
    %v6959 = vld [vmem:[#allocation11 + $0x4f8] sm:$0xff]
    %v6960 = vld [vmem:[#allocation11 + $0x500] sm:$0xff]
    %v6961 = vld [vmem:[#allocation11 + $0x508] sm:$0xff]
    %v6962 = vld [vmem:[#allocation11 + $0x510] sm:$0xff]
    %v6963 = vld [vmem:[#allocation11 + $0x518] sm:$0xff]
    %v6964 = vld [vmem:[#allocation11 + $0x520] sm:$0xff]
    %v6965 = vld [vmem:[#allocation11 + $0x528] sm:$0xff]
    %v6966 = vld [vmem:[#allocation11 + $0x530] sm:$0xff]
    %v6967 = vld [vmem:[#allocation11 + $0x538] sm:$0xff]
    %v6968 = vld [vmem:[#allocation11 + $0x540] sm:$0xff]
    %v6969 = vld [vmem:[#allocation11 + $0x548] sm:$0xff]
    %v6970 = vld [vmem:[#allocation11 + $0x550] sm:$0xff]
    %v6971 = vld [vmem:[#allocation11 + $0x558] sm:$0xff]
    %v6972 = vld [vmem:[#allocation11 + $0x560] sm:$0xff]
    %v6973 = vld [vmem:[#allocation11 + $0x568] sm:$0xff]
    %v6974 = vld [vmem:[#allocation11 + $0x570] sm:$0xff]
    %v6975 = vld [vmem:[#allocation11 + $0x578] sm:$0xff]
    %v6976 = vld [vmem:[#allocation11 + $0x580] sm:$0xff]
    %v6977 = vld [vmem:[#allocation11 + $0x588] sm:$0xff]
    %v6978 = vld [vmem:[#allocation11 + $0x590] sm:$0xff]
    %v6979 = vld [vmem:[#allocation11 + $0x598] sm:$0xff]
    %v6980 = vld [vmem:[#allocation11 + $0x5a0] sm:$0xff]
    %v6981 = vld [vmem:[#allocation11 + $0x5a8] sm:$0xff]
    %v6982 = vld [vmem:[#allocation11 + $0x5b0] sm:$0xff]
    %v6983 = vld [vmem:[#allocation11 + $0x5b8] sm:$0xff]
    %v6984 = vld [vmem:[#allocation11 + $0x5c0] sm:$0xff]
    %v6985 = vld [vmem:[#allocation11 + $0x5c8] sm:$0xff]
    %v6986 = vld [vmem:[#allocation11 + $0x5d0] sm:$0xff]
    %v6987 = vld [vmem:[#allocation11 + $0x5d8] sm:$0xff]
    %v6988 = vld [vmem:[#allocation11 + $0x5e0] sm:$0xff]
    %v6989 = vld [vmem:[#allocation11 + $0x5e8] sm:$0xff]
    %v6990 = vld [vmem:[#allocation11 + $0x5f0] sm:$0xff]
    %v6991 = vld [vmem:[#allocation11 + $0x5f8] sm:$0xff]
    %v6992 = vld [vmem:[#allocation11 + $0x600] sm:$0xff]
    %v6993 = vld [vmem:[#allocation11 + $0x608] sm:$0xff]
    %v6994 = vld [vmem:[#allocation11 + $0x610] sm:$0xff]
    %v6995 = vld [vmem:[#allocation11 + $0x618] sm:$0xff]
    %v6996 = vld [vmem:[#allocation11 + $0x620] sm:$0xff]
    %v6997 = vld [vmem:[#allocation11 + $0x628] sm:$0xff]
    %v6998 = vld [vmem:[#allocation11 + $0x630] sm:$0xff]
    %v6999 = vld [vmem:[#allocation11 + $0x638] sm:$0xff]
    %v7000 = vld [vmem:[#allocation11 + $0x640] sm:$0xff]
    %v7001 = vld [vmem:[#allocation11 + $0x648] sm:$0xff]
    %v7002 = vld [vmem:[#allocation11 + $0x650] sm:$0xff]
    %v7003 = vld [vmem:[#allocation11 + $0x658] sm:$0xff]
    %v7004 = vld [vmem:[#allocation11 + $0x660] sm:$0xff]
    %v7005 = vld [vmem:[#allocation11 + $0x668] sm:$0xff]
    %v7006 = vld [vmem:[#allocation11 + $0x670] sm:$0xff]
    %v7007 = vld [vmem:[#allocation11 + $0x678] sm:$0xff]
    %v7008 = vld [vmem:[#allocation11 + $0x680] sm:$0xff]
    %v7009 = vld [vmem:[#allocation11 + $0x688] sm:$0xff]
    %v7010 = vld [vmem:[#allocation11 + $0x690] sm:$0xff]
    %v7011 = vld [vmem:[#allocation11 + $0x698] sm:$0xff]
    %v7012 = vld [vmem:[#allocation11 + $0x6a0] sm:$0xff]
    %v7013 = vld [vmem:[#allocation11 + $0x6a8] sm:$0xff]
    %v7014 = vld [vmem:[#allocation11 + $0x6b0] sm:$0xff]
    %v7015 = vld [vmem:[#allocation11 + $0x6b8] sm:$0xff]
    %v7016 = vld [vmem:[#allocation11 + $0x6c0] sm:$0xff]
    %v7017 = vld [vmem:[#allocation11 + $0x6c8] sm:$0xff]
    %v7018 = vld [vmem:[#allocation11 + $0x6d0] sm:$0xff]
    %v7019 = vld [vmem:[#allocation11 + $0x6d8] sm:$0xff]
    %v7020 = vld [vmem:[#allocation11 + $0x6e0] sm:$0xff]
    %v7021 = vld [vmem:[#allocation11 + $0x6e8] sm:$0xff]
    %v7022 = vld [vmem:[#allocation11 + $0x6f0] sm:$0xff]
    %v7023 = vld [vmem:[#allocation11 + $0x6f8] sm:$0xff]
    %v7024 = vld [vmem:[#allocation11 + $0x700] sm:$0xff]
    %v7025 = vld [vmem:[#allocation11 + $0x708] sm:$0xff]
    %v7026 = vld [vmem:[#allocation11 + $0x710] sm:$0xff]
    %v7027 = vld [vmem:[#allocation11 + $0x718] sm:$0xff]
    %v7028 = vld [vmem:[#allocation11 + $0x720] sm:$0xff]
    %v7029 = vld [vmem:[#allocation11 + $0x728] sm:$0xff]
    %v7030 = vld [vmem:[#allocation11 + $0x730] sm:$0xff]
    %v7031 = vld [vmem:[#allocation11 + $0x738] sm:$0xff]
    %v7032 = vld [vmem:[#allocation11 + $0x740] sm:$0xff]
    %v7033 = vld [vmem:[#allocation11 + $0x748] sm:$0xff]
    %v7034 = vld [vmem:[#allocation11 + $0x750] sm:$0xff]
    %v7035 = vld [vmem:[#allocation11 + $0x758] sm:$0xff]
    %v7036 = vld [vmem:[#allocation11 + $0x760] sm:$0xff]
    %v7037 = vld [vmem:[#allocation11 + $0x768] sm:$0xff]
    %v7038 = vld [vmem:[#allocation11 + $0x770] sm:$0xff]
    %v7039 = vld [vmem:[#allocation11 + $0x778] sm:$0xff]
    %v7040 = vld [vmem:[#allocation11 + $0x780] sm:$0xff]
    %v7041 = vld [vmem:[#allocation11 + $0x788] sm:$0xff]
    %v7042 = vld [vmem:[#allocation11 + $0x790] sm:$0xff]
    %v7043 = vld [vmem:[#allocation11 + $0x798] sm:$0xff]
    %v7044 = vld [vmem:[#allocation11 + $0x7a0] sm:$0xff]
    %v7045 = vld [vmem:[#allocation11 + $0x7a8] sm:$0xff]
    %v7046 = vld [vmem:[#allocation11 + $0x7b0] sm:$0xff]
    %v7047 = vld [vmem:[#allocation11 + $0x7b8] sm:$0xff]
    %v7048 = vld [vmem:[#allocation11 + $0x7c0] sm:$0xff]
    %v7049 = vld [vmem:[#allocation11 + $0x7c8] sm:$0xff]
    %v7050 = vld [vmem:[#allocation11 + $0x7d0] sm:$0xff]
    %v7051 = vld [vmem:[#allocation11 + $0x7d8] sm:$0xff]
    %v7052 = vld [vmem:[#allocation11 + $0x7e0] sm:$0xff]
    %v7053 = vld [vmem:[#allocation11 + $0x7e8] sm:$0xff]
    %v7054 = vld [vmem:[#allocation11 + $0x7f0] sm:$0xff]
    %v7055 = vld [vmem:[#allocation11 + $0x7f8] sm:$0xff]
    %v7056 = vld [vmem:[#allocation13] sm:$0xf]
    %v7058 = vlaneseq
    %v7059 = vshrl.u32 %v7058, 7
    %v7060 = vsub.s32 0, %v7059
    %v7061 = vrot.slane %v7056, %v7060
    %v7062 = vlaneseq
    %v7063 = vshrl.u32 %v7062, 7
    %v7064 = vsub.s32 1, %v7063
    %v7065 = vrot.slane %v7056, %v7064
    %v7066 = vlaneseq
    %v7067 = vshrl.u32 %v7066, 7
    %v7068 = vsub.s32 2, %v7067
    %v7069 = vrot.slane %v7056, %v7068
    %v7070 = vlaneseq
    %v7071 = vshrl.u32 %v7070, 7
    %v7072 = vsub.s32 3, %v7071
    %v7073 = vrot.slane %v7056, %v7072
    %v7334 = vunpack.c.l.b16 %v6800
    %v7335 = vunpack.c.h.b16 %v6800
    %v7336 = vunpack.c.l.b16 %v6801
    %v7337 = vunpack.c.h.b16 %v6801
    %v7338 = vunpack.c.l.b16 %v6802
    %v7339 = vunpack.c.h.b16 %v6802
    %v7340 = vunpack.c.l.b16 %v6803
    %v7341 = vunpack.c.h.b16 %v6803
    %v7342 = vunpack.c.l.b16 %v6804
    %v7343 = vunpack.c.h.b16 %v6804
    %v7344 = vunpack.c.l.b16 %v6805
    %v7345 = vunpack.c.h.b16 %v6805
    %v7346 = vunpack.c.l.b16 %v6806
    %v7347 = vunpack.c.h.b16 %v6806
    %v7348 = vunpack.c.l.b16 %v6807
    %v7349 = vunpack.c.h.b16 %v6807
    %v7350 = vunpack.c.l.b16 %v6808
    %v7351 = vunpack.c.h.b16 %v6808
    %v7352 = vunpack.c.l.b16 %v6809
    %v7353 = vunpack.c.h.b16 %v6809
    %v7354 = vunpack.c.l.b16 %v6810
    %v7355 = vunpack.c.h.b16 %v6810
    %v7356 = vunpack.c.l.b16 %v6811
    %v7357 = vunpack.c.h.b16 %v6811
    %v7358 = vunpack.c.l.b16 %v6812
    %v7359 = vunpack.c.h.b16 %v6812
    %v7360 = vunpack.c.l.b16 %v6813
    %v7361 = vunpack.c.h.b16 %v6813
    %v7362 = vunpack.c.l.b16 %v6814
    %v7363 = vunpack.c.h.b16 %v6814
    %v7364 = vunpack.c.l.b16 %v6815
    %v7365 = vunpack.c.h.b16 %v6815
    %v7366 = vunpack.c.l.b16 %v6816
    %v7367 = vunpack.c.h.b16 %v6816
    %v7368 = vunpack.c.l.b16 %v6817
    %v7369 = vunpack.c.h.b16 %v6817
    %v7370 = vunpack.c.l.b16 %v6818
    %v7371 = vunpack.c.h.b16 %v6818
    %v7372 = vunpack.c.l.b16 %v6819
    %v7373 = vunpack.c.h.b16 %v6819
    %v7374 = vunpack.c.l.b16 %v6820
    %v7375 = vunpack.c.h.b16 %v6820
    %v7376 = vunpack.c.l.b16 %v6821
    %v7377 = vunpack.c.h.b16 %v6821
    %v7378 = vunpack.c.l.b16 %v6822
    %v7379 = vunpack.c.h.b16 %v6822
    %v7380 = vunpack.c.l.b16 %v6823
    %v7381 = vunpack.c.h.b16 %v6823
    %v7382 = vunpack.c.l.b16 %v6824
    %v7383 = vunpack.c.h.b16 %v6824
    %v7384 = vunpack.c.l.b16 %v6825
    %v7385 = vunpack.c.h.b16 %v6825
    %v7386 = vunpack.c.l.b16 %v6826
    %v7387 = vunpack.c.h.b16 %v6826
    %v7388 = vunpack.c.l.b16 %v6827
    %v7389 = vunpack.c.h.b16 %v6827
    %v7390 = vunpack.c.l.b16 %v6828
    %v7391 = vunpack.c.h.b16 %v6828
    %v7392 = vunpack.c.l.b16 %v6829
    %v7393 = vunpack.c.h.b16 %v6829
    %v7394 = vunpack.c.l.b16 %v6830
    %v7395 = vunpack.c.h.b16 %v6830
    %v7396 = vunpack.c.l.b16 %v6831
    %v7397 = vunpack.c.h.b16 %v6831
    %v7398 = vunpack.c.l.b16 %v6832
    %v7399 = vunpack.c.h.b16 %v6832
    %v7400 = vunpack.c.l.b16 %v6833
    %v7401 = vunpack.c.h.b16 %v6833
    %v7402 = vunpack.c.l.b16 %v6834
    %v7403 = vunpack.c.h.b16 %v6834
    %v7404 = vunpack.c.l.b16 %v6835
    %v7405 = vunpack.c.h.b16 %v6835
    %v7406 = vunpack.c.l.b16 %v6836
    %v7407 = vunpack.c.h.b16 %v6836
    %v7408 = vunpack.c.l.b16 %v6837
    %v7409 = vunpack.c.h.b16 %v6837
    %v7410 = vunpack.c.l.b16 %v6838
    %v7411 = vunpack.c.h.b16 %v6838
    %v7412 = vunpack.c.l.b16 %v6839
    %v7413 = vunpack.c.h.b16 %v6839
    %v7414 = vunpack.c.l.b16 %v6840
    %v7415 = vunpack.c.h.b16 %v6840
    %v7416 = vunpack.c.l.b16 %v6841
    %v7417 = vunpack.c.h.b16 %v6841
    %v7418 = vunpack.c.l.b16 %v6842
    %v7419 = vunpack.c.h.b16 %v6842
    %v7420 = vunpack.c.l.b16 %v6843
    %v7421 = vunpack.c.h.b16 %v6843
    %v7422 = vunpack.c.l.b16 %v6844
    %v7423 = vunpack.c.h.b16 %v6844
    %v7424 = vunpack.c.l.b16 %v6845
    %v7425 = vunpack.c.h.b16 %v6845
    %v7426 = vunpack.c.l.b16 %v6846
    %v7427 = vunpack.c.h.b16 %v6846
    %v7428 = vunpack.c.l.b16 %v6847
    %v7429 = vunpack.c.h.b16 %v6847
    %v7430 = vunpack.c.l.b16 %v6848
    %v7431 = vunpack.c.h.b16 %v6848
    %v7432 = vunpack.c.l.b16 %v6849
    %v7433 = vunpack.c.h.b16 %v6849
    %v7434 = vunpack.c.l.b16 %v6850
    %v7435 = vunpack.c.h.b16 %v6850
    %v7436 = vunpack.c.l.b16 %v6851
    %v7437 = vunpack.c.h.b16 %v6851
    %v7438 = vunpack.c.l.b16 %v6852
    %v7439 = vunpack.c.h.b16 %v6852
    %v7440 = vunpack.c.l.b16 %v6853
    %v7441 = vunpack.c.h.b16 %v6853
    %v7442 = vunpack.c.l.b16 %v6854
    %v7443 = vunpack.c.h.b16 %v6854
    %v7444 = vunpack.c.l.b16 %v6855
    %v7445 = vunpack.c.h.b16 %v6855
    %v7446 = vunpack.c.l.b16 %v6856
    %v7447 = vunpack.c.h.b16 %v6856
    %v7448 = vunpack.c.l.b16 %v6857
    %v7449 = vunpack.c.h.b16 %v6857
    %v7450 = vunpack.c.l.b16 %v6858
    %v7451 = vunpack.c.h.b16 %v6858
    %v7452 = vunpack.c.l.b16 %v6859
    %v7453 = vunpack.c.h.b16 %v6859
    %v7454 = vunpack.c.l.b16 %v6860
    %v7455 = vunpack.c.h.b16 %v6860
    %v7456 = vunpack.c.l.b16 %v6861
    %v7457 = vunpack.c.h.b16 %v6861
    %v7458 = vunpack.c.l.b16 %v6862
    %v7459 = vunpack.c.h.b16 %v6862
    %v7460 = vunpack.c.l.b16 %v6863
    %v7461 = vunpack.c.h.b16 %v6863
    %v7462 = vunpack.c.l.b16 %v6864
    %v7463 = vunpack.c.h.b16 %v6864
    %v7464 = vunpack.c.l.b16 %v6865
    %v7465 = vunpack.c.h.b16 %v6865
    %v7466 = vunpack.c.l.b16 %v6866
    %v7467 = vunpack.c.h.b16 %v6866
    %v7468 = vunpack.c.l.b16 %v6867
    %v7469 = vunpack.c.h.b16 %v6867
    %v7470 = vunpack.c.l.b16 %v6868
    %v7471 = vunpack.c.h.b16 %v6868
    %v7472 = vunpack.c.l.b16 %v6869
    %v7473 = vunpack.c.h.b16 %v6869
    %v7474 = vunpack.c.l.b16 %v6870
    %v7475 = vunpack.c.h.b16 %v6870
    %v7476 = vunpack.c.l.b16 %v6871
    %v7477 = vunpack.c.h.b16 %v6871
    %v7478 = vunpack.c.l.b16 %v6872
    %v7479 = vunpack.c.h.b16 %v6872
    %v7480 = vunpack.c.l.b16 %v6873
    %v7481 = vunpack.c.h.b16 %v6873
    %v7482 = vunpack.c.l.b16 %v6874
    %v7483 = vunpack.c.h.b16 %v6874
    %v7484 = vunpack.c.l.b16 %v6875
    %v7485 = vunpack.c.h.b16 %v6875
    %v7486 = vunpack.c.l.b16 %v6876
    %v7487 = vunpack.c.h.b16 %v6876
    %v7488 = vunpack.c.l.b16 %v6877
    %v7489 = vunpack.c.h.b16 %v6877
    %v7490 = vunpack.c.l.b16 %v6878
    %v7491 = vunpack.c.h.b16 %v6878
    %v7492 = vunpack.c.l.b16 %v6879
    %v7493 = vunpack.c.h.b16 %v6879
    %v7494 = vunpack.c.l.b16 %v6880
    %v7495 = vunpack.c.h.b16 %v6880
    %v7496 = vunpack.c.l.b16 %v6881
    %v7497 = vunpack.c.h.b16 %v6881
    %v7498 = vunpack.c.l.b16 %v6882
    %v7499 = vunpack.c.h.b16 %v6882
    %v7500 = vunpack.c.l.b16 %v6883
    %v7501 = vunpack.c.h.b16 %v6883
    %v7502 = vunpack.c.l.b16 %v6884
    %v7503 = vunpack.c.h.b16 %v6884
    %v7504 = vunpack.c.l.b16 %v6885
    %v7505 = vunpack.c.h.b16 %v6885
    %v7506 = vunpack.c.l.b16 %v6886
    %v7507 = vunpack.c.h.b16 %v6886
    %v7508 = vunpack.c.l.b16 %v6887
    %v7509 = vunpack.c.h.b16 %v6887
    %v7510 = vunpack.c.l.b16 %v6888
    %v7511 = vunpack.c.h.b16 %v6888
    %v7512 = vunpack.c.l.b16 %v6889
    %v7513 = vunpack.c.h.b16 %v6889
    %v7514 = vunpack.c.l.b16 %v6890
    %v7515 = vunpack.c.h.b16 %v6890
    %v7516 = vunpack.c.l.b16 %v6891
    %v7517 = vunpack.c.h.b16 %v6891
    %v7518 = vunpack.c.l.b16 %v6892
    %v7519 = vunpack.c.h.b16 %v6892
    %v7520 = vunpack.c.l.b16 %v6893
    %v7521 = vunpack.c.h.b16 %v6893
    %v7522 = vunpack.c.l.b16 %v6894
    %v7523 = vunpack.c.h.b16 %v6894
    %v7524 = vunpack.c.l.b16 %v6895
    %v7525 = vunpack.c.h.b16 %v6895
    %v7526 = vunpack.c.l.b16 %v6896
    %v7527 = vunpack.c.h.b16 %v6896
    %v7528 = vunpack.c.l.b16 %v6897
    %v7529 = vunpack.c.h.b16 %v6897
    %v7530 = vunpack.c.l.b16 %v6898
    %v7531 = vunpack.c.h.b16 %v6898
    %v7532 = vunpack.c.l.b16 %v6899
    %v7533 = vunpack.c.h.b16 %v6899
    %v7534 = vunpack.c.l.b16 %v6900
    %v7535 = vunpack.c.h.b16 %v6900
    %v7536 = vunpack.c.l.b16 %v6901
    %v7537 = vunpack.c.h.b16 %v6901
    %v7538 = vunpack.c.l.b16 %v6902
    %v7539 = vunpack.c.h.b16 %v6902
    %v7540 = vunpack.c.l.b16 %v6903
    %v7541 = vunpack.c.h.b16 %v6903
    %v7542 = vunpack.c.l.b16 %v6904
    %v7543 = vunpack.c.h.b16 %v6904
    %v7544 = vunpack.c.l.b16 %v6905
    %v7545 = vunpack.c.h.b16 %v6905
    %v7546 = vunpack.c.l.b16 %v6906
    %v7547 = vunpack.c.h.b16 %v6906
    %v7548 = vunpack.c.l.b16 %v6907
    %v7549 = vunpack.c.h.b16 %v6907
    %v7550 = vunpack.c.l.b16 %v6908
    %v7551 = vunpack.c.h.b16 %v6908
    %v7552 = vunpack.c.l.b16 %v6909
    %v7553 = vunpack.c.h.b16 %v6909
    %v7554 = vunpack.c.l.b16 %v6910
    %v7555 = vunpack.c.h.b16 %v6910
    %v7556 = vunpack.c.l.b16 %v6911
    %v7557 = vunpack.c.h.b16 %v6911
    %v7558 = vunpack.c.l.b16 %v6912
    %v7559 = vunpack.c.h.b16 %v6912
    %v7560 = vunpack.c.l.b16 %v6913
    %v7561 = vunpack.c.h.b16 %v6913
    %v7562 = vunpack.c.l.b16 %v6914
    %v7563 = vunpack.c.h.b16 %v6914
    %v7564 = vunpack.c.l.b16 %v6915
    %v7565 = vunpack.c.h.b16 %v6915
    %v7566 = vunpack.c.l.b16 %v6916
    %v7567 = vunpack.c.h.b16 %v6916
    %v7568 = vunpack.c.l.b16 %v6917
    %v7569 = vunpack.c.h.b16 %v6917
    %v7570 = vunpack.c.l.b16 %v6918
    %v7571 = vunpack.c.h.b16 %v6918
    %v7572 = vunpack.c.l.b16 %v6919
    %v7573 = vunpack.c.h.b16 %v6919
    %v7574 = vunpack.c.l.b16 %v6920
    %v7575 = vunpack.c.h.b16 %v6920
    %v7576 = vunpack.c.l.b16 %v6921
    %v7577 = vunpack.c.h.b16 %v6921
    %v7578 = vunpack.c.l.b16 %v6922
    %v7579 = vunpack.c.h.b16 %v6922
    %v7580 = vunpack.c.l.b16 %v6923
    %v7581 = vunpack.c.h.b16 %v6923
    %v7582 = vunpack.c.l.b16 %v6924
    %v7583 = vunpack.c.h.b16 %v6924
    %v7584 = vunpack.c.l.b16 %v6925
    %v7585 = vunpack.c.h.b16 %v6925
    %v7586 = vunpack.c.l.b16 %v6926
    %v7587 = vunpack.c.h.b16 %v6926
    %v7588 = vunpack.c.l.b16 %v6927
    %v7589 = vunpack.c.h.b16 %v6927
    %v7590 = vunpack.c.l.b16 %v6928
    %v7591 = vunpack.c.h.b16 %v6928
    %v7592 = vunpack.c.l.b16 %v6929
    %v7593 = vunpack.c.h.b16 %v6929
    %v7594 = vunpack.c.l.b16 %v6930
    %v7595 = vunpack.c.h.b16 %v6930
    %v7596 = vunpack.c.l.b16 %v6931
    %v7597 = vunpack.c.h.b16 %v6931
    %v7598 = vunpack.c.l.b16 %v6932
    %v7599 = vunpack.c.h.b16 %v6932
    %v7600 = vunpack.c.l.b16 %v6933
    %v7601 = vunpack.c.h.b16 %v6933
    %v7602 = vunpack.c.l.b16 %v6934
    %v7603 = vunpack.c.h.b16 %v6934
    %v7604 = vunpack.c.l.b16 %v6935
    %v7605 = vunpack.c.h.b16 %v6935
    %v7606 = vunpack.c.l.b16 %v6936
    %v7607 = vunpack.c.h.b16 %v6936
    %v7608 = vunpack.c.l.b16 %v6937
    %v7609 = vunpack.c.h.b16 %v6937
    %v7610 = vunpack.c.l.b16 %v6938
    %v7611 = vunpack.c.h.b16 %v6938
    %v7612 = vunpack.c.l.b16 %v6939
    %v7613 = vunpack.c.h.b16 %v6939
    %v7614 = vunpack.c.l.b16 %v6940
    %v7615 = vunpack.c.h.b16 %v6940
    %v7616 = vunpack.c.l.b16 %v6941
    %v7617 = vunpack.c.h.b16 %v6941
    %v7618 = vunpack.c.l.b16 %v6942
    %v7619 = vunpack.c.h.b16 %v6942
    %v7620 = vunpack.c.l.b16 %v6943
    %v7621 = vunpack.c.h.b16 %v6943
    %v7622 = vunpack.c.l.b16 %v6944
    %v7623 = vunpack.c.h.b16 %v6944
    %v7624 = vunpack.c.l.b16 %v6945
    %v7625 = vunpack.c.h.b16 %v6945
    %v7626 = vunpack.c.l.b16 %v6946
    %v7627 = vunpack.c.h.b16 %v6946
    %v7628 = vunpack.c.l.b16 %v6947
    %v7629 = vunpack.c.h.b16 %v6947
    %v7630 = vunpack.c.l.b16 %v6948
    %v7631 = vunpack.c.h.b16 %v6948
    %v7632 = vunpack.c.l.b16 %v6949
    %v7633 = vunpack.c.h.b16 %v6949
    %v7634 = vunpack.c.l.b16 %v6950
    %v7635 = vunpack.c.h.b16 %v6950
    %v7636 = vunpack.c.l.b16 %v6951
    %v7637 = vunpack.c.h.b16 %v6951
    %v7638 = vunpack.c.l.b16 %v6952
    %v7639 = vunpack.c.h.b16 %v6952
    %v7640 = vunpack.c.l.b16 %v6953
    %v7641 = vunpack.c.h.b16 %v6953
    %v7642 = vunpack.c.l.b16 %v6954
    %v7643 = vunpack.c.h.b16 %v6954
    %v7644 = vunpack.c.l.b16 %v6955
    %v7645 = vunpack.c.h.b16 %v6955
    %v7646 = vunpack.c.l.b16 %v6956
    %v7647 = vunpack.c.h.b16 %v6956
    %v7648 = vunpack.c.l.b16 %v6957
    %v7649 = vunpack.c.h.b16 %v6957
    %v7650 = vunpack.c.l.b16 %v6958
    %v7651 = vunpack.c.h.b16 %v6958
    %v7652 = vunpack.c.l.b16 %v6959
    %v7653 = vunpack.c.h.b16 %v6959
    %v7654 = vunpack.c.l.b16 %v6960
    %v7655 = vunpack.c.h.b16 %v6960
    %v7656 = vunpack.c.l.b16 %v6961
    %v7657 = vunpack.c.h.b16 %v6961
    %v7658 = vunpack.c.l.b16 %v6962
    %v7659 = vunpack.c.h.b16 %v6962
    %v7660 = vunpack.c.l.b16 %v6963
    %v7661 = vunpack.c.h.b16 %v6963
    %v7662 = vunpack.c.l.b16 %v6964
    %v7663 = vunpack.c.h.b16 %v6964
    %v7664 = vunpack.c.l.b16 %v6965
    %v7665 = vunpack.c.h.b16 %v6965
    %v7666 = vunpack.c.l.b16 %v6966
    %v7667 = vunpack.c.h.b16 %v6966
    %v7668 = vunpack.c.l.b16 %v6967
    %v7669 = vunpack.c.h.b16 %v6967
    %v7670 = vunpack.c.l.b16 %v6968
    %v7671 = vunpack.c.h.b16 %v6968
    %v7672 = vunpack.c.l.b16 %v6969
    %v7673 = vunpack.c.h.b16 %v6969
    %v7674 = vunpack.c.l.b16 %v6970
    %v7675 = vunpack.c.h.b16 %v6970
    %v7676 = vunpack.c.l.b16 %v6971
    %v7677 = vunpack.c.h.b16 %v6971
    %v7678 = vunpack.c.l.b16 %v6972
    %v7679 = vunpack.c.h.b16 %v6972
    %v7680 = vunpack.c.l.b16 %v6973
    %v7681 = vunpack.c.h.b16 %v6973
    %v7682 = vunpack.c.l.b16 %v6974
    %v7683 = vunpack.c.h.b16 %v6974
    %v7684 = vunpack.c.l.b16 %v6975
    %v7685 = vunpack.c.h.b16 %v6975
    %v7686 = vunpack.c.l.b16 %v6976
    %v7687 = vunpack.c.h.b16 %v6976
    %v7688 = vunpack.c.l.b16 %v6977
    %v7689 = vunpack.c.h.b16 %v6977
    %v7690 = vunpack.c.l.b16 %v6978
    %v7691 = vunpack.c.h.b16 %v6978
    %v7692 = vunpack.c.l.b16 %v6979
    %v7693 = vunpack.c.h.b16 %v6979
    %v7694 = vunpack.c.l.b16 %v6980
    %v7695 = vunpack.c.h.b16 %v6980
    %v7696 = vunpack.c.l.b16 %v6981
    %v7697 = vunpack.c.h.b16 %v6981
    %v7698 = vunpack.c.l.b16 %v6982
    %v7699 = vunpack.c.h.b16 %v6982
    %v7700 = vunpack.c.l.b16 %v6983
    %v7701 = vunpack.c.h.b16 %v6983
    %v7702 = vunpack.c.l.b16 %v6984
    %v7703 = vunpack.c.h.b16 %v6984
    %v7704 = vunpack.c.l.b16 %v6985
    %v7705 = vunpack.c.h.b16 %v6985
    %v7706 = vunpack.c.l.b16 %v6986
    %v7707 = vunpack.c.h.b16 %v6986
    %v7708 = vunpack.c.l.b16 %v6987
    %v7709 = vunpack.c.h.b16 %v6987
    %v7710 = vunpack.c.l.b16 %v6988
    %v7711 = vunpack.c.h.b16 %v6988
    %v7712 = vunpack.c.l.b16 %v6989
    %v7713 = vunpack.c.h.b16 %v6989
    %v7714 = vunpack.c.l.b16 %v6990
    %v7715 = vunpack.c.h.b16 %v6990
    %v7716 = vunpack.c.l.b16 %v6991
    %v7717 = vunpack.c.h.b16 %v6991
    %v7718 = vunpack.c.l.b16 %v6992
    %v7719 = vunpack.c.h.b16 %v6992
    %v7720 = vunpack.c.l.b16 %v6993
    %v7721 = vunpack.c.h.b16 %v6993
    %v7722 = vunpack.c.l.b16 %v6994
    %v7723 = vunpack.c.h.b16 %v6994
    %v7724 = vunpack.c.l.b16 %v6995
    %v7725 = vunpack.c.h.b16 %v6995
    %v7726 = vunpack.c.l.b16 %v6996
    %v7727 = vunpack.c.h.b16 %v6996
    %v7728 = vunpack.c.l.b16 %v6997
    %v7729 = vunpack.c.h.b16 %v6997
    %v7730 = vunpack.c.l.b16 %v6998
    %v7731 = vunpack.c.h.b16 %v6998
    %v7732 = vunpack.c.l.b16 %v6999
    %v7733 = vunpack.c.h.b16 %v6999
    %v7734 = vunpack.c.l.b16 %v7000
    %v7735 = vunpack.c.h.b16 %v7000
    %v7736 = vunpack.c.l.b16 %v7001
    %v7737 = vunpack.c.h.b16 %v7001
    %v7738 = vunpack.c.l.b16 %v7002
    %v7739 = vunpack.c.h.b16 %v7002
    %v7740 = vunpack.c.l.b16 %v7003
    %v7741 = vunpack.c.h.b16 %v7003
    %v7742 = vunpack.c.l.b16 %v7004
    %v7743 = vunpack.c.h.b16 %v7004
    %v7744 = vunpack.c.l.b16 %v7005
    %v7745 = vunpack.c.h.b16 %v7005
    %v7746 = vunpack.c.l.b16 %v7006
    %v7747 = vunpack.c.h.b16 %v7006
    %v7748 = vunpack.c.l.b16 %v7007
    %v7749 = vunpack.c.h.b16 %v7007
    %v7750 = vunpack.c.l.b16 %v7008
    %v7751 = vunpack.c.h.b16 %v7008
    %v7752 = vunpack.c.l.b16 %v7009
    %v7753 = vunpack.c.h.b16 %v7009
    %v7754 = vunpack.c.l.b16 %v7010
    %v7755 = vunpack.c.h.b16 %v7010
    %v7756 = vunpack.c.l.b16 %v7011
    %v7757 = vunpack.c.h.b16 %v7011
    %v7758 = vunpack.c.l.b16 %v7012
    %v7759 = vunpack.c.h.b16 %v7012
    %v7760 = vunpack.c.l.b16 %v7013
    %v7761 = vunpack.c.h.b16 %v7013
    %v7762 = vunpack.c.l.b16 %v7014
    %v7763 = vunpack.c.h.b16 %v7014
    %v7764 = vunpack.c.l.b16 %v7015
    %v7765 = vunpack.c.h.b16 %v7015
    %v7766 = vunpack.c.l.b16 %v7016
    %v7767 = vunpack.c.h.b16 %v7016
    %v7768 = vunpack.c.l.b16 %v7017
    %v7769 = vunpack.c.h.b16 %v7017
    %v7770 = vunpack.c.l.b16 %v7018
    %v7771 = vunpack.c.h.b16 %v7018
    %v7772 = vunpack.c.l.b16 %v7019
    %v7773 = vunpack.c.h.b16 %v7019
    %v7774 = vunpack.c.l.b16 %v7020
    %v7775 = vunpack.c.h.b16 %v7020
    %v7776 = vunpack.c.l.b16 %v7021
    %v7777 = vunpack.c.h.b16 %v7021
    %v7778 = vunpack.c.l.b16 %v7022
    %v7779 = vunpack.c.h.b16 %v7022
    %v7780 = vunpack.c.l.b16 %v7023
    %v7781 = vunpack.c.h.b16 %v7023
    %v7782 = vunpack.c.l.b16 %v7024
    %v7783 = vunpack.c.h.b16 %v7024
    %v7784 = vunpack.c.l.b16 %v7025
    %v7785 = vunpack.c.h.b16 %v7025
    %v7786 = vunpack.c.l.b16 %v7026
    %v7787 = vunpack.c.h.b16 %v7026
    %v7788 = vunpack.c.l.b16 %v7027
    %v7789 = vunpack.c.h.b16 %v7027
    %v7790 = vunpack.c.l.b16 %v7028
    %v7791 = vunpack.c.h.b16 %v7028
    %v7792 = vunpack.c.l.b16 %v7029
    %v7793 = vunpack.c.h.b16 %v7029
    %v7794 = vunpack.c.l.b16 %v7030
    %v7795 = vunpack.c.h.b16 %v7030
    %v7796 = vunpack.c.l.b16 %v7031
    %v7797 = vunpack.c.h.b16 %v7031
    %v7798 = vunpack.c.l.b16 %v7032
    %v7799 = vunpack.c.h.b16 %v7032
    %v7800 = vunpack.c.l.b16 %v7033
    %v7801 = vunpack.c.h.b16 %v7033
    %v7802 = vunpack.c.l.b16 %v7034
    %v7803 = vunpack.c.h.b16 %v7034
    %v7804 = vunpack.c.l.b16 %v7035
    %v7805 = vunpack.c.h.b16 %v7035
    %v7806 = vunpack.c.l.b16 %v7036
    %v7807 = vunpack.c.h.b16 %v7036
    %v7808 = vunpack.c.l.b16 %v7037
    %v7809 = vunpack.c.h.b16 %v7037
    %v7810 = vunpack.c.l.b16 %v7038
    %v7811 = vunpack.c.h.b16 %v7038
    %v7812 = vunpack.c.l.b16 %v7039
    %v7813 = vunpack.c.h.b16 %v7039
    %v7814 = vunpack.c.l.b16 %v7040
    %v7815 = vunpack.c.h.b16 %v7040
    %v7816 = vunpack.c.l.b16 %v7041
    %v7817 = vunpack.c.h.b16 %v7041
    %v7818 = vunpack.c.l.b16 %v7042
    %v7819 = vunpack.c.h.b16 %v7042
    %v7820 = vunpack.c.l.b16 %v7043
    %v7821 = vunpack.c.h.b16 %v7043
    %v7822 = vunpack.c.l.b16 %v7044
    %v7823 = vunpack.c.h.b16 %v7044
    %v7824 = vunpack.c.l.b16 %v7045
    %v7825 = vunpack.c.h.b16 %v7045
    %v7826 = vunpack.c.l.b16 %v7046
    %v7827 = vunpack.c.h.b16 %v7046
    %v7828 = vunpack.c.l.b16 %v7047
    %v7829 = vunpack.c.h.b16 %v7047
    %v7830 = vunpack.c.l.b16 %v7048
    %v7831 = vunpack.c.h.b16 %v7048
    %v7832 = vunpack.c.l.b16 %v7049
    %v7833 = vunpack.c.h.b16 %v7049
    %v7834 = vunpack.c.l.b16 %v7050
    %v7835 = vunpack.c.h.b16 %v7050
    %v7836 = vunpack.c.l.b16 %v7051
    %v7837 = vunpack.c.h.b16 %v7051
    %v7838 = vunpack.c.l.b16 %v7052
    %v7839 = vunpack.c.h.b16 %v7052
    %v7840 = vunpack.c.l.b16 %v7053
    %v7841 = vunpack.c.h.b16 %v7053
    %v7842 = vunpack.c.l.b16 %v7054
    %v7843 = vunpack.c.h.b16 %v7054
    %v7844 = vunpack.c.l.b16 %v7055
    %v7845 = vunpack.c.h.b16 %v7055
    %v7846 = vpack.c.b16 %v7338, %v7334
    %v7847 = vpack.c.b16 %v7339, %v7335
    %v7848 = vpack.c.b16 %v7340, %v7336
    %v7849 = vpack.c.b16 %v7341, %v7337
    %v7850 = vpack.c.b16 %v7346, %v7342
    %v7851 = vpack.c.b16 %v7347, %v7343
    %v7852 = vpack.c.b16 %v7348, %v7344
    %v7853 = vpack.c.b16 %v7349, %v7345
    %v7854 = vpack.c.b16 %v7354, %v7350
    %v7855 = vpack.c.b16 %v7355, %v7351
    %v7856 = vpack.c.b16 %v7356, %v7352
    %v7857 = vpack.c.b16 %v7357, %v7353
    %v7858 = vpack.c.b16 %v7362, %v7358
    %v7859 = vpack.c.b16 %v7363, %v7359
    %v7860 = vpack.c.b16 %v7364, %v7360
    %v7861 = vpack.c.b16 %v7365, %v7361
    %v7862 = vpack.c.b16 %v7370, %v7366
    %v7863 = vpack.c.b16 %v7371, %v7367
    %v7864 = vpack.c.b16 %v7372, %v7368
    %v7865 = vpack.c.b16 %v7373, %v7369
    %v7866 = vpack.c.b16 %v7378, %v7374
    %v7867 = vpack.c.b16 %v7379, %v7375
    %v7868 = vpack.c.b16 %v7380, %v7376
    %v7869 = vpack.c.b16 %v7381, %v7377
    %v7870 = vpack.c.b16 %v7386, %v7382
    %v7871 = vpack.c.b16 %v7387, %v7383
    %v7872 = vpack.c.b16 %v7388, %v7384
    %v7873 = vpack.c.b16 %v7389, %v7385
    %v7874 = vpack.c.b16 %v7394, %v7390
    %v7875 = vpack.c.b16 %v7395, %v7391
    %v7876 = vpack.c.b16 %v7396, %v7392
    %v7877 = vpack.c.b16 %v7397, %v7393
    %v7878 = vpack.c.b16 %v7402, %v7398
    %v7879 = vpack.c.b16 %v7403, %v7399
    %v7880 = vpack.c.b16 %v7404, %v7400
    %v7881 = vpack.c.b16 %v7405, %v7401
    %v7882 = vpack.c.b16 %v7410, %v7406
    %v7883 = vpack.c.b16 %v7411, %v7407
    %v7884 = vpack.c.b16 %v7412, %v7408
    %v7885 = vpack.c.b16 %v7413, %v7409
    %v7886 = vpack.c.b16 %v7418, %v7414
    %v7887 = vpack.c.b16 %v7419, %v7415
    %v7888 = vpack.c.b16 %v7420, %v7416
    %v7889 = vpack.c.b16 %v7421, %v7417
    %v7890 = vpack.c.b16 %v7426, %v7422
    %v7891 = vpack.c.b16 %v7427, %v7423
    %v7892 = vpack.c.b16 %v7428, %v7424
    %v7893 = vpack.c.b16 %v7429, %v7425
    %v7894 = vpack.c.b16 %v7434, %v7430
    %v7895 = vpack.c.b16 %v7435, %v7431
    %v7896 = vpack.c.b16 %v7436, %v7432
    %v7897 = vpack.c.b16 %v7437, %v7433
    %v7898 = vpack.c.b16 %v7442, %v7438
    %v7899 = vpack.c.b16 %v7443, %v7439
    %v7900 = vpack.c.b16 %v7444, %v7440
    %v7901 = vpack.c.b16 %v7445, %v7441
    %v7902 = vpack.c.b16 %v7450, %v7446
    %v7903 = vpack.c.b16 %v7451, %v7447
    %v7904 = vpack.c.b16 %v7452, %v7448
    %v7905 = vpack.c.b16 %v7453, %v7449
    %v7906 = vpack.c.b16 %v7458, %v7454
    %v7907 = vpack.c.b16 %v7459, %v7455
    %v7908 = vpack.c.b16 %v7460, %v7456
    %v7909 = vpack.c.b16 %v7461, %v7457
    %v7910 = vpack.c.b16 %v7466, %v7462
    %v7911 = vpack.c.b16 %v7467, %v7463
    %v7912 = vpack.c.b16 %v7468, %v7464
    %v7913 = vpack.c.b16 %v7469, %v7465
    %v7914 = vpack.c.b16 %v7474, %v7470
    %v7915 = vpack.c.b16 %v7475, %v7471
    %v7916 = vpack.c.b16 %v7476, %v7472
    %v7917 = vpack.c.b16 %v7477, %v7473
    %v7918 = vpack.c.b16 %v7482, %v7478
    %v7919 = vpack.c.b16 %v7483, %v7479
    %v7920 = vpack.c.b16 %v7484, %v7480
    %v7921 = vpack.c.b16 %v7485, %v7481
    %v7922 = vpack.c.b16 %v7490, %v7486
    %v7923 = vpack.c.b16 %v7491, %v7487
    %v7924 = vpack.c.b16 %v7492, %v7488
    %v7925 = vpack.c.b16 %v7493, %v7489
    %v7926 = vpack.c.b16 %v7498, %v7494
    %v7927 = vpack.c.b16 %v7499, %v7495
    %v7928 = vpack.c.b16 %v7500, %v7496
    %v7929 = vpack.c.b16 %v7501, %v7497
    %v7930 = vpack.c.b16 %v7506, %v7502
    %v7931 = vpack.c.b16 %v7507, %v7503
    %v7932 = vpack.c.b16 %v7508, %v7504
    %v7933 = vpack.c.b16 %v7509, %v7505
    %v7934 = vpack.c.b16 %v7514, %v7510
    %v7935 = vpack.c.b16 %v7515, %v7511
    %v7936 = vpack.c.b16 %v7516, %v7512
    %v7937 = vpack.c.b16 %v7517, %v7513
    %v7938 = vpack.c.b16 %v7522, %v7518
    %v7939 = vpack.c.b16 %v7523, %v7519
    %v7940 = vpack.c.b16 %v7524, %v7520
    %v7941 = vpack.c.b16 %v7525, %v7521
    %v7942 = vpack.c.b16 %v7530, %v7526
    %v7943 = vpack.c.b16 %v7531, %v7527
    %v7944 = vpack.c.b16 %v7532, %v7528
    %v7945 = vpack.c.b16 %v7533, %v7529
    %v7946 = vpack.c.b16 %v7538, %v7534
    %v7947 = vpack.c.b16 %v7539, %v7535
    %v7948 = vpack.c.b16 %v7540, %v7536
    %v7949 = vpack.c.b16 %v7541, %v7537
    %v7950 = vpack.c.b16 %v7546, %v7542
    %v7951 = vpack.c.b16 %v7547, %v7543
    %v7952 = vpack.c.b16 %v7548, %v7544
    %v7953 = vpack.c.b16 %v7549, %v7545
    %v7954 = vpack.c.b16 %v7554, %v7550
    %v7955 = vpack.c.b16 %v7555, %v7551
    %v7956 = vpack.c.b16 %v7556, %v7552
    %v7957 = vpack.c.b16 %v7557, %v7553
    %v7958 = vpack.c.b16 %v7562, %v7558
    %v7959 = vpack.c.b16 %v7563, %v7559
    %v7960 = vpack.c.b16 %v7564, %v7560
    %v7961 = vpack.c.b16 %v7565, %v7561
    %v7962 = vpack.c.b16 %v7570, %v7566
    %v7963 = vpack.c.b16 %v7571, %v7567
    %v7964 = vpack.c.b16 %v7572, %v7568
    %v7965 = vpack.c.b16 %v7573, %v7569
    %v7966 = vpack.c.b16 %v7578, %v7574
    %v7967 = vpack.c.b16 %v7579, %v7575
    %v7968 = vpack.c.b16 %v7580, %v7576
    %v7969 = vpack.c.b16 %v7581, %v7577
    %v7970 = vpack.c.b16 %v7586, %v7582
    %v7971 = vpack.c.b16 %v7587, %v7583
    %v7972 = vpack.c.b16 %v7588, %v7584
    %v7973 = vpack.c.b16 %v7589, %v7585
    %v7974 = vpack.c.b16 %v7594, %v7590
    %v7975 = vpack.c.b16 %v7595, %v7591
    %v7976 = vpack.c.b16 %v7596, %v7592
    %v7977 = vpack.c.b16 %v7597, %v7593
    %v7978 = vpack.c.b16 %v7602, %v7598
    %v7979 = vpack.c.b16 %v7603, %v7599
    %v7980 = vpack.c.b16 %v7604, %v7600
    %v7981 = vpack.c.b16 %v7605, %v7601
    %v7982 = vpack.c.b16 %v7610, %v7606
    %v7983 = vpack.c.b16 %v7611, %v7607
    %v7984 = vpack.c.b16 %v7612, %v7608
    %v7985 = vpack.c.b16 %v7613, %v7609
    %v7986 = vpack.c.b16 %v7618, %v7614
    %v7987 = vpack.c.b16 %v7619, %v7615
    %v7988 = vpack.c.b16 %v7620, %v7616
    %v7989 = vpack.c.b16 %v7621, %v7617
    %v7990 = vpack.c.b16 %v7626, %v7622
    %v7991 = vpack.c.b16 %v7627, %v7623
    %v7992 = vpack.c.b16 %v7628, %v7624
    %v7993 = vpack.c.b16 %v7629, %v7625
    %v7994 = vpack.c.b16 %v7634, %v7630
    %v7995 = vpack.c.b16 %v7635, %v7631
    %v7996 = vpack.c.b16 %v7636, %v7632
    %v7997 = vpack.c.b16 %v7637, %v7633
    %v7998 = vpack.c.b16 %v7642, %v7638
    %v7999 = vpack.c.b16 %v7643, %v7639
    %v8000 = vpack.c.b16 %v7644, %v7640
    %v8001 = vpack.c.b16 %v7645, %v7641
    %v8002 = vpack.c.b16 %v7650, %v7646
    %v8003 = vpack.c.b16 %v7651, %v7647
    %v8004 = vpack.c.b16 %v7652, %v7648
    %v8005 = vpack.c.b16 %v7653, %v7649
    %v8006 = vpack.c.b16 %v7658, %v7654
    %v8007 = vpack.c.b16 %v7659, %v7655
    %v8008 = vpack.c.b16 %v7660, %v7656
    %v8009 = vpack.c.b16 %v7661, %v7657
    %v8010 = vpack.c.b16 %v7666, %v7662
    %v8011 = vpack.c.b16 %v7667, %v7663
    %v8012 = vpack.c.b16 %v7668, %v7664
    %v8013 = vpack.c.b16 %v7669, %v7665
    %v8014 = vpack.c.b16 %v7674, %v7670
    %v8015 = vpack.c.b16 %v7675, %v7671
    %v8016 = vpack.c.b16 %v7676, %v7672
    %v8017 = vpack.c.b16 %v7677, %v7673
    %v8018 = vpack.c.b16 %v7682, %v7678
    %v8019 = vpack.c.b16 %v7683, %v7679
    %v8020 = vpack.c.b16 %v7684, %v7680
    %v8021 = vpack.c.b16 %v7685, %v7681
    %v8022 = vpack.c.b16 %v7690, %v7686
    %v8023 = vpack.c.b16 %v7691, %v7687
    %v8024 = vpack.c.b16 %v7692, %v7688
    %v8025 = vpack.c.b16 %v7693, %v7689
    %v8026 = vpack.c.b16 %v7698, %v7694
    %v8027 = vpack.c.b16 %v7699, %v7695
    %v8028 = vpack.c.b16 %v7700, %v7696
    %v8029 = vpack.c.b16 %v7701, %v7697
    %v8030 = vpack.c.b16 %v7706, %v7702
    %v8031 = vpack.c.b16 %v7707, %v7703
    %v8032 = vpack.c.b16 %v7708, %v7704
    %v8033 = vpack.c.b16 %v7709, %v7705
    %v8034 = vpack.c.b16 %v7714, %v7710
    %v8035 = vpack.c.b16 %v7715, %v7711
    %v8036 = vpack.c.b16 %v7716, %v7712
    %v8037 = vpack.c.b16 %v7717, %v7713
    %v8038 = vpack.c.b16 %v7722, %v7718
    %v8039 = vpack.c.b16 %v7723, %v7719
    %v8040 = vpack.c.b16 %v7724, %v7720
    %v8041 = vpack.c.b16 %v7725, %v7721
    %v8042 = vpack.c.b16 %v7730, %v7726
    %v8043 = vpack.c.b16 %v7731, %v7727
    %v8044 = vpack.c.b16 %v7732, %v7728
    %v8045 = vpack.c.b16 %v7733, %v7729
    %v8046 = vpack.c.b16 %v7738, %v7734
    %v8047 = vpack.c.b16 %v7739, %v7735
    %v8048 = vpack.c.b16 %v7740, %v7736
    %v8049 = vpack.c.b16 %v7741, %v7737
    %v8050 = vpack.c.b16 %v7746, %v7742
    %v8051 = vpack.c.b16 %v7747, %v7743
    %v8052 = vpack.c.b16 %v7748, %v7744
    %v8053 = vpack.c.b16 %v7749, %v7745
    %v8054 = vpack.c.b16 %v7754, %v7750
    %v8055 = vpack.c.b16 %v7755, %v7751
    %v8056 = vpack.c.b16 %v7756, %v7752
    %v8057 = vpack.c.b16 %v7757, %v7753
    %v8058 = vpack.c.b16 %v7762, %v7758
    %v8059 = vpack.c.b16 %v7763, %v7759
    %v8060 = vpack.c.b16 %v7764, %v7760
    %v8061 = vpack.c.b16 %v7765, %v7761
    %v8062 = vpack.c.b16 %v7770, %v7766
    %v8063 = vpack.c.b16 %v7771, %v7767
    %v8064 = vpack.c.b16 %v7772, %v7768
    %v8065 = vpack.c.b16 %v7773, %v7769
    %v8066 = vpack.c.b16 %v7778, %v7774
    %v8067 = vpack.c.b16 %v7779, %v7775
    %v8068 = vpack.c.b16 %v7780, %v7776
    %v8069 = vpack.c.b16 %v7781, %v7777
    %v8070 = vpack.c.b16 %v7786, %v7782
    %v8071 = vpack.c.b16 %v7787, %v7783
    %v8072 = vpack.c.b16 %v7788, %v7784
    %v8073 = vpack.c.b16 %v7789, %v7785
    %v8074 = vpack.c.b16 %v7794, %v7790
    %v8075 = vpack.c.b16 %v7795, %v7791
    %v8076 = vpack.c.b16 %v7796, %v7792
    %v8077 = vpack.c.b16 %v7797, %v7793
    %v8078 = vpack.c.b16 %v7802, %v7798
    %v8079 = vpack.c.b16 %v7803, %v7799
    %v8080 = vpack.c.b16 %v7804, %v7800
    %v8081 = vpack.c.b16 %v7805, %v7801
    %v8082 = vpack.c.b16 %v7810, %v7806
    %v8083 = vpack.c.b16 %v7811, %v7807
    %v8084 = vpack.c.b16 %v7812, %v7808
    %v8085 = vpack.c.b16 %v7813, %v7809
    %v8086 = vpack.c.b16 %v7818, %v7814
    %v8087 = vpack.c.b16 %v7819, %v7815
    %v8088 = vpack.c.b16 %v7820, %v7816
    %v8089 = vpack.c.b16 %v7821, %v7817
    %v8090 = vpack.c.b16 %v7826, %v7822
    %v8091 = vpack.c.b16 %v7827, %v7823
    %v8092 = vpack.c.b16 %v7828, %v7824
    %v8093 = vpack.c.b16 %v7829, %v7825
    %v8094 = vpack.c.b16 %v7834, %v7830
    %v8095 = vpack.c.b16 %v7835, %v7831
    %v8096 = vpack.c.b16 %v7836, %v7832
    %v8097 = vpack.c.b16 %v7837, %v7833
    %v8098 = vpack.c.b16 %v7842, %v7838
    %v8099 = vpack.c.b16 %v7843, %v7839
    %v8100 = vpack.c.b16 %v7844, %v7840
    %v8101 = vpack.c.b16 %v7845, %v7841
    %8358 = vmatprep.subr.bf16.mxu0 %v7847
    %8359 = vmatpush1.bf16.msra.mxu0 %v7846
    %8360 = vmatprep.subr.bf16.mxu0 %v7851
    %8361 = vmatpush1.bf16.msra.mxu0 %v7850
    %8362 = vmatprep.subr.bf16.mxu0 %v7855
    %8363 = vmatpush1.bf16.msra.mxu0 %v7854
    %8364 = vmatprep.subr.bf16.mxu0 %v7859
    %8365 = vmatpush1.bf16.msra.mxu0 %v7858
    %8366 = vmatprep.subr.bf16.mxu0 %v7863
    %8367 = vmatpush1.bf16.msra.mxu0 %v7862
    %8368 = vmatprep.subr.bf16.mxu0 %v7867
    %8369 = vmatpush1.bf16.msra.mxu0 %v7866
    %8370 = vmatprep.subr.bf16.mxu0 %v7871
    %8371 = vmatpush1.bf16.msra.mxu0 %v7870
    %8372 = vmatprep.subr.bf16.mxu0 %v7875
    %8373 = vmatpush1.bf16.msra.mxu0 %v7874
    %8374 = vmatprep.subr.bf16.mxu0 %v7879
    %8375 = vmatpush1.bf16.msra.mxu0 %v7878
    %8376 = vmatprep.subr.bf16.mxu0 %v7883
    %8377 = vmatpush1.bf16.msra.mxu0 %v7882
    %8378 = vmatprep.subr.bf16.mxu0 %v7887
    %8379 = vmatpush1.bf16.msra.mxu0 %v7886
    %8380 = vmatprep.subr.bf16.mxu0 %v7891
    %8381 = vmatpush1.bf16.msra.mxu0 %v7890
    %8382 = vmatprep.subr.bf16.mxu0 %v7895
    %8383 = vmatpush1.bf16.msra.mxu0 %v7894
    %8384 = vmatprep.subr.bf16.mxu0 %v7899
    %8385 = vmatpush1.bf16.msra.mxu0 %v7898
    %8386 = vmatprep.subr.bf16.mxu0 %v7903
    %8387 = vmatpush1.bf16.msra.mxu0 %v7902
    %8388 = vmatprep.subr.bf16.mxu0 %v7907
    %8389 = vmatpush1.bf16.msra.mxu0 %v7906
    %8390 = vmatprep.mubr.bf16.mxu0 %v6769
    %8391 = vmatmul.mubr.bf16.gmra.mrb[0].mxu0 %v6768
    %v8392 = vpop.f32.mrb[0].mxu0
    %v8393 = vadd.f32 %v7061, %v8392
    %v8394 = vpop.f32.mrb[0].mxu0
    %v8395 = vadd.f32 %v7065, %v8394
    %v8396 = vpop.f32.mrb[0].mxu0
    %v8397 = vadd.f32 %v7061, %v8396
    %v8398 = vpop.f32.mrb[0].mxu0
    %v8399 = vadd.f32 %v7065, %v8398
    %8400 = vmatprep.mubr.bf16.mxu0 %v6777
    %8401 = vmatmul.mubr.bf16.gmra.mrb[0].mxu0 %v6776
    %v8402 = vpop.f32.mrb[0].mxu0
    %v8403 = vadd.f32 %v7061, %v8402
    %v8404 = vpop.f32.mrb[0].mxu0
    %v8405 = vadd.f32 %v7065, %v8404
    %v8406 = vpop.f32.mrb[0].mxu0
    %v8407 = vadd.f32 %v7061, %v8406
    %v8408 = vpop.f32.mrb[0].mxu0
    %v8409 = vadd.f32 %v7065, %v8408
    %8410 = vmatprep.mubr.bf16.mxu0 %v6785
    %8411 = vmatmul.mubr.bf16.gmra.mrb[0].mxu0 %v6784
    %v8412 = vpop.f32.mrb[0].mxu0
    %v8413 = vadd.f32 %v7061, %v8412
    %v8414 = vpop.f32.mrb[0].mxu0
    %v8415 = vadd.f32 %v7065, %v8414
    %v8416 = vpop.f32.mrb[0].mxu0
    %v8417 = vadd.f32 %v7061, %v8416
    %v8418 = vpop.f32.mrb[0].mxu0
    %v8419 = vadd.f32 %v7065, %v8418
    %8420 = vmatprep.mubr.bf16.mxu0 %v6793
    %8421 = vmatmul.mubr.bf16.gmra.mrb[0].mxu0 %v6792
    %v8422 = vpop.f32.mrb[0].mxu0
    %v8423 = vadd.f32 %v7061, %v8422
    %v8424 = vpop.f32.mrb[0].mxu0
    %v8425 = vadd.f32 %v7065, %v8424
    %v8426 = vpop.f32.mrb[0].mxu0
    %v8427 = vadd.f32 %v7061, %v8426
    %v8428 = vpop.f32.mrb[0].mxu0
    %v8429 = vadd.f32 %v7065, %v8428
    %8430 = vdwg.mxu0
    %8431 = vmatprep.subr.bf16.mxu0 %v7911
    %8432 = vmatpush1.bf16.msra.mxu0 %v7910
    %8433 = vmatprep.subr.bf16.mxu0 %v7915
    %8434 = vmatpush1.bf16.msra.mxu0 %v7914
    %8435 = vmatprep.subr.bf16.mxu0 %v7919
    %8436 = vmatpush1.bf16.msra.mxu0 %v7918
    %8437 = vmatprep.subr.bf16.mxu0 %v7923
    %8438 = vmatpush1.bf16.msra.mxu0 %v7922
    %8439 = vmatprep.subr.bf16.mxu0 %v7927
    %8440 = vmatpush1.bf16.msra.mxu0 %v7926
    %8441 = vmatprep.subr.bf16.mxu0 %v7931
    %8442 = vmatpush1.bf16.msra.mxu0 %v7930
    %8443 = vmatprep.subr.bf16.mxu0 %v7935
    %8444 = vmatpush1.bf16.msra.mxu0 %v7934
    %8445 = vmatprep.subr.bf16.mxu0 %v7939
    %8446 = vmatpush1.bf16.msra.mxu0 %v7938
    %8447 = vmatprep.subr.bf16.mxu0 %v7943
    %8448 = vmatpush1.bf16.msra.mxu0 %v7942
    %8449 = vmatprep.subr.bf16.mxu0 %v7947
    %8450 = vmatpush1.bf16.msra.mxu0 %v7946
    %8451 = vmatprep.subr.bf16.mxu0 %v7951
    %8452 = vmatpush1.bf16.msra.mxu0 %v7950
    %8453 = vmatprep.subr.bf16.mxu0 %v7955
    %8454 = vmatpush1.bf16.msra.mxu0 %v7954
    %8455 = vmatprep.subr.bf16.mxu0 %v7959
    %8456 = vmatpush1.bf16.msra.mxu0 %v7958
    %8457 = vmatprep.subr.bf16.mxu0 %v7963
    %8458 = vmatpush1.bf16.msra.mxu0 %v7962
    %8459 = vmatprep.subr.bf16.mxu0 %v7967
    %8460 = vmatpush1.bf16.msra.mxu0 %v7966
    %8461 = vmatprep.subr.bf16.mxu0 %v7971
    %8462 = vmatpush1.bf16.msra.mxu0 %v7970
    %8463 = vmatprep.mubr.bf16.mxu0 %v6771
    %8464 = vmatmul.mubr.bf16.gmra.mrb[0].mxu0 %v6770
    %v8465 = vpop.f32.mrb[0].mxu0
    %v8466 = vadd.f32 %v8393, %v8465
    %v8467 = vpop.f32.mrb[0].mxu0
    %v8468 = vadd.f32 %v8395, %v8467
    %v8469 = vpop.f32.mrb[0].mxu0
    %v8470 = vadd.f32 %v8397, %v8469
    %v8471 = vpop.f32.mrb[0].mxu0
    %v8472 = vadd.f32 %v8399, %v8471
    %8473 = vmatprep.mubr.bf16.mxu0 %v6779
    %8474 = vmatmul.mubr.bf16.gmra.mrb[0].mxu0 %v6778
    %v8475 = vpop.f32.mrb[0].mxu0
    %v8476 = vadd.f32 %v8403, %v8475
    %v8477 = vpop.f32.mrb[0].mxu0
    %v8478 = vadd.f32 %v8405, %v8477
    %v8479 = vpop.f32.mrb[0].mxu0
    %v8480 = vadd.f32 %v8407, %v8479
    %v8481 = vpop.f32.mrb[0].mxu0
    %v8482 = vadd.f32 %v8409, %v8481
    %8483 = vmatprep.mubr.bf16.mxu0 %v6787
    %8484 = vmatmul.mubr.bf16.gmra.mrb[0].mxu0 %v6786
    %v8485 = vpop.f32.mrb[0].mxu0
    %v8486 = vadd.f32 %v8413, %v8485
    %v8487 = vpop.f32.mrb[0].mxu0
    %v8488 = vadd.f32 %v8415, %v8487
    %v8489 = vpop.f32.mrb[0].mxu0
    %v8490 = vadd.f32 %v8417, %v8489
    %v8491 = vpop.f32.mrb[0].mxu0
    %v8492 = vadd.f32 %v8419, %v8491
    %8493 = vmatprep.mubr.bf16.mxu0 %v6795
    %8494 = vmatmul.mubr.bf16.gmra.mrb[0].mxu0 %v6794
    %v8495 = vpop.f32.mrb[0].mxu0
    %v8496 = vadd.f32 %v8423, %v8495
    %v8497 = vpop.f32.mrb[0].mxu0
    %v8498 = vadd.f32 %v8425, %v8497
    %v8499 = vpop.f32.mrb[0].mxu0
    %v8500 = vadd.f32 %v8427, %v8499
    %v8501 = vpop.f32.mrb[0].mxu0
    %v8502 = vadd.f32 %v8429, %v8501
    %8503 = vdwg.mxu0
    %8504 = vmatprep.subr.bf16.mxu0 %v7975
    %8505 = vmatpush1.bf16.msra.mxu0 %v7974
    %8506 = vmatprep.subr.bf16.mxu0 %v7979
    %8507 = vmatpush1.bf16.msra.mxu0 %v7978
    %8508 = vmatprep.subr.bf16.mxu0 %v7983
    %8509 = vmatpush1.bf16.msra.mxu0 %v7982
    %8510 = vmatprep.subr.bf16.mxu0 %v7987
    %8511 = vmatpush1.bf16.msra.mxu0 %v7986
    %8512 = vmatprep.subr.bf16.mxu0 %v7991
    %8513 = vmatpush1.bf16.msra.mxu0 %v7990
    %8514 = vmatprep.subr.bf16.mxu0 %v7995
    %8515 = vmatpush1.bf16.msra.mxu0 %v7994
    %8516 = vmatprep.subr.bf16.mxu0 %v7999
    %8517 = vmatpush1.bf16.msra.mxu0 %v7998
    %8518 = vmatprep.subr.bf16.mxu0 %v8003
    %8519 = vmatpush1.bf16.msra.mxu0 %v8002
    %8520 = vmatprep.subr.bf16.mxu0 %v8007
    %8521 = vmatpush1.bf16.msra.mxu0 %v8006
    %8522 = vmatprep.subr.bf16.mxu0 %v8011
    %8523 = vmatpush1.bf16.msra.mxu0 %v8010
    %8524 = vmatprep.subr.bf16.mxu0 %v8015
    %8525 = vmatpush1.bf16.msra.mxu0 %v8014
    %8526 = vmatprep.subr.bf16.mxu0 %v8019
    %8527 = vmatpush1.bf16.msra.mxu0 %v8018
    %8528 = vmatprep.subr.bf16.mxu0 %v8023
    %8529 = vmatpush1.bf16.msra.mxu0 %v8022
    %8530 = vmatprep.subr.bf16.mxu0 %v8027
    %8531 = vmatpush1.bf16.msra.mxu0 %v8026
    %8532 = vmatprep.subr.bf16.mxu0 %v8031
    %8533 = vmatpush1.bf16.msra.mxu0 %v8030
    %8534 = vmatprep.subr.bf16.mxu0 %v8035
    %8535 = vmatpush1.bf16.msra.mxu0 %v8034
    %8536 = vmatprep.mubr.bf16.mxu0 %v6773
    %8537 = vmatmul.mubr.bf16.gmra.mrb[0].mxu0 %v6772
    %v8538 = vpop.f32.mrb[0].mxu0
    %v8539 = vadd.f32 %v8466, %v8538
    %v8540 = vpop.f32.mrb[0].mxu0
    %v8541 = vadd.f32 %v8468, %v8540
    %v8542 = vpop.f32.mrb[0].mxu0
    %v8543 = vadd.f32 %v8470, %v8542
    %v8544 = vpop.f32.mrb[0].mxu0
    %v8545 = vadd.f32 %v8472, %v8544
    %8546 = vmatprep.mubr.bf16.mxu0 %v6781
    %8547 = vmatmul.mubr.bf16.gmra.mrb[0].mxu0 %v6780
    %v8548 = vpop.f32.mrb[0].mxu0
    %v8549 = vadd.f32 %v8476, %v8548
    %v8550 = vpop.f32.mrb[0].mxu0
    %v8551 = vadd.f32 %v8478, %v8550
    %v8552 = vpop.f32.mrb[0].mxu0
    %v8553 = vadd.f32 %v8480, %v8552
    %v8554 = vpop.f32.mrb[0].mxu0
    %v8555 = vadd.f32 %v8482, %v8554
    %8556 = vmatprep.mubr.bf16.mxu0 %v6789
    %8557 = vmatmul.mubr.bf16.gmra.mrb[0].mxu0 %v6788
    %v8558 = vpop.f32.mrb[0].mxu0
    %v8559 = vadd.f32 %v8486, %v8558
    %v8560 = vpop.f32.mrb[0].mxu0
    %v8561 = vadd.f32 %v8488, %v8560
    %v8562 = vpop.f32.mrb[0].mxu0
    %v8563 = vadd.f32 %v8490, %v8562
    %v8564 = vpop.f32.mrb[0].mxu0
    %v8565 = vadd.f32 %v8492, %v8564
    %8566 = vmatprep.mubr.bf16.mxu0 %v6797
    %8567 = vmatmul.mubr.bf16.gmra.mrb[0].mxu0 %v6796
    %v8568 = vpop.f32.mrb[0].mxu0
    %v8569 = vadd.f32 %v8496, %v8568
    %v8570 = vpop.f32.mrb[0].mxu0
    %v8571 = vadd.f32 %v8498, %v8570
    %v8572 = vpop.f32.mrb[0].mxu0
    %v8573 = vadd.f32 %v8500, %v8572
    %v8574 = vpop.f32.mrb[0].mxu0
    %v8575 = vadd.f32 %v8502, %v8574
    %8576 = vdwg.mxu0
    %8577 = vmatprep.subr.bf16.mxu0 %v8039
    %8578 = vmatpush1.bf16.msra.mxu0 %v8038
    %8579 = vmatprep.subr.bf16.mxu0 %v8043
    %8580 = vmatpush1.bf16.msra.mxu0 %v8042
    %8581 = vmatprep.subr.bf16.mxu0 %v8047
    %8582 = vmatpush1.bf16.msra.mxu0 %v8046
    %8583 = vmatprep.subr.bf16.mxu0 %v8051
    %8584 = vmatpush1.bf16.msra.mxu0 %v8050
    %8585 = vmatprep.subr.bf16.mxu0 %v8055
    %8586 = vmatpush1.bf16.msra.mxu0 %v8054
    %8587 = vmatprep.subr.bf16.mxu0 %v8059
    %8588 = vmatpush1.bf16.msra.mxu0 %v8058
    %8589 = vmatprep.subr.bf16.mxu0 %v8063
    %8590 = vmatpush1.bf16.msra.mxu0 %v8062
    %8591 = vmatprep.subr.bf16.mxu0 %v8067
    %8592 = vmatpush1.bf16.msra.mxu0 %v8066
    %8593 = vmatprep.subr.bf16.mxu0 %v8071
    %8594 = vmatpush1.bf16.msra.mxu0 %v8070
    %8595 = vmatprep.subr.bf16.mxu0 %v8075
    %8596 = vmatpush1.bf16.msra.mxu0 %v8074
    %8597 = vmatprep.subr.bf16.mxu0 %v8079
    %8598 = vmatpush1.bf16.msra.mxu0 %v8078
    %8599 = vmatprep.subr.bf16.mxu0 %v8083
    %8600 = vmatpush1.bf16.msra.mxu0 %v8082
    %8601 = vmatprep.subr.bf16.mxu0 %v8087
    %8602 = vmatpush1.bf16.msra.mxu0 %v8086
    %8603 = vmatprep.subr.bf16.mxu0 %v8091
    %8604 = vmatpush1.bf16.msra.mxu0 %v8090
    %8605 = vmatprep.subr.bf16.mxu0 %v8095
    %8606 = vmatpush1.bf16.msra.mxu0 %v8094
    %8607 = vmatprep.subr.bf16.mxu0 %v8099
    %8608 = vmatpush1.bf16.msra.mxu0 %v8098
    %8609 = vmatprep.mubr.bf16.mxu0 %v6775
    %8610 = vmatmul.mubr.bf16.gmra.mrb[0].mxu0 %v6774
    %v8611 = vpop.f32.mrb[0].mxu0
    %v8612 = vadd.f32 %v8539, %v8611
    %v8613 = vpop.f32.mrb[0].mxu0
    %v8614 = vadd.f32 %v8541, %v8613
    %v8615 = vpop.f32.mrb[0].mxu0
    %v8616 = vadd.f32 %v8543, %v8615
    %v8617 = vpop.f32.mrb[0].mxu0
    %v8618 = vadd.f32 %v8545, %v8617
    %8619 = vmatprep.mubr.bf16.mxu0 %v6783
    %8620 = vmatmul.mubr.bf16.gmra.mrb[0].mxu0 %v6782
    %v8621 = vpop.f32.mrb[0].mxu0
    %v8622 = vadd.f32 %v8549, %v8621
    %v8623 = vpop.f32.mrb[0].mxu0
    %v8624 = vadd.f32 %v8551, %v8623
    %v8625 = vpop.f32.mrb[0].mxu0
    %v8626 = vadd.f32 %v8553, %v8625
    %v8627 = vpop.f32.mrb[0].mxu0
    %v8628 = vadd.f32 %v8555, %v8627
    %8629 = vmatprep.mubr.bf16.mxu0 %v6791
    %8630 = vmatmul.mubr.bf16.gmra.mrb[0].mxu0 %v6790
    %v8631 = vpop.f32.mrb[0].mxu0
    %v8632 = vadd.f32 %v8559, %v8631
    %v8633 = vpop.f32.mrb[0].mxu0
    %v8634 = vadd.f32 %v8561, %v8633
    %v8635 = vpop.f32.mrb[0].mxu0
    %v8636 = vadd.f32 %v8563, %v8635
    %v8637 = vpop.f32.mrb[0].mxu0
    %v8638 = vadd.f32 %v8565, %v8637
    %8639 = vmatprep.mubr.bf16.mxu0 %v6799
    %8640 = vmatmul.mubr.bf16.gmra.mrb[0].mxu0 %v6798
    %v8641 = vpop.f32.mrb[0].mxu0
    %v8642 = vadd.f32 %v8569, %v8641
    %v8643 = vpop.f32.mrb[0].mxu0
    %v8644 = vadd.f32 %v8571, %v8643
    %v8645 = vpop.f32.mrb[0].mxu0
    %v8646 = vadd.f32 %v8573, %v8645
    %v8647 = vpop.f32.mrb[0].mxu0
    %v8648 = vadd.f32 %v8575, %v8647
    %8649 = vdwg.mxu0
    %8650 = vmatprep.subr.bf16.mxu0 %v7849
    %8651 = vmatpush1.bf16.msra.mxu0 %v7848
    %8652 = vmatprep.subr.bf16.mxu0 %v7853
    %8653 = vmatpush1.bf16.msra.mxu0 %v7852
    %8654 = vmatprep.subr.bf16.mxu0 %v7857
    %8655 = vmatpush1.bf16.msra.mxu0 %v7856
    %8656 = vmatprep.subr.bf16.mxu0 %v7861
    %8657 = vmatpush1.bf16.msra.mxu0 %v7860
    %8658 = vmatprep.subr.bf16.mxu0 %v7865
    %8659 = vmatpush1.bf16.msra.mxu0 %v7864
    %8660 = vmatprep.subr.bf16.mxu0 %v7869
    %8661 = vmatpush1.bf16.msra.mxu0 %v7868
    %8662 = vmatprep.subr.bf16.mxu0 %v7873
    %8663 = vmatpush1.bf16.msra.mxu0 %v7872
    %8664 = vmatprep.subr.bf16.mxu0 %v7877
    %8665 = vmatpush1.bf16.msra.mxu0 %v7876
    %8666 = vmatprep.subr.bf16.mxu0 %v7881
    %8667 = vmatpush1.bf16.msra.mxu0 %v7880
    %8668 = vmatprep.subr.bf16.mxu0 %v7885
    %8669 = vmatpush1.bf16.msra.mxu0 %v7884
    %8670 = vmatprep.subr.bf16.mxu0 %v7889
    %8671 = vmatpush1.bf16.msra.mxu0 %v7888
    %8672 = vmatprep.subr.bf16.mxu0 %v7893
    %8673 = vmatpush1.bf16.msra.mxu0 %v7892
    %8674 = vmatprep.subr.bf16.mxu0 %v7897
    %8675 = vmatpush1.bf16.msra.mxu0 %v7896
    %8676 = vmatprep.subr.bf16.mxu0 %v7901
    %8677 = vmatpush1.bf16.msra.mxu0 %v7900
    %8678 = vmatprep.subr.bf16.mxu0 %v7905
    %8679 = vmatpush1.bf16.msra.mxu0 %v7904
    %8680 = vmatprep.subr.bf16.mxu0 %v7909
    %8681 = vmatpush1.bf16.msra.mxu0 %v7908
    %8682 = vmatprep.mubr.bf16.mxu0 %v6769
    %8683 = vmatmul.mubr.bf16.gmra.mrb[0].mxu0 %v6768
    %v8684 = vpop.f32.mrb[0].mxu0
    %v8685 = vadd.f32 %v7069, %v8684
    %v8686 = vpop.f32.mrb[0].mxu0
    %v8687 = vadd.f32 %v7073, %v8686
    %v8688 = vpop.f32.mrb[0].mxu0
    %v8689 = vadd.f32 %v7069, %v8688
    %v8690 = vpop.f32.mrb[0].mxu0
    %v8691 = vadd.f32 %v7073, %v8690
    %8692 = vmatprep.mubr.bf16.mxu0 %v6777
    %8693 = vmatmul.mubr.bf16.gmra.mrb[0].mxu0 %v6776
    %v8694 = vpop.f32.mrb[0].mxu0
    %v8695 = vadd.f32 %v7069, %v8694
    %v8696 = vpop.f32.mrb[0].mxu0
    %v8697 = vadd.f32 %v7073, %v8696
    %v8698 = vpop.f32.mrb[0].mxu0
    %v8699 = vadd.f32 %v7069, %v8698
    %v8700 = vpop.f32.mrb[0].mxu0
    %v8701 = vadd.f32 %v7073, %v8700
    %8702 = vmatprep.mubr.bf16.mxu0 %v6785
    %8703 = vmatmul.mubr.bf16.gmra.mrb[0].mxu0 %v6784
    %v8704 = vpop.f32.mrb[0].mxu0
    %v8705 = vadd.f32 %v7069, %v8704
    %v8706 = vpop.f32.mrb[0].mxu0
    %v8707 = vadd.f32 %v7073, %v8706
    %v8708 = vpop.f32.mrb[0].mxu0
    %v8709 = vadd.f32 %v7069, %v8708
    %v8710 = vpop.f32.mrb[0].mxu0
    %v8711 = vadd.f32 %v7073, %v8710
    %8712 = vmatprep.mubr.bf16.mxu0 %v6793
    %8713 = vmatmul.mubr.bf16.gmra.mrb[0].mxu0 %v6792
    %v8714 = vpop.f32.mrb[0].mxu0
    %v8715 = vadd.f32 %v7069, %v8714
    %v8716 = vpop.f32.mrb[0].mxu0
    %v8717 = vadd.f32 %v7073, %v8716
    %v8718 = vpop.f32.mrb[0].mxu0
    %v8719 = vadd.f32 %v7069, %v8718
    %v8720 = vpop.f32.mrb[0].mxu0
    %v8721 = vadd.f32 %v7073, %v8720
    %8722 = vdwg.mxu0
    %8723 = vmatprep.subr.bf16.mxu0 %v7913
    %8724 = vmatpush1.bf16.msra.mxu0 %v7912
    %8725 = vmatprep.subr.bf16.mxu0 %v7917
    %8726 = vmatpush1.bf16.msra.mxu0 %v7916
    %8727 = vmatprep.subr.bf16.mxu0 %v7921
    %8728 = vmatpush1.bf16.msra.mxu0 %v7920
    %8729 = vmatprep.subr.bf16.mxu0 %v7925
    %8730 = vmatpush1.bf16.msra.mxu0 %v7924
    %8731 = vmatprep.subr.bf16.mxu0 %v7929
    %8732 = vmatpush1.bf16.msra.mxu0 %v7928
    %8733 = vmatprep.subr.bf16.mxu0 %v7933
    %8734 = vmatpush1.bf16.msra.mxu0 %v7932
    %8735 = vmatprep.subr.bf16.mxu0 %v7937
    %8736 = vmatpush1.bf16.msra.mxu0 %v7936
    %8737 = vmatprep.subr.bf16.mxu0 %v7941
    %8738 = vmatpush1.bf16.msra.mxu0 %v7940
    %8739 = vmatprep.subr.bf16.mxu0 %v7945
    %8740 = vmatpush1.bf16.msra.mxu0 %v7944
    %8741 = vmatprep.subr.bf16.mxu0 %v7949
    %8742 = vmatpush1.bf16.msra.mxu0 %v7948
    %8743 = vmatprep.subr.bf16.mxu0 %v7953
    %8744 = vmatpush1.bf16.msra.mxu0 %v7952
    %8745 = vmatprep.subr.bf16.mxu0 %v7957
    %8746 = vmatpush1.bf16.msra.mxu0 %v7956
    %8747 = vmatprep.subr.bf16.mxu0 %v7961
    %8748 = vmatpush1.bf16.msra.mxu0 %v7960
    %8749 = vmatprep.subr.bf16.mxu0 %v7965
    %8750 = vmatpush1.bf16.msra.mxu0 %v7964
    %8751 = vmatprep.subr.bf16.mxu0 %v7969
    %8752 = vmatpush1.bf16.msra.mxu0 %v7968
    %8753 = vmatprep.subr.bf16.mxu0 %v7973
    %8754 = vmatpush1.bf16.msra.mxu0 %v7972
    %8755 = vmatprep.mubr.bf16.mxu0 %v6771
    %8756 = vmatmul.mubr.bf16.gmra.mrb[0].mxu0 %v6770
    %v8757 = vpop.f32.mrb[0].mxu0
    %v8758 = vadd.f32 %v8685, %v8757
    %v8759 = vpop.f32.mrb[0].mxu0
    %v8760 = vadd.f32 %v8687, %v8759
    %v8761 = vpop.f32.mrb[0].mxu0
    %v8762 = vadd.f32 %v8689, %v8761
    %v8763 = vpop.f32.mrb[0].mxu0
    %v8764 = vadd.f32 %v8691, %v8763
    %8765 = vmatprep.mubr.bf16.mxu0 %v6779
    %8766 = vmatmul.mubr.bf16.gmra.mrb[0].mxu0 %v6778
    %v8767 = vpop.f32.mrb[0].mxu0
    %v8768 = vadd.f32 %v8695, %v8767
    %v8769 = vpop.f32.mrb[0].mxu0
    %v8770 = vadd.f32 %v8697, %v8769
    %v8771 = vpop.f32.mrb[0].mxu0
    %v8772 = vadd.f32 %v8699, %v8771
    %v8773 = vpop.f32.mrb[0].mxu0
    %v8774 = vadd.f32 %v8701, %v8773
    %8775 = vmatprep.mubr.bf16.mxu0 %v6787
    %8776 = vmatmul.mubr.bf16.gmra.mrb[0].mxu0 %v6786
    %v8777 = vpop.f32.mrb[0].mxu0
    %v8778 = vadd.f32 %v8705, %v8777
    %v8779 = vpop.f32.mrb[0].mxu0
    %v8780 = vadd.f32 %v8707, %v8779
    %v8781 = vpop.f32.mrb[0].mxu0
    %v8782 = vadd.f32 %v8709, %v8781
    %v8783 = vpop.f32.mrb[0].mxu0
    %v8784 = vadd.f32 %v8711, %v8783
    %8785 = vmatprep.mubr.bf16.mxu0 %v6795
    %8786 = vmatmul.mubr.bf16.gmra.mrb[0].mxu0 %v6794
    %v8787 = vpop.f32.mrb[0].mxu0
    %v8788 = vadd.f32 %v8715, %v8787
    %v8789 = vpop.f32.mrb[0].mxu0
    %v8790 = vadd.f32 %v8717, %v8789
    %v8791 = vpop.f32.mrb[0].mxu0
    %v8792 = vadd.f32 %v8719, %v8791
    %v8793 = vpop.f32.mrb[0].mxu0
    %v8794 = vadd.f32 %v8721, %v8793
    %8795 = vdwg.mxu0
    %8796 = vmatprep.subr.bf16.mxu0 %v7977
    %8797 = vmatpush1.bf16.msra.mxu0 %v7976
    %8798 = vmatprep.subr.bf16.mxu0 %v7981
    %8799 = vmatpush1.bf16.msra.mxu0 %v7980
    %8800 = vmatprep.subr.bf16.mxu0 %v7985
    %8801 = vmatpush1.bf16.msra.mxu0 %v7984
    %8802 = vmatprep.subr.bf16.mxu0 %v7989
    %8803 = vmatpush1.bf16.msra.mxu0 %v7988
    %8804 = vmatprep.subr.bf16.mxu0 %v7993
    %8805 = vmatpush1.bf16.msra.mxu0 %v7992
    %8806 = vmatprep.subr.bf16.mxu0 %v7997
    %8807 = vmatpush1.bf16.msra.mxu0 %v7996
    %8808 = vmatprep.subr.bf16.mxu0 %v8001
    %8809 = vmatpush1.bf16.msra.mxu0 %v8000
    %8810 = vmatprep.subr.bf16.mxu0 %v8005
    %8811 = vmatpush1.bf16.msra.mxu0 %v8004
    %8812 = vmatprep.subr.bf16.mxu0 %v8009
    %8813 = vmatpush1.bf16.msra.mxu0 %v8008
    %8814 = vmatprep.subr.bf16.mxu0 %v8013
    %8815 = vmatpush1.bf16.msra.mxu0 %v8012
    %8816 = vmatprep.subr.bf16.mxu0 %v8017
    %8817 = vmatpush1.bf16.msra.mxu0 %v8016
    %8818 = vmatprep.subr.bf16.mxu0 %v8021
    %8819 = vmatpush1.bf16.msra.mxu0 %v8020
    %8820 = vmatprep.subr.bf16.mxu0 %v8025
    %8821 = vmatpush1.bf16.msra.mxu0 %v8024
    %8822 = vmatprep.subr.bf16.mxu0 %v8029
    %8823 = vmatpush1.bf16.msra.mxu0 %v8028
    %8824 = vmatprep.subr.bf16.mxu0 %v8033
    %8825 = vmatpush1.bf16.msra.mxu0 %v8032
    %8826 = vmatprep.subr.bf16.mxu0 %v8037
    %8827 = vmatpush1.bf16.msra.mxu0 %v8036
    %8828 = vmatprep.mubr.bf16.mxu0 %v6773
    %8829 = vmatmul.mubr.bf16.gmra.mrb[0].mxu0 %v6772
    %v8830 = vpop.f32.mrb[0].mxu0
    %v8831 = vadd.f32 %v8758, %v8830
    %v8832 = vpop.f32.mrb[0].mxu0
    %v8833 = vadd.f32 %v8760, %v8832
    %v8834 = vpop.f32.mrb[0].mxu0
    %v8835 = vadd.f32 %v8762, %v8834
    %v8836 = vpop.f32.mrb[0].mxu0
    %v8837 = vadd.f32 %v8764, %v8836
    %8838 = vmatprep.mubr.bf16.mxu0 %v6781
    %8839 = vmatmul.mubr.bf16.gmra.mrb[0].mxu0 %v6780
    %v8840 = vpop.f32.mrb[0].mxu0
    %v8841 = vadd.f32 %v8768, %v8840
    %v8842 = vpop.f32.mrb[0].mxu0
    %v8843 = vadd.f32 %v8770, %v8842
    %v8844 = vpop.f32.mrb[0].mxu0
    %v8845 = vadd.f32 %v8772, %v8844
    %v8846 = vpop.f32.mrb[0].mxu0
    %v8847 = vadd.f32 %v8774, %v8846
    %8848 = vmatprep.mubr.bf16.mxu0 %v6789
    %8849 = vmatmul.mubr.bf16.gmra.mrb[0].mxu0 %v6788
    %v8850 = vpop.f32.mrb[0].mxu0
    %v8851 = vadd.f32 %v8778, %v8850
    %v8852 = vpop.f32.mrb[0].mxu0
    %v8853 = vadd.f32 %v8780, %v8852
    %v8854 = vpop.f32.mrb[0].mxu0
    %v8855 = vadd.f32 %v8782, %v8854
    %v8856 = vpop.f32.mrb[0].mxu0
    %v8857 = vadd.f32 %v8784, %v8856
    %8858 = vmatprep.mubr.bf16.mxu0 %v6797
    %8859 = vmatmul.mubr.bf16.gmra.mrb[0].mxu0 %v6796
    %v8860 = vpop.f32.mrb[0].mxu0
    %v8861 = vadd.f32 %v8788, %v8860
    %v8862 = vpop.f32.mrb[0].mxu0
    %v8863 = vadd.f32 %v8790, %v8862
    %v8864 = vpop.f32.mrb[0].mxu0
    %v8865 = vadd.f32 %v8792, %v8864
    %v8866 = vpop.f32.mrb[0].mxu0
    %v8867 = vadd.f32 %v8794, %v8866
    %8868 = vdwg.mxu0
    %8869 = vmatprep.subr.bf16.mxu0 %v8041
    %8870 = vmatpush1.bf16.msra.mxu0 %v8040
    %8871 = vmatprep.subr.bf16.mxu0 %v8045
    %8872 = vmatpush1.bf16.msra.mxu0 %v8044
    %8873 = vmatprep.subr.bf16.mxu0 %v8049
    %8874 = vmatpush1.bf16.msra.mxu0 %v8048
    %8875 = vmatprep.subr.bf16.mxu0 %v8053
    %8876 = vmatpush1.bf16.msra.mxu0 %v8052
    %8877 = vmatprep.subr.bf16.mxu0 %v8057
    %8878 = vmatpush1.bf16.msra.mxu0 %v8056
    %8879 = vmatprep.subr.bf16.mxu0 %v8061
    %8880 = vmatpush1.bf16.msra.mxu0 %v8060
    %8881 = vmatprep.subr.bf16.mxu0 %v8065
    %8882 = vmatpush1.bf16.msra.mxu0 %v8064
    %8883 = vmatprep.subr.bf16.mxu0 %v8069
    %8884 = vmatpush1.bf16.msra.mxu0 %v8068
    %8885 = vmatprep.subr.bf16.mxu0 %v8073
    %8886 = vmatpush1.bf16.msra.mxu0 %v8072
    %8887 = vmatprep.subr.bf16.mxu0 %v8077
    %8888 = vmatpush1.bf16.msra.mxu0 %v8076
    %8889 = vmatprep.subr.bf16.mxu0 %v8081
    %8890 = vmatpush1.bf16.msra.mxu0 %v8080
    %8891 = vmatprep.subr.bf16.mxu0 %v8085
    %8892 = vmatpush1.bf16.msra.mxu0 %v8084
    %8893 = vmatprep.subr.bf16.mxu0 %v8089
    %8894 = vmatpush1.bf16.msra.mxu0 %v8088
    %8895 = vmatprep.subr.bf16.mxu0 %v8093
    %8896 = vmatpush1.bf16.msra.mxu0 %v8092
    %8897 = vmatprep.subr.bf16.mxu0 %v8097
    %8898 = vmatpush1.bf16.msra.mxu0 %v8096
    %8899 = vmatprep.subr.bf16.mxu0 %v8101
    %8900 = vmatpush1.bf16.msra.mxu0 %v8100
    %8901 = vmatprep.mubr.bf16.mxu0 %v6775
    %8902 = vmatmul.mubr.bf16.gmra.mrb[0].mxu0 %v6774
    %v8903 = vpop.f32.mrb[0].mxu0
    %v8904 = vadd.f32 %v8831, %v8903
    %v8905 = vpop.f32.mrb[0].mxu0
    %v8906 = vadd.f32 %v8833, %v8905
    %v8907 = vpop.f32.mrb[0].mxu0
    %v8908 = vadd.f32 %v8835, %v8907
    %v8909 = vpop.f32.mrb[0].mxu0
    %v8910 = vadd.f32 %v8837, %v8909
    %8911 = vmatprep.mubr.bf16.mxu0 %v6783
    %8912 = vmatmul.mubr.bf16.gmra.mrb[0].mxu0 %v6782
    %v8913 = vpop.f32.mrb[0].mxu0
    %v8914 = vadd.f32 %v8841, %v8913
    %v8915 = vpop.f32.mrb[0].mxu0
    %v8916 = vadd.f32 %v8843, %v8915
    %v8917 = vpop.f32.mrb[0].mxu0
    %v8918 = vadd.f32 %v8845, %v8917
    %v8919 = vpop.f32.mrb[0].mxu0
    %v8920 = vadd.f32 %v8847, %v8919
    %8921 = vmatprep.mubr.bf16.mxu0 %v6791
    %8922 = vmatmul.mubr.bf16.gmra.mrb[0].mxu0 %v6790
    %v8923 = vpop.f32.mrb[0].mxu0
    %v8924 = vadd.f32 %v8851, %v8923
    %v8925 = vpop.f32.mrb[0].mxu0
    %v8926 = vadd.f32 %v8853, %v8925
    %v8927 = vpop.f32.mrb[0].mxu0
    %v8928 = vadd.f32 %v8855, %v8927
    %v8929 = vpop.f32.mrb[0].mxu0
    %v8930 = vadd.f32 %v8857, %v8929
    %8931 = vmatprep.mubr.bf16.mxu0 %v6799
    %8932 = vmatmul.mubr.bf16.gmra.mrb[0].mxu0 %v6798
    %v8933 = vpop.f32.mrb[0].mxu0
    %v8934 = vadd.f32 %v8861, %v8933
    %v8935 = vpop.f32.mrb[0].mxu0
    %v8936 = vadd.f32 %v8863, %v8935
    %v8937 = vpop.f32.mrb[0].mxu0
    %v8938 = vadd.f32 %v8865, %v8937
    %v8939 = vpop.f32.mrb[0].mxu0
    %v8940 = vadd.f32 %v8867, %v8939
    %8941 = vdwg.mxu0
    %8942 = vst [vmem:[#allocation14] sm:$0xff] %v8612
    %8943 = vst [vmem:[#allocation14 + $0x8] sm:$0xff] %v8614
    %8944 = vst [vmem:[#allocation14 + $0x10] sm:$0xff] %v8904
    %8945 = vst [vmem:[#allocation14 + $0x18] sm:$0xff] %v8906
    %8946 = vst [vmem:[#allocation14 + $0x20] sm:$0xff] %v8616
    %8947 = vst [vmem:[#allocation14 + $0x28] sm:$0xff] %v8618
    %8948 = vst [vmem:[#allocation14 + $0x30] sm:$0xff] %v8908
    %8949 = vst [vmem:[#allocation14 + $0x38] sm:$0xff] %v8910
    %8950 = vst [vmem:[#allocation14 + $0x40] sm:$0xff] %v8622
    %8951 = vst [vmem:[#allocation14 + $0x48] sm:$0xff] %v8624
    %8952 = vst [vmem:[#allocation14 + $0x50] sm:$0xff] %v8914
    %8953 = vst [vmem:[#allocation14 + $0x58] sm:$0xff] %v8916
    %8954 = vst [vmem:[#allocation14 + $0x60] sm:$0xff] %v8626
    %8955 = vst [vmem:[#allocation14 + $0x68] sm:$0xff] %v8628
    %8956 = vst [vmem:[#allocation14 + $0x70] sm:$0xff] %v8918
    %8957 = vst [vmem:[#allocation14 + $0x78] sm:$0xff] %v8920
    %8958 = vst [vmem:[#allocation14 + $0x80] sm:$0xff] %v8632
    %8959 = vst [vmem:[#allocation14 + $0x88] sm:$0xff] %v8634
    %8960 = vst [vmem:[#allocation14 + $0x90] sm:$0xff] %v8924
    %8961 = vst [vmem:[#allocation14 + $0x98] sm:$0xff] %v8926
    %8962 = vst [vmem:[#allocation14 + $0xa0] sm:$0xff] %v8636
    %8963 = vst [vmem:[#allocation14 + $0xa8] sm:$0xff] %v8638
    %8964 = vst [vmem:[#allocation14 + $0xb0] sm:$0xff] %v8928
    %8965 = vst [vmem:[#allocation14 + $0xb8] sm:$0xff] %v8930
    %8966 = vst [vmem:[#allocation14 + $0xc0] sm:$0xff] %v8642
    %8967 = vst [vmem:[#allocation14 + $0xc8] sm:$0xff] %v8644
    %8968 = vst [vmem:[#allocation14 + $0xd0] sm:$0xff] %v8934
    %8969 = vst [vmem:[#allocation14 + $0xd8] sm:$0xff] %v8936
    %8970 = vst [vmem:[#allocation14 + $0xe0] sm:$0xff] %v8646
    %8971 = vst [vmem:[#allocation14 + $0xe8] sm:$0xff] %v8648
    %8972 = vst [vmem:[#allocation14 + $0xf0] sm:$0xff] %v8938
    %8973 = vst [vmem:[#allocation14 + $0xf8] sm:$0xff] %v8940
    // Predicated region
    $region58: #{tpu_custom_call.1} parent=1 // pred_check
      _
    $region59: #{tpu_custom_call.1} parent=1 // pred_check_branch
      %8975 = sbr.rel (0) target = $region61
    $region60: #{tpu_custom_call.1} parent=1 // pred_region
      %s8977 = ssub.s32 4096, 4096
      %8978 = vsyncadd [#allocation4], %s8977
      %s8979 = sshll.u32 [#allocation14], 4
      %s8980 = int_to_ptr.vmem [resolvable:$true] %s8979
      %8985 = dma.vmem_to_hbm [thread:$0]  %s8980, 4096, %s7, [#allocation4], 512, 512, 32
    $region61: #{tpu_custom_call.1} parent=1 // pred_fallthru
      _
    // Predicated region
    $region62: #{tpu_custom_call.1} parent=1 // pred_check
      _
    $region63: #{tpu_custom_call.1} parent=1 // pred_check_branch
      %8987 = sbr.rel (0) target = $region65
    $region64: #{tpu_custom_call.1} parent=1 // pred_region
      %8988 = dma.done [#allocation4], 4096
    $region65: #{tpu_custom_call.1} parent=1 // pred_fallthru
      _
    %8989 = vsyncpa [#allocation3], 1
    %8990 = vsyncpa [#allocation6], 1
    %8991 = vsyncpa [#allocation9], 1
    %8992 = vsyncpa [#allocation12], 1
    %8993 = vsyncpa [#allocation4], 1

</llo_original>
